<compile_context>
chip_gen: v5e
topology: v5e:2x2
jax: 0.10.0
libtpu: 0.0.40
codegen_flags: <defaults>
</compile_context>

<pallas_src>
import jax
import jax.numpy as jnp
from jax.experimental import pallas as pl
from jax.experimental.pallas import tpu as pltpu


# ----------------------------- Pallas kernel -------------------------------

def _make_basic_block_kernel(P, Rp, Rc, S, offsets):
    """Fused conv1+BN1+ReLU -> conv2+BN2+add+ReLU for one batch element."""

    def kernel(xp_ref, w1_ref, w2_ref, sh1_ref, sh2_ref, mask_ref, o_ref, y1_ref):
        # Zero the intermediate buffer so its halo columns are exactly 0
        # (scratch persists across grid steps).
        y1_ref[...] = jnp.zeros((P, Rp), jnp.bfloat16)

        # ---- conv1 + BN1 + ReLU : implicit GEMM over the 27 taps ------------
        acc1 = jnp.zeros((P, Rc), jnp.float32)
        for k, off in enumerate(offsets):
            xs = xp_ref[:, off:off + Rc].astype(jnp.bfloat16)        # (C, Rc)
            acc1 = acc1 + jnp.dot(w1_ref[k], xs,
                                  preferred_element_type=jnp.float32)
        # BN scale already folded into w1; add shift, ReLU, zero wrap-around
        # garbage (non-interior columns) so it acts as conv2's zero padding.
        y1 = jnp.maximum(acc1 + sh1_ref[...], 0.0) * mask_ref[...]
        y1_ref[:, S:S + Rc] = y1.astype(jnp.bfloat16)

        # ---- conv2 + BN2 + residual + ReLU ----------------------------------
        acc2 = jnp.zeros((P, Rc), jnp.float32)
        for k, off in enumerate(offsets):
            ys = y1_ref[:, off:off + Rc]                             # (P, Rc) bf16
            acc2 = acc2 + jnp.dot(w2_ref[k], ys,
                                  preferred_element_type=jnp.float32)
        res = xp_ref[:, S:S + Rc]                                    # f32 residual
        out = jnp.maximum(acc2 + sh2_ref[...] + res, 0.0)
        o_ref[...] = out.astype(o_ref.dtype)

    return kernel


# ------------------------------ JAX glue ------------------------------------

def _fold_bn(gamma, beta, mean, var, eps=1e-5):
    scale = gamma / jnp.sqrt(var + eps)
    shift = beta - mean * scale
    return scale, shift


def _taps(w_oidhw, scale):
    """(Cout, Cin, 3, 3, 3) -> (27, Cout, Cin) bf16 with BN scale folded in."""
    cout, cin = w_oidhw.shape[0], w_oidhw.shape[1]
    w = jnp.transpose(w_oidhw, (2, 3, 4, 0, 1)).reshape(27, cout, cin)
    return (w * scale.reshape(1, cout, 1)).astype(jnp.bfloat16)


def basic_block_forward(x_ncdhw, params):
    """Forward of BasicBlock (stride=1, downsample=None, batch_norm=True, ReLU)."""
    N, C, D, H, W = x_ncdhw.shape
    P = params["w1"].shape[0]
    if params["w1"].shape[1] != C or P != C:
        raise ValueError("stride=1 / downsample=None requires inplanes == planes")

    Dp, Hp, Wp = D + 2, H + 2, W + 2
    Rp = Dp * Hp * Wp                    # padded flat length per sample
    S = Hp * Wp + Wp + 1                 # max |tap offset| in flat coordinates
    Rc = Rp - 2 * S                      # safe column range computed in-kernel
    offsets = tuple(kd * Hp * Wp + kh * Wp + kw
                    for kd in range(3) for kh in range(3) for kw in range(3))

    # Zero-padded, channels-first, flattened-spatial activations: (N, C, Rp).
    xp = jnp.pad(x_ncdhw, ((0, 0), (0, 0), (1, 1), (1, 1), (1, 1)))
    xp = xp.reshape(N, C, Rp).astype(jnp.float32)

    s1, b1 = _fold_bn(params["gamma1"], params["beta1"],
                      params["mean1"], params["var1"])
    s2, b2 = _fold_bn(params["gamma2"], params["beta2"],
                      params["mean2"], params["var2"])
    w1f = _taps(params["w1"], s1)
    w2f = _taps(params["w2"], s2)
    sh1 = b1.reshape(P, 1).astype(jnp.float32)
    sh2 = b2.reshape(P, 1).astype(jnp.float32)

    # Interior mask for columns [S, S+Rc): 1 on real voxels, 0 on halo /
    # wrap-around columns (they must be 0 when conv2 reads them as padding).
    r = jnp.arange(Rc, dtype=jnp.int32) + S
    wi = r % Wp
    hi = (r // Wp) % Hp
    di = r // (Hp * Wp)
    mask = ((di >= 1) & (di <= D) & (hi >= 1) & (hi <= H)
            & (wi >= 1) & (wi <= W)).astype(jnp.float32).reshape(1, Rc)

    kernel = _make_basic_block_kernel(P, Rp, Rc, S, offsets)

    out_flat = pl.pallas_call(
        kernel,
        out_shape=jax.ShapeDtypeStruct((N, P, Rc), jnp.float32),
        grid_spec=pltpu.PrefetchScalarGridSpec(
            num_scalar_prefetch=0,
            grid=(N,),
            in_specs=[
                pl.BlockSpec((None, C, Rp), lambda b: (b, 0, 0)),   # padded flat x
                pl.BlockSpec((27, P, C), lambda b: (0, 0, 0)),      # conv1 taps
                pl.BlockSpec((27, P, P), lambda b: (0, 0, 0)),      # conv2 taps
                pl.BlockSpec((P, 1), lambda b: (0, 0)),             # BN1 shift
                pl.BlockSpec((P, 1), lambda b: (0, 0)),             # BN2 shift
                pl.BlockSpec((1, Rc), lambda b: (0, 0)),            # interior mask
            ],
            out_specs=pl.BlockSpec((None, P, Rc), lambda b: (b, 0, 0)),
            scratch_shapes=[pltpu.VMEM((P, Rp), jnp.bfloat16)],     # y1 stays on-chip
        ),
        compiler_params=pltpu.CompilerParams(
            dimension_semantics=("parallel",),
            vmem_limit_bytes=32 * 1024 * 1024,
        ),
    )(xp, w1f, w2f, sh1, sh2, mask)

    # Scatter the computed columns back into padded-flat space, crop the interior.
    out_full = jnp.pad(out_flat, ((0, 0), (0, 0), (S, S)))          # (N, P, Rp)
    out = out_full.reshape(N, P, Dp, Hp, Wp)[:, :, 1:1 + D, 1:1 + H, 1:1 + W]
    return out


# --------------------------- pure-JAX reference ------------------------------

def _ref_conv_bn(x_ncdhw, w, gamma, beta, mean, var, relu):
    dn = jax.lax.conv_dimension_numbers(x_ncdhw.shape, w.shape,
                                        ("NCDHW", "OIDHW", "NCDHW"))
    y = jax.lax.conv_general_dilated(
        x_ncdhw, w, window_strides=(1, 1, 1), padding="SAME",
        dimension_numbers=dn, precision=jax.lax.Precision.HIGHEST)
    s, b = _fold_bn(gamma, beta, mean, var)
    y = y * s.reshape(1, -1, 1, 1, 1) + b.reshape(1, -1, 1, 1, 1)
    return jnp.maximum(y, 0.0) if relu else y


def basic_block_reference(x, params):
    y = _ref_conv_bn(x, params["w1"], params["gamma1"], params["beta1"],
                     params["mean1"], params["var1"], relu=True)
    y = _ref_conv_bn(y, params["w2"], params["gamma2"], params["beta2"],
                     params["mean2"], params["var2"], relu=False)
    return jnp.maximum(y + x, 0.0)


# --------------------------------- main ---------------------------------------

if __name__ == "__main__":
    key = jax.random.PRNGKey(0)
    kx, kw1, kw2, kg1, kb1, km1, kv1, kg2, kb2, km2, kv2 = jax.random.split(key, 11)

    N, C, D, H, W = 2, 4, 8, 8, 8   # inplanes = planes = 4, stride = 1
    planes = C

    x = jax.random.normal(kx, (N, C, D, H, W), dtype=jnp.float32)

    params = {
        "w1": 0.1 * jax.random.normal(kw1, (planes, C, 3, 3, 3), jnp.float32),
        "w2": 0.1 * jax.random.normal(kw2, (planes, planes, 3, 3, 3), jnp.float32),
        "gamma1": jax.random.uniform(kg1, (planes,), jnp.float32, 0.5, 1.5),
        "beta1": 0.1 * jax.random.normal(kb1, (planes,), jnp.float32),
        "mean1": 0.1 * jax.random.normal(km1, (planes,), jnp.float32),
        "var1": jax.random.uniform(kv1, (planes,), jnp.float32, 0.5, 1.5),
        "gamma2": jax.random.uniform(kg2, (planes,), jnp.float32, 0.5, 1.5),
        "beta2": 0.1 * jax.random.normal(kb2, (planes,), jnp.float32),
        "mean2": 0.1 * jax.random.normal(km2, (planes,), jnp.float32),
        "var2": jax.random.uniform(kv2, (planes,), jnp.float32, 0.5, 1.5),
    }

    out = jax.block_until_ready(jax.jit(basic_block_forward)(x, params))
    ref = jax.block_until_ready(jax.jit(basic_block_reference)(x, params))

    assert out.shape == (N, planes, D, H, W) and out.dtype == jnp.float32
    # Kernel uses bf16 operands / f32 accumulation; reference is f32 HIGHEST.
    if not jnp.allclose(out, ref, atol=5e-2, rtol=5e-2):
        raise AssertionError(
            f"mismatch vs reference, max |diff| = {jnp.max(jnp.abs(out - ref))}")

    print("KERNEL_OK")
</pallas_src>

<mosaic_0001>
module attributes {stable_mosaic.version = 11 : i64} {
  func.func @kernel(%arg0: i32, %arg1: memref<1x4x1000xf32, #tpu.memory_space<vmem>>, %arg2: memref<27x4x4xbf16, #tpu.memory_space<vmem>>, %arg3: memref<27x4x4xbf16, #tpu.memory_space<vmem>>, %arg4: memref<4x1xf32, #tpu.memory_space<vmem>>, %arg5: memref<4x1xf32, #tpu.memory_space<vmem>>, %arg6: memref<1x778xf32, #tpu.memory_space<vmem>>, %arg7: memref<1x4x778xf32, #tpu.memory_space<vmem>>, %arg8: memref<4x1000xbf16, #tpu.memory_space<vmem>>) attributes {dimension_semantics = [#tpu.dimension_semantics<parallel>], iteration_bounds = array<i64: 2>, scalar_prefetch = 0 : i64, scratch_operands = 1 : i64, tpu.core_type = #tpu.core_type<tc>, window_params = [{transform_indices = @transform_0, window_bounds = array<i64: 1, 4, 1000>}, {pipeline_mode = #tpu.pipeline_mode<synchronous>, transform_indices = @transform_1, window_bounds = array<i64: 27, 4, 4>}, {pipeline_mode = #tpu.pipeline_mode<synchronous>, transform_indices = @transform_2, window_bounds = array<i64: 27, 4, 4>}, {pipeline_mode = #tpu.pipeline_mode<synchronous>, transform_indices = @transform_3, window_bounds = array<i64: 4, 1>}, {pipeline_mode = #tpu.pipeline_mode<synchronous>, transform_indices = @transform_4, window_bounds = array<i64: 4, 1>}, {pipeline_mode = #tpu.pipeline_mode<synchronous>, transform_indices = @transform_5, window_bounds = array<i64: 1, 778>}, {transform_indices = @transform_6, window_bounds = array<i64: 1, 4, 778>}]} {
    %cst = arith.constant 0.000000e+00 : bf16
    %0 = vector.broadcast %cst : bf16 to vector<4x1000xbf16>
    %c0 = arith.constant 0 : index
    %c0_0 = arith.constant 0 : index
    %1 = vector.load %arg8[%c0, %c0_0] : memref<4x1000xbf16, #tpu.memory_space<vmem>>, vector<4x1000xbf16>
    tpu.vector_store %arg8[%c0, %c0_0], %0 {strides = array<i32>} : memref<4x1000xbf16, #tpu.memory_space<vmem>>, vector<4x1000xbf16>,
    %cst_1 = arith.constant 0.000000e+00 : f32
    %2 = vector.broadcast %cst_1 : f32 to vector<4x778xf32>
    %c0_2 = arith.constant 0 : index
    %c0_3 = arith.constant 0 : index
    %c0_4 = arith.constant 0 : index
    %3 = vector.load %arg1[%c0_2, %c0_3, %c0_4] : memref<1x4x1000xf32, #tpu.memory_space<vmem>>, vector<1x4x778xf32>
    %4 = vector.shape_cast %3 : vector<1x4x778xf32> to vector<4x778xf32>
    %5 = arith.truncf %4 : vector<4x778xf32> to vector<4x778xbf16>
    %c0_5 = arith.constant 0 : index
    %c0_6 = arith.constant 0 : index
    %c0_7 = arith.constant 0 : index
    %6 = vector.load %arg2[%c0_5, %c0_6, %c0_7] : memref<27x4x4xbf16, #tpu.memory_space<vmem>>, vector<1x4x4xbf16>
    %7 = vector.shape_cast %6 : vector<1x4x4xbf16> to vector<4x4xbf16>
    %cst_8 = arith.constant dense<0.000000e+00> : vector<4x778xf32>
    %8 = tpu.matmul %7, %5, %cst_8 {dimension_numbers = #tpu.dot_dimension_numbers<[1], [0], [0], [1], [0, 0, 1, 1], [], []>} : vector<4x4xbf16>, vector<4x778xbf16>, vector<4x778xf32> -> vector<4x778xf32>
    %9 = arith.addf %2, %8 : vector<4x778xf32>
    %c0_9 = arith.constant 0 : index
    %c0_10 = arith.constant 0 : index
    %c1 = arith.constant 1 : index
    %10 = vector.load %arg1[%c0_9, %c0_10, %c1] : memref<1x4x1000xf32, #tpu.memory_space<vmem>>, vector<1x4x778xf32>
    %11 = vector.shape_cast %10 : vector<1x4x778xf32> to vector<4x778xf32>
    %12 = arith.truncf %11 : vector<4x778xf32> to vector<4x778xbf16>
    %c1_11 = arith.constant 1 : index
    %c0_12 = arith.constant 0 : index
    %c0_13 = arith.constant 0 : index
    %13 = vector.load %arg2[%c1_11, %c0_12, %c0_13] : memref<27x4x4xbf16, #tpu.memory_space<vmem>>, vector<1x4x4xbf16>
    %14 = vector.shape_cast %13 : vector<1x4x4xbf16> to vector<4x4xbf16>
    %cst_14 = arith.constant dense<0.000000e+00> : vector<4x778xf32>
    %15 = tpu.matmul %14, %12, %cst_14 {dimension_numbers = #tpu.dot_dimension_numbers<[1], [0], [0], [1], [0, 0, 1, 1], [], []>} : vector<4x4xbf16>, vector<4x778xbf16>, vector<4x778xf32> -> vector<4x778xf32>
    %16 = arith.addf %9, %15 : vector<4x778xf32>
    %c0_15 = arith.constant 0 : index
    %c0_16 = arith.constant 0 : index
    %c2 = arith.constant 2 : index
    %17 = vector.load %arg1[%c0_15, %c0_16, %c2] : memref<1x4x1000xf32, #tpu.memory_space<vmem>>, vector<1x4x778xf32>
    %18 = vector.shape_cast %17 : vector<1x4x778xf32> to vector<4x778xf32>
    %19 = arith.truncf %18 : vector<4x778xf32> to vector<4x778xbf16>
    %c2_17 = arith.constant 2 : index
    %c0_18 = arith.constant 0 : index
    %c0_19 = arith.constant 0 : index
    %20 = vector.load %arg2[%c2_17, %c0_18, %c0_19] : memref<27x4x4xbf16, #tpu.memory_space<vmem>>, vector<1x4x4xbf16>
    %21 = vector.shape_cast %20 : vector<1x4x4xbf16> to vector<4x4xbf16>
    %cst_20 = arith.constant dense<0.000000e+00> : vector<4x778xf32>
    %22 = tpu.matmul %21, %19, %cst_20 {dimension_numbers = #tpu.dot_dimension_numbers<[1], [0], [0], [1], [0, 0, 1, 1], [], []>} : vector<4x4xbf16>, vector<4x778xbf16>, vector<4x778xf32> -> vector<4x778xf32>
    %23 = arith.addf %16, %22 : vector<4x778xf32>
    %c0_21 = arith.constant 0 : index
    %c0_22 = arith.constant 0 : index
    %c10 = arith.constant 10 : index
    %24 = vector.load %arg1[%c0_21, %c0_22, %c10] : memref<1x4x1000xf32, #tpu.memory_space<vmem>>, vector<1x4x778xf32>
    %25 = vector.shape_cast %24 : vector<1x4x778xf32> to vector<4x778xf32>
    %26 = arith.truncf %25 : vector<4x778xf32> to vector<4x778xbf16>
    %c3 = arith.constant 3 : index
    %c0_23 = arith.constant 0 : index
    %c0_24 = arith.constant 0 : index
    %27 = vector.load %arg2[%c3, %c0_23, %c0_24] : memref<27x4x4xbf16, #tpu.memory_space<vmem>>, vector<1x4x4xbf16>
    %28 = vector.shape_cast %27 : vector<1x4x4xbf16> to vector<4x4xbf16>
    %cst_25 = arith.constant dense<0.000000e+00> : vector<4x778xf32>
    %29 = tpu.matmul %28, %26, %cst_25 {dimension_numbers = #tpu.dot_dimension_numbers<[1], [0], [0], [1], [0, 0, 1, 1], [], []>} : vector<4x4xbf16>, vector<4x778xbf16>, vector<4x778xf32> -> vector<4x778xf32>
    %30 = arith.addf %23, %29 : vector<4x778xf32>
    %c0_26 = arith.constant 0 : index
    %c0_27 = arith.constant 0 : index
    %c11 = arith.constant 11 : index
    %31 = vector.load %arg1[%c0_26, %c0_27, %c11] : memref<1x4x1000xf32, #tpu.memory_space<vmem>>, vector<1x4x778xf32>
    %32 = vector.shape_cast %31 : vector<1x4x778xf32> to vector<4x778xf32>
    %33 = arith.truncf %32 : vector<4x778xf32> to vector<4x778xbf16>
    %c4 = arith.constant 4 : index
    %c0_28 = arith.constant 0 : index
    %c0_29 = arith.constant 0 : index
    %34 = vector.load %arg2[%c4, %c0_28, %c0_29] : memref<27x4x4xbf16, #tpu.memory_space<vmem>>, vector<1x4x4xbf16>
    %35 = vector.shape_cast %34 : vector<1x4x4xbf16> to vector<4x4xbf16>
    %cst_30 = arith.constant dense<0.000000e+00> : vector<4x778xf32>
    %36 = tpu.matmul %35, %33, %cst_30 {dimension_numbers = #tpu.dot_dimension_numbers<[1], [0], [0], [1], [0, 0, 1, 1], [], []>} : vector<4x4xbf16>, vector<4x778xbf16>, vector<4x778xf32> -> vector<4x778xf32>
    %37 = arith.addf %30, %36 : vector<4x778xf32>
    %c0_31 = arith.constant 0 : index
    %c0_32 = arith.constant 0 : index
    %c12 = arith.constant 12 : index
    %38 = vector.load %arg1[%c0_31, %c0_32, %c12] : memref<1x4x1000xf32, #tpu.memory_space<vmem>>, vector<1x4x778xf32>
    %39 = vector.shape_cast %38 : vector<1x4x778xf32> to vector<4x778xf32>
    %40 = arith.truncf %39 : vector<4x778xf32> to vector<4x778xbf16>
    %c5 = arith.constant 5 : index
    %c0_33 = arith.constant 0 : index
    %c0_34 = arith.constant 0 : index
    %41 = vector.load %arg2[%c5, %c0_33, %c0_34] : memref<27x4x4xbf16, #tpu.memory_space<vmem>>, vector<1x4x4xbf16>
    %42 = vector.shape_cast %41 : vector<1x4x4xbf16> to vector<4x4xbf16>
    %cst_35 = arith.constant dense<0.000000e+00> : vector<4x778xf32>
    %43 = tpu.matmul %42, %40, %cst_35 {dimension_numbers = #tpu.dot_dimension_numbers<[1], [0], [0], [1], [0, 0, 1, 1], [], []>} : vector<4x4xbf16>, vector<4x778xbf16>, vector<4x778xf32> -> vector<4x778xf32>
    %44 = arith.addf %37, %43 : vector<4x778xf32>
    %c0_36 = arith.constant 0 : index
    %c0_37 = arith.constant 0 : index
    %c20 = arith.constant 20 : index
    %45 = vector.load %arg1[%c0_36, %c0_37, %c20] : memref<1x4x1000xf32, #tpu.memory_space<vmem>>, vector<1x4x778xf32>
    %46 = vector.shape_cast %45 : vector<1x4x778xf32> to vector<4x778xf32>
    %47 = arith.truncf %46 : vector<4x778xf32> to vector<4x778xbf16>
    %c6 = arith.constant 6 : index
    %c0_38 = arith.constant 0 : index
    %c0_39 = arith.constant 0 : index
    %48 = vector.load %arg2[%c6, %c0_38, %c0_39] : memref<27x4x4xbf16, #tpu.memory_space<vmem>>, vector<1x4x4xbf16>
    %49 = vector.shape_cast %48 : vector<1x4x4xbf16> to vector<4x4xbf16>
    %cst_40 = arith.constant dense<0.000000e+00> : vector<4x778xf32>
    %50 = tpu.matmul %49, %47, %cst_40 {dimension_numbers = #tpu.dot_dimension_numbers<[1], [0], [0], [1], [0, 0, 1, 1], [], []>} : vector<4x4xbf16>, vector<4x778xbf16>, vector<4x778xf32> -> vector<4x778xf32>
    %51 = arith.addf %44, %50 : vector<4x778xf32>
    %c0_41 = arith.constant 0 : index
    %c0_42 = arith.constant 0 : index
    %c21 = arith.constant 21 : index
    %52 = vector.load %arg1[%c0_41, %c0_42, %c21] : memref<1x4x1000xf32, #tpu.memory_space<vmem>>, vector<1x4x778xf32>
    %53 = vector.shape_cast %52 : vector<1x4x778xf32> to vector<4x778xf32>
    %54 = arith.truncf %53 : vector<4x778xf32> to vector<4x778xbf16>
    %c7 = arith.constant 7 : index
    %c0_43 = arith.constant 0 : index
    %c0_44 = arith.constant 0 : index
    %55 = vector.load %arg2[%c7, %c0_43, %c0_44] : memref<27x4x4xbf16, #tpu.memory_space<vmem>>, vector<1x4x4xbf16>
    %56 = vector.shape_cast %55 : vector<1x4x4xbf16> to vector<4x4xbf16>
    %cst_45 = arith.constant dense<0.000000e+00> : vector<4x778xf32>
    %57 = tpu.matmul %56, %54, %cst_45 {dimension_numbers = #tpu.dot_dimension_numbers<[1], [0], [0], [1], [0, 0, 1, 1], [], []>} : vector<4x4xbf16>, vector<4x778xbf16>, vector<4x778xf32> -> vector<4x778xf32>
    %58 = arith.addf %51, %57 : vector<4x778xf32>
    %c0_46 = arith.constant 0 : index
    %c0_47 = arith.constant 0 : index
    %c22 = arith.constant 22 : index
    %59 = vector.load %arg1[%c0_46, %c0_47, %c22] : memref<1x4x1000xf32, #tpu.memory_space<vmem>>, vector<1x4x778xf32>
    %60 = vector.shape_cast %59 : vector<1x4x778xf32> to vector<4x778xf32>
    %61 = arith.truncf %60 : vector<4x778xf32> to vector<4x778xbf16>
    %c8 = arith.constant 8 : index
    %c0_48 = arith.constant 0 : index
    %c0_49 = arith.constant 0 : index
    %62 = vector.load %arg2[%c8, %c0_48, %c0_49] : memref<27x4x4xbf16, #tpu.memory_space<vmem>>, vector<1x4x4xbf16>
    %63 = vector.shape_cast %62 : vector<1x4x4xbf16> to vector<4x4xbf16>
    %cst_50 = arith.constant dense<0.000000e+00> : vector<4x778xf32>
    %64 = tpu.matmul %63, %61, %cst_50 {dimension_numbers = #tpu.dot_dimension_numbers<[1], [0], [0], [1], [0, 0, 1, 1], [], []>} : vector<4x4xbf16>, vector<4x778xbf16>, vector<4x778xf32> -> vector<4x778xf32>
    %65 = arith.addf %58, %64 : vector<4x778xf32>
    %c0_51 = arith.constant 0 : index
    %c0_52 = arith.constant 0 : index
    %c100 = arith.constant 100 : index
    %66 = vector.load %arg1[%c0_51, %c0_52, %c100] : memref<1x4x1000xf32, #tpu.memory_space<vmem>>, vector<1x4x778xf32>
    %67 = vector.shape_cast %66 : vector<1x4x778xf32> to vector<4x778xf32>
    %68 = arith.truncf %67 : vector<4x778xf32> to vector<4x778xbf16>
    %c9 = arith.constant 9 : index
    %c0_53 = arith.constant 0 : index
    %c0_54 = arith.constant 0 : index
    %69 = vector.load %arg2[%c9, %c0_53, %c0_54] : memref<27x4x4xbf16, #tpu.memory_space<vmem>>, vector<1x4x4xbf16>
    %70 = vector.shape_cast %69 : vector<1x4x4xbf16> to vector<4x4xbf16>
    %cst_55 = arith.constant dense<0.000000e+00> : vector<4x778xf32>
    %71 = tpu.matmul %70, %68, %cst_55 {dimension_numbers = #tpu.dot_dimension_numbers<[1], [0], [0], [1], [0, 0, 1, 1], [], []>} : vector<4x4xbf16>, vector<4x778xbf16>, vector<4x778xf32> -> vector<4x778xf32>
    %72 = arith.addf %65, %71 : vector<4x778xf32>
    %c0_56 = arith.constant 0 : index
    %c0_57 = arith.constant 0 : index
    %c101 = arith.constant 101 : index
    %73 = vector.load %arg1[%c0_56, %c0_57, %c101] : memref<1x4x1000xf32, #tpu.memory_space<vmem>>, vector<1x4x778xf32>
    %74 = vector.shape_cast %73 : vector<1x4x778xf32> to vector<4x778xf32>
    %75 = arith.truncf %74 : vector<4x778xf32> to vector<4x778xbf16>
    %c10_58 = arith.constant 10 : index
    %c0_59 = arith.constant 0 : index
    %c0_60 = arith.constant 0 : index
    %76 = vector.load %arg2[%c10_58, %c0_59, %c0_60] : memref<27x4x4xbf16, #tpu.memory_space<vmem>>, vector<1x4x4xbf16>
    %77 = vector.shape_cast %76 : vector<1x4x4xbf16> to vector<4x4xbf16>
    %cst_61 = arith.constant dense<0.000000e+00> : vector<4x778xf32>
    %78 = tpu.matmul %77, %75, %cst_61 {dimension_numbers = #tpu.dot_dimension_numbers<[1], [0], [0], [1], [0, 0, 1, 1], [], []>} : vector<4x4xbf16>, vector<4x778xbf16>, vector<4x778xf32> -> vector<4x778xf32>
    %79 = arith.addf %72, %78 : vector<4x778xf32>
    %c0_62 = arith.constant 0 : index
    %c0_63 = arith.constant 0 : index
    %c102 = arith.constant 102 : index
    %80 = vector.load %arg1[%c0_62, %c0_63, %c102] : memref<1x4x1000xf32, #tpu.memory_space<vmem>>, vector<1x4x778xf32>
    %81 = vector.shape_cast %80 : vector<1x4x778xf32> to vector<4x778xf32>
    %82 = arith.truncf %81 : vector<4x778xf32> to vector<4x778xbf16>
    %c11_64 = arith.constant 11 : index
    %c0_65 = arith.constant 0 : index
    %c0_66 = arith.constant 0 : index
    %83 = vector.load %arg2[%c11_64, %c0_65, %c0_66] : memref<27x4x4xbf16, #tpu.memory_space<vmem>>, vector<1x4x4xbf16>
    %84 = vector.shape_cast %83 : vector<1x4x4xbf16> to vector<4x4xbf16>
    %cst_67 = arith.constant dense<0.000000e+00> : vector<4x778xf32>
    %85 = tpu.matmul %84, %82, %cst_67 {dimension_numbers = #tpu.dot_dimension_numbers<[1], [0], [0], [1], [0, 0, 1, 1], [], []>} : vector<4x4xbf16>, vector<4x778xbf16>, vector<4x778xf32> -> vector<4x778xf32>
    %86 = arith.addf %79, %85 : vector<4x778xf32>
    %c0_68 = arith.constant 0 : index
    %c0_69 = arith.constant 0 : index
    %c110 = arith.constant 110 : index
    %87 = vector.load %arg1[%c0_68, %c0_69, %c110] : memref<1x4x1000xf32, #tpu.memory_space<vmem>>, vector<1x4x778xf32>
    %88 = vector.shape_cast %87 : vector<1x4x778xf32> to vector<4x778xf32>
    %89 = arith.truncf %88 : vector<4x778xf32> to vector<4x778xbf16>
    %c12_70 = arith.constant 12 : index
    %c0_71 = arith.constant 0 : index
    %c0_72 = arith.constant 0 : index
    %90 = vector.load %arg2[%c12_70, %c0_71, %c0_72] : memref<27x4x4xbf16, #tpu.memory_space<vmem>>, vector<1x4x4xbf16>
    %91 = vector.shape_cast %90 : vector<1x4x4xbf16> to vector<4x4xbf16>
    %cst_73 = arith.constant dense<0.000000e+00> : vector<4x778xf32>
    %92 = tpu.matmul %91, %89, %cst_73 {dimension_numbers = #tpu.dot_dimension_numbers<[1], [0], [0], [1], [0, 0, 1, 1], [], []>} : vector<4x4xbf16>, vector<4x778xbf16>, vector<4x778xf32> -> vector<4x778xf32>
    %93 = arith.addf %86, %92 : vector<4x778xf32>
    %c0_74 = arith.constant 0 : index
    %c0_75 = arith.constant 0 : index
    %c111 = arith.constant 111 : index
    %94 = vector.load %arg1[%c0_74, %c0_75, %c111] : memref<1x4x1000xf32, #tpu.memory_space<vmem>>, vector<1x4x778xf32>
    %95 = vector.shape_cast %94 : vector<1x4x778xf32> to vector<4x778xf32>
    %96 = arith.truncf %95 : vector<4x778xf32> to vector<4x778xbf16>
    %c13 = arith.constant 13 : index
    %c0_76 = arith.constant 0 : index
    %c0_77 = arith.constant 0 : index
    %97 = vector.load %arg2[%c13, %c0_76, %c0_77] : memref<27x4x4xbf16, #tpu.memory_space<vmem>>, vector<1x4x4xbf16>
    %98 = vector.shape_cast %97 : vector<1x4x4xbf16> to vector<4x4xbf16>
    %cst_78 = arith.constant dense<0.000000e+00> : vector<4x778xf32>
    %99 = tpu.matmul %98, %96, %cst_78 {dimension_numbers = #tpu.dot_dimension_numbers<[1], [0], [0], [1], [0, 0, 1, 1], [], []>} : vector<4x4xbf16>, vector<4x778xbf16>, vector<4x778xf32> -> vector<4x778xf32>
    %100 = arith.addf %93, %99 : vector<4x778xf32>
    %c0_79 = arith.constant 0 : index
    %c0_80 = arith.constant 0 : index
    %c112 = arith.constant 112 : index
    %101 = vector.load %arg1[%c0_79, %c0_80, %c112] : memref<1x4x1000xf32, #tpu.memory_space<vmem>>, vector<1x4x778xf32>
    %102 = vector.shape_cast %101 : vector<1x4x778xf32> to vector<4x778xf32>
    %103 = arith.truncf %102 : vector<4x778xf32> to vector<4x778xbf16>
    %c14 = arith.constant 14 : index
    %c0_81 = arith.constant 0 : index
    %c0_82 = arith.constant 0 : index
    %104 = vector.load %arg2[%c14, %c0_81, %c0_82] : memref<27x4x4xbf16, #tpu.memory_space<vmem>>, vector<1x4x4xbf16>
    %105 = vector.shape_cast %104 : vector<1x4x4xbf16> to vector<4x4xbf16>
    %cst_83 = arith.constant dense<0.000000e+00> : vector<4x778xf32>
    %106 = tpu.matmul %105, %103, %cst_83 {dimension_numbers = #tpu.dot_dimension_numbers<[1], [0], [0], [1], [0, 0, 1, 1], [], []>} : vector<4x4xbf16>, vector<4x778xbf16>, vector<4x778xf32> -> vector<4x778xf32>
    %107 = arith.addf %100, %106 : vector<4x778xf32>
    %c0_84 = arith.constant 0 : index
    %c0_85 = arith.constant 0 : index
    %c120 = arith.constant 120 : index
    %108 = vector.load %arg1[%c0_84, %c0_85, %c120] : memref<1x4x1000xf32, #tpu.memory_space<vmem>>, vector<1x4x778xf32>
    %109 = vector.shape_cast %108 : vector<1x4x778xf32> to vector<4x778xf32>
    %110 = arith.truncf %109 : vector<4x778xf32> to vector<4x778xbf16>
    %c15 = arith.constant 15 : index
    %c0_86 = arith.constant 0 : index
    %c0_87 = arith.constant 0 : index
    %111 = vector.load %arg2[%c15, %c0_86, %c0_87] : memref<27x4x4xbf16, #tpu.memory_space<vmem>>, vector<1x4x4xbf16>
    %112 = vector.shape_cast %111 : vector<1x4x4xbf16> to vector<4x4xbf16>
    %cst_88 = arith.constant dense<0.000000e+00> : vector<4x778xf32>
    %113 = tpu.matmul %112, %110, %cst_88 {dimension_numbers = #tpu.dot_dimension_numbers<[1], [0], [0], [1], [0, 0, 1, 1], [], []>} : vector<4x4xbf16>, vector<4x778xbf16>, vector<4x778xf32> -> vector<4x778xf32>
    %114 = arith.addf %107, %113 : vector<4x778xf32>
    %c0_89 = arith.constant 0 : index
    %c0_90 = arith.constant 0 : index
    %c121 = arith.constant 121 : index
    %115 = vector.load %arg1[%c0_89, %c0_90, %c121] : memref<1x4x1000xf32, #tpu.memory_space<vmem>>, vector<1x4x778xf32>
    %116 = vector.shape_cast %115 : vector<1x4x778xf32> to vector<4x778xf32>
    %117 = arith.truncf %116 : vector<4x778xf32> to vector<4x778xbf16>
    %c16 = arith.constant 16 : index
    %c0_91 = arith.constant 0 : index
    %c0_92 = arith.constant 0 : index
    %118 = vector.load %arg2[%c16, %c0_91, %c0_92] : memref<27x4x4xbf16, #tpu.memory_space<vmem>>, vector<1x4x4xbf16>
    %119 = vector.shape_cast %118 : vector<1x4x4xbf16> to vector<4x4xbf16>
    %cst_93 = arith.constant dense<0.000000e+00> : vector<4x778xf32>
    %120 = tpu.matmul %119, %117, %cst_93 {dimension_numbers = #tpu.dot_dimension_numbers<[1], [0], [0], [1], [0, 0, 1, 1], [], []>} : vector<4x4xbf16>, vector<4x778xbf16>, vector<4x778xf32> -> vector<4x778xf32>
    %121 = arith.addf %114, %120 : vector<4x778xf32>
    %c0_94 = arith.constant 0 : index
    %c0_95 = arith.constant 0 : index
    %c122 = arith.constant 122 : index
    %122 = vector.load %arg1[%c0_94, %c0_95, %c122] : memref<1x4x1000xf32, #tpu.memory_space<vmem>>, vector<1x4x778xf32>
    %123 = vector.shape_cast %122 : vector<1x4x778xf32> to vector<4x778xf32>
    %124 = arith.truncf %123 : vector<4x778xf32> to vector<4x778xbf16>
    %c17 = arith.constant 17 : index
    %c0_96 = arith.constant 0 : index
    %c0_97 = arith.constant 0 : index
    %125 = vector.load %arg2[%c17, %c0_96, %c0_97] : memref<27x4x4xbf16, #tpu.memory_space<vmem>>, vector<1x4x4xbf16>
    %126 = vector.shape_cast %125 : vector<1x4x4xbf16> to vector<4x4xbf16>
    %cst_98 = arith.constant dense<0.000000e+00> : vector<4x778xf32>
    %127 = tpu.matmul %126, %124, %cst_98 {dimension_numbers = #tpu.dot_dimension_numbers<[1], [0], [0], [1], [0, 0, 1, 1], [], []>} : vector<4x4xbf16>, vector<4x778xbf16>, vector<4x778xf32> -> vector<4x778xf32>
    %128 = arith.addf %121, %127 : vector<4x778xf32>
    %c0_99 = arith.constant 0 : index
    %c0_100 = arith.constant 0 : index
    %c200 = arith.constant 200 : index
    %129 = vector.load %arg1[%c0_99, %c0_100, %c200] : memref<1x4x1000xf32, #tpu.memory_space<vmem>>, vector<1x4x778xf32>
    %130 = vector.shape_cast %129 : vector<1x4x778xf32> to vector<4x778xf32>
    %131 = arith.truncf %130 : vector<4x778xf32> to vector<4x778xbf16>
    %c18 = arith.constant 18 : index
    %c0_101 = arith.constant 0 : index
    %c0_102 = arith.constant 0 : index
    %132 = vector.load %arg2[%c18, %c0_101, %c0_102] : memref<27x4x4xbf16, #tpu.memory_space<vmem>>, vector<1x4x4xbf16>
    %133 = vector.shape_cast %132 : vector<1x4x4xbf16> to vector<4x4xbf16>
    %cst_103 = arith.constant dense<0.000000e+00> : vector<4x778xf32>
    %134 = tpu.matmul %133, %131, %cst_103 {dimension_numbers = #tpu.dot_dimension_numbers<[1], [0], [0], [1], [0, 0, 1, 1], [], []>} : vector<4x4xbf16>, vector<4x778xbf16>, vector<4x778xf32> -> vector<4x778xf32>
    %135 = arith.addf %128, %134 : vector<4x778xf32>
    %c0_104 = arith.constant 0 : index
    %c0_105 = arith.constant 0 : index
    %c201 = arith.constant 201 : index
    %136 = vector.load %arg1[%c0_104, %c0_105, %c201] : memref<1x4x1000xf32, #tpu.memory_space<vmem>>, vector<1x4x778xf32>
    %137 = vector.shape_cast %136 : vector<1x4x778xf32> to vector<4x778xf32>
    %138 = arith.truncf %137 : vector<4x778xf32> to vector<4x778xbf16>
    %c19 = arith.constant 19 : index
    %c0_106 = arith.constant 0 : index
    %c0_107 = arith.constant 0 : index
    %139 = vector.load %arg2[%c19, %c0_106, %c0_107] : memref<27x4x4xbf16, #tpu.memory_space<vmem>>, vector<1x4x4xbf16>
    %140 = vector.shape_cast %139 : vector<1x4x4xbf16> to vector<4x4xbf16>
    %cst_108 = arith.constant dense<0.000000e+00> : vector<4x778xf32>
    %141 = tpu.matmul %140, %138, %cst_108 {dimension_numbers = #tpu.dot_dimension_numbers<[1], [0], [0], [1], [0, 0, 1, 1], [], []>} : vector<4x4xbf16>, vector<4x778xbf16>, vector<4x778xf32> -> vector<4x778xf32>
    %142 = arith.addf %135, %141 : vector<4x778xf32>
    %c0_109 = arith.constant 0 : index
    %c0_110 = arith.constant 0 : index
    %c202 = arith.constant 202 : index
    %143 = vector.load %arg1[%c0_109, %c0_110, %c202] : memref<1x4x1000xf32, #tpu.memory_space<vmem>>, vector<1x4x778xf32>
    %144 = vector.shape_cast %143 : vector<1x4x778xf32> to vector<4x778xf32>
    %145 = arith.truncf %144 : vector<4x778xf32> to vector<4x778xbf16>
    %c20_111 = arith.constant 20 : index
    %c0_112 = arith.constant 0 : index
    %c0_113 = arith.constant 0 : index
    %146 = vector.load %arg2[%c20_111, %c0_112, %c0_113] : memref<27x4x4xbf16, #tpu.memory_space<vmem>>, vector<1x4x4xbf16>
    %147 = vector.shape_cast %146 : vector<1x4x4xbf16> to vector<4x4xbf16>
    %cst_114 = arith.constant dense<0.000000e+00> : vector<4x778xf32>
    %148 = tpu.matmul %147, %145, %cst_114 {dimension_numbers = #tpu.dot_dimension_numbers<[1], [0], [0], [1], [0, 0, 1, 1], [], []>} : vector<4x4xbf16>, vector<4x778xbf16>, vector<4x778xf32> -> vector<4x778xf32>
    %149 = arith.addf %142, %148 : vector<4x778xf32>
    %c0_115 = arith.constant 0 : index
    %c0_116 = arith.constant 0 : index
    %c210 = arith.constant 210 : index
    %150 = vector.load %arg1[%c0_115, %c0_116, %c210] : memref<1x4x1000xf32, #tpu.memory_space<vmem>>, vector<1x4x778xf32>
    %151 = vector.shape_cast %150 : vector<1x4x778xf32> to vector<4x778xf32>
    %152 = arith.truncf %151 : vector<4x778xf32> to vector<4x778xbf16>
    %c21_117 = arith.constant 21 : index
    %c0_118 = arith.constant 0 : index
    %c0_119 = arith.constant 0 : index
    %153 = vector.load %arg2[%c21_117, %c0_118, %c0_119] : memref<27x4x4xbf16, #tpu.memory_space<vmem>>, vector<1x4x4xbf16>
    %154 = vector.shape_cast %153 : vector<1x4x4xbf16> to vector<4x4xbf16>
    %cst_120 = arith.constant dense<0.000000e+00> : vector<4x778xf32>
    %155 = tpu.matmul %154, %152, %cst_120 {dimension_numbers = #tpu.dot_dimension_numbers<[1], [0], [0], [1], [0, 0, 1, 1], [], []>} : vector<4x4xbf16>, vector<4x778xbf16>, vector<4x778xf32> -> vector<4x778xf32>
    %156 = arith.addf %149, %155 : vector<4x778xf32>
    %c0_121 = arith.constant 0 : index
    %c0_122 = arith.constant 0 : index
    %c211 = arith.constant 211 : index
    %157 = vector.load %arg1[%c0_121, %c0_122, %c211] : memref<1x4x1000xf32, #tpu.memory_space<vmem>>, vector<1x4x778xf32>
    %158 = vector.shape_cast %157 : vector<1x4x778xf32> to vector<4x778xf32>
    %159 = arith.truncf %158 : vector<4x778xf32> to vector<4x778xbf16>
    %c22_123 = arith.constant 22 : index
    %c0_124 = arith.constant 0 : index
    %c0_125 = arith.constant 0 : index
    %160 = vector.load %arg2[%c22_123, %c0_124, %c0_125] : memref<27x4x4xbf16, #tpu.memory_space<vmem>>, vector<1x4x4xbf16>
    %161 = vector.shape_cast %160 : vector<1x4x4xbf16> to vector<4x4xbf16>
    %cst_126 = arith.constant dense<0.000000e+00> : vector<4x778xf32>
    %162 = tpu.matmul %161, %159, %cst_126 {dimension_numbers = #tpu.dot_dimension_numbers<[1], [0], [0], [1], [0, 0, 1, 1], [], []>} : vector<4x4xbf16>, vector<4x778xbf16>, vector<4x778xf32> -> vector<4x778xf32>
    %163 = arith.addf %156, %162 : vector<4x778xf32>
    %c0_127 = arith.constant 0 : index
    %c0_128 = arith.constant 0 : index
    %c212 = arith.constant 212 : index
    %164 = vector.load %arg1[%c0_127, %c0_128, %c212] : memref<1x4x1000xf32, #tpu.memory_space<vmem>>, vector<1x4x778xf32>
    %165 = vector.shape_cast %164 : vector<1x4x778xf32> to vector<4x778xf32>
    %166 = arith.truncf %165 : vector<4x778xf32> to vector<4x778xbf16>
    %c23 = arith.constant 23 : index
    %c0_129 = arith.constant 0 : index
    %c0_130 = arith.constant 0 : index
    %167 = vector.load %arg2[%c23, %c0_129, %c0_130] : memref<27x4x4xbf16, #tpu.memory_space<vmem>>, vector<1x4x4xbf16>
    %168 = vector.shape_cast %167 : vector<1x4x4xbf16> to vector<4x4xbf16>
    %cst_131 = arith.constant dense<0.000000e+00> : vector<4x778xf32>
    %169 = tpu.matmul %168, %166, %cst_131 {dimension_numbers = #tpu.dot_dimension_numbers<[1], [0], [0], [1], [0, 0, 1, 1], [], []>} : vector<4x4xbf16>, vector<4x778xbf16>, vector<4x778xf32> -> vector<4x778xf32>
    %170 = arith.addf %163, %169 : vector<4x778xf32>
    %c0_132 = arith.constant 0 : index
    %c0_133 = arith.constant 0 : index
    %c220 = arith.constant 220 : index
    %171 = vector.load %arg1[%c0_132, %c0_133, %c220] : memref<1x4x1000xf32, #tpu.memory_space<vmem>>, vector<1x4x778xf32>
    %172 = vector.shape_cast %171 : vector<1x4x778xf32> to vector<4x778xf32>
    %173 = arith.truncf %172 : vector<4x778xf32> to vector<4x778xbf16>
    %c24 = arith.constant 24 : index
    %c0_134 = arith.constant 0 : index
    %c0_135 = arith.constant 0 : index
    %174 = vector.load %arg2[%c24, %c0_134, %c0_135] : memref<27x4x4xbf16, #tpu.memory_space<vmem>>, vector<1x4x4xbf16>
    %175 = vector.shape_cast %174 : vector<1x4x4xbf16> to vector<4x4xbf16>
    %cst_136 = arith.constant dense<0.000000e+00> : vector<4x778xf32>
    %176 = tpu.matmul %175, %173, %cst_136 {dimension_numbers = #tpu.dot_dimension_numbers<[1], [0], [0], [1], [0, 0, 1, 1], [], []>} : vector<4x4xbf16>, vector<4x778xbf16>, vector<4x778xf32> -> vector<4x778xf32>
    %177 = arith.addf %170, %176 : vector<4x778xf32>
    %c0_137 = arith.constant 0 : index
    %c0_138 = arith.constant 0 : index
    %c221 = arith.constant 221 : index
    %178 = vector.load %arg1[%c0_137, %c0_138, %c221] : memref<1x4x1000xf32, #tpu.memory_space<vmem>>, vector<1x4x778xf32>
    %179 = vector.shape_cast %178 : vector<1x4x778xf32> to vector<4x778xf32>
    %180 = arith.truncf %179 : vector<4x778xf32> to vector<4x778xbf16>
    %c25 = arith.constant 25 : index
    %c0_139 = arith.constant 0 : index
    %c0_140 = arith.constant 0 : index
    %181 = vector.load %arg2[%c25, %c0_139, %c0_140] : memref<27x4x4xbf16, #tpu.memory_space<vmem>>, vector<1x4x4xbf16>
    %182 = vector.shape_cast %181 : vector<1x4x4xbf16> to vector<4x4xbf16>
    %cst_141 = arith.constant dense<0.000000e+00> : vector<4x778xf32>
    %183 = tpu.matmul %182, %180, %cst_141 {dimension_numbers = #tpu.dot_dimension_numbers<[1], [0], [0], [1], [0, 0, 1, 1], [], []>} : vector<4x4xbf16>, vector<4x778xbf16>, vector<4x778xf32> -> vector<4x778xf32>
    %184 = arith.addf %177, %183 : vector<4x778xf32>
    %c0_142 = arith.constant 0 : index
    %c0_143 = arith.constant 0 : index
    %c222 = arith.constant 222 : index
    %185 = vector.load %arg1[%c0_142, %c0_143, %c222] : memref<1x4x1000xf32, #tpu.memory_space<vmem>>, vector<1x4x778xf32>
    %186 = vector.shape_cast %185 : vector<1x4x778xf32> to vector<4x778xf32>
    %187 = arith.truncf %186 : vector<4x778xf32> to vector<4x778xbf16>
    %c26 = arith.constant 26 : index
    %c0_144 = arith.constant 0 : index
    %c0_145 = arith.constant 0 : index
    %188 = vector.load %arg2[%c26, %c0_144, %c0_145] : memref<27x4x4xbf16, #tpu.memory_space<vmem>>, vector<1x4x4xbf16>
    %189 = vector.shape_cast %188 : vector<1x4x4xbf16> to vector<4x4xbf16>
    %cst_146 = arith.constant dense<0.000000e+00> : vector<4x778xf32>
    %190 = tpu.matmul %189, %187, %cst_146 {dimension_numbers = #tpu.dot_dimension_numbers<[1], [0], [0], [1], [0, 0, 1, 1], [], []>} : vector<4x4xbf16>, vector<4x778xbf16>, vector<4x778xf32> -> vector<4x778xf32>
    %191 = arith.addf %184, %190 : vector<4x778xf32>
    %c0_147 = arith.constant 0 : index
    %c0_148 = arith.constant 0 : index
    %192 = vector.load %arg4[%c0_147, %c0_148] : memref<4x1xf32, #tpu.memory_space<vmem>>, vector<4x1xf32>
    %193 = vector.broadcast %192 : vector<4x1xf32> to vector<4x778xf32>
    %194 = arith.addf %191, %193 : vector<4x778xf32>
    %cst_149 = arith.constant 0.000000e+00 : f32
    %195 = vector.broadcast %cst_149 : f32 to vector<4x778xf32>
    %196 = arith.maximumf %194, %195 : vector<4x778xf32>
    %c0_150 = arith.constant 0 : index
    %c0_151 = arith.constant 0 : index
    %197 = vector.load %arg6[%c0_150, %c0_151] : memref<1x778xf32, #tpu.memory_space<vmem>>, vector<1x778xf32>
    %198 = vector.broadcast %197 : vector<1x778xf32> to vector<4x778xf32>
    %199 = arith.mulf %196, %198 : vector<4x778xf32>
    %200 = arith.truncf %199 : vector<4x778xf32> to vector<4x778xbf16>
    %c0_152 = arith.constant 0 : index
    %c111_153 = arith.constant 111 : index
    %201 = vector.load %arg8[%c0_152, %c111_153] : memref<4x1000xbf16, #tpu.memory_space<vmem>>, vector<4x778xbf16>
    tpu.vector_store %arg8[%c0_152, %c111_153], %200 {strides = array<i32>} : memref<4x1000xbf16, #tpu.memory_space<vmem>>, vector<4x778xbf16>,
    %cst_154 = arith.constant 0.000000e+00 : f32
    %202 = vector.broadcast %cst_154 : f32 to vector<4x778xf32>
    %c0_155 = arith.constant 0 : index
    %c0_156 = arith.constant 0 : index
    %203 = vector.load %arg8[%c0_155, %c0_156] : memref<4x1000xbf16, #tpu.memory_space<vmem>>, vector<4x778xbf16>
    %c0_157 = arith.constant 0 : index
    %c0_158 = arith.constant 0 : index
    %c0_159 = arith.constant 0 : index
    %204 = vector.load %arg3[%c0_157, %c0_158, %c0_159] : memref<27x4x4xbf16, #tpu.memory_space<vmem>>, vector<1x4x4xbf16>
    %205 = vector.shape_cast %204 : vector<1x4x4xbf16> to vector<4x4xbf16>
    %cst_160 = arith.constant dense<0.000000e+00> : vector<4x778xf32>
    %206 = tpu.matmul %205, %203, %cst_160 {dimension_numbers = #tpu.dot_dimension_numbers<[1], [0], [0], [1], [0, 0, 1, 1], [], []>} : vector<4x4xbf16>, vector<4x778xbf16>, vector<4x778xf32> -> vector<4x778xf32>
    %207 = arith.addf %202, %206 : vector<4x778xf32>
    %c0_161 = arith.constant 0 : index
    %c1_162 = arith.constant 1 : index
    %208 = vector.load %arg8[%c0_161, %c1_162] : memref<4x1000xbf16, #tpu.memory_space<vmem>>, vector<4x778xbf16>
    %c1_163 = arith.constant 1 : index
    %c0_164 = arith.constant 0 : index
    %c0_165 = arith.constant 0 : index
    %209 = vector.load %arg3[%c1_163, %c0_164, %c0_165] : memref<27x4x4xbf16, #tpu.memory_space<vmem>>, vector<1x4x4xbf16>
    %210 = vector.shape_cast %209 : vector<1x4x4xbf16> to vector<4x4xbf16>
    %cst_166 = arith.constant dense<0.000000e+00> : vector<4x778xf32>
    %211 = tpu.matmul %210, %208, %cst_166 {dimension_numbers = #tpu.dot_dimension_numbers<[1], [0], [0], [1], [0, 0, 1, 1], [], []>} : vector<4x4xbf16>, vector<4x778xbf16>, vector<4x778xf32> -> vector<4x778xf32>
    %212 = arith.addf %207, %211 : vector<4x778xf32>
    %c0_167 = arith.constant 0 : index
    %c2_168 = arith.constant 2 : index
    %213 = vector.load %arg8[%c0_167, %c2_168] : memref<4x1000xbf16, #tpu.memory_space<vmem>>, vector<4x778xbf16>
    %c2_169 = arith.constant 2 : index
    %c0_170 = arith.constant 0 : index
    %c0_171 = arith.constant 0 : index
    %214 = vector.load %arg3[%c2_169, %c0_170, %c0_171] : memref<27x4x4xbf16, #tpu.memory_space<vmem>>, vector<1x4x4xbf16>
    %215 = vector.shape_cast %214 : vector<1x4x4xbf16> to vector<4x4xbf16>
    %cst_172 = arith.constant dense<0.000000e+00> : vector<4x778xf32>
    %216 = tpu.matmul %215, %213, %cst_172 {dimension_numbers = #tpu.dot_dimension_numbers<[1], [0], [0], [1], [0, 0, 1, 1], [], []>} : vector<4x4xbf16>, vector<4x778xbf16>, vector<4x778xf32> -> vector<4x778xf32>
    %217 = arith.addf %212, %216 : vector<4x778xf32>
    %c0_173 = arith.constant 0 : index
    %c10_174 = arith.constant 10 : index
    %218 = vector.load %arg8[%c0_173, %c10_174] : memref<4x1000xbf16, #tpu.memory_space<vmem>>, vector<4x778xbf16>
    %c3_175 = arith.constant 3 : index
    %c0_176 = arith.constant 0 : index
    %c0_177 = arith.constant 0 : index
    %219 = vector.load %arg3[%c3_175, %c0_176, %c0_177] : memref<27x4x4xbf16, #tpu.memory_space<vmem>>, vector<1x4x4xbf16>
    %220 = vector.shape_cast %219 : vector<1x4x4xbf16> to vector<4x4xbf16>
    %cst_178 = arith.constant dense<0.000000e+00> : vector<4x778xf32>
    %221 = tpu.matmul %220, %218, %cst_178 {dimension_numbers = #tpu.dot_dimension_numbers<[1], [0], [0], [1], [0, 0, 1, 1], [], []>} : vector<4x4xbf16>, vector<4x778xbf16>, vector<4x778xf32> -> vector<4x778xf32>
    %222 = arith.addf %217, %221 : vector<4x778xf32>
    %c0_179 = arith.constant 0 : index
    %c11_180 = arith.constant 11 : index
    %223 = vector.load %arg8[%c0_179, %c11_180] : memref<4x1000xbf16, #tpu.memory_space<vmem>>, vector<4x778xbf16>
    %c4_181 = arith.constant 4 : index
    %c0_182 = arith.constant 0 : index
    %c0_183 = arith.constant 0 : index
    %224 = vector.load %arg3[%c4_181, %c0_182, %c0_183] : memref<27x4x4xbf16, #tpu.memory_space<vmem>>, vector<1x4x4xbf16>
    %225 = vector.shape_cast %224 : vector<1x4x4xbf16> to vector<4x4xbf16>
    %cst_184 = arith.constant dense<0.000000e+00> : vector<4x778xf32>
    %226 = tpu.matmul %225, %223, %cst_184 {dimension_numbers = #tpu.dot_dimension_numbers<[1], [0], [0], [1], [0, 0, 1, 1], [], []>} : vector<4x4xbf16>, vector<4x778xbf16>, vector<4x778xf32> -> vector<4x778xf32>
    %227 = arith.addf %222, %226 : vector<4x778xf32>
    %c0_185 = arith.constant 0 : index
    %c12_186 = arith.constant 12 : index
    %228 = vector.load %arg8[%c0_185, %c12_186] : memref<4x1000xbf16, #tpu.memory_space<vmem>>, vector<4x778xbf16>
    %c5_187 = arith.constant 5 : index
    %c0_188 = arith.constant 0 : index
    %c0_189 = arith.constant 0 : index
    %229 = vector.load %arg3[%c5_187, %c0_188, %c0_189] : memref<27x4x4xbf16, #tpu.memory_space<vmem>>, vector<1x4x4xbf16>
    %230 = vector.shape_cast %229 : vector<1x4x4xbf16> to vector<4x4xbf16>
    %cst_190 = arith.constant dense<0.000000e+00> : vector<4x778xf32>
    %231 = tpu.matmul %230, %228, %cst_190 {dimension_numbers = #tpu.dot_dimension_numbers<[1], [0], [0], [1], [0, 0, 1, 1], [], []>} : vector<4x4xbf16>, vector<4x778xbf16>, vector<4x778xf32> -> vector<4x778xf32>
    %232 = arith.addf %227, %231 : vector<4x778xf32>
    %c0_191 = arith.constant 0 : index
    %c20_192 = arith.constant 20 : index
    %233 = vector.load %arg8[%c0_191, %c20_192] : memref<4x1000xbf16, #tpu.memory_space<vmem>>, vector<4x778xbf16>
    %c6_193 = arith.constant 6 : index
    %c0_194 = arith.constant 0 : index
    %c0_195 = arith.constant 0 : index
    %234 = vector.load %arg3[%c6_193, %c0_194, %c0_195] : memref<27x4x4xbf16, #tpu.memory_space<vmem>>, vector<1x4x4xbf16>
    %235 = vector.shape_cast %234 : vector<1x4x4xbf16> to vector<4x4xbf16>
    %cst_196 = arith.constant dense<0.000000e+00> : vector<4x778xf32>
    %236 = tpu.matmul %235, %233, %cst_196 {dimension_numbers = #tpu.dot_dimension_numbers<[1], [0], [0], [1], [0, 0, 1, 1], [], []>} : vector<4x4xbf16>, vector<4x778xbf16>, vector<4x778xf32> -> vector<4x778xf32>
    %237 = arith.addf %232, %236 : vector<4x778xf32>
    %c0_197 = arith.constant 0 : index
    %c21_198 = arith.constant 21 : index
    %238 = vector.load %arg8[%c0_197, %c21_198] : memref<4x1000xbf16, #tpu.memory_space<vmem>>, vector<4x778xbf16>
    %c7_199 = arith.constant 7 : index
    %c0_200 = arith.constant 0 : index
    %c0_201 = arith.constant 0 : index
    %239 = vector.load %arg3[%c7_199, %c0_200, %c0_201] : memref<27x4x4xbf16, #tpu.memory_space<vmem>>, vector<1x4x4xbf16>
    %240 = vector.shape_cast %239 : vector<1x4x4xbf16> to vector<4x4xbf16>
    %cst_202 = arith.constant dense<0.000000e+00> : vector<4x778xf32>
    %241 = tpu.matmul %240, %238, %cst_202 {dimension_numbers = #tpu.dot_dimension_numbers<[1], [0], [0], [1], [0, 0, 1, 1], [], []>} : vector<4x4xbf16>, vector<4x778xbf16>, vector<4x778xf32> -> vector<4x778xf32>
    %242 = arith.addf %237, %241 : vector<4x778xf32>
    %c0_203 = arith.constant 0 : index
    %c22_204 = arith.constant 22 : index
    %243 = vector.load %arg8[%c0_203, %c22_204] : memref<4x1000xbf16, #tpu.memory_space<vmem>>, vector<4x778xbf16>
    %c8_205 = arith.constant 8 : index
    %c0_206 = arith.constant 0 : index
    %c0_207 = arith.constant 0 : index
    %244 = vector.load %arg3[%c8_205, %c0_206, %c0_207] : memref<27x4x4xbf16, #tpu.memory_space<vmem>>, vector<1x4x4xbf16>
    %245 = vector.shape_cast %244 : vector<1x4x4xbf16> to vector<4x4xbf16>
    %cst_208 = arith.constant dense<0.000000e+00> : vector<4x778xf32>
    %246 = tpu.matmul %245, %243, %cst_208 {dimension_numbers = #tpu.dot_dimension_numbers<[1], [0], [0], [1], [0, 0, 1, 1], [], []>} : vector<4x4xbf16>, vector<4x778xbf16>, vector<4x778xf32> -> vector<4x778xf32>
    %247 = arith.addf %242, %246 : vector<4x778xf32>
    %c0_209 = arith.constant 0 : index
    %c100_210 = arith.constant 100 : index
    %248 = vector.load %arg8[%c0_209, %c100_210] : memref<4x1000xbf16, #tpu.memory_space<vmem>>, vector<4x778xbf16>
    %c9_211 = arith.constant 9 : index
    %c0_212 = arith.constant 0 : index
    %c0_213 = arith.constant 0 : index
    %249 = vector.load %arg3[%c9_211, %c0_212, %c0_213] : memref<27x4x4xbf16, #tpu.memory_space<vmem>>, vector<1x4x4xbf16>
    %250 = vector.shape_cast %249 : vector<1x4x4xbf16> to vector<4x4xbf16>
    %cst_214 = arith.constant dense<0.000000e+00> : vector<4x778xf32>
    %251 = tpu.matmul %250, %248, %cst_214 {dimension_numbers = #tpu.dot_dimension_numbers<[1], [0], [0], [1], [0, 0, 1, 1], [], []>} : vector<4x4xbf16>, vector<4x778xbf16>, vector<4x778xf32> -> vector<4x778xf32>
    %252 = arith.addf %247, %251 : vector<4x778xf32>
    %c0_215 = arith.constant 0 : index
    %c101_216 = arith.constant 101 : index
    %253 = vector.load %arg8[%c0_215, %c101_216] : memref<4x1000xbf16, #tpu.memory_space<vmem>>, vector<4x778xbf16>
    %c10_217 = arith.constant 10 : index
    %c0_218 = arith.constant 0 : index
    %c0_219 = arith.constant 0 : index
    %254 = vector.load %arg3[%c10_217, %c0_218, %c0_219] : memref<27x4x4xbf16, #tpu.memory_space<vmem>>, vector<1x4x4xbf16>
    %255 = vector.shape_cast %254 : vector<1x4x4xbf16> to vector<4x4xbf16>
    %cst_220 = arith.constant dense<0.000000e+00> : vector<4x778xf32>
    %256 = tpu.matmul %255, %253, %cst_220 {dimension_numbers = #tpu.dot_dimension_numbers<[1], [0], [0], [1], [0, 0, 1, 1], [], []>} : vector<4x4xbf16>, vector<4x778xbf16>, vector<4x778xf32> -> vector<4x778xf32>
    %257 = arith.addf %252, %256 : vector<4x778xf32>
    %c0_221 = arith.constant 0 : index
    %c102_222 = arith.constant 102 : index
    %258 = vector.load %arg8[%c0_221, %c102_222] : memref<4x1000xbf16, #tpu.memory_space<vmem>>, vector<4x778xbf16>
    %c11_223 = arith.constant 11 : index
    %c0_224 = arith.constant 0 : index
    %c0_225 = arith.constant 0 : index
    %259 = vector.load %arg3[%c11_223, %c0_224, %c0_225] : memref<27x4x4xbf16, #tpu.memory_space<vmem>>, vector<1x4x4xbf16>
    %260 = vector.shape_cast %259 : vector<1x4x4xbf16> to vector<4x4xbf16>
    %cst_226 = arith.constant dense<0.000000e+00> : vector<4x778xf32>
    %261 = tpu.matmul %260, %258, %cst_226 {dimension_numbers = #tpu.dot_dimension_numbers<[1], [0], [0], [1], [0, 0, 1, 1], [], []>} : vector<4x4xbf16>, vector<4x778xbf16>, vector<4x778xf32> -> vector<4x778xf32>
    %262 = arith.addf %257, %261 : vector<4x778xf32>
    %c0_227 = arith.constant 0 : index
    %c110_228 = arith.constant 110 : index
    %263 = vector.load %arg8[%c0_227, %c110_228] : memref<4x1000xbf16, #tpu.memory_space<vmem>>, vector<4x778xbf16>
    %c12_229 = arith.constant 12 : index
    %c0_230 = arith.constant 0 : index
    %c0_231 = arith.constant 0 : index
    %264 = vector.load %arg3[%c12_229, %c0_230, %c0_231] : memref<27x4x4xbf16, #tpu.memory_space<vmem>>, vector<1x4x4xbf16>
    %265 = vector.shape_cast %264 : vector<1x4x4xbf16> to vector<4x4xbf16>
    %cst_232 = arith.constant dense<0.000000e+00> : vector<4x778xf32>
    %266 = tpu.matmul %265, %263, %cst_232 {dimension_numbers = #tpu.dot_dimension_numbers<[1], [0], [0], [1], [0, 0, 1, 1], [], []>} : vector<4x4xbf16>, vector<4x778xbf16>, vector<4x778xf32> -> vector<4x778xf32>
    %267 = arith.addf %262, %266 : vector<4x778xf32>
    %c0_233 = arith.constant 0 : index
    %c111_234 = arith.constant 111 : index
    %268 = vector.load %arg8[%c0_233, %c111_234] : memref<4x1000xbf16, #tpu.memory_space<vmem>>, vector<4x778xbf16>
    %c13_235 = arith.constant 13 : index
    %c0_236 = arith.constant 0 : index
    %c0_237 = arith.constant 0 : index
    %269 = vector.load %arg3[%c13_235, %c0_236, %c0_237] : memref<27x4x4xbf16, #tpu.memory_space<vmem>>, vector<1x4x4xbf16>
    %270 = vector.shape_cast %269 : vector<1x4x4xbf16> to vector<4x4xbf16>
    %cst_238 = arith.constant dense<0.000000e+00> : vector<4x778xf32>
    %271 = tpu.matmul %270, %268, %cst_238 {dimension_numbers = #tpu.dot_dimension_numbers<[1], [0], [0], [1], [0, 0, 1, 1], [], []>} : vector<4x4xbf16>, vector<4x778xbf16>, vector<4x778xf32> -> vector<4x778xf32>
    %272 = arith.addf %267, %271 : vector<4x778xf32>
    %c0_239 = arith.constant 0 : index
    %c112_240 = arith.constant 112 : index
    %273 = vector.load %arg8[%c0_239, %c112_240] : memref<4x1000xbf16, #tpu.memory_space<vmem>>, vector<4x778xbf16>
    %c14_241 = arith.constant 14 : index
    %c0_242 = arith.constant 0 : index
    %c0_243 = arith.constant 0 : index
    %274 = vector.load %arg3[%c14_241, %c0_242, %c0_243] : memref<27x4x4xbf16, #tpu.memory_space<vmem>>, vector<1x4x4xbf16>
    %275 = vector.shape_cast %274 : vector<1x4x4xbf16> to vector<4x4xbf16>
    %cst_244 = arith.constant dense<0.000000e+00> : vector<4x778xf32>
    %276 = tpu.matmul %275, %273, %cst_244 {dimension_numbers = #tpu.dot_dimension_numbers<[1], [0], [0], [1], [0, 0, 1, 1], [], []>} : vector<4x4xbf16>, vector<4x778xbf16>, vector<4x778xf32> -> vector<4x778xf32>
    %277 = arith.addf %272, %276 : vector<4x778xf32>
    %c0_245 = arith.constant 0 : index
    %c120_246 = arith.constant 120 : index
    %278 = vector.load %arg8[%c0_245, %c120_246] : memref<4x1000xbf16, #tpu.memory_space<vmem>>, vector<4x778xbf16>
    %c15_247 = arith.constant 15 : index
    %c0_248 = arith.constant 0 : index
    %c0_249 = arith.constant 0 : index
    %279 = vector.load %arg3[%c15_247, %c0_248, %c0_249] : memref<27x4x4xbf16, #tpu.memory_space<vmem>>, vector<1x4x4xbf16>
    %280 = vector.shape_cast %279 : vector<1x4x4xbf16> to vector<4x4xbf16>
    %cst_250 = arith.constant dense<0.000000e+00> : vector<4x778xf32>
    %281 = tpu.matmul %280, %278, %cst_250 {dimension_numbers = #tpu.dot_dimension_numbers<[1], [0], [0], [1], [0, 0, 1, 1], [], []>} : vector<4x4xbf16>, vector<4x778xbf16>, vector<4x778xf32> -> vector<4x778xf32>
    %282 = arith.addf %277, %281 : vector<4x778xf32>
    %c0_251 = arith.constant 0 : index
    %c121_252 = arith.constant 121 : index
    %283 = vector.load %arg8[%c0_251, %c121_252] : memref<4x1000xbf16, #tpu.memory_space<vmem>>, vector<4x778xbf16>
    %c16_253 = arith.constant 16 : index
    %c0_254 = arith.constant 0 : index
    %c0_255 = arith.constant 0 : index
    %284 = vector.load %arg3[%c16_253, %c0_254, %c0_255] : memref<27x4x4xbf16, #tpu.memory_space<vmem>>, vector<1x4x4xbf16>
    %285 = vector.shape_cast %284 : vector<1x4x4xbf16> to vector<4x4xbf16>
    %cst_256 = arith.constant dense<0.000000e+00> : vector<4x778xf32>
    %286 = tpu.matmul %285, %283, %cst_256 {dimension_numbers = #tpu.dot_dimension_numbers<[1], [0], [0], [1], [0, 0, 1, 1], [], []>} : vector<4x4xbf16>, vector<4x778xbf16>, vector<4x778xf32> -> vector<4x778xf32>
    %287 = arith.addf %282, %286 : vector<4x778xf32>
    %c0_257 = arith.constant 0 : index
    %c122_258 = arith.constant 122 : index
    %288 = vector.load %arg8[%c0_257, %c122_258] : memref<4x1000xbf16, #tpu.memory_space<vmem>>, vector<4x778xbf16>
    %c17_259 = arith.constant 17 : index
    %c0_260 = arith.constant 0 : index
    %c0_261 = arith.constant 0 : index
    %289 = vector.load %arg3[%c17_259, %c0_260, %c0_261] : memref<27x4x4xbf16, #tpu.memory_space<vmem>>, vector<1x4x4xbf16>
    %290 = vector.shape_cast %289 : vector<1x4x4xbf16> to vector<4x4xbf16>
    %cst_262 = arith.constant dense<0.000000e+00> : vector<4x778xf32>
    %291 = tpu.matmul %290, %288, %cst_262 {dimension_numbers = #tpu.dot_dimension_numbers<[1], [0], [0], [1], [0, 0, 1, 1], [], []>} : vector<4x4xbf16>, vector<4x778xbf16>, vector<4x778xf32> -> vector<4x778xf32>
    %292 = arith.addf %287, %291 : vector<4x778xf32>
    %c0_263 = arith.constant 0 : index
    %c200_264 = arith.constant 200 : index
    %293 = vector.load %arg8[%c0_263, %c200_264] : memref<4x1000xbf16, #tpu.memory_space<vmem>>, vector<4x778xbf16>
    %c18_265 = arith.constant 18 : index
    %c0_266 = arith.constant 0 : index
    %c0_267 = arith.constant 0 : index
    %294 = vector.load %arg3[%c18_265, %c0_266, %c0_267] : memref<27x4x4xbf16, #tpu.memory_space<vmem>>, vector<1x4x4xbf16>
    %295 = vector.shape_cast %294 : vector<1x4x4xbf16> to vector<4x4xbf16>
    %cst_268 = arith.constant dense<0.000000e+00> : vector<4x778xf32>
    %296 = tpu.matmul %295, %293, %cst_268 {dimension_numbers = #tpu.dot_dimension_numbers<[1], [0], [0], [1], [0, 0, 1, 1], [], []>} : vector<4x4xbf16>, vector<4x778xbf16>, vector<4x778xf32> -> vector<4x778xf32>
    %297 = arith.addf %292, %296 : vector<4x778xf32>
    %c0_269 = arith.constant 0 : index
    %c201_270 = arith.constant 201 : index
    %298 = vector.load %arg8[%c0_269, %c201_270] : memref<4x1000xbf16, #tpu.memory_space<vmem>>, vector<4x778xbf16>
    %c19_271 = arith.constant 19 : index
    %c0_272 = arith.constant 0 : index
    %c0_273 = arith.constant 0 : index
    %299 = vector.load %arg3[%c19_271, %c0_272, %c0_273] : memref<27x4x4xbf16, #tpu.memory_space<vmem>>, vector<1x4x4xbf16>
    %300 = vector.shape_cast %299 : vector<1x4x4xbf16> to vector<4x4xbf16>
    %cst_274 = arith.constant dense<0.000000e+00> : vector<4x778xf32>
    %301 = tpu.matmul %300, %298, %cst_274 {dimension_numbers = #tpu.dot_dimension_numbers<[1], [0], [0], [1], [0, 0, 1, 1], [], []>} : vector<4x4xbf16>, vector<4x778xbf16>, vector<4x778xf32> -> vector<4x778xf32>
    %302 = arith.addf %297, %301 : vector<4x778xf32>
    %c0_275 = arith.constant 0 : index
    %c202_276 = arith.constant 202 : index
    %303 = vector.load %arg8[%c0_275, %c202_276] : memref<4x1000xbf16, #tpu.memory_space<vmem>>, vector<4x778xbf16>
    %c20_277 = arith.constant 20 : index
    %c0_278 = arith.constant 0 : index
    %c0_279 = arith.constant 0 : index
    %304 = vector.load %arg3[%c20_277, %c0_278, %c0_279] : memref<27x4x4xbf16, #tpu.memory_space<vmem>>, vector<1x4x4xbf16>
    %305 = vector.shape_cast %304 : vector<1x4x4xbf16> to vector<4x4xbf16>
    %cst_280 = arith.constant dense<0.000000e+00> : vector<4x778xf32>
    %306 = tpu.matmul %305, %303, %cst_280 {dimension_numbers = #tpu.dot_dimension_numbers<[1], [0], [0], [1], [0, 0, 1, 1], [], []>} : vector<4x4xbf16>, vector<4x778xbf16>, vector<4x778xf32> -> vector<4x778xf32>
    %307 = arith.addf %302, %306 : vector<4x778xf32>
    %c0_281 = arith.constant 0 : index
    %c210_282 = arith.constant 210 : index
    %308 = vector.load %arg8[%c0_281, %c210_282] : memref<4x1000xbf16, #tpu.memory_space<vmem>>, vector<4x778xbf16>
    %c21_283 = arith.constant 21 : index
    %c0_284 = arith.constant 0 : index
    %c0_285 = arith.constant 0 : index
    %309 = vector.load %arg3[%c21_283, %c0_284, %c0_285] : memref<27x4x4xbf16, #tpu.memory_space<vmem>>, vector<1x4x4xbf16>
    %310 = vector.shape_cast %309 : vector<1x4x4xbf16> to vector<4x4xbf16>
    %cst_286 = arith.constant dense<0.000000e+00> : vector<4x778xf32>
    %311 = tpu.matmul %310, %308, %cst_286 {dimension_numbers = #tpu.dot_dimension_numbers<[1], [0], [0], [1], [0, 0, 1, 1], [], []>} : vector<4x4xbf16>, vector<4x778xbf16>, vector<4x778xf32> -> vector<4x778xf32>
    %312 = arith.addf %307, %311 : vector<4x778xf32>
    %c0_287 = arith.constant 0 : index
    %c211_288 = arith.constant 211 : index
    %313 = vector.load %arg8[%c0_287, %c211_288] : memref<4x1000xbf16, #tpu.memory_space<vmem>>, vector<4x778xbf16>
    %c22_289 = arith.constant 22 : index
    %c0_290 = arith.constant 0 : index
    %c0_291 = arith.constant 0 : index
    %314 = vector.load %arg3[%c22_289, %c0_290, %c0_291] : memref<27x4x4xbf16, #tpu.memory_space<vmem>>, vector<1x4x4xbf16>
    %315 = vector.shape_cast %314 : vector<1x4x4xbf16> to vector<4x4xbf16>
    %cst_292 = arith.constant dense<0.000000e+00> : vector<4x778xf32>
    %316 = tpu.matmul %315, %313, %cst_292 {dimension_numbers = #tpu.dot_dimension_numbers<[1], [0], [0], [1], [0, 0, 1, 1], [], []>} : vector<4x4xbf16>, vector<4x778xbf16>, vector<4x778xf32> -> vector<4x778xf32>
    %317 = arith.addf %312, %316 : vector<4x778xf32>
    %c0_293 = arith.constant 0 : index
    %c212_294 = arith.constant 212 : index
    %318 = vector.load %arg8[%c0_293, %c212_294] : memref<4x1000xbf16, #tpu.memory_space<vmem>>, vector<4x778xbf16>
    %c23_295 = arith.constant 23 : index
    %c0_296 = arith.constant 0 : index
    %c0_297 = arith.constant 0 : index
    %319 = vector.load %arg3[%c23_295, %c0_296, %c0_297] : memref<27x4x4xbf16, #tpu.memory_space<vmem>>, vector<1x4x4xbf16>
    %320 = vector.shape_cast %319 : vector<1x4x4xbf16> to vector<4x4xbf16>
    %cst_298 = arith.constant dense<0.000000e+00> : vector<4x778xf32>
    %321 = tpu.matmul %320, %318, %cst_298 {dimension_numbers = #tpu.dot_dimension_numbers<[1], [0], [0], [1], [0, 0, 1, 1], [], []>} : vector<4x4xbf16>, vector<4x778xbf16>, vector<4x778xf32> -> vector<4x778xf32>
    %322 = arith.addf %317, %321 : vector<4x778xf32>
    %c0_299 = arith.constant 0 : index
    %c220_300 = arith.constant 220 : index
    %323 = vector.load %arg8[%c0_299, %c220_300] : memref<4x1000xbf16, #tpu.memory_space<vmem>>, vector<4x778xbf16>
    %c24_301 = arith.constant 24 : index
    %c0_302 = arith.constant 0 : index
    %c0_303 = arith.constant 0 : index
    %324 = vector.load %arg3[%c24_301, %c0_302, %c0_303] : memref<27x4x4xbf16, #tpu.memory_space<vmem>>, vector<1x4x4xbf16>
    %325 = vector.shape_cast %324 : vector<1x4x4xbf16> to vector<4x4xbf16>
    %cst_304 = arith.constant dense<0.000000e+00> : vector<4x778xf32>
    %326 = tpu.matmul %325, %323, %cst_304 {dimension_numbers = #tpu.dot_dimension_numbers<[1], [0], [0], [1], [0, 0, 1, 1], [], []>} : vector<4x4xbf16>, vector<4x778xbf16>, vector<4x778xf32> -> vector<4x778xf32>
    %327 = arith.addf %322, %326 : vector<4x778xf32>
    %c0_305 = arith.constant 0 : index
    %c221_306 = arith.constant 221 : index
    %328 = vector.load %arg8[%c0_305, %c221_306] : memref<4x1000xbf16, #tpu.memory_space<vmem>>, vector<4x778xbf16>
    %c25_307 = arith.constant 25 : index
    %c0_308 = arith.constant 0 : index
    %c0_309 = arith.constant 0 : index
    %329 = vector.load %arg3[%c25_307, %c0_308, %c0_309] : memref<27x4x4xbf16, #tpu.memory_space<vmem>>, vector<1x4x4xbf16>
    %330 = vector.shape_cast %329 : vector<1x4x4xbf16> to vector<4x4xbf16>
    %cst_310 = arith.constant dense<0.000000e+00> : vector<4x778xf32>
    %331 = tpu.matmul %330, %328, %cst_310 {dimension_numbers = #tpu.dot_dimension_numbers<[1], [0], [0], [1], [0, 0, 1, 1], [], []>} : vector<4x4xbf16>, vector<4x778xbf16>, vector<4x778xf32> -> vector<4x778xf32>
    %332 = arith.addf %327, %331 : vector<4x778xf32>
    %c0_311 = arith.constant 0 : index
    %c222_312 = arith.constant 222 : index
    %333 = vector.load %arg8[%c0_311, %c222_312] : memref<4x1000xbf16, #tpu.memory_space<vmem>>, vector<4x778xbf16>
    %c26_313 = arith.constant 26 : index
    %c0_314 = arith.constant 0 : index
    %c0_315 = arith.constant 0 : index
    %334 = vector.load %arg3[%c26_313, %c0_314, %c0_315] : memref<27x4x4xbf16, #tpu.memory_space<vmem>>, vector<1x4x4xbf16>
    %335 = vector.shape_cast %334 : vector<1x4x4xbf16> to vector<4x4xbf16>
    %cst_316 = arith.constant dense<0.000000e+00> : vector<4x778xf32>
    %336 = tpu.matmul %335, %333, %cst_316 {dimension_numbers = #tpu.dot_dimension_numbers<[1], [0], [0], [1], [0, 0, 1, 1], [], []>} : vector<4x4xbf16>, vector<4x778xbf16>, vector<4x778xf32> -> vector<4x778xf32>
    %337 = arith.addf %332, %336 : vector<4x778xf32>
    %c0_317 = arith.constant 0 : index
    %c0_318 = arith.constant 0 : index
    %c111_319 = arith.constant 111 : index
    %338 = vector.load %arg1[%c0_317, %c0_318, %c111_319] : memref<1x4x1000xf32, #tpu.memory_space<vmem>>, vector<1x4x778xf32>
    %339 = vector.shape_cast %338 : vector<1x4x778xf32> to vector<4x778xf32>
    %c0_320 = arith.constant 0 : index
    %c0_321 = arith.constant 0 : index
    %340 = vector.load %arg5[%c0_320, %c0_321] : memref<4x1xf32, #tpu.memory_space<vmem>>, vector<4x1xf32>
    %341 = vector.broadcast %340 : vector<4x1xf32> to vector<4x778xf32>
    %342 = arith.addf %337, %341 : vector<4x778xf32>
    %343 = arith.addf %342, %339 : vector<4x778xf32>
    %cst_322 = arith.constant 0.000000e+00 : f32
    %344 = vector.broadcast %cst_322 : f32 to vector<4x778xf32>
    %345 = arith.maximumf %343, %344 : vector<4x778xf32>
    %c0_323 = arith.constant 0 : index
    %c0_324 = arith.constant 0 : index
    %c0_325 = arith.constant 0 : index
    %346 = vector.load %arg7[%c0_323, %c0_324, %c0_325] : memref<1x4x778xf32, #tpu.memory_space<vmem>>, vector<1x4x778xf32>
    %347 = vector.shape_cast %346 : vector<1x4x778xf32> to vector<4x778xf32>
    %348 = vector.shape_cast %345 : vector<4x778xf32> to vector<1x4x778xf32>
    tpu.vector_store %arg7[%c0_323, %c0_324, %c0_325], %348 {strides = array<i32>} : memref<1x4x778xf32, #tpu.memory_space<vmem>>, vector<1x4x778xf32>,
    return
  }
  func.func @transform_0(%arg0: i32) -> (i32, i32, i32) {
    %c0_i32 = arith.constant 0 : i32
    %c0_i32_0 = arith.constant 0 : i32
    %c0_i32_1 = arith.constant 0 : i32
    return %arg0, %c0_i32, %c0_i32_0 : i32, i32, i32
  }
  func.func @transform_1(%arg0: i32) -> (i32, i32, i32) {
    %c0_i32 = arith.constant 0 : i32
    %c0_i32_0 = arith.constant 0 : i32
    %c0_i32_1 = arith.constant 0 : i32
    %c0_i32_2 = arith.constant 0 : i32
    return %c0_i32, %c0_i32_0, %c0_i32_1 : i32, i32, i32
  }
  func.func @transform_2(%arg0: i32) -> (i32, i32, i32) {
    %c0_i32 = arith.constant 0 : i32
    %c0_i32_0 = arith.constant 0 : i32
    %c0_i32_1 = arith.constant 0 : i32
    %c0_i32_2 = arith.constant 0 : i32
    return %c0_i32, %c0_i32_0, %c0_i32_1 : i32, i32, i32
  }
  func.func @transform_3(%arg0: i32) -> (i32, i32) {
    %c0_i32 = arith.constant 0 : i32
    %c0_i32_0 = arith.constant 0 : i32
    %c0_i32_1 = arith.constant 0 : i32
    return %c0_i32, %c0_i32_0 : i32, i32
  }
  func.func @transform_4(%arg0: i32) -> (i32, i32) {
    %c0_i32 = arith.constant 0 : i32
    %c0_i32_0 = arith.constant 0 : i32
    %c0_i32_1 = arith.constant 0 : i32
    return %c0_i32, %c0_i32_0 : i32, i32
  }
  func.func @transform_5(%arg0: i32) -> (i32, i32) {
    %c0_i32 = arith.constant 0 : i32
    %c0_i32_0 = arith.constant 0 : i32
    %c0_i32_1 = arith.constant 0 : i32
    return %c0_i32, %c0_i32_0 : i32, i32
  }
  func.func @transform_6(%arg0: i32) -> (i32, i32, i32) {
    %c0_i32 = arith.constant 0 : i32
    %c0_i32_0 = arith.constant 0 : i32
    %c0_i32_1 = arith.constant 0 : i32
    return %arg0, %c0_i32, %c0_i32_0 : i32, i32, i32
  }
}

</mosaic_0001>

<llo_original>
// kernel: basic_block_forward.1
$region0: #{basic_block_forward.1}
  #allocation0 [shape = 'u32[]', space=smem, size = 0x4, offset = 0x4, fixed_abs, tag = 'smem constant byte address 0x4 - core index']
  #allocation1 [shape = 'u32[72,128]{1,0:T(1,128)}', space=vmem, size = 0x9000, scoped, tag = 'internal scratch']
  #allocation2 [shape = 'bf16[4,1000]{1,0:T(4,128)(2,1)}', space=vmem, size = 0x2000, scoped, tag = 'scratch operand']
  %s0 = inlined_call_operand.vmem [shape: f32[2,4,1000], index: 0, kind: input, shape index: {}]
  %s1 = inlined_call_operand.vmem [shape: bf16[27,4,4], index: 1, kind: input, shape index: {}]
  %s2 = inlined_call_operand.vmem [shape: bf16[27,4,4], index: 2, kind: input, shape index: {}]
  %s3 = inlined_call_operand.vmem [shape: f32[4,1], index: 3, kind: input, shape index: {}]
  %s4 = inlined_call_operand.vmem [shape: f32[4,1], index: 4, kind: input, shape index: {}]
  %s5 = inlined_call_operand.vmem [shape: f32[1,778], index: 5, kind: input, shape index: {}]
  %s6 = inlined_call_operand.vmem [shape: f32[2,4,778], index: 6, kind: output, shape index: {}]
  %s7 = sld [smem:[#allocation0]]
  $region57: #{basic_block_forward.1} parent=0
    _
  %s9 = ssub.s32 1, %s7
  %s10 = scalar_select 0, %s9, %s7
  loop: start=0, step=1, limit=4
  $region2: #{basic_block_forward.1} parent=0 // loop_pre_header
    _
  $region3: #{basic_block_forward.1} parent=0 // loop_header
    %s12 = sphi 0, %s16
    %p13 = scmp.ge.s32.totalorder %s12, 4
    %s22 = sphi 0, %s24
    %s25 = sphi 0, %s22
    %s26 = sphi 0, %s25
    %s42 = sphi 0, %s26
    %s46 = sphi 0, %s46
    %s48 = sphi 0, %s46
    %s49 = sphi 0, %s48
    %s63 = sphi 0, %s49
    %s67 = sphi 0, %s67
    %s69 = sphi 0, %s67
    %s70 = sphi 0, %s69
    %s84 = sphi 0, %s70
    %s88 = sphi 0, %s88
    %s90 = sphi 0, %s88
    %s91 = sphi 0, %s90
    %s105 = sphi 0, %s91
    %s109 = sphi 0, %s109
    %s111 = sphi 0, %s109
    %s112 = sphi 0, %s111
    %s126 = sphi 0, %s112
    %s130 = sphi 0, %s130
    %s132 = sphi 0, %s130
    %s133 = sphi 0, %s132
    %s147 = sphi 0, %s133
    %s153 = sphi 0, %s155
    %s156 = sphi 0, %s153
    %s157 = sphi 0, %s156
    %s173 = sphi 0, %s157
  $region4: #{basic_block_forward.1} parent=0 // loop_header_branch
    %15 = sbr.rel (%p13) target = $region8
  $region5: #{basic_block_forward.1} parent=0 // loop_body
    %s17 = ssub.s32 %s12, 1
    %s18 = ssub.s32 %s12, 2
    %s19 = sadd.s32 %s12, 1
    %s20 = ssub.s32 %s12, %s19
    %p21 = scmp.eq.s32.totalorder %s20, 0
    %s23 = sadd.s32 %s22, 1
    %s24 = scalar_select %p21, %s22, %s23
    %p27 = pneg %p21
    %p28 = scmp.eq.s32.totalorder %s12, 1
    %p29 = por %p27, %p28
    %p30 = scmp.ne.s32.totalorder %s22, %s25
    %p31 = scmp.eq.s32.totalorder %s12, 0
    %p32 = por %p30, %p31
    %p33 = scmp.ne.s32.totalorder %s22, %s25
    %p34 = scmp.eq.s32.totalorder %s17, 1
    %p35 = por %p33, %p34
    %p36 = scmp.ne.s32.totalorder %s25, %s26
    %p37 = scmp.eq.s32.totalorder %s17, 0
    %p38 = por %p36, %p37
    %p39 = scmp.ne.s32.totalorder %s25, %s26
    %p40 = scmp.eq.s32.totalorder %s18, 1
    %p41 = por %p39, %p40
    %p43 = scmp.ne.s32.totalorder %s26, %s42
    %p44 = scmp.eq.s32.totalorder %s18, 0
    %p45 = por %p43, %p44
    %s47 = sadd.s32 %s46, 1
    %p50 = scmp.eq.s32.totalorder %s12, 1
    %p51 = scmp.ne.s32.totalorder %s46, %s48
    %p52 = scmp.eq.s32.totalorder %s12, 0
    %p53 = por %p51, %p52
    %p54 = scmp.ne.s32.totalorder %s46, %s48
    %p55 = scmp.eq.s32.totalorder %s17, 1
    %p56 = por %p54, %p55
    %p57 = scmp.ne.s32.totalorder %s48, %s49
    %p58 = scmp.eq.s32.totalorder %s17, 0
    %p59 = por %p57, %p58
    %p60 = scmp.ne.s32.totalorder %s48, %s49
    %p61 = scmp.eq.s32.totalorder %s18, 1
    %p62 = por %p60, %p61
    %p64 = scmp.ne.s32.totalorder %s49, %s63
    %p65 = scmp.eq.s32.totalorder %s18, 0
    %p66 = por %p64, %p65
    %s68 = sadd.s32 %s67, 1
    %p71 = scmp.eq.s32.totalorder %s12, 1
    %p72 = scmp.ne.s32.totalorder %s67, %s69
    %p73 = scmp.eq.s32.totalorder %s12, 0
    %p74 = por %p72, %p73
    %p75 = scmp.ne.s32.totalorder %s67, %s69
    %p76 = scmp.eq.s32.totalorder %s17, 1
    %p77 = por %p75, %p76
    %p78 = scmp.ne.s32.totalorder %s69, %s70
    %p79 = scmp.eq.s32.totalorder %s17, 0
    %p80 = por %p78, %p79
    %p81 = scmp.ne.s32.totalorder %s69, %s70
    %p82 = scmp.eq.s32.totalorder %s18, 1
    %p83 = por %p81, %p82
    %p85 = scmp.ne.s32.totalorder %s70, %s84
    %p86 = scmp.eq.s32.totalorder %s18, 0
    %p87 = por %p85, %p86
    %s89 = sadd.s32 %s88, 1
    %p92 = scmp.eq.s32.totalorder %s12, 1
    %p93 = scmp.ne.s32.totalorder %s88, %s90
    %p94 = scmp.eq.s32.totalorder %s12, 0
    %p95 = por %p93, %p94
    %p96 = scmp.ne.s32.totalorder %s88, %s90
    %p97 = scmp.eq.s32.totalorder %s17, 1
    %p98 = por %p96, %p97
    %p99 = scmp.ne.s32.totalorder %s90, %s91
    %p100 = scmp.eq.s32.totalorder %s17, 0
    %p101 = por %p99, %p100
    %p102 = scmp.ne.s32.totalorder %s90, %s91
    %p103 = scmp.eq.s32.totalorder %s18, 1
    %p104 = por %p102, %p103
    %p106 = scmp.ne.s32.totalorder %s91, %s105
    %p107 = scmp.eq.s32.totalorder %s18, 0
    %p108 = por %p106, %p107
    %s110 = sadd.s32 %s109, 1
    %p113 = scmp.eq.s32.totalorder %s12, 1
    %p114 = scmp.ne.s32.totalorder %s109, %s111
    %p115 = scmp.eq.s32.totalorder %s12, 0
    %p116 = por %p114, %p115
    %p117 = scmp.ne.s32.totalorder %s109, %s111
    %p118 = scmp.eq.s32.totalorder %s17, 1
    %p119 = por %p117, %p118
    %p120 = scmp.ne.s32.totalorder %s111, %s112
    %p121 = scmp.eq.s32.totalorder %s17, 0
    %p122 = por %p120, %p121
    %p123 = scmp.ne.s32.totalorder %s111, %s112
    %p124 = scmp.eq.s32.totalorder %s18, 1
    %p125 = por %p123, %p124
    %p127 = scmp.ne.s32.totalorder %s112, %s126
    %p128 = scmp.eq.s32.totalorder %s18, 0
    %p129 = por %p127, %p128
    %s131 = sadd.s32 %s130, 1
    %p134 = scmp.eq.s32.totalorder %s12, 1
    %p135 = scmp.ne.s32.totalorder %s130, %s132
    %p136 = scmp.eq.s32.totalorder %s12, 0
    %p137 = por %p135, %p136
    %p138 = scmp.ne.s32.totalorder %s130, %s132
    %p139 = scmp.eq.s32.totalorder %s17, 1
    %p140 = por %p138, %p139
    %p141 = scmp.ne.s32.totalorder %s132, %s133
    %p142 = scmp.eq.s32.totalorder %s17, 0
    %p143 = por %p141, %p142
    %p144 = scmp.ne.s32.totalorder %s132, %s133
    %p145 = scmp.eq.s32.totalorder %s18, 1
    %p146 = por %p144, %p145
    %p148 = scmp.ne.s32.totalorder %s133, %s147
    %p149 = scmp.eq.s32.totalorder %s18, 0
    %p150 = por %p148, %p149
    %s151 = ssub.s32 %s12, %s19
    %p152 = scmp.eq.s32.totalorder %s151, 0
    %s154 = sadd.s32 %s153, 1
    %s155 = scalar_select %p152, %s153, %s154
    %p158 = pneg %p152
    %p159 = scmp.eq.s32.totalorder %s12, 1
    %p160 = por %p158, %p159
    %p161 = scmp.ne.s32.totalorder %s153, %s156
    %p162 = scmp.eq.s32.totalorder %s12, 0
    %p163 = por %p161, %p162
    %p164 = scmp.ne.s32.totalorder %s153, %s156
    %p165 = scmp.eq.s32.totalorder %s17, 1
    %p166 = por %p164, %p165
    %p167 = scmp.ne.s32.totalorder %s156, %s157
    %p168 = scmp.eq.s32.totalorder %s17, 0
    %p169 = por %p167, %p168
    %p170 = scmp.ne.s32.totalorder %s156, %s157
    %p171 = scmp.eq.s32.totalorder %s18, 1
    %p172 = por %p170, %p171
    %p174 = scmp.ne.s32.totalorder %s157, %s173
    %p175 = scmp.eq.s32.totalorder %s18, 0
    %p176 = por %p174, %p175
    %p177 = scmp.le.s32.totalorder 1, %s12
    %p178 = scmp.lt.s32.totalorder %s12, 3
    %p179 = pnand %p177, %p178
    %p180 = pneg %p179
    // Predicated region
    $region9: #{basic_block_forward.1} parent=5 // pred_check
      _
    $region10: #{basic_block_forward.1} parent=5 // pred_check_branch
      %182 = sbr.rel (%p179) target = $region12
    $region11: #{basic_block_forward.1} parent=5 // pred_region
      %s183 = ssub.s32 %s12, 1
      // Predicated region
      $region13: #{basic_block_forward.1} parent=11 // pred_check
        %p184 = pneg %p59
      $region14: #{basic_block_forward.1} parent=11 // pred_check_branch
        %186 = sbr.rel (%p184) target = $region16
      $region15: #{basic_block_forward.1} parent=11 // pred_region
        _
      $region16: #{basic_block_forward.1} parent=11 // pred_fallthru
        _
      // Predicated region
      $region17: #{basic_block_forward.1} parent=11 // pred_check
        %p187 = pneg %p80
      $region18: #{basic_block_forward.1} parent=11 // pred_check_branch
        %189 = sbr.rel (%p187) target = $region20
      $region19: #{basic_block_forward.1} parent=11 // pred_region
        _
      $region20: #{basic_block_forward.1} parent=11 // pred_fallthru
        _
      // Predicated region
      $region21: #{basic_block_forward.1} parent=11 // pred_check
        %p190 = pneg %p101
      $region22: #{basic_block_forward.1} parent=11 // pred_check_branch
        %192 = sbr.rel (%p190) target = $region24
      $region23: #{basic_block_forward.1} parent=11 // pred_region
        _
      $region24: #{basic_block_forward.1} parent=11 // pred_fallthru
        _
      // Predicated region
      $region25: #{basic_block_forward.1} parent=11 // pred_check
        %p193 = pneg %p122
      $region26: #{basic_block_forward.1} parent=11 // pred_check_branch
        %195 = sbr.rel (%p193) target = $region28
      $region27: #{basic_block_forward.1} parent=11 // pred_region
        _
      $region28: #{basic_block_forward.1} parent=11 // pred_fallthru
        _
      // Predicated region
      $region29: #{basic_block_forward.1} parent=11 // pred_check
        %p196 = pneg %p143
      $region30: #{basic_block_forward.1} parent=11 // pred_check_branch
        %198 = sbr.rel (%p196) target = $region32
      $region31: #{basic_block_forward.1} parent=11 // pred_region
        _
      $region32: #{basic_block_forward.1} parent=11 // pred_fallthru
        _
    $region12: #{basic_block_forward.1} parent=5 // pred_fallthru
      _
    %p199 = scmp.lt.s32.totalorder %s12, 2
    // Predicated region
    $region33: #{basic_block_forward.1} parent=5 // pred_check
      %p200 = pneg %p199
    $region34: #{basic_block_forward.1} parent=5 // pred_check_branch
      %202 = sbr.rel (%p200) target = $region36
    $region35: #{basic_block_forward.1} parent=5 // pred_region
      // Predicated region
      $region37: #{basic_block_forward.1} parent=35 // pred_check
        %p203 = pneg %p32
      $region38: #{basic_block_forward.1} parent=35 // pred_check_branch
        %205 = sbr.rel (%p203) target = $region40
      $region39: #{basic_block_forward.1} parent=35 // pred_region
        %p206 = scmp.lt.s32.totalorder %s12, 1
        %s207 = scalar_select %p206, %s12, 1
        %s208 = smul.addr %s207, 8
        %s209 = smul.addr %s208, 4
        %s210 = scalar_lea.vmem %s0, %s209
      $region40: #{basic_block_forward.1} parent=35 // pred_fallthru
        _
    $region36: #{basic_block_forward.1} parent=5 // pred_fallthru
      _
    %p211 = scmp.le.s32.totalorder 1, %s12
    %p212 = scmp.lt.s32.totalorder %s12, 3
    %p213 = pnand %p211, %p212
    %p214 = pneg %p213
    // Predicated region
    $region41: #{basic_block_forward.1} parent=5 // pred_check
      _
    $region42: #{basic_block_forward.1} parent=5 // pred_check_branch
      %216 = sbr.rel (%p213) target = $region44
    $region43: #{basic_block_forward.1} parent=5 // pred_region
      %s217 = ssub.s32 %s12, 1
      %p218 = scmp.lt.s32.totalorder %s17, 1
      %s219 = scalar_select %p218, %s17, 1
      %s220 = smul.addr %s219, 8
      %s221 = smul.addr %s220, 4
      %s222 = scalar_lea.vmem %s0, %s221
      %p223 = pneg %p38
      %p224 = pneg %p35
      %p225 = pneg %p59
      %p226 = pneg %p56
      %p227 = pneg %p80
      %p228 = pneg %p77
      %p229 = pneg %p101
      %p230 = pneg %p98
      %p231 = pneg %p122
      %p232 = pneg %p119
      %p233 = pneg %p143
      %p234 = pneg %p140
      %p235 = pneg %p169
      %p236 = pneg %p166
      %p237 = scmp.lt.s32.totalorder %s17, 1
      %s238 = scalar_select %p237, %s17, 1
      %s239 = smul.addr %s238, 7
      %s240 = smul.addr %s239, 4
      %s241 = scalar_lea.vmem %s6, %s240
      %p242 = scmp.lt.s32.totalorder %s17, 1
      %s243 = scalar_select %p242, %s17, 1
      %s244 = smul.addr %s243, 8
      %s245 = smul.addr %s244, 4
      %s246 = scalar_lea.vmem %s0, %s245
      %p247 = scmp.lt.s32.totalorder %s17, 1
      %s248 = scalar_select %p247, %s17, 1
      %s249 = smul.addr %s248, 7
      %s250 = smul.addr %s249, 4
      %s251 = scalar_lea.vmem %s6, %s250
      %253 = vst [vmem:[#allocation2] sm:$0xff] 0
      %vm254 = vcmask 1041408
      %vm255 = vcmask 1043458
      %vm256 = vmor %vm255, %vm254
      %vm257 = vcmask 1045508
      %vm258 = vmor %vm257, %vm256
      %vm259 = vcmask 850950
      %vm260 = vmor %vm259, %vm258
      %261 = vst.msk [vmem:[#allocation2 + $0x8] sm:$0xff] %vm260, 0
      %v262 = vld [vmem:[%s246] sm:$0xff]
      %v263 = vld [vmem:[%s246 + $0x8] sm:$0xff]
      %v264 = vld [vmem:[%s246 + $0x10] sm:$0xff]
      %v265 = vld [vmem:[%s246 + $0x18] sm:$0xf]
      %270 = vst [vmem:[#allocation1] ss:$2 sm:$0xff] %v262
      %s271 = scalar_lea.vmem [#allocation1], 16
      %272 = vst [vmem:[%s271] ss:$2 sm:$0xff] %v263
      %s273 = scalar_lea.vmem [#allocation1], 32
      %274 = vst [vmem:[%s273] ss:$2 sm:$0xff] %v264
      %s275 = scalar_lea.vmem [#allocation1], 48
      %276 = vst [vmem:[%s275] ss:$2 sm:$0xff] %v265
      %v277 = vld.sshfl [vmem:[#allocation1] sm:$0xff pattern:$0x75316420]
      %v278 = vld.sshfl [vmem:[#allocation1 + $0x8] sm:$0xff pattern:$0x75316420]
      %v279 = vld.sshfl [vmem:[#allocation1 + $0x10] sm:$0xff pattern:$0x75316420]
      %v280 = vld.sshfl [vmem:[#allocation1 + $0x18] sm:$0xff pattern:$0x75316420]
      %v281 = vld.sshfl [vmem:[#allocation1 + $0x20] sm:$0xff pattern:$0x75316420]
      %v282 = vld.sshfl [vmem:[#allocation1 + $0x28] sm:$0xff pattern:$0x75316420]
      %v283 = vld.sshfl [vmem:[#allocation1 + $0x30] sm:$0xff pattern:$0x75316420]
      %v291 = vpack.c.bf16 %v277, %v277
      %v292 = vpack.c.bf16 %v278, %v278
      %v293 = vpack.c.bf16 %v279, %v279
      %v294 = vpack.c.bf16 %v280, %v280
      %v295 = vpack.c.bf16 %v281, %v281
      %v296 = vpack.c.bf16 %v282, %v282
      %v297 = vpack.c.bf16 %v283, %v283
      %v298 = vld [vmem:[%s1] sm:$0x3]
      %v299 = vld [vmem:[%s246] sm:$0xff]
      %v300 = vld [vmem:[%s246 + $0x8] sm:$0xff]
      %v301 = vld [vmem:[%s246 + $0x10] sm:$0xff]
      %v302 = vld [vmem:[%s246 + $0x18] sm:$0xf]
      %307 = vst [vmem:[#allocation1] ss:$2 sm:$0xff] %v299
      %s308 = scalar_lea.vmem [#allocation1], 16
      %309 = vst [vmem:[%s308] ss:$2 sm:$0xff] %v300
      %s310 = scalar_lea.vmem [#allocation1], 32
      %311 = vst [vmem:[%s310] ss:$2 sm:$0xff] %v301
      %s312 = scalar_lea.vmem [#allocation1], 48
      %313 = vst [vmem:[%s312] ss:$2 sm:$0xff] %v302
      %v314 = vld.sshfl [vmem:[#allocation1] sm:$0xff pattern:$0x75316420]
      %v315 = vld.sshfl [vmem:[#allocation1 + $0x8] sm:$0xff pattern:$0x75316420]
      %v316 = vld.sshfl [vmem:[#allocation1 + $0x10] sm:$0xff pattern:$0x75316420]
      %v317 = vld.sshfl [vmem:[#allocation1 + $0x18] sm:$0xff pattern:$0x75316420]
      %v318 = vld.sshfl [vmem:[#allocation1 + $0x20] sm:$0xff pattern:$0x75316420]
      %v319 = vld.sshfl [vmem:[#allocation1 + $0x28] sm:$0xff pattern:$0x75316420]
      %v320 = vld.sshfl [vmem:[#allocation1 + $0x30] sm:$0xff pattern:$0x75316420]
      %v328 = vpack.c.bf16 %v314, %v314
      %v329 = vpack.c.bf16 %v315, %v315
      %v330 = vpack.c.bf16 %v316, %v316
      %v331 = vpack.c.bf16 %v317, %v317
      %v332 = vpack.c.bf16 %v318, %v318
      %v333 = vpack.c.bf16 %v319, %v319
      %v334 = vpack.c.bf16 %v320, %v320
      %s335 = scalar_lea.vmem %s1, 2
      %v336 = vld [vmem:[%s335] sm:$0x3]
      %344 = vrot.lane.b32.xlu0 %v328, 127
      %v345 = vpop.permute.xlu0 %344
      %346 = vrot.lane.b32.xlu0 %v329, 127
      %v347 = vpop.permute.xlu0 %346
      %348 = vrot.lane.b32.xlu0 %v330, 127
      %v349 = vpop.permute.xlu0 %348
      %350 = vrot.lane.b32.xlu0 %v331, 127
      %v351 = vpop.permute.xlu0 %350
      %352 = vrot.lane.b32.xlu0 %v332, 127
      %v353 = vpop.permute.xlu0 %352
      %354 = vrot.lane.b32.xlu0 %v333, 127
      %v355 = vpop.permute.xlu0 %354
      %356 = vrot.lane.b32.xlu0 %v334, 127
      %v357 = vpop.permute.xlu0 %356
      %vm358 = vcmask 1039360
      %v359 = vsel %vm358, %v345, %v347
      %v360 = vsel %vm358, %v347, %v349
      %v361 = vsel %vm358, %v349, %v351
      %v362 = vsel %vm358, %v351, %v353
      %v363 = vsel %vm358, %v353, %v355
      %v364 = vsel %vm358, %v355, %v357
      %vm365 = vcmask 31744
      %v367 = vsel %vm365, %v336, 0
      %v370 = vsel %vm254, %v359, 0
      %v373 = vsel %vm254, %v360, 0
      %v376 = vsel %vm254, %v361, 0
      %v379 = vsel %vm254, %v362, 0
      %v382 = vsel %vm254, %v363, 0
      %v385 = vsel %vm254, %v364, 0
      %v388 = vsel %vm254, %v357, 0
      %390 = vmatpush.bf16.msra.mxu0 0
      %391 = vmatpush.bf16.msra.mxu0 0
      %392 = vmatpush.bf16.msra.mxu0 0
      %393 = vmatpush.bf16.msra.mxu0 0
      %394 = vmatpush.bf16.msra.mxu0 0
      %395 = vmatpush.bf16.msra.mxu0 0
      %396 = vmatpush.bf16.msra.mxu0 0
      %397 = vmatpush.bf16.msra.mxu0 %v370
      %398 = vmatmul.bf16.gmra.mxu0 %v367
      %v399 = vpop.f32.mrf.mxu0
      %v400 = vadd.f32 0.0, %v399
      %v401 = vpop.f32.mrf.mxu0
      %402 = vdwg.mxu0
      %403 = vmatpush.bf16.msra.mxu0 0
      %404 = vmatpush.bf16.msra.mxu0 0
      %405 = vmatpush.bf16.msra.mxu0 0
      %406 = vmatpush.bf16.msra.mxu0 0
      %407 = vmatpush.bf16.msra.mxu0 0
      %408 = vmatpush.bf16.msra.mxu0 0
      %409 = vmatpush.bf16.msra.mxu0 0
      %410 = vmatpush.bf16.msra.mxu0 %v373
      %411 = vmatmul.bf16.gmra.mxu0 %v367
      %v412 = vpop.f32.mrf.mxu0
      %v413 = vadd.f32 0.0, %v412
      %v414 = vpop.f32.mrf.mxu0
      %415 = vdwg.mxu0
      %416 = vmatpush.bf16.msra.mxu0 0
      %417 = vmatpush.bf16.msra.mxu0 0
      %418 = vmatpush.bf16.msra.mxu0 0
      %419 = vmatpush.bf16.msra.mxu0 0
      %420 = vmatpush.bf16.msra.mxu0 0
      %421 = vmatpush.bf16.msra.mxu0 0
      %422 = vmatpush.bf16.msra.mxu0 0
      %423 = vmatpush.bf16.msra.mxu0 %v376
      %424 = vmatmul.bf16.gmra.mxu0 %v367
      %v425 = vpop.f32.mrf.mxu0
      %v426 = vadd.f32 0.0, %v425
      %v427 = vpop.f32.mrf.mxu0
      %428 = vdwg.mxu0
      %429 = vmatpush.bf16.msra.mxu0 0
      %430 = vmatpush.bf16.msra.mxu0 0
      %431 = vmatpush.bf16.msra.mxu0 0
      %432 = vmatpush.bf16.msra.mxu0 0
      %433 = vmatpush.bf16.msra.mxu0 0
      %434 = vmatpush.bf16.msra.mxu0 0
      %435 = vmatpush.bf16.msra.mxu0 0
      %436 = vmatpush.bf16.msra.mxu0 %v379
      %437 = vmatmul.bf16.gmra.mxu0 %v367
      %v438 = vpop.f32.mrf.mxu0
      %v439 = vadd.f32 0.0, %v438
      %v440 = vpop.f32.mrf.mxu0
      %441 = vdwg.mxu0
      %442 = vmatpush.bf16.msra.mxu0 0
      %443 = vmatpush.bf16.msra.mxu0 0
      %444 = vmatpush.bf16.msra.mxu0 0
      %445 = vmatpush.bf16.msra.mxu0 0
      %446 = vmatpush.bf16.msra.mxu0 0
      %447 = vmatpush.bf16.msra.mxu0 0
      %448 = vmatpush.bf16.msra.mxu0 0
      %449 = vmatpush.bf16.msra.mxu0 %v382
      %450 = vmatmul.bf16.gmra.mxu0 %v367
      %v451 = vpop.f32.mrf.mxu0
      %v452 = vadd.f32 0.0, %v451
      %v453 = vpop.f32.mrf.mxu0
      %454 = vdwg.mxu0
      %455 = vmatpush.bf16.msra.mxu0 0
      %456 = vmatpush.bf16.msra.mxu0 0
      %457 = vmatpush.bf16.msra.mxu0 0
      %458 = vmatpush.bf16.msra.mxu0 0
      %459 = vmatpush.bf16.msra.mxu0 0
      %460 = vmatpush.bf16.msra.mxu0 0
      %461 = vmatpush.bf16.msra.mxu0 0
      %462 = vmatpush.bf16.msra.mxu0 %v385
      %463 = vmatmul.bf16.gmra.mxu0 %v367
      %v464 = vpop.f32.mrf.mxu0
      %v465 = vadd.f32 0.0, %v464
      %v466 = vpop.f32.mrf.mxu0
      %467 = vdwg.mxu0
      %468 = vmatpush.bf16.msra.mxu0 0
      %469 = vmatpush.bf16.msra.mxu0 0
      %470 = vmatpush.bf16.msra.mxu0 0
      %471 = vmatpush.bf16.msra.mxu0 0
      %472 = vmatpush.bf16.msra.mxu0 0
      %473 = vmatpush.bf16.msra.mxu0 0
      %474 = vmatpush.bf16.msra.mxu0 0
      %475 = vmatpush.bf16.msra.mxu0 %v388
      %476 = vmatmul.bf16.gmra.mxu0 %v367
      %v477 = vpop.f32.mrf.mxu0
      %v478 = vadd.f32 0.0, %v477
      %v479 = vpop.f32.mrf.mxu0
      %480 = vdwg.mxu0
      %v482 = vsel %vm365, %v298, 0
      %v485 = vsel %vm254, %v291, 0
      %v488 = vsel %vm254, %v292, 0
      %v491 = vsel %vm254, %v293, 0
      %v494 = vsel %vm254, %v294, 0
      %v497 = vsel %vm254, %v295, 0
      %v500 = vsel %vm254, %v296, 0
      %v503 = vsel %vm254, %v297, 0
      %505 = vmatpush.bf16.msra.mxu0 0
      %506 = vmatpush.bf16.msra.mxu0 0
      %507 = vmatpush.bf16.msra.mxu0 0
      %508 = vmatpush.bf16.msra.mxu0 0
      %509 = vmatpush.bf16.msra.mxu0 0
      %510 = vmatpush.bf16.msra.mxu0 0
      %511 = vmatpush.bf16.msra.mxu0 0
      %512 = vmatpush.bf16.msra.mxu0 %v485
      %513 = vmatmul.bf16.gmra.mxu0 %v482
      %v514 = vpop.f32.mrf.mxu0
      %v515 = vadd.f32 %v400, %v514
      %v516 = vpop.f32.mrf.mxu0
      %517 = vdwg.mxu0
      %518 = vmatpush.bf16.msra.mxu0 0
      %519 = vmatpush.bf16.msra.mxu0 0
      %520 = vmatpush.bf16.msra.mxu0 0
      %521 = vmatpush.bf16.msra.mxu0 0
      %522 = vmatpush.bf16.msra.mxu0 0
      %523 = vmatpush.bf16.msra.mxu0 0
      %524 = vmatpush.bf16.msra.mxu0 0
      %525 = vmatpush.bf16.msra.mxu0 %v488
      %526 = vmatmul.bf16.gmra.mxu0 %v482
      %v527 = vpop.f32.mrf.mxu0
      %v528 = vadd.f32 %v413, %v527
      %v529 = vpop.f32.mrf.mxu0
      %530 = vdwg.mxu0
      %531 = vmatpush.bf16.msra.mxu0 0
      %532 = vmatpush.bf16.msra.mxu0 0
      %533 = vmatpush.bf16.msra.mxu0 0
      %534 = vmatpush.bf16.msra.mxu0 0
      %535 = vmatpush.bf16.msra.mxu0 0
      %536 = vmatpush.bf16.msra.mxu0 0
      %537 = vmatpush.bf16.msra.mxu0 0
      %538 = vmatpush.bf16.msra.mxu0 %v491
      %539 = vmatmul.bf16.gmra.mxu0 %v482
      %v540 = vpop.f32.mrf.mxu0
      %v541 = vadd.f32 %v426, %v540
      %v542 = vpop.f32.mrf.mxu0
      %543 = vdwg.mxu0
      %544 = vmatpush.bf16.msra.mxu0 0
      %545 = vmatpush.bf16.msra.mxu0 0
      %546 = vmatpush.bf16.msra.mxu0 0
      %547 = vmatpush.bf16.msra.mxu0 0
      %548 = vmatpush.bf16.msra.mxu0 0
      %549 = vmatpush.bf16.msra.mxu0 0
      %550 = vmatpush.bf16.msra.mxu0 0
      %551 = vmatpush.bf16.msra.mxu0 %v494
      %552 = vmatmul.bf16.gmra.mxu0 %v482
      %v553 = vpop.f32.mrf.mxu0
      %v554 = vadd.f32 %v439, %v553
      %v555 = vpop.f32.mrf.mxu0
      %556 = vdwg.mxu0
      %557 = vmatpush.bf16.msra.mxu0 0
      %558 = vmatpush.bf16.msra.mxu0 0
      %559 = vmatpush.bf16.msra.mxu0 0
      %560 = vmatpush.bf16.msra.mxu0 0
      %561 = vmatpush.bf16.msra.mxu0 0
      %562 = vmatpush.bf16.msra.mxu0 0
      %563 = vmatpush.bf16.msra.mxu0 0
      %564 = vmatpush.bf16.msra.mxu0 %v497
      %565 = vmatmul.bf16.gmra.mxu0 %v482
      %v566 = vpop.f32.mrf.mxu0
      %v567 = vadd.f32 %v452, %v566
      %v568 = vpop.f32.mrf.mxu0
      %569 = vdwg.mxu0
      %570 = vmatpush.bf16.msra.mxu0 0
      %571 = vmatpush.bf16.msra.mxu0 0
      %572 = vmatpush.bf16.msra.mxu0 0
      %573 = vmatpush.bf16.msra.mxu0 0
      %574 = vmatpush.bf16.msra.mxu0 0
      %575 = vmatpush.bf16.msra.mxu0 0
      %576 = vmatpush.bf16.msra.mxu0 0
      %577 = vmatpush.bf16.msra.mxu0 %v500
      %578 = vmatmul.bf16.gmra.mxu0 %v482
      %v579 = vpop.f32.mrf.mxu0
      %v580 = vadd.f32 %v465, %v579
      %v581 = vpop.f32.mrf.mxu0
      %582 = vdwg.mxu0
      %583 = vmatpush.bf16.msra.mxu0 0
      %584 = vmatpush.bf16.msra.mxu0 0
      %585 = vmatpush.bf16.msra.mxu0 0
      %586 = vmatpush.bf16.msra.mxu0 0
      %587 = vmatpush.bf16.msra.mxu0 0
      %588 = vmatpush.bf16.msra.mxu0 0
      %589 = vmatpush.bf16.msra.mxu0 0
      %590 = vmatpush.bf16.msra.mxu0 %v503
      %591 = vmatmul.bf16.gmra.mxu0 %v482
      %v592 = vpop.f32.mrf.mxu0
      %v593 = vadd.f32 %v478, %v592
      %v594 = vpop.f32.mrf.mxu0
      %595 = vdwg.mxu0
      %v596 = vld [vmem:[%s246] sm:$0xff]
      %v597 = vld [vmem:[%s246 + $0x8] sm:$0xff]
      %v598 = vld [vmem:[%s246 + $0x10] sm:$0xff]
      %v599 = vld [vmem:[%s246 + $0x18] sm:$0xf]
      %604 = vst [vmem:[#allocation1] ss:$2 sm:$0xff] %v596
      %s605 = scalar_lea.vmem [#allocation1], 16
      %606 = vst [vmem:[%s605] ss:$2 sm:$0xff] %v597
      %s607 = scalar_lea.vmem [#allocation1], 32
      %608 = vst [vmem:[%s607] ss:$2 sm:$0xff] %v598
      %s609 = scalar_lea.vmem [#allocation1], 48
      %610 = vst [vmem:[%s609] ss:$2 sm:$0xff] %v599
      %v611 = vld.sshfl [vmem:[#allocation1] sm:$0xff pattern:$0x75316420]
      %v612 = vld.sshfl [vmem:[#allocation1 + $0x8] sm:$0xff pattern:$0x75316420]
      %v613 = vld.sshfl [vmem:[#allocation1 + $0x10] sm:$0xff pattern:$0x75316420]
      %v614 = vld.sshfl [vmem:[#allocation1 + $0x18] sm:$0xff pattern:$0x75316420]
      %v615 = vld.sshfl [vmem:[#allocation1 + $0x20] sm:$0xff pattern:$0x75316420]
      %v616 = vld.sshfl [vmem:[#allocation1 + $0x28] sm:$0xff pattern:$0x75316420]
      %v617 = vld.sshfl [vmem:[#allocation1 + $0x30] sm:$0xff pattern:$0x75316420]
      %v625 = vpack.c.bf16 %v611, %v611
      %v626 = vpack.c.bf16 %v612, %v612
      %v627 = vpack.c.bf16 %v613, %v613
      %v628 = vpack.c.bf16 %v614, %v614
      %v629 = vpack.c.bf16 %v615, %v615
      %v630 = vpack.c.bf16 %v616, %v616
      %v631 = vpack.c.bf16 %v617, %v617
      %s632 = scalar_lea.vmem %s1, 4
      %v633 = vld [vmem:[%s632] sm:$0x3]
      %641 = vrot.lane.b32.xlu0 %v625, 126
      %v642 = vpop.permute.xlu0 %641
      %643 = vrot.lane.b32.xlu0 %v626, 126
      %v644 = vpop.permute.xlu0 %643
      %645 = vrot.lane.b32.xlu0 %v627, 126
      %v646 = vpop.permute.xlu0 %645
      %647 = vrot.lane.b32.xlu0 %v628, 126
      %v648 = vpop.permute.xlu0 %647
      %649 = vrot.lane.b32.xlu0 %v629, 126
      %v650 = vpop.permute.xlu0 %649
      %651 = vrot.lane.b32.xlu0 %v630, 126
      %v652 = vpop.permute.xlu0 %651
      %653 = vrot.lane.b32.xlu0 %v631, 126
      %v654 = vpop.permute.xlu0 %653
      %vm655 = vcmask 1031168
      %v656 = vsel %vm655, %v642, %v644
      %v657 = vsel %vm655, %v644, %v646
      %v658 = vsel %vm655, %v646, %v648
      %v659 = vsel %vm655, %v648, %v650
      %v660 = vsel %vm655, %v650, %v652
      %v661 = vsel %vm655, %v652, %v654
      %v663 = vsel %vm365, %v633, 0
      %v666 = vsel %vm254, %v656, 0
      %v669 = vsel %vm254, %v657, 0
      %v672 = vsel %vm254, %v658, 0
      %v675 = vsel %vm254, %v659, 0
      %v678 = vsel %vm254, %v660, 0
      %v681 = vsel %vm254, %v661, 0
      %v684 = vsel %vm254, %v654, 0
      %686 = vmatpush.bf16.msra.mxu0 0
      %687 = vmatpush.bf16.msra.mxu0 0
      %688 = vmatpush.bf16.msra.mxu0 0
      %689 = vmatpush.bf16.msra.mxu0 0
      %690 = vmatpush.bf16.msra.mxu0 0
      %691 = vmatpush.bf16.msra.mxu0 0
      %692 = vmatpush.bf16.msra.mxu0 0
      %693 = vmatpush.bf16.msra.mxu0 %v666
      %694 = vmatmul.bf16.gmra.mxu0 %v663
      %v695 = vpop.f32.mrf.mxu0
      %v696 = vadd.f32 0.0, %v695
      %v697 = vpop.f32.mrf.mxu0
      %698 = vdwg.mxu0
      %699 = vmatpush.bf16.msra.mxu0 0
      %700 = vmatpush.bf16.msra.mxu0 0
      %701 = vmatpush.bf16.msra.mxu0 0
      %702 = vmatpush.bf16.msra.mxu0 0
      %703 = vmatpush.bf16.msra.mxu0 0
      %704 = vmatpush.bf16.msra.mxu0 0
      %705 = vmatpush.bf16.msra.mxu0 0
      %706 = vmatpush.bf16.msra.mxu0 %v669
      %707 = vmatmul.bf16.gmra.mxu0 %v663
      %v708 = vpop.f32.mrf.mxu0
      %v709 = vadd.f32 0.0, %v708
      %v710 = vpop.f32.mrf.mxu0
      %711 = vdwg.mxu0
      %712 = vmatpush.bf16.msra.mxu0 0
      %713 = vmatpush.bf16.msra.mxu0 0
      %714 = vmatpush.bf16.msra.mxu0 0
      %715 = vmatpush.bf16.msra.mxu0 0
      %716 = vmatpush.bf16.msra.mxu0 0
      %717 = vmatpush.bf16.msra.mxu0 0
      %718 = vmatpush.bf16.msra.mxu0 0
      %719 = vmatpush.bf16.msra.mxu0 %v672
      %720 = vmatmul.bf16.gmra.mxu0 %v663
      %v721 = vpop.f32.mrf.mxu0
      %v722 = vadd.f32 0.0, %v721
      %v723 = vpop.f32.mrf.mxu0
      %724 = vdwg.mxu0
      %725 = vmatpush.bf16.msra.mxu0 0
      %726 = vmatpush.bf16.msra.mxu0 0
      %727 = vmatpush.bf16.msra.mxu0 0
      %728 = vmatpush.bf16.msra.mxu0 0
      %729 = vmatpush.bf16.msra.mxu0 0
      %730 = vmatpush.bf16.msra.mxu0 0
      %731 = vmatpush.bf16.msra.mxu0 0
      %732 = vmatpush.bf16.msra.mxu0 %v675
      %733 = vmatmul.bf16.gmra.mxu0 %v663
      %v734 = vpop.f32.mrf.mxu0
      %v735 = vadd.f32 0.0, %v734
      %v736 = vpop.f32.mrf.mxu0
      %737 = vdwg.mxu0
      %738 = vmatpush.bf16.msra.mxu0 0
      %739 = vmatpush.bf16.msra.mxu0 0
      %740 = vmatpush.bf16.msra.mxu0 0
      %741 = vmatpush.bf16.msra.mxu0 0
      %742 = vmatpush.bf16.msra.mxu0 0
      %743 = vmatpush.bf16.msra.mxu0 0
      %744 = vmatpush.bf16.msra.mxu0 0
      %745 = vmatpush.bf16.msra.mxu0 %v678
      %746 = vmatmul.bf16.gmra.mxu0 %v663
      %v747 = vpop.f32.mrf.mxu0
      %v748 = vadd.f32 0.0, %v747
      %v749 = vpop.f32.mrf.mxu0
      %750 = vdwg.mxu0
      %751 = vmatpush.bf16.msra.mxu0 0
      %752 = vmatpush.bf16.msra.mxu0 0
      %753 = vmatpush.bf16.msra.mxu0 0
      %754 = vmatpush.bf16.msra.mxu0 0
      %755 = vmatpush.bf16.msra.mxu0 0
      %756 = vmatpush.bf16.msra.mxu0 0
      %757 = vmatpush.bf16.msra.mxu0 0
      %758 = vmatpush.bf16.msra.mxu0 %v681
      %759 = vmatmul.bf16.gmra.mxu0 %v663
      %v760 = vpop.f32.mrf.mxu0
      %v761 = vadd.f32 0.0, %v760
      %v762 = vpop.f32.mrf.mxu0
      %763 = vdwg.mxu0
      %764 = vmatpush.bf16.msra.mxu0 0
      %765 = vmatpush.bf16.msra.mxu0 0
      %766 = vmatpush.bf16.msra.mxu0 0
      %767 = vmatpush.bf16.msra.mxu0 0
      %768 = vmatpush.bf16.msra.mxu0 0
      %769 = vmatpush.bf16.msra.mxu0 0
      %770 = vmatpush.bf16.msra.mxu0 0
      %771 = vmatpush.bf16.msra.mxu0 %v684
      %772 = vmatmul.bf16.gmra.mxu0 %v663
      %v773 = vpop.f32.mrf.mxu0
      %v774 = vadd.f32 0.0, %v773
      %v775 = vpop.f32.mrf.mxu0
      %776 = vdwg.mxu0
      %v777 = vadd.f32 %v515, %v696
      %v778 = vadd.f32 %v528, %v709
      %v779 = vadd.f32 %v541, %v722
      %v780 = vadd.f32 %v554, %v735
      %v781 = vadd.f32 %v567, %v748
      %v782 = vadd.f32 %v580, %v761
      %v783 = vadd.f32 %v593, %v774
      %v784 = vld [vmem:[%s246] sm:$0xff]
      %v785 = vld [vmem:[%s246 + $0x8] sm:$0xff]
      %v786 = vld [vmem:[%s246 + $0x10] sm:$0xff]
      %v787 = vld [vmem:[%s246 + $0x18] sm:$0xf]
      %792 = vst [vmem:[#allocation1] ss:$2 sm:$0xff] %v784
      %s793 = scalar_lea.vmem [#allocation1], 16
      %794 = vst [vmem:[%s793] ss:$2 sm:$0xff] %v785
      %s795 = scalar_lea.vmem [#allocation1], 32
      %796 = vst [vmem:[%s795] ss:$2 sm:$0xff] %v786
      %s797 = scalar_lea.vmem [#allocation1], 48
      %798 = vst [vmem:[%s797] ss:$2 sm:$0xff] %v787
      %v799 = vld.sshfl [vmem:[#allocation1] sm:$0xff pattern:$0x75316420]
      %v800 = vld.sshfl [vmem:[#allocation1 + $0x8] sm:$0xff pattern:$0x75316420]
      %v801 = vld.sshfl [vmem:[#allocation1 + $0x10] sm:$0xff pattern:$0x75316420]
      %v802 = vld.sshfl [vmem:[#allocation1 + $0x18] sm:$0xff pattern:$0x75316420]
      %v803 = vld.sshfl [vmem:[#allocation1 + $0x20] sm:$0xff pattern:$0x75316420]
      %v804 = vld.sshfl [vmem:[#allocation1 + $0x28] sm:$0xff pattern:$0x75316420]
      %v805 = vld.sshfl [vmem:[#allocation1 + $0x30] sm:$0xff pattern:$0x75316420]
      %v813 = vpack.c.bf16 %v799, %v799
      %v814 = vpack.c.bf16 %v800, %v800
      %v815 = vpack.c.bf16 %v801, %v801
      %v816 = vpack.c.bf16 %v802, %v802
      %v817 = vpack.c.bf16 %v803, %v803
      %v818 = vpack.c.bf16 %v804, %v804
      %v819 = vpack.c.bf16 %v805, %v805
      %s820 = scalar_lea.vmem %s1, 6
      %v821 = vld [vmem:[%s820] sm:$0x3]
      %829 = vrot.lane.b32.xlu0 %v813, 118
      %v830 = vpop.permute.xlu0 %829
      %831 = vrot.lane.b32.xlu0 %v814, 118
      %v832 = vpop.permute.xlu0 %831
      %833 = vrot.lane.b32.xlu0 %v815, 118
      %v834 = vpop.permute.xlu0 %833
      %835 = vrot.lane.b32.xlu0 %v816, 118
      %v836 = vpop.permute.xlu0 %835
      %837 = vrot.lane.b32.xlu0 %v817, 118
      %v838 = vpop.permute.xlu0 %837
      %839 = vrot.lane.b32.xlu0 %v818, 118
      %v840 = vpop.permute.xlu0 %839
      %841 = vrot.lane.b32.xlu0 %v819, 118
      %v842 = vpop.permute.xlu0 %841
      %vm843 = vcmask 965632
      %v844 = vsel %vm843, %v830, %v832
      %v845 = vsel %vm843, %v832, %v834
      %v846 = vsel %vm843, %v834, %v836
      %v847 = vsel %vm843, %v836, %v838
      %v848 = vsel %vm843, %v838, %v840
      %v849 = vsel %vm843, %v840, %v842
      %v851 = vsel %vm365, %v821, 0
      %v854 = vsel %vm254, %v844, 0
      %v857 = vsel %vm254, %v845, 0
      %v860 = vsel %vm254, %v846, 0
      %v863 = vsel %vm254, %v847, 0
      %v866 = vsel %vm254, %v848, 0
      %v869 = vsel %vm254, %v849, 0
      %v872 = vsel %vm254, %v842, 0
      %874 = vmatpush.bf16.msra.mxu0 0
      %875 = vmatpush.bf16.msra.mxu0 0
      %876 = vmatpush.bf16.msra.mxu0 0
      %877 = vmatpush.bf16.msra.mxu0 0
      %878 = vmatpush.bf16.msra.mxu0 0
      %879 = vmatpush.bf16.msra.mxu0 0
      %880 = vmatpush.bf16.msra.mxu0 0
      %881 = vmatpush.bf16.msra.mxu0 %v854
      %882 = vmatmul.bf16.gmra.mxu0 %v851
      %v883 = vpop.f32.mrf.mxu0
      %v884 = vadd.f32 0.0, %v883
      %v885 = vpop.f32.mrf.mxu0
      %886 = vdwg.mxu0
      %887 = vmatpush.bf16.msra.mxu0 0
      %888 = vmatpush.bf16.msra.mxu0 0
      %889 = vmatpush.bf16.msra.mxu0 0
      %890 = vmatpush.bf16.msra.mxu0 0
      %891 = vmatpush.bf16.msra.mxu0 0
      %892 = vmatpush.bf16.msra.mxu0 0
      %893 = vmatpush.bf16.msra.mxu0 0
      %894 = vmatpush.bf16.msra.mxu0 %v857
      %895 = vmatmul.bf16.gmra.mxu0 %v851
      %v896 = vpop.f32.mrf.mxu0
      %v897 = vadd.f32 0.0, %v896
      %v898 = vpop.f32.mrf.mxu0
      %899 = vdwg.mxu0
      %900 = vmatpush.bf16.msra.mxu0 0
      %901 = vmatpush.bf16.msra.mxu0 0
      %902 = vmatpush.bf16.msra.mxu0 0
      %903 = vmatpush.bf16.msra.mxu0 0
      %904 = vmatpush.bf16.msra.mxu0 0
      %905 = vmatpush.bf16.msra.mxu0 0
      %906 = vmatpush.bf16.msra.mxu0 0
      %907 = vmatpush.bf16.msra.mxu0 %v860
      %908 = vmatmul.bf16.gmra.mxu0 %v851
      %v909 = vpop.f32.mrf.mxu0
      %v910 = vadd.f32 0.0, %v909
      %v911 = vpop.f32.mrf.mxu0
      %912 = vdwg.mxu0
      %913 = vmatpush.bf16.msra.mxu0 0
      %914 = vmatpush.bf16.msra.mxu0 0
      %915 = vmatpush.bf16.msra.mxu0 0
      %916 = vmatpush.bf16.msra.mxu0 0
      %917 = vmatpush.bf16.msra.mxu0 0
      %918 = vmatpush.bf16.msra.mxu0 0
      %919 = vmatpush.bf16.msra.mxu0 0
      %920 = vmatpush.bf16.msra.mxu0 %v863
      %921 = vmatmul.bf16.gmra.mxu0 %v851
      %v922 = vpop.f32.mrf.mxu0
      %v923 = vadd.f32 0.0, %v922
      %v924 = vpop.f32.mrf.mxu0
      %925 = vdwg.mxu0
      %926 = vmatpush.bf16.msra.mxu0 0
      %927 = vmatpush.bf16.msra.mxu0 0
      %928 = vmatpush.bf16.msra.mxu0 0
      %929 = vmatpush.bf16.msra.mxu0 0
      %930 = vmatpush.bf16.msra.mxu0 0
      %931 = vmatpush.bf16.msra.mxu0 0
      %932 = vmatpush.bf16.msra.mxu0 0
      %933 = vmatpush.bf16.msra.mxu0 %v866
      %934 = vmatmul.bf16.gmra.mxu0 %v851
      %v935 = vpop.f32.mrf.mxu0
      %v936 = vadd.f32 0.0, %v935
      %v937 = vpop.f32.mrf.mxu0
      %938 = vdwg.mxu0
      %939 = vmatpush.bf16.msra.mxu0 0
      %940 = vmatpush.bf16.msra.mxu0 0
      %941 = vmatpush.bf16.msra.mxu0 0
      %942 = vmatpush.bf16.msra.mxu0 0
      %943 = vmatpush.bf16.msra.mxu0 0
      %944 = vmatpush.bf16.msra.mxu0 0
      %945 = vmatpush.bf16.msra.mxu0 0
      %946 = vmatpush.bf16.msra.mxu0 %v869
      %947 = vmatmul.bf16.gmra.mxu0 %v851
      %v948 = vpop.f32.mrf.mxu0
      %v949 = vadd.f32 0.0, %v948
      %v950 = vpop.f32.mrf.mxu0
      %951 = vdwg.mxu0
      %952 = vmatpush.bf16.msra.mxu0 0
      %953 = vmatpush.bf16.msra.mxu0 0
      %954 = vmatpush.bf16.msra.mxu0 0
      %955 = vmatpush.bf16.msra.mxu0 0
      %956 = vmatpush.bf16.msra.mxu0 0
      %957 = vmatpush.bf16.msra.mxu0 0
      %958 = vmatpush.bf16.msra.mxu0 0
      %959 = vmatpush.bf16.msra.mxu0 %v872
      %960 = vmatmul.bf16.gmra.mxu0 %v851
      %v961 = vpop.f32.mrf.mxu0
      %v962 = vadd.f32 0.0, %v961
      %v963 = vpop.f32.mrf.mxu0
      %964 = vdwg.mxu0
      %v965 = vadd.f32 %v777, %v884
      %v966 = vadd.f32 %v778, %v897
      %v967 = vadd.f32 %v779, %v910
      %v968 = vadd.f32 %v780, %v923
      %v969 = vadd.f32 %v781, %v936
      %v970 = vadd.f32 %v782, %v949
      %v971 = vadd.f32 %v783, %v962
      %v972 = vld [vmem:[%s246] sm:$0xff]
      %v973 = vld [vmem:[%s246 + $0x8] sm:$0xff]
      %v974 = vld [vmem:[%s246 + $0x10] sm:$0xff]
      %v975 = vld [vmem:[%s246 + $0x18] sm:$0xf]
      %980 = vst [vmem:[#allocation1] ss:$2 sm:$0xff] %v972
      %s981 = scalar_lea.vmem [#allocation1], 16
      %982 = vst [vmem:[%s981] ss:$2 sm:$0xff] %v973
      %s983 = scalar_lea.vmem [#allocation1], 32
      %984 = vst [vmem:[%s983] ss:$2 sm:$0xff] %v974
      %s985 = scalar_lea.vmem [#allocation1], 48
      %986 = vst [vmem:[%s985] ss:$2 sm:$0xff] %v975
      %v987 = vld.sshfl [vmem:[#allocation1] sm:$0xff pattern:$0x75316420]
      %v988 = vld.sshfl [vmem:[#allocation1 + $0x8] sm:$0xff pattern:$0x75316420]
      %v989 = vld.sshfl [vmem:[#allocation1 + $0x10] sm:$0xff pattern:$0x75316420]
      %v990 = vld.sshfl [vmem:[#allocation1 + $0x18] sm:$0xff pattern:$0x75316420]
      %v991 = vld.sshfl [vmem:[#allocation1 + $0x20] sm:$0xff pattern:$0x75316420]
      %v992 = vld.sshfl [vmem:[#allocation1 + $0x28] sm:$0xff pattern:$0x75316420]
      %v993 = vld.sshfl [vmem:[#allocation1 + $0x30] sm:$0xff pattern:$0x75316420]
      %v1001 = vpack.c.bf16 %v987, %v987
      %v1002 = vpack.c.bf16 %v988, %v988
      %v1003 = vpack.c.bf16 %v989, %v989
      %v1004 = vpack.c.bf16 %v990, %v990
      %v1005 = vpack.c.bf16 %v991, %v991
      %v1006 = vpack.c.bf16 %v992, %v992
      %v1007 = vpack.c.bf16 %v993, %v993
      %s1008 = scalar_lea.vmem %s1, 8
      %v1009 = vld [vmem:[%s1008] sm:$0x3]
      %1017 = vrot.lane.b32.xlu0 %v1001, 117
      %v1018 = vpop.permute.xlu0 %1017
      %1019 = vrot.lane.b32.xlu0 %v1002, 117
      %v1020 = vpop.permute.xlu0 %1019
      %1021 = vrot.lane.b32.xlu0 %v1003, 117
      %v1022 = vpop.permute.xlu0 %1021
      %1023 = vrot.lane.b32.xlu0 %v1004, 117
      %v1024 = vpop.permute.xlu0 %1023
      %1025 = vrot.lane.b32.xlu0 %v1005, 117
      %v1026 = vpop.permute.xlu0 %1025
      %1027 = vrot.lane.b32.xlu0 %v1006, 117
      %v1028 = vpop.permute.xlu0 %1027
      %1029 = vrot.lane.b32.xlu0 %v1007, 117
      %v1030 = vpop.permute.xlu0 %1029
      %vm1031 = vcmask 957440
      %v1032 = vsel %vm1031, %v1018, %v1020
      %v1033 = vsel %vm1031, %v1020, %v1022
      %v1034 = vsel %vm1031, %v1022, %v1024
      %v1035 = vsel %vm1031, %v1024, %v1026
      %v1036 = vsel %vm1031, %v1026, %v1028
      %v1037 = vsel %vm1031, %v1028, %v1030
      %v1039 = vsel %vm365, %v1009, 0
      %v1042 = vsel %vm254, %v1032, 0
      %v1045 = vsel %vm254, %v1033, 0
      %v1048 = vsel %vm254, %v1034, 0
      %v1051 = vsel %vm254, %v1035, 0
      %v1054 = vsel %vm254, %v1036, 0
      %v1057 = vsel %vm254, %v1037, 0
      %v1060 = vsel %vm254, %v1030, 0
      %1062 = vmatpush.bf16.msra.mxu0 0
      %1063 = vmatpush.bf16.msra.mxu0 0
      %1064 = vmatpush.bf16.msra.mxu0 0
      %1065 = vmatpush.bf16.msra.mxu0 0
      %1066 = vmatpush.bf16.msra.mxu0 0
      %1067 = vmatpush.bf16.msra.mxu0 0
      %1068 = vmatpush.bf16.msra.mxu0 0
      %1069 = vmatpush.bf16.msra.mxu0 %v1042
      %1070 = vmatmul.bf16.gmra.mxu0 %v1039
      %v1071 = vpop.f32.mrf.mxu0
      %v1072 = vadd.f32 0.0, %v1071
      %v1073 = vpop.f32.mrf.mxu0
      %1074 = vdwg.mxu0
      %1075 = vmatpush.bf16.msra.mxu0 0
      %1076 = vmatpush.bf16.msra.mxu0 0
      %1077 = vmatpush.bf16.msra.mxu0 0
      %1078 = vmatpush.bf16.msra.mxu0 0
      %1079 = vmatpush.bf16.msra.mxu0 0
      %1080 = vmatpush.bf16.msra.mxu0 0
      %1081 = vmatpush.bf16.msra.mxu0 0
      %1082 = vmatpush.bf16.msra.mxu0 %v1045
      %1083 = vmatmul.bf16.gmra.mxu0 %v1039
      %v1084 = vpop.f32.mrf.mxu0
      %v1085 = vadd.f32 0.0, %v1084
      %v1086 = vpop.f32.mrf.mxu0
      %1087 = vdwg.mxu0
      %1088 = vmatpush.bf16.msra.mxu0 0
      %1089 = vmatpush.bf16.msra.mxu0 0
      %1090 = vmatpush.bf16.msra.mxu0 0
      %1091 = vmatpush.bf16.msra.mxu0 0
      %1092 = vmatpush.bf16.msra.mxu0 0
      %1093 = vmatpush.bf16.msra.mxu0 0
      %1094 = vmatpush.bf16.msra.mxu0 0
      %1095 = vmatpush.bf16.msra.mxu0 %v1048
      %1096 = vmatmul.bf16.gmra.mxu0 %v1039
      %v1097 = vpop.f32.mrf.mxu0
      %v1098 = vadd.f32 0.0, %v1097
      %v1099 = vpop.f32.mrf.mxu0
      %1100 = vdwg.mxu0
      %1101 = vmatpush.bf16.msra.mxu0 0
      %1102 = vmatpush.bf16.msra.mxu0 0
      %1103 = vmatpush.bf16.msra.mxu0 0
      %1104 = vmatpush.bf16.msra.mxu0 0
      %1105 = vmatpush.bf16.msra.mxu0 0
      %1106 = vmatpush.bf16.msra.mxu0 0
      %1107 = vmatpush.bf16.msra.mxu0 0
      %1108 = vmatpush.bf16.msra.mxu0 %v1051
      %1109 = vmatmul.bf16.gmra.mxu0 %v1039
      %v1110 = vpop.f32.mrf.mxu0
      %v1111 = vadd.f32 0.0, %v1110
      %v1112 = vpop.f32.mrf.mxu0
      %1113 = vdwg.mxu0
      %1114 = vmatpush.bf16.msra.mxu0 0
      %1115 = vmatpush.bf16.msra.mxu0 0
      %1116 = vmatpush.bf16.msra.mxu0 0
      %1117 = vmatpush.bf16.msra.mxu0 0
      %1118 = vmatpush.bf16.msra.mxu0 0
      %1119 = vmatpush.bf16.msra.mxu0 0
      %1120 = vmatpush.bf16.msra.mxu0 0
      %1121 = vmatpush.bf16.msra.mxu0 %v1054
      %1122 = vmatmul.bf16.gmra.mxu0 %v1039
      %v1123 = vpop.f32.mrf.mxu0
      %v1124 = vadd.f32 0.0, %v1123
      %v1125 = vpop.f32.mrf.mxu0
      %1126 = vdwg.mxu0
      %1127 = vmatpush.bf16.msra.mxu0 0
      %1128 = vmatpush.bf16.msra.mxu0 0
      %1129 = vmatpush.bf16.msra.mxu0 0
      %1130 = vmatpush.bf16.msra.mxu0 0
      %1131 = vmatpush.bf16.msra.mxu0 0
      %1132 = vmatpush.bf16.msra.mxu0 0
      %1133 = vmatpush.bf16.msra.mxu0 0
      %1134 = vmatpush.bf16.msra.mxu0 %v1057
      %1135 = vmatmul.bf16.gmra.mxu0 %v1039
      %v1136 = vpop.f32.mrf.mxu0
      %v1137 = vadd.f32 0.0, %v1136
      %v1138 = vpop.f32.mrf.mxu0
      %1139 = vdwg.mxu0
      %1140 = vmatpush.bf16.msra.mxu0 0
      %1141 = vmatpush.bf16.msra.mxu0 0
      %1142 = vmatpush.bf16.msra.mxu0 0
      %1143 = vmatpush.bf16.msra.mxu0 0
      %1144 = vmatpush.bf16.msra.mxu0 0
      %1145 = vmatpush.bf16.msra.mxu0 0
      %1146 = vmatpush.bf16.msra.mxu0 0
      %1147 = vmatpush.bf16.msra.mxu0 %v1060
      %1148 = vmatmul.bf16.gmra.mxu0 %v1039
      %v1149 = vpop.f32.mrf.mxu0
      %v1150 = vadd.f32 0.0, %v1149
      %v1151 = vpop.f32.mrf.mxu0
      %1152 = vdwg.mxu0
      %v1153 = vadd.f32 %v965, %v1072
      %v1154 = vadd.f32 %v966, %v1085
      %v1155 = vadd.f32 %v967, %v1098
      %v1156 = vadd.f32 %v968, %v1111
      %v1157 = vadd.f32 %v969, %v1124
      %v1158 = vadd.f32 %v970, %v1137
      %v1159 = vadd.f32 %v971, %v1150
      %v1160 = vld [vmem:[%s246] sm:$0xff]
      %v1161 = vld [vmem:[%s246 + $0x8] sm:$0xff]
      %v1162 = vld [vmem:[%s246 + $0x10] sm:$0xff]
      %v1163 = vld [vmem:[%s246 + $0x18] sm:$0xf]
      %1168 = vst [vmem:[#allocation1] ss:$2 sm:$0xff] %v1160
      %s1169 = scalar_lea.vmem [#allocation1], 16
      %1170 = vst [vmem:[%s1169] ss:$2 sm:$0xff] %v1161
      %s1171 = scalar_lea.vmem [#allocation1], 32
      %1172 = vst [vmem:[%s1171] ss:$2 sm:$0xff] %v1162
      %s1173 = scalar_lea.vmem [#allocation1], 48
      %1174 = vst [vmem:[%s1173] ss:$2 sm:$0xff] %v1163
      %v1175 = vld.sshfl [vmem:[#allocation1] sm:$0xff pattern:$0x75316420]
      %v1176 = vld.sshfl [vmem:[#allocation1 + $0x8] sm:$0xff pattern:$0x75316420]
      %v1177 = vld.sshfl [vmem:[#allocation1 + $0x10] sm:$0xff pattern:$0x75316420]
      %v1178 = vld.sshfl [vmem:[#allocation1 + $0x18] sm:$0xff pattern:$0x75316420]
      %v1179 = vld.sshfl [vmem:[#allocation1 + $0x20] sm:$0xff pattern:$0x75316420]
      %v1180 = vld.sshfl [vmem:[#allocation1 + $0x28] sm:$0xff pattern:$0x75316420]
      %v1181 = vld.sshfl [vmem:[#allocation1 + $0x30] sm:$0xff pattern:$0x75316420]
      %v1189 = vpack.c.bf16 %v1175, %v1175
      %v1190 = vpack.c.bf16 %v1176, %v1176
      %v1191 = vpack.c.bf16 %v1177, %v1177
      %v1192 = vpack.c.bf16 %v1178, %v1178
      %v1193 = vpack.c.bf16 %v1179, %v1179
      %v1194 = vpack.c.bf16 %v1180, %v1180
      %v1195 = vpack.c.bf16 %v1181, %v1181
      %s1196 = scalar_lea.vmem %s1, 10
      %v1197 = vld [vmem:[%s1196] sm:$0x3]
      %1205 = vrot.lane.b32.xlu0 %v1189, 116
      %v1206 = vpop.permute.xlu0 %1205
      %1207 = vrot.lane.b32.xlu0 %v1190, 116
      %v1208 = vpop.permute.xlu0 %1207
      %1209 = vrot.lane.b32.xlu0 %v1191, 116
      %v1210 = vpop.permute.xlu0 %1209
      %1211 = vrot.lane.b32.xlu0 %v1192, 116
      %v1212 = vpop.permute.xlu0 %1211
      %1213 = vrot.lane.b32.xlu0 %v1193, 116
      %v1214 = vpop.permute.xlu0 %1213
      %1215 = vrot.lane.b32.xlu0 %v1194, 116
      %v1216 = vpop.permute.xlu0 %1215
      %1217 = vrot.lane.b32.xlu0 %v1195, 116
      %v1218 = vpop.permute.xlu0 %1217
      %vm1219 = vcmask 949248
      %v1220 = vsel %vm1219, %v1206, %v1208
      %v1221 = vsel %vm1219, %v1208, %v1210
      %v1222 = vsel %vm1219, %v1210, %v1212
      %v1223 = vsel %vm1219, %v1212, %v1214
      %v1224 = vsel %vm1219, %v1214, %v1216
      %v1225 = vsel %vm1219, %v1216, %v1218
      %v1227 = vsel %vm365, %v1197, 0
      %v1230 = vsel %vm254, %v1220, 0
      %v1233 = vsel %vm254, %v1221, 0
      %v1236 = vsel %vm254, %v1222, 0
      %v1239 = vsel %vm254, %v1223, 0
      %v1242 = vsel %vm254, %v1224, 0
      %v1245 = vsel %vm254, %v1225, 0
      %v1248 = vsel %vm254, %v1218, 0
      %1250 = vmatpush.bf16.msra.mxu0 0
      %1251 = vmatpush.bf16.msra.mxu0 0
      %1252 = vmatpush.bf16.msra.mxu0 0
      %1253 = vmatpush.bf16.msra.mxu0 0
      %1254 = vmatpush.bf16.msra.mxu0 0
      %1255 = vmatpush.bf16.msra.mxu0 0
      %1256 = vmatpush.bf16.msra.mxu0 0
      %1257 = vmatpush.bf16.msra.mxu0 %v1230
      %1258 = vmatmul.bf16.gmra.mxu0 %v1227
      %v1259 = vpop.f32.mrf.mxu0
      %v1260 = vadd.f32 0.0, %v1259
      %v1261 = vpop.f32.mrf.mxu0
      %1262 = vdwg.mxu0
      %1263 = vmatpush.bf16.msra.mxu0 0
      %1264 = vmatpush.bf16.msra.mxu0 0
      %1265 = vmatpush.bf16.msra.mxu0 0
      %1266 = vmatpush.bf16.msra.mxu0 0
      %1267 = vmatpush.bf16.msra.mxu0 0
      %1268 = vmatpush.bf16.msra.mxu0 0
      %1269 = vmatpush.bf16.msra.mxu0 0
      %1270 = vmatpush.bf16.msra.mxu0 %v1233
      %1271 = vmatmul.bf16.gmra.mxu0 %v1227
      %v1272 = vpop.f32.mrf.mxu0
      %v1273 = vadd.f32 0.0, %v1272
      %v1274 = vpop.f32.mrf.mxu0
      %1275 = vdwg.mxu0
      %1276 = vmatpush.bf16.msra.mxu0 0
      %1277 = vmatpush.bf16.msra.mxu0 0
      %1278 = vmatpush.bf16.msra.mxu0 0
      %1279 = vmatpush.bf16.msra.mxu0 0
      %1280 = vmatpush.bf16.msra.mxu0 0
      %1281 = vmatpush.bf16.msra.mxu0 0
      %1282 = vmatpush.bf16.msra.mxu0 0
      %1283 = vmatpush.bf16.msra.mxu0 %v1236
      %1284 = vmatmul.bf16.gmra.mxu0 %v1227
      %v1285 = vpop.f32.mrf.mxu0
      %v1286 = vadd.f32 0.0, %v1285
      %v1287 = vpop.f32.mrf.mxu0
      %1288 = vdwg.mxu0
      %1289 = vmatpush.bf16.msra.mxu0 0
      %1290 = vmatpush.bf16.msra.mxu0 0
      %1291 = vmatpush.bf16.msra.mxu0 0
      %1292 = vmatpush.bf16.msra.mxu0 0
      %1293 = vmatpush.bf16.msra.mxu0 0
      %1294 = vmatpush.bf16.msra.mxu0 0
      %1295 = vmatpush.bf16.msra.mxu0 0
      %1296 = vmatpush.bf16.msra.mxu0 %v1239
      %1297 = vmatmul.bf16.gmra.mxu0 %v1227
      %v1298 = vpop.f32.mrf.mxu0
      %v1299 = vadd.f32 0.0, %v1298
      %v1300 = vpop.f32.mrf.mxu0
      %1301 = vdwg.mxu0
      %1302 = vmatpush.bf16.msra.mxu0 0
      %1303 = vmatpush.bf16.msra.mxu0 0
      %1304 = vmatpush.bf16.msra.mxu0 0
      %1305 = vmatpush.bf16.msra.mxu0 0
      %1306 = vmatpush.bf16.msra.mxu0 0
      %1307 = vmatpush.bf16.msra.mxu0 0
      %1308 = vmatpush.bf16.msra.mxu0 0
      %1309 = vmatpush.bf16.msra.mxu0 %v1242
      %1310 = vmatmul.bf16.gmra.mxu0 %v1227
      %v1311 = vpop.f32.mrf.mxu0
      %v1312 = vadd.f32 0.0, %v1311
      %v1313 = vpop.f32.mrf.mxu0
      %1314 = vdwg.mxu0
      %1315 = vmatpush.bf16.msra.mxu0 0
      %1316 = vmatpush.bf16.msra.mxu0 0
      %1317 = vmatpush.bf16.msra.mxu0 0
      %1318 = vmatpush.bf16.msra.mxu0 0
      %1319 = vmatpush.bf16.msra.mxu0 0
      %1320 = vmatpush.bf16.msra.mxu0 0
      %1321 = vmatpush.bf16.msra.mxu0 0
      %1322 = vmatpush.bf16.msra.mxu0 %v1245
      %1323 = vmatmul.bf16.gmra.mxu0 %v1227
      %v1324 = vpop.f32.mrf.mxu0
      %v1325 = vadd.f32 0.0, %v1324
      %v1326 = vpop.f32.mrf.mxu0
      %1327 = vdwg.mxu0
      %1328 = vmatpush.bf16.msra.mxu0 0
      %1329 = vmatpush.bf16.msra.mxu0 0
      %1330 = vmatpush.bf16.msra.mxu0 0
      %1331 = vmatpush.bf16.msra.mxu0 0
      %1332 = vmatpush.bf16.msra.mxu0 0
      %1333 = vmatpush.bf16.msra.mxu0 0
      %1334 = vmatpush.bf16.msra.mxu0 0
      %1335 = vmatpush.bf16.msra.mxu0 %v1248
      %1336 = vmatmul.bf16.gmra.mxu0 %v1227
      %v1337 = vpop.f32.mrf.mxu0
      %v1338 = vadd.f32 0.0, %v1337
      %v1339 = vpop.f32.mrf.mxu0
      %1340 = vdwg.mxu0
      %v1341 = vadd.f32 %v1153, %v1260
      %v1342 = vadd.f32 %v1154, %v1273
      %v1343 = vadd.f32 %v1155, %v1286
      %v1344 = vadd.f32 %v1156, %v1299
      %v1345 = vadd.f32 %v1157, %v1312
      %v1346 = vadd.f32 %v1158, %v1325
      %v1347 = vadd.f32 %v1159, %v1338
      %v1348 = vld [vmem:[%s246] sm:$0xff]
      %v1349 = vld [vmem:[%s246 + $0x8] sm:$0xff]
      %v1350 = vld [vmem:[%s246 + $0x10] sm:$0xff]
      %v1351 = vld [vmem:[%s246 + $0x18] sm:$0xf]
      %1356 = vst [vmem:[#allocation1] ss:$2 sm:$0xff] %v1348
      %s1357 = scalar_lea.vmem [#allocation1], 16
      %1358 = vst [vmem:[%s1357] ss:$2 sm:$0xff] %v1349
      %s1359 = scalar_lea.vmem [#allocation1], 32
      %1360 = vst [vmem:[%s1359] ss:$2 sm:$0xff] %v1350
      %s1361 = scalar_lea.vmem [#allocation1], 48
      %1362 = vst [vmem:[%s1361] ss:$2 sm:$0xff] %v1351
      %v1363 = vld.sshfl [vmem:[#allocation1] sm:$0xff pattern:$0x75316420]
      %v1364 = vld.sshfl [vmem:[#allocation1 + $0x8] sm:$0xff pattern:$0x75316420]
      %v1365 = vld.sshfl [vmem:[#allocation1 + $0x10] sm:$0xff pattern:$0x75316420]
      %v1366 = vld.sshfl [vmem:[#allocation1 + $0x18] sm:$0xff pattern:$0x75316420]
      %v1367 = vld.sshfl [vmem:[#allocation1 + $0x20] sm:$0xff pattern:$0x75316420]
      %v1368 = vld.sshfl [vmem:[#allocation1 + $0x28] sm:$0xff pattern:$0x75316420]
      %v1369 = vld.sshfl [vmem:[#allocation1 + $0x30] sm:$0xff pattern:$0x75316420]
      %v1377 = vpack.c.bf16 %v1363, %v1363
      %v1378 = vpack.c.bf16 %v1364, %v1364
      %v1379 = vpack.c.bf16 %v1365, %v1365
      %v1380 = vpack.c.bf16 %v1366, %v1366
      %v1381 = vpack.c.bf16 %v1367, %v1367
      %v1382 = vpack.c.bf16 %v1368, %v1368
      %v1383 = vpack.c.bf16 %v1369, %v1369
      %s1384 = scalar_lea.vmem %s1, 12
      %v1385 = vld [vmem:[%s1384] sm:$0x3]
      %1393 = vrot.lane.b32.xlu0 %v1377, 108
      %v1394 = vpop.permute.xlu0 %1393
      %1395 = vrot.lane.b32.xlu0 %v1378, 108
      %v1396 = vpop.permute.xlu0 %1395
      %1397 = vrot.lane.b32.xlu0 %v1379, 108
      %v1398 = vpop.permute.xlu0 %1397
      %1399 = vrot.lane.b32.xlu0 %v1380, 108
      %v1400 = vpop.permute.xlu0 %1399
      %1401 = vrot.lane.b32.xlu0 %v1381, 108
      %v1402 = vpop.permute.xlu0 %1401
      %1403 = vrot.lane.b32.xlu0 %v1382, 108
      %v1404 = vpop.permute.xlu0 %1403
      %1405 = vrot.lane.b32.xlu0 %v1383, 108
      %v1406 = vpop.permute.xlu0 %1405
      %vm1407 = vcmask 883712
      %v1408 = vsel %vm1407, %v1394, %v1396
      %v1409 = vsel %vm1407, %v1396, %v1398
      %v1410 = vsel %vm1407, %v1398, %v1400
      %v1411 = vsel %vm1407, %v1400, %v1402
      %v1412 = vsel %vm1407, %v1402, %v1404
      %v1413 = vsel %vm1407, %v1404, %v1406
      %v1415 = vsel %vm365, %v1385, 0
      %v1418 = vsel %vm254, %v1408, 0
      %v1421 = vsel %vm254, %v1409, 0
      %v1424 = vsel %vm254, %v1410, 0
      %v1427 = vsel %vm254, %v1411, 0
      %v1430 = vsel %vm254, %v1412, 0
      %v1433 = vsel %vm254, %v1413, 0
      %v1436 = vsel %vm254, %v1406, 0
      %1438 = vmatpush.bf16.msra.mxu0 0
      %1439 = vmatpush.bf16.msra.mxu0 0
      %1440 = vmatpush.bf16.msra.mxu0 0
      %1441 = vmatpush.bf16.msra.mxu0 0
      %1442 = vmatpush.bf16.msra.mxu0 0
      %1443 = vmatpush.bf16.msra.mxu0 0
      %1444 = vmatpush.bf16.msra.mxu0 0
      %1445 = vmatpush.bf16.msra.mxu0 %v1418
      %1446 = vmatmul.bf16.gmra.mxu0 %v1415
      %v1447 = vpop.f32.mrf.mxu0
      %v1448 = vadd.f32 0.0, %v1447
      %v1449 = vpop.f32.mrf.mxu0
      %1450 = vdwg.mxu0
      %1451 = vmatpush.bf16.msra.mxu0 0
      %1452 = vmatpush.bf16.msra.mxu0 0
      %1453 = vmatpush.bf16.msra.mxu0 0
      %1454 = vmatpush.bf16.msra.mxu0 0
      %1455 = vmatpush.bf16.msra.mxu0 0
      %1456 = vmatpush.bf16.msra.mxu0 0
      %1457 = vmatpush.bf16.msra.mxu0 0
      %1458 = vmatpush.bf16.msra.mxu0 %v1421
      %1459 = vmatmul.bf16.gmra.mxu0 %v1415
      %v1460 = vpop.f32.mrf.mxu0
      %v1461 = vadd.f32 0.0, %v1460
      %v1462 = vpop.f32.mrf.mxu0
      %1463 = vdwg.mxu0
      %1464 = vmatpush.bf16.msra.mxu0 0
      %1465 = vmatpush.bf16.msra.mxu0 0
      %1466 = vmatpush.bf16.msra.mxu0 0
      %1467 = vmatpush.bf16.msra.mxu0 0
      %1468 = vmatpush.bf16.msra.mxu0 0
      %1469 = vmatpush.bf16.msra.mxu0 0
      %1470 = vmatpush.bf16.msra.mxu0 0
      %1471 = vmatpush.bf16.msra.mxu0 %v1424
      %1472 = vmatmul.bf16.gmra.mxu0 %v1415
      %v1473 = vpop.f32.mrf.mxu0
      %v1474 = vadd.f32 0.0, %v1473
      %v1475 = vpop.f32.mrf.mxu0
      %1476 = vdwg.mxu0
      %1477 = vmatpush.bf16.msra.mxu0 0
      %1478 = vmatpush.bf16.msra.mxu0 0
      %1479 = vmatpush.bf16.msra.mxu0 0
      %1480 = vmatpush.bf16.msra.mxu0 0
      %1481 = vmatpush.bf16.msra.mxu0 0
      %1482 = vmatpush.bf16.msra.mxu0 0
      %1483 = vmatpush.bf16.msra.mxu0 0
      %1484 = vmatpush.bf16.msra.mxu0 %v1427
      %1485 = vmatmul.bf16.gmra.mxu0 %v1415
      %v1486 = vpop.f32.mrf.mxu0
      %v1487 = vadd.f32 0.0, %v1486
      %v1488 = vpop.f32.mrf.mxu0
      %1489 = vdwg.mxu0
      %1490 = vmatpush.bf16.msra.mxu0 0
      %1491 = vmatpush.bf16.msra.mxu0 0
      %1492 = vmatpush.bf16.msra.mxu0 0
      %1493 = vmatpush.bf16.msra.mxu0 0
      %1494 = vmatpush.bf16.msra.mxu0 0
      %1495 = vmatpush.bf16.msra.mxu0 0
      %1496 = vmatpush.bf16.msra.mxu0 0
      %1497 = vmatpush.bf16.msra.mxu0 %v1430
      %1498 = vmatmul.bf16.gmra.mxu0 %v1415
      %v1499 = vpop.f32.mrf.mxu0
      %v1500 = vadd.f32 0.0, %v1499
      %v1501 = vpop.f32.mrf.mxu0
      %1502 = vdwg.mxu0
      %1503 = vmatpush.bf16.msra.mxu0 0
      %1504 = vmatpush.bf16.msra.mxu0 0
      %1505 = vmatpush.bf16.msra.mxu0 0
      %1506 = vmatpush.bf16.msra.mxu0 0
      %1507 = vmatpush.bf16.msra.mxu0 0
      %1508 = vmatpush.bf16.msra.mxu0 0
      %1509 = vmatpush.bf16.msra.mxu0 0
      %1510 = vmatpush.bf16.msra.mxu0 %v1433
      %1511 = vmatmul.bf16.gmra.mxu0 %v1415
      %v1512 = vpop.f32.mrf.mxu0
      %v1513 = vadd.f32 0.0, %v1512
      %v1514 = vpop.f32.mrf.mxu0
      %1515 = vdwg.mxu0
      %1516 = vmatpush.bf16.msra.mxu0 0
      %1517 = vmatpush.bf16.msra.mxu0 0
      %1518 = vmatpush.bf16.msra.mxu0 0
      %1519 = vmatpush.bf16.msra.mxu0 0
      %1520 = vmatpush.bf16.msra.mxu0 0
      %1521 = vmatpush.bf16.msra.mxu0 0
      %1522 = vmatpush.bf16.msra.mxu0 0
      %1523 = vmatpush.bf16.msra.mxu0 %v1436
      %1524 = vmatmul.bf16.gmra.mxu0 %v1415
      %v1525 = vpop.f32.mrf.mxu0
      %v1526 = vadd.f32 0.0, %v1525
      %v1527 = vpop.f32.mrf.mxu0
      %1528 = vdwg.mxu0
      %v1529 = vadd.f32 %v1341, %v1448
      %v1530 = vadd.f32 %v1342, %v1461
      %v1531 = vadd.f32 %v1343, %v1474
      %v1532 = vadd.f32 %v1344, %v1487
      %v1533 = vadd.f32 %v1345, %v1500
      %v1534 = vadd.f32 %v1346, %v1513
      %v1535 = vadd.f32 %v1347, %v1526
      %v1536 = vld [vmem:[%s246] sm:$0xff]
      %v1537 = vld [vmem:[%s246 + $0x8] sm:$0xff]
      %v1538 = vld [vmem:[%s246 + $0x10] sm:$0xff]
      %v1539 = vld [vmem:[%s246 + $0x18] sm:$0xf]
      %1544 = vst [vmem:[#allocation1] ss:$2 sm:$0xff] %v1536
      %s1545 = scalar_lea.vmem [#allocation1], 16
      %1546 = vst [vmem:[%s1545] ss:$2 sm:$0xff] %v1537
      %s1547 = scalar_lea.vmem [#allocation1], 32
      %1548 = vst [vmem:[%s1547] ss:$2 sm:$0xff] %v1538
      %s1549 = scalar_lea.vmem [#allocation1], 48
      %1550 = vst [vmem:[%s1549] ss:$2 sm:$0xff] %v1539
      %v1551 = vld.sshfl [vmem:[#allocation1] sm:$0xff pattern:$0x75316420]
      %v1552 = vld.sshfl [vmem:[#allocation1 + $0x8] sm:$0xff pattern:$0x75316420]
      %v1553 = vld.sshfl [vmem:[#allocation1 + $0x10] sm:$0xff pattern:$0x75316420]
      %v1554 = vld.sshfl [vmem:[#allocation1 + $0x18] sm:$0xff pattern:$0x75316420]
      %v1555 = vld.sshfl [vmem:[#allocation1 + $0x20] sm:$0xff pattern:$0x75316420]
      %v1556 = vld.sshfl [vmem:[#allocation1 + $0x28] sm:$0xff pattern:$0x75316420]
      %v1557 = vld.sshfl [vmem:[#allocation1 + $0x30] sm:$0xff pattern:$0x75316420]
      %v1565 = vpack.c.bf16 %v1551, %v1551
      %v1566 = vpack.c.bf16 %v1552, %v1552
      %v1567 = vpack.c.bf16 %v1553, %v1553
      %v1568 = vpack.c.bf16 %v1554, %v1554
      %v1569 = vpack.c.bf16 %v1555, %v1555
      %v1570 = vpack.c.bf16 %v1556, %v1556
      %v1571 = vpack.c.bf16 %v1557, %v1557
      %s1572 = scalar_lea.vmem %s1, 14
      %v1573 = vld [vmem:[%s1572] sm:$0x3]
      %1581 = vrot.lane.b32.xlu0 %v1565, 107
      %v1582 = vpop.permute.xlu0 %1581
      %1583 = vrot.lane.b32.xlu0 %v1566, 107
      %v1584 = vpop.permute.xlu0 %1583
      %1585 = vrot.lane.b32.xlu0 %v1567, 107
      %v1586 = vpop.permute.xlu0 %1585
      %1587 = vrot.lane.b32.xlu0 %v1568, 107
      %v1588 = vpop.permute.xlu0 %1587
      %1589 = vrot.lane.b32.xlu0 %v1569, 107
      %v1590 = vpop.permute.xlu0 %1589
      %1591 = vrot.lane.b32.xlu0 %v1570, 107
      %v1592 = vpop.permute.xlu0 %1591
      %1593 = vrot.lane.b32.xlu0 %v1571, 107
      %v1594 = vpop.permute.xlu0 %1593
      %vm1595 = vcmask 875520
      %v1596 = vsel %vm1595, %v1582, %v1584
      %v1597 = vsel %vm1595, %v1584, %v1586
      %v1598 = vsel %vm1595, %v1586, %v1588
      %v1599 = vsel %vm1595, %v1588, %v1590
      %v1600 = vsel %vm1595, %v1590, %v1592
      %v1601 = vsel %vm1595, %v1592, %v1594
      %v1603 = vsel %vm365, %v1573, 0
      %v1606 = vsel %vm254, %v1596, 0
      %v1609 = vsel %vm254, %v1597, 0
      %v1612 = vsel %vm254, %v1598, 0
      %v1615 = vsel %vm254, %v1599, 0
      %v1618 = vsel %vm254, %v1600, 0
      %v1621 = vsel %vm254, %v1601, 0
      %v1624 = vsel %vm254, %v1594, 0
      %1626 = vmatpush.bf16.msra.mxu0 0
      %1627 = vmatpush.bf16.msra.mxu0 0
      %1628 = vmatpush.bf16.msra.mxu0 0
      %1629 = vmatpush.bf16.msra.mxu0 0
      %1630 = vmatpush.bf16.msra.mxu0 0
      %1631 = vmatpush.bf16.msra.mxu0 0
      %1632 = vmatpush.bf16.msra.mxu0 0
      %1633 = vmatpush.bf16.msra.mxu0 %v1606
      %1634 = vmatmul.bf16.gmra.mxu0 %v1603
      %v1635 = vpop.f32.mrf.mxu0
      %v1636 = vadd.f32 0.0, %v1635
      %v1637 = vpop.f32.mrf.mxu0
      %1638 = vdwg.mxu0
      %1639 = vmatpush.bf16.msra.mxu0 0
      %1640 = vmatpush.bf16.msra.mxu0 0
      %1641 = vmatpush.bf16.msra.mxu0 0
      %1642 = vmatpush.bf16.msra.mxu0 0
      %1643 = vmatpush.bf16.msra.mxu0 0
      %1644 = vmatpush.bf16.msra.mxu0 0
      %1645 = vmatpush.bf16.msra.mxu0 0
      %1646 = vmatpush.bf16.msra.mxu0 %v1609
      %1647 = vmatmul.bf16.gmra.mxu0 %v1603
      %v1648 = vpop.f32.mrf.mxu0
      %v1649 = vadd.f32 0.0, %v1648
      %v1650 = vpop.f32.mrf.mxu0
      %1651 = vdwg.mxu0
      %1652 = vmatpush.bf16.msra.mxu0 0
      %1653 = vmatpush.bf16.msra.mxu0 0
      %1654 = vmatpush.bf16.msra.mxu0 0
      %1655 = vmatpush.bf16.msra.mxu0 0
      %1656 = vmatpush.bf16.msra.mxu0 0
      %1657 = vmatpush.bf16.msra.mxu0 0
      %1658 = vmatpush.bf16.msra.mxu0 0
      %1659 = vmatpush.bf16.msra.mxu0 %v1612
      %1660 = vmatmul.bf16.gmra.mxu0 %v1603
      %v1661 = vpop.f32.mrf.mxu0
      %v1662 = vadd.f32 0.0, %v1661
      %v1663 = vpop.f32.mrf.mxu0
      %1664 = vdwg.mxu0
      %1665 = vmatpush.bf16.msra.mxu0 0
      %1666 = vmatpush.bf16.msra.mxu0 0
      %1667 = vmatpush.bf16.msra.mxu0 0
      %1668 = vmatpush.bf16.msra.mxu0 0
      %1669 = vmatpush.bf16.msra.mxu0 0
      %1670 = vmatpush.bf16.msra.mxu0 0
      %1671 = vmatpush.bf16.msra.mxu0 0
      %1672 = vmatpush.bf16.msra.mxu0 %v1615
      %1673 = vmatmul.bf16.gmra.mxu0 %v1603
      %v1674 = vpop.f32.mrf.mxu0
      %v1675 = vadd.f32 0.0, %v1674
      %v1676 = vpop.f32.mrf.mxu0
      %1677 = vdwg.mxu0
      %1678 = vmatpush.bf16.msra.mxu0 0
      %1679 = vmatpush.bf16.msra.mxu0 0
      %1680 = vmatpush.bf16.msra.mxu0 0
      %1681 = vmatpush.bf16.msra.mxu0 0
      %1682 = vmatpush.bf16.msra.mxu0 0
      %1683 = vmatpush.bf16.msra.mxu0 0
      %1684 = vmatpush.bf16.msra.mxu0 0
      %1685 = vmatpush.bf16.msra.mxu0 %v1618
      %1686 = vmatmul.bf16.gmra.mxu0 %v1603
      %v1687 = vpop.f32.mrf.mxu0
      %v1688 = vadd.f32 0.0, %v1687
      %v1689 = vpop.f32.mrf.mxu0
      %1690 = vdwg.mxu0
      %1691 = vmatpush.bf16.msra.mxu0 0
      %1692 = vmatpush.bf16.msra.mxu0 0
      %1693 = vmatpush.bf16.msra.mxu0 0
      %1694 = vmatpush.bf16.msra.mxu0 0
      %1695 = vmatpush.bf16.msra.mxu0 0
      %1696 = vmatpush.bf16.msra.mxu0 0
      %1697 = vmatpush.bf16.msra.mxu0 0
      %1698 = vmatpush.bf16.msra.mxu0 %v1621
      %1699 = vmatmul.bf16.gmra.mxu0 %v1603
      %v1700 = vpop.f32.mrf.mxu0
      %v1701 = vadd.f32 0.0, %v1700
      %v1702 = vpop.f32.mrf.mxu0
      %1703 = vdwg.mxu0
      %1704 = vmatpush.bf16.msra.mxu0 0
      %1705 = vmatpush.bf16.msra.mxu0 0
      %1706 = vmatpush.bf16.msra.mxu0 0
      %1707 = vmatpush.bf16.msra.mxu0 0
      %1708 = vmatpush.bf16.msra.mxu0 0
      %1709 = vmatpush.bf16.msra.mxu0 0
      %1710 = vmatpush.bf16.msra.mxu0 0
      %1711 = vmatpush.bf16.msra.mxu0 %v1624
      %1712 = vmatmul.bf16.gmra.mxu0 %v1603
      %v1713 = vpop.f32.mrf.mxu0
      %v1714 = vadd.f32 0.0, %v1713
      %v1715 = vpop.f32.mrf.mxu0
      %1716 = vdwg.mxu0
      %v1717 = vadd.f32 %v1529, %v1636
      %v1718 = vadd.f32 %v1530, %v1649
      %v1719 = vadd.f32 %v1531, %v1662
      %v1720 = vadd.f32 %v1532, %v1675
      %v1721 = vadd.f32 %v1533, %v1688
      %v1722 = vadd.f32 %v1534, %v1701
      %v1723 = vadd.f32 %v1535, %v1714
      %v1724 = vld [vmem:[%s246] sm:$0xff]
      %v1725 = vld [vmem:[%s246 + $0x8] sm:$0xff]
      %v1726 = vld [vmem:[%s246 + $0x10] sm:$0xff]
      %v1727 = vld [vmem:[%s246 + $0x18] sm:$0xf]
      %1732 = vst [vmem:[#allocation1] ss:$2 sm:$0xff] %v1724
      %s1733 = scalar_lea.vmem [#allocation1], 16
      %1734 = vst [vmem:[%s1733] ss:$2 sm:$0xff] %v1725
      %s1735 = scalar_lea.vmem [#allocation1], 32
      %1736 = vst [vmem:[%s1735] ss:$2 sm:$0xff] %v1726
      %s1737 = scalar_lea.vmem [#allocation1], 48
      %1738 = vst [vmem:[%s1737] ss:$2 sm:$0xff] %v1727
      %v1739 = vld.sshfl [vmem:[#allocation1] sm:$0xff pattern:$0x75316420]
      %v1740 = vld.sshfl [vmem:[#allocation1 + $0x8] sm:$0xff pattern:$0x75316420]
      %v1741 = vld.sshfl [vmem:[#allocation1 + $0x10] sm:$0xff pattern:$0x75316420]
      %v1742 = vld.sshfl [vmem:[#allocation1 + $0x18] sm:$0xff pattern:$0x75316420]
      %v1743 = vld.sshfl [vmem:[#allocation1 + $0x20] sm:$0xff pattern:$0x75316420]
      %v1744 = vld.sshfl [vmem:[#allocation1 + $0x28] sm:$0xff pattern:$0x75316420]
      %v1745 = vld.sshfl [vmem:[#allocation1 + $0x30] sm:$0xff pattern:$0x75316420]
      %v1753 = vpack.c.bf16 %v1739, %v1739
      %v1754 = vpack.c.bf16 %v1740, %v1740
      %v1755 = vpack.c.bf16 %v1741, %v1741
      %v1756 = vpack.c.bf16 %v1742, %v1742
      %v1757 = vpack.c.bf16 %v1743, %v1743
      %v1758 = vpack.c.bf16 %v1744, %v1744
      %v1759 = vpack.c.bf16 %v1745, %v1745
      %s1760 = scalar_lea.vmem %s1, 16
      %v1761 = vld [vmem:[%s1760] sm:$0x3]
      %1769 = vrot.lane.b32.xlu0 %v1753, 106
      %v1770 = vpop.permute.xlu0 %1769
      %1771 = vrot.lane.b32.xlu0 %v1754, 106
      %v1772 = vpop.permute.xlu0 %1771
      %1773 = vrot.lane.b32.xlu0 %v1755, 106
      %v1774 = vpop.permute.xlu0 %1773
      %1775 = vrot.lane.b32.xlu0 %v1756, 106
      %v1776 = vpop.permute.xlu0 %1775
      %1777 = vrot.lane.b32.xlu0 %v1757, 106
      %v1778 = vpop.permute.xlu0 %1777
      %1779 = vrot.lane.b32.xlu0 %v1758, 106
      %v1780 = vpop.permute.xlu0 %1779
      %1781 = vrot.lane.b32.xlu0 %v1759, 106
      %v1782 = vpop.permute.xlu0 %1781
      %vm1783 = vcmask 867328
      %v1784 = vsel %vm1783, %v1770, %v1772
      %v1785 = vsel %vm1783, %v1772, %v1774
      %v1786 = vsel %vm1783, %v1774, %v1776
      %v1787 = vsel %vm1783, %v1776, %v1778
      %v1788 = vsel %vm1783, %v1778, %v1780
      %v1789 = vsel %vm1783, %v1780, %v1782
      %v1791 = vsel %vm365, %v1761, 0
      %v1794 = vsel %vm254, %v1784, 0
      %v1797 = vsel %vm254, %v1785, 0
      %v1800 = vsel %vm254, %v1786, 0
      %v1803 = vsel %vm254, %v1787, 0
      %v1806 = vsel %vm254, %v1788, 0
      %v1809 = vsel %vm254, %v1789, 0
      %v1812 = vsel %vm254, %v1782, 0
      %1814 = vmatpush.bf16.msra.mxu0 0
      %1815 = vmatpush.bf16.msra.mxu0 0
      %1816 = vmatpush.bf16.msra.mxu0 0
      %1817 = vmatpush.bf16.msra.mxu0 0
      %1818 = vmatpush.bf16.msra.mxu0 0
      %1819 = vmatpush.bf16.msra.mxu0 0
      %1820 = vmatpush.bf16.msra.mxu0 0
      %1821 = vmatpush.bf16.msra.mxu0 %v1794
      %1822 = vmatmul.bf16.gmra.mxu0 %v1791
      %v1823 = vpop.f32.mrf.mxu0
      %v1824 = vadd.f32 0.0, %v1823
      %v1825 = vpop.f32.mrf.mxu0
      %1826 = vdwg.mxu0
      %1827 = vmatpush.bf16.msra.mxu0 0
      %1828 = vmatpush.bf16.msra.mxu0 0
      %1829 = vmatpush.bf16.msra.mxu0 0
      %1830 = vmatpush.bf16.msra.mxu0 0
      %1831 = vmatpush.bf16.msra.mxu0 0
      %1832 = vmatpush.bf16.msra.mxu0 0
      %1833 = vmatpush.bf16.msra.mxu0 0
      %1834 = vmatpush.bf16.msra.mxu0 %v1797
      %1835 = vmatmul.bf16.gmra.mxu0 %v1791
      %v1836 = vpop.f32.mrf.mxu0
      %v1837 = vadd.f32 0.0, %v1836
      %v1838 = vpop.f32.mrf.mxu0
      %1839 = vdwg.mxu0
      %1840 = vmatpush.bf16.msra.mxu0 0
      %1841 = vmatpush.bf16.msra.mxu0 0
      %1842 = vmatpush.bf16.msra.mxu0 0
      %1843 = vmatpush.bf16.msra.mxu0 0
      %1844 = vmatpush.bf16.msra.mxu0 0
      %1845 = vmatpush.bf16.msra.mxu0 0
      %1846 = vmatpush.bf16.msra.mxu0 0
      %1847 = vmatpush.bf16.msra.mxu0 %v1800
      %1848 = vmatmul.bf16.gmra.mxu0 %v1791
      %v1849 = vpop.f32.mrf.mxu0
      %v1850 = vadd.f32 0.0, %v1849
      %v1851 = vpop.f32.mrf.mxu0
      %1852 = vdwg.mxu0
      %1853 = vmatpush.bf16.msra.mxu0 0
      %1854 = vmatpush.bf16.msra.mxu0 0
      %1855 = vmatpush.bf16.msra.mxu0 0
      %1856 = vmatpush.bf16.msra.mxu0 0
      %1857 = vmatpush.bf16.msra.mxu0 0
      %1858 = vmatpush.bf16.msra.mxu0 0
      %1859 = vmatpush.bf16.msra.mxu0 0
      %1860 = vmatpush.bf16.msra.mxu0 %v1803
      %1861 = vmatmul.bf16.gmra.mxu0 %v1791
      %v1862 = vpop.f32.mrf.mxu0
      %v1863 = vadd.f32 0.0, %v1862
      %v1864 = vpop.f32.mrf.mxu0
      %1865 = vdwg.mxu0
      %1866 = vmatpush.bf16.msra.mxu0 0
      %1867 = vmatpush.bf16.msra.mxu0 0
      %1868 = vmatpush.bf16.msra.mxu0 0
      %1869 = vmatpush.bf16.msra.mxu0 0
      %1870 = vmatpush.bf16.msra.mxu0 0
      %1871 = vmatpush.bf16.msra.mxu0 0
      %1872 = vmatpush.bf16.msra.mxu0 0
      %1873 = vmatpush.bf16.msra.mxu0 %v1806
      %1874 = vmatmul.bf16.gmra.mxu0 %v1791
      %v1875 = vpop.f32.mrf.mxu0
      %v1876 = vadd.f32 0.0, %v1875
      %v1877 = vpop.f32.mrf.mxu0
      %1878 = vdwg.mxu0
      %1879 = vmatpush.bf16.msra.mxu0 0
      %1880 = vmatpush.bf16.msra.mxu0 0
      %1881 = vmatpush.bf16.msra.mxu0 0
      %1882 = vmatpush.bf16.msra.mxu0 0
      %1883 = vmatpush.bf16.msra.mxu0 0
      %1884 = vmatpush.bf16.msra.mxu0 0
      %1885 = vmatpush.bf16.msra.mxu0 0
      %1886 = vmatpush.bf16.msra.mxu0 %v1809
      %1887 = vmatmul.bf16.gmra.mxu0 %v1791
      %v1888 = vpop.f32.mrf.mxu0
      %v1889 = vadd.f32 0.0, %v1888
      %v1890 = vpop.f32.mrf.mxu0
      %1891 = vdwg.mxu0
      %1892 = vmatpush.bf16.msra.mxu0 0
      %1893 = vmatpush.bf16.msra.mxu0 0
      %1894 = vmatpush.bf16.msra.mxu0 0
      %1895 = vmatpush.bf16.msra.mxu0 0
      %1896 = vmatpush.bf16.msra.mxu0 0
      %1897 = vmatpush.bf16.msra.mxu0 0
      %1898 = vmatpush.bf16.msra.mxu0 0
      %1899 = vmatpush.bf16.msra.mxu0 %v1812
      %1900 = vmatmul.bf16.gmra.mxu0 %v1791
      %v1901 = vpop.f32.mrf.mxu0
      %v1902 = vadd.f32 0.0, %v1901
      %v1903 = vpop.f32.mrf.mxu0
      %1904 = vdwg.mxu0
      %v1905 = vadd.f32 %v1717, %v1824
      %v1906 = vadd.f32 %v1718, %v1837
      %v1907 = vadd.f32 %v1719, %v1850
      %v1908 = vadd.f32 %v1720, %v1863
      %v1909 = vadd.f32 %v1721, %v1876
      %v1910 = vadd.f32 %v1722, %v1889
      %v1911 = vadd.f32 %v1723, %v1902
      %v1912 = vld [vmem:[%s246] sm:$0xff]
      %v1913 = vld [vmem:[%s246 + $0x8] sm:$0xff]
      %v1914 = vld [vmem:[%s246 + $0x10] sm:$0xff]
      %v1915 = vld [vmem:[%s246 + $0x18] sm:$0xf]
      %1920 = vst [vmem:[#allocation1] ss:$2 sm:$0xff] %v1912
      %s1921 = scalar_lea.vmem [#allocation1], 16
      %1922 = vst [vmem:[%s1921] ss:$2 sm:$0xff] %v1913
      %s1923 = scalar_lea.vmem [#allocation1], 32
      %1924 = vst [vmem:[%s1923] ss:$2 sm:$0xff] %v1914
      %s1925 = scalar_lea.vmem [#allocation1], 48
      %1926 = vst [vmem:[%s1925] ss:$2 sm:$0xff] %v1915
      %v1927 = vld.sshfl [vmem:[#allocation1] sm:$0xff pattern:$0x75316420]
      %v1928 = vld.sshfl [vmem:[#allocation1 + $0x8] sm:$0xff pattern:$0x75316420]
      %v1929 = vld.sshfl [vmem:[#allocation1 + $0x10] sm:$0xff pattern:$0x75316420]
      %v1930 = vld.sshfl [vmem:[#allocation1 + $0x18] sm:$0xff pattern:$0x75316420]
      %v1931 = vld.sshfl [vmem:[#allocation1 + $0x20] sm:$0xff pattern:$0x75316420]
      %v1932 = vld.sshfl [vmem:[#allocation1 + $0x28] sm:$0xff pattern:$0x75316420]
      %v1933 = vld.sshfl [vmem:[#allocation1 + $0x30] sm:$0xff pattern:$0x75316420]
      %v1941 = vpack.c.bf16 %v1927, %v1927
      %v1942 = vpack.c.bf16 %v1928, %v1928
      %v1943 = vpack.c.bf16 %v1929, %v1929
      %v1944 = vpack.c.bf16 %v1930, %v1930
      %v1945 = vpack.c.bf16 %v1931, %v1931
      %v1946 = vpack.c.bf16 %v1932, %v1932
      %v1947 = vpack.c.bf16 %v1933, %v1933
      %s1948 = scalar_lea.vmem %s1, 18
      %v1949 = vld [vmem:[%s1948] sm:$0x3]
      %1957 = vrot.lane.b32.xlu0 %v1941, 28
      %v1958 = vpop.permute.xlu0 %1957
      %1959 = vrot.lane.b32.xlu0 %v1942, 28
      %v1960 = vpop.permute.xlu0 %1959
      %1961 = vrot.lane.b32.xlu0 %v1943, 28
      %v1962 = vpop.permute.xlu0 %1961
      %1963 = vrot.lane.b32.xlu0 %v1944, 28
      %v1964 = vpop.permute.xlu0 %1963
      %1965 = vrot.lane.b32.xlu0 %v1945, 28
      %v1966 = vpop.permute.xlu0 %1965
      %1967 = vrot.lane.b32.xlu0 %v1946, 28
      %v1968 = vpop.permute.xlu0 %1967
      %1969 = vrot.lane.b32.xlu0 %v1947, 28
      %v1970 = vpop.permute.xlu0 %1969
      %vm1971 = vcmask 228352
      %v1972 = vsel %vm1971, %v1958, %v1960
      %v1973 = vsel %vm1971, %v1960, %v1962
      %v1974 = vsel %vm1971, %v1962, %v1964
      %v1975 = vsel %vm1971, %v1964, %v1966
      %v1976 = vsel %vm1971, %v1966, %v1968
      %v1977 = vsel %vm1971, %v1968, %v1970
      %v1979 = vsel %vm365, %v1949, 0
      %v1982 = vsel %vm254, %v1972, 0
      %v1985 = vsel %vm254, %v1973, 0
      %v1988 = vsel %vm254, %v1974, 0
      %v1991 = vsel %vm254, %v1975, 0
      %v1994 = vsel %vm254, %v1976, 0
      %v1997 = vsel %vm254, %v1977, 0
      %v2000 = vsel %vm254, %v1970, 0
      %2002 = vmatpush.bf16.msra.mxu0 0
      %2003 = vmatpush.bf16.msra.mxu0 0
      %2004 = vmatpush.bf16.msra.mxu0 0
      %2005 = vmatpush.bf16.msra.mxu0 0
      %2006 = vmatpush.bf16.msra.mxu0 0
      %2007 = vmatpush.bf16.msra.mxu0 0
      %2008 = vmatpush.bf16.msra.mxu0 0
      %2009 = vmatpush.bf16.msra.mxu0 %v1982
      %2010 = vmatmul.bf16.gmra.mxu0 %v1979
      %v2011 = vpop.f32.mrf.mxu0
      %v2012 = vadd.f32 0.0, %v2011
      %v2013 = vpop.f32.mrf.mxu0
      %2014 = vdwg.mxu0
      %2015 = vmatpush.bf16.msra.mxu0 0
      %2016 = vmatpush.bf16.msra.mxu0 0
      %2017 = vmatpush.bf16.msra.mxu0 0
      %2018 = vmatpush.bf16.msra.mxu0 0
      %2019 = vmatpush.bf16.msra.mxu0 0
      %2020 = vmatpush.bf16.msra.mxu0 0
      %2021 = vmatpush.bf16.msra.mxu0 0
      %2022 = vmatpush.bf16.msra.mxu0 %v1985
      %2023 = vmatmul.bf16.gmra.mxu0 %v1979
      %v2024 = vpop.f32.mrf.mxu0
      %v2025 = vadd.f32 0.0, %v2024
      %v2026 = vpop.f32.mrf.mxu0
      %2027 = vdwg.mxu0
      %2028 = vmatpush.bf16.msra.mxu0 0
      %2029 = vmatpush.bf16.msra.mxu0 0
      %2030 = vmatpush.bf16.msra.mxu0 0
      %2031 = vmatpush.bf16.msra.mxu0 0
      %2032 = vmatpush.bf16.msra.mxu0 0
      %2033 = vmatpush.bf16.msra.mxu0 0
      %2034 = vmatpush.bf16.msra.mxu0 0
      %2035 = vmatpush.bf16.msra.mxu0 %v1988
      %2036 = vmatmul.bf16.gmra.mxu0 %v1979
      %v2037 = vpop.f32.mrf.mxu0
      %v2038 = vadd.f32 0.0, %v2037
      %v2039 = vpop.f32.mrf.mxu0
      %2040 = vdwg.mxu0
      %2041 = vmatpush.bf16.msra.mxu0 0
      %2042 = vmatpush.bf16.msra.mxu0 0
      %2043 = vmatpush.bf16.msra.mxu0 0
      %2044 = vmatpush.bf16.msra.mxu0 0
      %2045 = vmatpush.bf16.msra.mxu0 0
      %2046 = vmatpush.bf16.msra.mxu0 0
      %2047 = vmatpush.bf16.msra.mxu0 0
      %2048 = vmatpush.bf16.msra.mxu0 %v1991
      %2049 = vmatmul.bf16.gmra.mxu0 %v1979
      %v2050 = vpop.f32.mrf.mxu0
      %v2051 = vadd.f32 0.0, %v2050
      %v2052 = vpop.f32.mrf.mxu0
      %2053 = vdwg.mxu0
      %2054 = vmatpush.bf16.msra.mxu0 0
      %2055 = vmatpush.bf16.msra.mxu0 0
      %2056 = vmatpush.bf16.msra.mxu0 0
      %2057 = vmatpush.bf16.msra.mxu0 0
      %2058 = vmatpush.bf16.msra.mxu0 0
      %2059 = vmatpush.bf16.msra.mxu0 0
      %2060 = vmatpush.bf16.msra.mxu0 0
      %2061 = vmatpush.bf16.msra.mxu0 %v1994
      %2062 = vmatmul.bf16.gmra.mxu0 %v1979
      %v2063 = vpop.f32.mrf.mxu0
      %v2064 = vadd.f32 0.0, %v2063
      %v2065 = vpop.f32.mrf.mxu0
      %2066 = vdwg.mxu0
      %2067 = vmatpush.bf16.msra.mxu0 0
      %2068 = vmatpush.bf16.msra.mxu0 0
      %2069 = vmatpush.bf16.msra.mxu0 0
      %2070 = vmatpush.bf16.msra.mxu0 0
      %2071 = vmatpush.bf16.msra.mxu0 0
      %2072 = vmatpush.bf16.msra.mxu0 0
      %2073 = vmatpush.bf16.msra.mxu0 0
      %2074 = vmatpush.bf16.msra.mxu0 %v1997
      %2075 = vmatmul.bf16.gmra.mxu0 %v1979
      %v2076 = vpop.f32.mrf.mxu0
      %v2077 = vadd.f32 0.0, %v2076
      %v2078 = vpop.f32.mrf.mxu0
      %2079 = vdwg.mxu0
      %2080 = vmatpush.bf16.msra.mxu0 0
      %2081 = vmatpush.bf16.msra.mxu0 0
      %2082 = vmatpush.bf16.msra.mxu0 0
      %2083 = vmatpush.bf16.msra.mxu0 0
      %2084 = vmatpush.bf16.msra.mxu0 0
      %2085 = vmatpush.bf16.msra.mxu0 0
      %2086 = vmatpush.bf16.msra.mxu0 0
      %2087 = vmatpush.bf16.msra.mxu0 %v2000
      %2088 = vmatmul.bf16.gmra.mxu0 %v1979
      %v2089 = vpop.f32.mrf.mxu0
      %v2090 = vadd.f32 0.0, %v2089
      %v2091 = vpop.f32.mrf.mxu0
      %2092 = vdwg.mxu0
      %v2093 = vadd.f32 %v1905, %v2012
      %v2094 = vadd.f32 %v1906, %v2025
      %v2095 = vadd.f32 %v1907, %v2038
      %v2096 = vadd.f32 %v1908, %v2051
      %v2097 = vadd.f32 %v1909, %v2064
      %v2098 = vadd.f32 %v1910, %v2077
      %v2099 = vadd.f32 %v1911, %v2090
      %v2100 = vld [vmem:[%s246] sm:$0xff]
      %v2101 = vld [vmem:[%s246 + $0x8] sm:$0xff]
      %v2102 = vld [vmem:[%s246 + $0x10] sm:$0xff]
      %v2103 = vld [vmem:[%s246 + $0x18] sm:$0xf]
      %2108 = vst [vmem:[#allocation1] ss:$2 sm:$0xff] %v2100
      %s2109 = scalar_lea.vmem [#allocation1], 16
      %2110 = vst [vmem:[%s2109] ss:$2 sm:$0xff] %v2101
      %s2111 = scalar_lea.vmem [#allocation1], 32
      %2112 = vst [vmem:[%s2111] ss:$2 sm:$0xff] %v2102
      %s2113 = scalar_lea.vmem [#allocation1], 48
      %2114 = vst [vmem:[%s2113] ss:$2 sm:$0xff] %v2103
      %v2115 = vld.sshfl [vmem:[#allocation1] sm:$0xff pattern:$0x75316420]
      %v2116 = vld.sshfl [vmem:[#allocation1 + $0x8] sm:$0xff pattern:$0x75316420]
      %v2117 = vld.sshfl [vmem:[#allocation1 + $0x10] sm:$0xff pattern:$0x75316420]
      %v2118 = vld.sshfl [vmem:[#allocation1 + $0x18] sm:$0xff pattern:$0x75316420]
      %v2119 = vld.sshfl [vmem:[#allocation1 + $0x20] sm:$0xff pattern:$0x75316420]
      %v2120 = vld.sshfl [vmem:[#allocation1 + $0x28] sm:$0xff pattern:$0x75316420]
      %v2121 = vld.sshfl [vmem:[#allocation1 + $0x30] sm:$0xff pattern:$0x75316420]
      %v2129 = vpack.c.bf16 %v2115, %v2115
      %v2130 = vpack.c.bf16 %v2116, %v2116
      %v2131 = vpack.c.bf16 %v2117, %v2117
      %v2132 = vpack.c.bf16 %v2118, %v2118
      %v2133 = vpack.c.bf16 %v2119, %v2119
      %v2134 = vpack.c.bf16 %v2120, %v2120
      %v2135 = vpack.c.bf16 %v2121, %v2121
      %s2136 = scalar_lea.vmem %s1, 20
      %v2137 = vld [vmem:[%s2136] sm:$0x3]
      %2145 = vrot.lane.b32.xlu0 %v2129, 27
      %v2146 = vpop.permute.xlu0 %2145
      %2147 = vrot.lane.b32.xlu0 %v2130, 27
      %v2148 = vpop.permute.xlu0 %2147
      %2149 = vrot.lane.b32.xlu0 %v2131, 27
      %v2150 = vpop.permute.xlu0 %2149
      %2151 = vrot.lane.b32.xlu0 %v2132, 27
      %v2152 = vpop.permute.xlu0 %2151
      %2153 = vrot.lane.b32.xlu0 %v2133, 27
      %v2154 = vpop.permute.xlu0 %2153
      %2155 = vrot.lane.b32.xlu0 %v2134, 27
      %v2156 = vpop.permute.xlu0 %2155
      %2157 = vrot.lane.b32.xlu0 %v2135, 27
      %v2158 = vpop.permute.xlu0 %2157
      %vm2159 = vcmask 220160
      %v2160 = vsel %vm2159, %v2146, %v2148
      %v2161 = vsel %vm2159, %v2148, %v2150
      %v2162 = vsel %vm2159, %v2150, %v2152
      %v2163 = vsel %vm2159, %v2152, %v2154
      %v2164 = vsel %vm2159, %v2154, %v2156
      %v2165 = vsel %vm2159, %v2156, %v2158
      %v2167 = vsel %vm365, %v2137, 0
      %v2170 = vsel %vm254, %v2160, 0
      %v2173 = vsel %vm254, %v2161, 0
      %v2176 = vsel %vm254, %v2162, 0
      %v2179 = vsel %vm254, %v2163, 0
      %v2182 = vsel %vm254, %v2164, 0
      %v2185 = vsel %vm254, %v2165, 0
      %v2188 = vsel %vm254, %v2158, 0
      %2190 = vmatpush.bf16.msra.mxu0 0
      %2191 = vmatpush.bf16.msra.mxu0 0
      %2192 = vmatpush.bf16.msra.mxu0 0
      %2193 = vmatpush.bf16.msra.mxu0 0
      %2194 = vmatpush.bf16.msra.mxu0 0
      %2195 = vmatpush.bf16.msra.mxu0 0
      %2196 = vmatpush.bf16.msra.mxu0 0
      %2197 = vmatpush.bf16.msra.mxu0 %v2170
      %2198 = vmatmul.bf16.gmra.mxu0 %v2167
      %v2199 = vpop.f32.mrf.mxu0
      %v2200 = vadd.f32 0.0, %v2199
      %v2201 = vpop.f32.mrf.mxu0
      %2202 = vdwg.mxu0
      %2203 = vmatpush.bf16.msra.mxu0 0
      %2204 = vmatpush.bf16.msra.mxu0 0
      %2205 = vmatpush.bf16.msra.mxu0 0
      %2206 = vmatpush.bf16.msra.mxu0 0
      %2207 = vmatpush.bf16.msra.mxu0 0
      %2208 = vmatpush.bf16.msra.mxu0 0
      %2209 = vmatpush.bf16.msra.mxu0 0
      %2210 = vmatpush.bf16.msra.mxu0 %v2173
      %2211 = vmatmul.bf16.gmra.mxu0 %v2167
      %v2212 = vpop.f32.mrf.mxu0
      %v2213 = vadd.f32 0.0, %v2212
      %v2214 = vpop.f32.mrf.mxu0
      %2215 = vdwg.mxu0
      %2216 = vmatpush.bf16.msra.mxu0 0
      %2217 = vmatpush.bf16.msra.mxu0 0
      %2218 = vmatpush.bf16.msra.mxu0 0
      %2219 = vmatpush.bf16.msra.mxu0 0
      %2220 = vmatpush.bf16.msra.mxu0 0
      %2221 = vmatpush.bf16.msra.mxu0 0
      %2222 = vmatpush.bf16.msra.mxu0 0
      %2223 = vmatpush.bf16.msra.mxu0 %v2176
      %2224 = vmatmul.bf16.gmra.mxu0 %v2167
      %v2225 = vpop.f32.mrf.mxu0
      %v2226 = vadd.f32 0.0, %v2225
      %v2227 = vpop.f32.mrf.mxu0
      %2228 = vdwg.mxu0
      %2229 = vmatpush.bf16.msra.mxu0 0
      %2230 = vmatpush.bf16.msra.mxu0 0
      %2231 = vmatpush.bf16.msra.mxu0 0
      %2232 = vmatpush.bf16.msra.mxu0 0
      %2233 = vmatpush.bf16.msra.mxu0 0
      %2234 = vmatpush.bf16.msra.mxu0 0
      %2235 = vmatpush.bf16.msra.mxu0 0
      %2236 = vmatpush.bf16.msra.mxu0 %v2179
      %2237 = vmatmul.bf16.gmra.mxu0 %v2167
      %v2238 = vpop.f32.mrf.mxu0
      %v2239 = vadd.f32 0.0, %v2238
      %v2240 = vpop.f32.mrf.mxu0
      %2241 = vdwg.mxu0
      %2242 = vmatpush.bf16.msra.mxu0 0
      %2243 = vmatpush.bf16.msra.mxu0 0
      %2244 = vmatpush.bf16.msra.mxu0 0
      %2245 = vmatpush.bf16.msra.mxu0 0
      %2246 = vmatpush.bf16.msra.mxu0 0
      %2247 = vmatpush.bf16.msra.mxu0 0
      %2248 = vmatpush.bf16.msra.mxu0 0
      %2249 = vmatpush.bf16.msra.mxu0 %v2182
      %2250 = vmatmul.bf16.gmra.mxu0 %v2167
      %v2251 = vpop.f32.mrf.mxu0
      %v2252 = vadd.f32 0.0, %v2251
      %v2253 = vpop.f32.mrf.mxu0
      %2254 = vdwg.mxu0
      %2255 = vmatpush.bf16.msra.mxu0 0
      %2256 = vmatpush.bf16.msra.mxu0 0
      %2257 = vmatpush.bf16.msra.mxu0 0
      %2258 = vmatpush.bf16.msra.mxu0 0
      %2259 = vmatpush.bf16.msra.mxu0 0
      %2260 = vmatpush.bf16.msra.mxu0 0
      %2261 = vmatpush.bf16.msra.mxu0 0
      %2262 = vmatpush.bf16.msra.mxu0 %v2185
      %2263 = vmatmul.bf16.gmra.mxu0 %v2167
      %v2264 = vpop.f32.mrf.mxu0
      %v2265 = vadd.f32 0.0, %v2264
      %v2266 = vpop.f32.mrf.mxu0
      %2267 = vdwg.mxu0
      %2268 = vmatpush.bf16.msra.mxu0 0
      %2269 = vmatpush.bf16.msra.mxu0 0
      %2270 = vmatpush.bf16.msra.mxu0 0
      %2271 = vmatpush.bf16.msra.mxu0 0
      %2272 = vmatpush.bf16.msra.mxu0 0
      %2273 = vmatpush.bf16.msra.mxu0 0
      %2274 = vmatpush.bf16.msra.mxu0 0
      %2275 = vmatpush.bf16.msra.mxu0 %v2188
      %2276 = vmatmul.bf16.gmra.mxu0 %v2167
      %v2277 = vpop.f32.mrf.mxu0
      %v2278 = vadd.f32 0.0, %v2277
      %v2279 = vpop.f32.mrf.mxu0
      %2280 = vdwg.mxu0
      %v2281 = vadd.f32 %v2093, %v2200
      %v2282 = vadd.f32 %v2094, %v2213
      %v2283 = vadd.f32 %v2095, %v2226
      %v2284 = vadd.f32 %v2096, %v2239
      %v2285 = vadd.f32 %v2097, %v2252
      %v2286 = vadd.f32 %v2098, %v2265
      %v2287 = vadd.f32 %v2099, %v2278
      %v2288 = vld [vmem:[%s246] sm:$0xff]
      %v2289 = vld [vmem:[%s246 + $0x8] sm:$0xff]
      %v2290 = vld [vmem:[%s246 + $0x10] sm:$0xff]
      %v2291 = vld [vmem:[%s246 + $0x18] sm:$0xf]
      %2296 = vst [vmem:[#allocation1] ss:$2 sm:$0xff] %v2288
      %s2297 = scalar_lea.vmem [#allocation1], 16
      %2298 = vst [vmem:[%s2297] ss:$2 sm:$0xff] %v2289
      %s2299 = scalar_lea.vmem [#allocation1], 32
      %2300 = vst [vmem:[%s2299] ss:$2 sm:$0xff] %v2290
      %s2301 = scalar_lea.vmem [#allocation1], 48
      %2302 = vst [vmem:[%s2301] ss:$2 sm:$0xff] %v2291
      %v2303 = vld.sshfl [vmem:[#allocation1] sm:$0xff pattern:$0x75316420]
      %v2304 = vld.sshfl [vmem:[#allocation1 + $0x8] sm:$0xff pattern:$0x75316420]
      %v2305 = vld.sshfl [vmem:[#allocation1 + $0x10] sm:$0xff pattern:$0x75316420]
      %v2306 = vld.sshfl [vmem:[#allocation1 + $0x18] sm:$0xff pattern:$0x75316420]
      %v2307 = vld.sshfl [vmem:[#allocation1 + $0x20] sm:$0xff pattern:$0x75316420]
      %v2308 = vld.sshfl [vmem:[#allocation1 + $0x28] sm:$0xff pattern:$0x75316420]
      %v2309 = vld.sshfl [vmem:[#allocation1 + $0x30] sm:$0xff pattern:$0x75316420]
      %v2317 = vpack.c.bf16 %v2303, %v2303
      %v2318 = vpack.c.bf16 %v2304, %v2304
      %v2319 = vpack.c.bf16 %v2305, %v2305
      %v2320 = vpack.c.bf16 %v2306, %v2306
      %v2321 = vpack.c.bf16 %v2307, %v2307
      %v2322 = vpack.c.bf16 %v2308, %v2308
      %v2323 = vpack.c.bf16 %v2309, %v2309
      %s2324 = scalar_lea.vmem %s1, 22
      %v2325 = vld [vmem:[%s2324] sm:$0x3]
      %2333 = vrot.lane.b32.xlu0 %v2317, 26
      %v2334 = vpop.permute.xlu0 %2333
      %2335 = vrot.lane.b32.xlu0 %v2318, 26
      %v2336 = vpop.permute.xlu0 %2335
      %2337 = vrot.lane.b32.xlu0 %v2319, 26
      %v2338 = vpop.permute.xlu0 %2337
      %2339 = vrot.lane.b32.xlu0 %v2320, 26
      %v2340 = vpop.permute.xlu0 %2339
      %2341 = vrot.lane.b32.xlu0 %v2321, 26
      %v2342 = vpop.permute.xlu0 %2341
      %2343 = vrot.lane.b32.xlu0 %v2322, 26
      %v2344 = vpop.permute.xlu0 %2343
      %2345 = vrot.lane.b32.xlu0 %v2323, 26
      %v2346 = vpop.permute.xlu0 %2345
      %vm2347 = vcmask 211968
      %v2348 = vsel %vm2347, %v2334, %v2336
      %v2349 = vsel %vm2347, %v2336, %v2338
      %v2350 = vsel %vm2347, %v2338, %v2340
      %v2351 = vsel %vm2347, %v2340, %v2342
      %v2352 = vsel %vm2347, %v2342, %v2344
      %v2353 = vsel %vm2347, %v2344, %v2346
      %v2355 = vsel %vm365, %v2325, 0
      %v2358 = vsel %vm254, %v2348, 0
      %v2361 = vsel %vm254, %v2349, 0
      %v2364 = vsel %vm254, %v2350, 0
      %v2367 = vsel %vm254, %v2351, 0
      %v2370 = vsel %vm254, %v2352, 0
      %v2373 = vsel %vm254, %v2353, 0
      %v2376 = vsel %vm254, %v2346, 0
      %2378 = vmatpush.bf16.msra.mxu0 0
      %2379 = vmatpush.bf16.msra.mxu0 0
      %2380 = vmatpush.bf16.msra.mxu0 0
      %2381 = vmatpush.bf16.msra.mxu0 0
      %2382 = vmatpush.bf16.msra.mxu0 0
      %2383 = vmatpush.bf16.msra.mxu0 0
      %2384 = vmatpush.bf16.msra.mxu0 0
      %2385 = vmatpush.bf16.msra.mxu0 %v2358
      %2386 = vmatmul.bf16.gmra.mxu0 %v2355
      %v2387 = vpop.f32.mrf.mxu0
      %v2388 = vadd.f32 0.0, %v2387
      %v2389 = vpop.f32.mrf.mxu0
      %2390 = vdwg.mxu0
      %2391 = vmatpush.bf16.msra.mxu0 0
      %2392 = vmatpush.bf16.msra.mxu0 0
      %2393 = vmatpush.bf16.msra.mxu0 0
      %2394 = vmatpush.bf16.msra.mxu0 0
      %2395 = vmatpush.bf16.msra.mxu0 0
      %2396 = vmatpush.bf16.msra.mxu0 0
      %2397 = vmatpush.bf16.msra.mxu0 0
      %2398 = vmatpush.bf16.msra.mxu0 %v2361
      %2399 = vmatmul.bf16.gmra.mxu0 %v2355
      %v2400 = vpop.f32.mrf.mxu0
      %v2401 = vadd.f32 0.0, %v2400
      %v2402 = vpop.f32.mrf.mxu0
      %2403 = vdwg.mxu0
      %2404 = vmatpush.bf16.msra.mxu0 0
      %2405 = vmatpush.bf16.msra.mxu0 0
      %2406 = vmatpush.bf16.msra.mxu0 0
      %2407 = vmatpush.bf16.msra.mxu0 0
      %2408 = vmatpush.bf16.msra.mxu0 0
      %2409 = vmatpush.bf16.msra.mxu0 0
      %2410 = vmatpush.bf16.msra.mxu0 0
      %2411 = vmatpush.bf16.msra.mxu0 %v2364
      %2412 = vmatmul.bf16.gmra.mxu0 %v2355
      %v2413 = vpop.f32.mrf.mxu0
      %v2414 = vadd.f32 0.0, %v2413
      %v2415 = vpop.f32.mrf.mxu0
      %2416 = vdwg.mxu0
      %2417 = vmatpush.bf16.msra.mxu0 0
      %2418 = vmatpush.bf16.msra.mxu0 0
      %2419 = vmatpush.bf16.msra.mxu0 0
      %2420 = vmatpush.bf16.msra.mxu0 0
      %2421 = vmatpush.bf16.msra.mxu0 0
      %2422 = vmatpush.bf16.msra.mxu0 0
      %2423 = vmatpush.bf16.msra.mxu0 0
      %2424 = vmatpush.bf16.msra.mxu0 %v2367
      %2425 = vmatmul.bf16.gmra.mxu0 %v2355
      %v2426 = vpop.f32.mrf.mxu0
      %v2427 = vadd.f32 0.0, %v2426
      %v2428 = vpop.f32.mrf.mxu0
      %2429 = vdwg.mxu0
      %2430 = vmatpush.bf16.msra.mxu0 0
      %2431 = vmatpush.bf16.msra.mxu0 0
      %2432 = vmatpush.bf16.msra.mxu0 0
      %2433 = vmatpush.bf16.msra.mxu0 0
      %2434 = vmatpush.bf16.msra.mxu0 0
      %2435 = vmatpush.bf16.msra.mxu0 0
      %2436 = vmatpush.bf16.msra.mxu0 0
      %2437 = vmatpush.bf16.msra.mxu0 %v2370
      %2438 = vmatmul.bf16.gmra.mxu0 %v2355
      %v2439 = vpop.f32.mrf.mxu0
      %v2440 = vadd.f32 0.0, %v2439
      %v2441 = vpop.f32.mrf.mxu0
      %2442 = vdwg.mxu0
      %2443 = vmatpush.bf16.msra.mxu0 0
      %2444 = vmatpush.bf16.msra.mxu0 0
      %2445 = vmatpush.bf16.msra.mxu0 0
      %2446 = vmatpush.bf16.msra.mxu0 0
      %2447 = vmatpush.bf16.msra.mxu0 0
      %2448 = vmatpush.bf16.msra.mxu0 0
      %2449 = vmatpush.bf16.msra.mxu0 0
      %2450 = vmatpush.bf16.msra.mxu0 %v2373
      %2451 = vmatmul.bf16.gmra.mxu0 %v2355
      %v2452 = vpop.f32.mrf.mxu0
      %v2453 = vadd.f32 0.0, %v2452
      %v2454 = vpop.f32.mrf.mxu0
      %2455 = vdwg.mxu0
      %2456 = vmatpush.bf16.msra.mxu0 0
      %2457 = vmatpush.bf16.msra.mxu0 0
      %2458 = vmatpush.bf16.msra.mxu0 0
      %2459 = vmatpush.bf16.msra.mxu0 0
      %2460 = vmatpush.bf16.msra.mxu0 0
      %2461 = vmatpush.bf16.msra.mxu0 0
      %2462 = vmatpush.bf16.msra.mxu0 0
      %2463 = vmatpush.bf16.msra.mxu0 %v2376
      %2464 = vmatmul.bf16.gmra.mxu0 %v2355
      %v2465 = vpop.f32.mrf.mxu0
      %v2466 = vadd.f32 0.0, %v2465
      %v2467 = vpop.f32.mrf.mxu0
      %2468 = vdwg.mxu0
      %v2469 = vadd.f32 %v2281, %v2388
      %v2470 = vadd.f32 %v2282, %v2401
      %v2471 = vadd.f32 %v2283, %v2414
      %v2472 = vadd.f32 %v2284, %v2427
      %v2473 = vadd.f32 %v2285, %v2440
      %v2474 = vadd.f32 %v2286, %v2453
      %v2475 = vadd.f32 %v2287, %v2466
      %v2476 = vld [vmem:[%s246] sm:$0xff]
      %v2477 = vld [vmem:[%s246 + $0x8] sm:$0xff]
      %v2478 = vld [vmem:[%s246 + $0x10] sm:$0xff]
      %v2479 = vld [vmem:[%s246 + $0x18] sm:$0xf]
      %2484 = vst [vmem:[#allocation1] ss:$2 sm:$0xff] %v2476
      %s2485 = scalar_lea.vmem [#allocation1], 16
      %2486 = vst [vmem:[%s2485] ss:$2 sm:$0xff] %v2477
      %s2487 = scalar_lea.vmem [#allocation1], 32
      %2488 = vst [vmem:[%s2487] ss:$2 sm:$0xff] %v2478
      %s2489 = scalar_lea.vmem [#allocation1], 48
      %2490 = vst [vmem:[%s2489] ss:$2 sm:$0xff] %v2479
      %v2491 = vld.sshfl [vmem:[#allocation1] sm:$0xff pattern:$0x75316420]
      %v2492 = vld.sshfl [vmem:[#allocation1 + $0x8] sm:$0xff pattern:$0x75316420]
      %v2493 = vld.sshfl [vmem:[#allocation1 + $0x10] sm:$0xff pattern:$0x75316420]
      %v2494 = vld.sshfl [vmem:[#allocation1 + $0x18] sm:$0xff pattern:$0x75316420]
      %v2495 = vld.sshfl [vmem:[#allocation1 + $0x20] sm:$0xff pattern:$0x75316420]
      %v2496 = vld.sshfl [vmem:[#allocation1 + $0x28] sm:$0xff pattern:$0x75316420]
      %v2497 = vld.sshfl [vmem:[#allocation1 + $0x30] sm:$0xff pattern:$0x75316420]
      %v2505 = vpack.c.bf16 %v2491, %v2491
      %v2506 = vpack.c.bf16 %v2492, %v2492
      %v2507 = vpack.c.bf16 %v2493, %v2493
      %v2508 = vpack.c.bf16 %v2494, %v2494
      %v2509 = vpack.c.bf16 %v2495, %v2495
      %v2510 = vpack.c.bf16 %v2496, %v2496
      %v2511 = vpack.c.bf16 %v2497, %v2497
      %s2512 = scalar_lea.vmem %s1, 24
      %v2513 = vld [vmem:[%s2512] sm:$0x3]
      %2521 = vrot.lane.b32.xlu0 %v2505, 18
      %v2522 = vpop.permute.xlu0 %2521
      %2523 = vrot.lane.b32.xlu0 %v2506, 18
      %v2524 = vpop.permute.xlu0 %2523
      %2525 = vrot.lane.b32.xlu0 %v2507, 18
      %v2526 = vpop.permute.xlu0 %2525
      %2527 = vrot.lane.b32.xlu0 %v2508, 18
      %v2528 = vpop.permute.xlu0 %2527
      %2529 = vrot.lane.b32.xlu0 %v2509, 18
      %v2530 = vpop.permute.xlu0 %2529
      %2531 = vrot.lane.b32.xlu0 %v2510, 18
      %v2532 = vpop.permute.xlu0 %2531
      %2533 = vrot.lane.b32.xlu0 %v2511, 18
      %v2534 = vpop.permute.xlu0 %2533
      %vm2535 = vcmask 146432
      %v2536 = vsel %vm2535, %v2522, %v2524
      %v2537 = vsel %vm2535, %v2524, %v2526
      %v2538 = vsel %vm2535, %v2526, %v2528
      %v2539 = vsel %vm2535, %v2528, %v2530
      %v2540 = vsel %vm2535, %v2530, %v2532
      %v2541 = vsel %vm2535, %v2532, %v2534
      %v2543 = vsel %vm365, %v2513, 0
      %v2546 = vsel %vm254, %v2536, 0
      %v2549 = vsel %vm254, %v2537, 0
      %v2552 = vsel %vm254, %v2538, 0
      %v2555 = vsel %vm254, %v2539, 0
      %v2558 = vsel %vm254, %v2540, 0
      %v2561 = vsel %vm254, %v2541, 0
      %v2564 = vsel %vm254, %v2534, 0
      %2566 = vmatpush.bf16.msra.mxu0 0
      %2567 = vmatpush.bf16.msra.mxu0 0
      %2568 = vmatpush.bf16.msra.mxu0 0
      %2569 = vmatpush.bf16.msra.mxu0 0
      %2570 = vmatpush.bf16.msra.mxu0 0
      %2571 = vmatpush.bf16.msra.mxu0 0
      %2572 = vmatpush.bf16.msra.mxu0 0
      %2573 = vmatpush.bf16.msra.mxu0 %v2546
      %2574 = vmatmul.bf16.gmra.mxu0 %v2543
      %v2575 = vpop.f32.mrf.mxu0
      %v2576 = vadd.f32 0.0, %v2575
      %v2577 = vpop.f32.mrf.mxu0
      %2578 = vdwg.mxu0
      %2579 = vmatpush.bf16.msra.mxu0 0
      %2580 = vmatpush.bf16.msra.mxu0 0
      %2581 = vmatpush.bf16.msra.mxu0 0
      %2582 = vmatpush.bf16.msra.mxu0 0
      %2583 = vmatpush.bf16.msra.mxu0 0
      %2584 = vmatpush.bf16.msra.mxu0 0
      %2585 = vmatpush.bf16.msra.mxu0 0
      %2586 = vmatpush.bf16.msra.mxu0 %v2549
      %2587 = vmatmul.bf16.gmra.mxu0 %v2543
      %v2588 = vpop.f32.mrf.mxu0
      %v2589 = vadd.f32 0.0, %v2588
      %v2590 = vpop.f32.mrf.mxu0
      %2591 = vdwg.mxu0
      %2592 = vmatpush.bf16.msra.mxu0 0
      %2593 = vmatpush.bf16.msra.mxu0 0
      %2594 = vmatpush.bf16.msra.mxu0 0
      %2595 = vmatpush.bf16.msra.mxu0 0
      %2596 = vmatpush.bf16.msra.mxu0 0
      %2597 = vmatpush.bf16.msra.mxu0 0
      %2598 = vmatpush.bf16.msra.mxu0 0
      %2599 = vmatpush.bf16.msra.mxu0 %v2552
      %2600 = vmatmul.bf16.gmra.mxu0 %v2543
      %v2601 = vpop.f32.mrf.mxu0
      %v2602 = vadd.f32 0.0, %v2601
      %v2603 = vpop.f32.mrf.mxu0
      %2604 = vdwg.mxu0
      %2605 = vmatpush.bf16.msra.mxu0 0
      %2606 = vmatpush.bf16.msra.mxu0 0
      %2607 = vmatpush.bf16.msra.mxu0 0
      %2608 = vmatpush.bf16.msra.mxu0 0
      %2609 = vmatpush.bf16.msra.mxu0 0
      %2610 = vmatpush.bf16.msra.mxu0 0
      %2611 = vmatpush.bf16.msra.mxu0 0
      %2612 = vmatpush.bf16.msra.mxu0 %v2555
      %2613 = vmatmul.bf16.gmra.mxu0 %v2543
      %v2614 = vpop.f32.mrf.mxu0
      %v2615 = vadd.f32 0.0, %v2614
      %v2616 = vpop.f32.mrf.mxu0
      %2617 = vdwg.mxu0
      %2618 = vmatpush.bf16.msra.mxu0 0
      %2619 = vmatpush.bf16.msra.mxu0 0
      %2620 = vmatpush.bf16.msra.mxu0 0
      %2621 = vmatpush.bf16.msra.mxu0 0
      %2622 = vmatpush.bf16.msra.mxu0 0
      %2623 = vmatpush.bf16.msra.mxu0 0
      %2624 = vmatpush.bf16.msra.mxu0 0
      %2625 = vmatpush.bf16.msra.mxu0 %v2558
      %2626 = vmatmul.bf16.gmra.mxu0 %v2543
      %v2627 = vpop.f32.mrf.mxu0
      %v2628 = vadd.f32 0.0, %v2627
      %v2629 = vpop.f32.mrf.mxu0
      %2630 = vdwg.mxu0
      %2631 = vmatpush.bf16.msra.mxu0 0
      %2632 = vmatpush.bf16.msra.mxu0 0
      %2633 = vmatpush.bf16.msra.mxu0 0
      %2634 = vmatpush.bf16.msra.mxu0 0
      %2635 = vmatpush.bf16.msra.mxu0 0
      %2636 = vmatpush.bf16.msra.mxu0 0
      %2637 = vmatpush.bf16.msra.mxu0 0
      %2638 = vmatpush.bf16.msra.mxu0 %v2561
      %2639 = vmatmul.bf16.gmra.mxu0 %v2543
      %v2640 = vpop.f32.mrf.mxu0
      %v2641 = vadd.f32 0.0, %v2640
      %v2642 = vpop.f32.mrf.mxu0
      %2643 = vdwg.mxu0
      %2644 = vmatpush.bf16.msra.mxu0 0
      %2645 = vmatpush.bf16.msra.mxu0 0
      %2646 = vmatpush.bf16.msra.mxu0 0
      %2647 = vmatpush.bf16.msra.mxu0 0
      %2648 = vmatpush.bf16.msra.mxu0 0
      %2649 = vmatpush.bf16.msra.mxu0 0
      %2650 = vmatpush.bf16.msra.mxu0 0
      %2651 = vmatpush.bf16.msra.mxu0 %v2564
      %2652 = vmatmul.bf16.gmra.mxu0 %v2543
      %v2653 = vpop.f32.mrf.mxu0
      %v2654 = vadd.f32 0.0, %v2653
      %v2655 = vpop.f32.mrf.mxu0
      %2656 = vdwg.mxu0
      %v2657 = vadd.f32 %v2469, %v2576
      %v2658 = vadd.f32 %v2470, %v2589
      %v2659 = vadd.f32 %v2471, %v2602
      %v2660 = vadd.f32 %v2472, %v2615
      %v2661 = vadd.f32 %v2473, %v2628
      %v2662 = vadd.f32 %v2474, %v2641
      %v2663 = vadd.f32 %v2475, %v2654
      %v2664 = vld [vmem:[%s246] sm:$0xff]
      %v2665 = vld [vmem:[%s246 + $0x8] sm:$0xff]
      %v2666 = vld [vmem:[%s246 + $0x10] sm:$0xff]
      %v2667 = vld [vmem:[%s246 + $0x18] sm:$0xf]
      %2672 = vst [vmem:[#allocation1] ss:$2 sm:$0xff] %v2664
      %s2673 = scalar_lea.vmem [#allocation1], 16
      %2674 = vst [vmem:[%s2673] ss:$2 sm:$0xff] %v2665
      %s2675 = scalar_lea.vmem [#allocation1], 32
      %2676 = vst [vmem:[%s2675] ss:$2 sm:$0xff] %v2666
      %s2677 = scalar_lea.vmem [#allocation1], 48
      %2678 = vst [vmem:[%s2677] ss:$2 sm:$0xff] %v2667
      %v2679 = vld.sshfl [vmem:[#allocation1] sm:$0xff pattern:$0x75316420]
      %v2680 = vld.sshfl [vmem:[#allocation1 + $0x8] sm:$0xff pattern:$0x75316420]
      %v2681 = vld.sshfl [vmem:[#allocation1 + $0x10] sm:$0xff pattern:$0x75316420]
      %v2682 = vld.sshfl [vmem:[#allocation1 + $0x18] sm:$0xff pattern:$0x75316420]
      %v2683 = vld.sshfl [vmem:[#allocation1 + $0x20] sm:$0xff pattern:$0x75316420]
      %v2684 = vld.sshfl [vmem:[#allocation1 + $0x28] sm:$0xff pattern:$0x75316420]
      %v2685 = vld.sshfl [vmem:[#allocation1 + $0x30] sm:$0xff pattern:$0x75316420]
      %v2693 = vpack.c.bf16 %v2679, %v2679
      %v2694 = vpack.c.bf16 %v2680, %v2680
      %v2695 = vpack.c.bf16 %v2681, %v2681
      %v2696 = vpack.c.bf16 %v2682, %v2682
      %v2697 = vpack.c.bf16 %v2683, %v2683
      %v2698 = vpack.c.bf16 %v2684, %v2684
      %v2699 = vpack.c.bf16 %v2685, %v2685
      %s2700 = scalar_lea.vmem %s1, 26
      %v2701 = vld [vmem:[%s2700] sm:$0x3]
      %2709 = vrot.lane.b32.xlu0 %v2693, 17
      %v2710 = vpop.permute.xlu0 %2709
      %2711 = vrot.lane.b32.xlu0 %v2694, 17
      %v2712 = vpop.permute.xlu0 %2711
      %2713 = vrot.lane.b32.xlu0 %v2695, 17
      %v2714 = vpop.permute.xlu0 %2713
      %2715 = vrot.lane.b32.xlu0 %v2696, 17
      %v2716 = vpop.permute.xlu0 %2715
      %2717 = vrot.lane.b32.xlu0 %v2697, 17
      %v2718 = vpop.permute.xlu0 %2717
      %2719 = vrot.lane.b32.xlu0 %v2698, 17
      %v2720 = vpop.permute.xlu0 %2719
      %2721 = vrot.lane.b32.xlu0 %v2699, 17
      %v2722 = vpop.permute.xlu0 %2721
      %vm2723 = vcmask 138240
      %v2724 = vsel %vm2723, %v2710, %v2712
      %v2725 = vsel %vm2723, %v2712, %v2714
      %v2726 = vsel %vm2723, %v2714, %v2716
      %v2727 = vsel %vm2723, %v2716, %v2718
      %v2728 = vsel %vm2723, %v2718, %v2720
      %v2729 = vsel %vm2723, %v2720, %v2722
      %v2731 = vsel %vm365, %v2701, 0
      %v2734 = vsel %vm254, %v2724, 0
      %v2737 = vsel %vm254, %v2725, 0
      %v2740 = vsel %vm254, %v2726, 0
      %v2743 = vsel %vm254, %v2727, 0
      %v2746 = vsel %vm254, %v2728, 0
      %v2749 = vsel %vm254, %v2729, 0
      %v2752 = vsel %vm254, %v2722, 0
      %2754 = vmatpush.bf16.msra.mxu0 0
      %2755 = vmatpush.bf16.msra.mxu0 0
      %2756 = vmatpush.bf16.msra.mxu0 0
      %2757 = vmatpush.bf16.msra.mxu0 0
      %2758 = vmatpush.bf16.msra.mxu0 0
      %2759 = vmatpush.bf16.msra.mxu0 0
      %2760 = vmatpush.bf16.msra.mxu0 0
      %2761 = vmatpush.bf16.msra.mxu0 %v2734
      %2762 = vmatmul.bf16.gmra.mxu0 %v2731
      %v2763 = vpop.f32.mrf.mxu0
      %v2764 = vadd.f32 0.0, %v2763
      %v2765 = vpop.f32.mrf.mxu0
      %2766 = vdwg.mxu0
      %2767 = vmatpush.bf16.msra.mxu0 0
      %2768 = vmatpush.bf16.msra.mxu0 0
      %2769 = vmatpush.bf16.msra.mxu0 0
      %2770 = vmatpush.bf16.msra.mxu0 0
      %2771 = vmatpush.bf16.msra.mxu0 0
      %2772 = vmatpush.bf16.msra.mxu0 0
      %2773 = vmatpush.bf16.msra.mxu0 0
      %2774 = vmatpush.bf16.msra.mxu0 %v2737
      %2775 = vmatmul.bf16.gmra.mxu0 %v2731
      %v2776 = vpop.f32.mrf.mxu0
      %v2777 = vadd.f32 0.0, %v2776
      %v2778 = vpop.f32.mrf.mxu0
      %2779 = vdwg.mxu0
      %2780 = vmatpush.bf16.msra.mxu0 0
      %2781 = vmatpush.bf16.msra.mxu0 0
      %2782 = vmatpush.bf16.msra.mxu0 0
      %2783 = vmatpush.bf16.msra.mxu0 0
      %2784 = vmatpush.bf16.msra.mxu0 0
      %2785 = vmatpush.bf16.msra.mxu0 0
      %2786 = vmatpush.bf16.msra.mxu0 0
      %2787 = vmatpush.bf16.msra.mxu0 %v2740
      %2788 = vmatmul.bf16.gmra.mxu0 %v2731
      %v2789 = vpop.f32.mrf.mxu0
      %v2790 = vadd.f32 0.0, %v2789
      %v2791 = vpop.f32.mrf.mxu0
      %2792 = vdwg.mxu0
      %2793 = vmatpush.bf16.msra.mxu0 0
      %2794 = vmatpush.bf16.msra.mxu0 0
      %2795 = vmatpush.bf16.msra.mxu0 0
      %2796 = vmatpush.bf16.msra.mxu0 0
      %2797 = vmatpush.bf16.msra.mxu0 0
      %2798 = vmatpush.bf16.msra.mxu0 0
      %2799 = vmatpush.bf16.msra.mxu0 0
      %2800 = vmatpush.bf16.msra.mxu0 %v2743
      %2801 = vmatmul.bf16.gmra.mxu0 %v2731
      %v2802 = vpop.f32.mrf.mxu0
      %v2803 = vadd.f32 0.0, %v2802
      %v2804 = vpop.f32.mrf.mxu0
      %2805 = vdwg.mxu0
      %2806 = vmatpush.bf16.msra.mxu0 0
      %2807 = vmatpush.bf16.msra.mxu0 0
      %2808 = vmatpush.bf16.msra.mxu0 0
      %2809 = vmatpush.bf16.msra.mxu0 0
      %2810 = vmatpush.bf16.msra.mxu0 0
      %2811 = vmatpush.bf16.msra.mxu0 0
      %2812 = vmatpush.bf16.msra.mxu0 0
      %2813 = vmatpush.bf16.msra.mxu0 %v2746
      %2814 = vmatmul.bf16.gmra.mxu0 %v2731
      %v2815 = vpop.f32.mrf.mxu0
      %v2816 = vadd.f32 0.0, %v2815
      %v2817 = vpop.f32.mrf.mxu0
      %2818 = vdwg.mxu0
      %2819 = vmatpush.bf16.msra.mxu0 0
      %2820 = vmatpush.bf16.msra.mxu0 0
      %2821 = vmatpush.bf16.msra.mxu0 0
      %2822 = vmatpush.bf16.msra.mxu0 0
      %2823 = vmatpush.bf16.msra.mxu0 0
      %2824 = vmatpush.bf16.msra.mxu0 0
      %2825 = vmatpush.bf16.msra.mxu0 0
      %2826 = vmatpush.bf16.msra.mxu0 %v2749
      %2827 = vmatmul.bf16.gmra.mxu0 %v2731
      %v2828 = vpop.f32.mrf.mxu0
      %v2829 = vadd.f32 0.0, %v2828
      %v2830 = vpop.f32.mrf.mxu0
      %2831 = vdwg.mxu0
      %2832 = vmatpush.bf16.msra.mxu0 0
      %2833 = vmatpush.bf16.msra.mxu0 0
      %2834 = vmatpush.bf16.msra.mxu0 0
      %2835 = vmatpush.bf16.msra.mxu0 0
      %2836 = vmatpush.bf16.msra.mxu0 0
      %2837 = vmatpush.bf16.msra.mxu0 0
      %2838 = vmatpush.bf16.msra.mxu0 0
      %2839 = vmatpush.bf16.msra.mxu0 %v2752
      %2840 = vmatmul.bf16.gmra.mxu0 %v2731
      %v2841 = vpop.f32.mrf.mxu0
      %v2842 = vadd.f32 0.0, %v2841
      %v2843 = vpop.f32.mrf.mxu0
      %2844 = vdwg.mxu0
      %v2845 = vadd.f32 %v2657, %v2764
      %v2846 = vadd.f32 %v2658, %v2777
      %v2847 = vadd.f32 %v2659, %v2790
      %v2848 = vadd.f32 %v2660, %v2803
      %v2849 = vadd.f32 %v2661, %v2816
      %v2850 = vadd.f32 %v2662, %v2829
      %v2851 = vadd.f32 %v2663, %v2842
      %v2852 = vld [vmem:[%s246] sm:$0xff]
      %v2853 = vld [vmem:[%s246 + $0x8] sm:$0xff]
      %v2854 = vld [vmem:[%s246 + $0x10] sm:$0xff]
      %v2855 = vld [vmem:[%s246 + $0x18] sm:$0xf]
      %2860 = vst [vmem:[#allocation1] ss:$2 sm:$0xff] %v2852
      %s2861 = scalar_lea.vmem [#allocation1], 16
      %2862 = vst [vmem:[%s2861] ss:$2 sm:$0xff] %v2853
      %s2863 = scalar_lea.vmem [#allocation1], 32
      %2864 = vst [vmem:[%s2863] ss:$2 sm:$0xff] %v2854
      %s2865 = scalar_lea.vmem [#allocation1], 48
      %2866 = vst [vmem:[%s2865] ss:$2 sm:$0xff] %v2855
      %v2867 = vld.sshfl [vmem:[#allocation1] sm:$0xff pattern:$0x75316420]
      %v2868 = vld.sshfl [vmem:[#allocation1 + $0x8] sm:$0xff pattern:$0x75316420]
      %v2869 = vld.sshfl [vmem:[#allocation1 + $0x10] sm:$0xff pattern:$0x75316420]
      %v2870 = vld.sshfl [vmem:[#allocation1 + $0x18] sm:$0xff pattern:$0x75316420]
      %v2871 = vld.sshfl [vmem:[#allocation1 + $0x20] sm:$0xff pattern:$0x75316420]
      %v2872 = vld.sshfl [vmem:[#allocation1 + $0x28] sm:$0xff pattern:$0x75316420]
      %v2873 = vld.sshfl [vmem:[#allocation1 + $0x30] sm:$0xff pattern:$0x75316420]
      %v2881 = vpack.c.bf16 %v2867, %v2867
      %v2882 = vpack.c.bf16 %v2868, %v2868
      %v2883 = vpack.c.bf16 %v2869, %v2869
      %v2884 = vpack.c.bf16 %v2870, %v2870
      %v2885 = vpack.c.bf16 %v2871, %v2871
      %v2886 = vpack.c.bf16 %v2872, %v2872
      %v2887 = vpack.c.bf16 %v2873, %v2873
      %s2888 = scalar_lea.vmem %s1, 28
      %v2889 = vld [vmem:[%s2888] sm:$0x3]
      %2897 = vrot.lane.b32.xlu0 %v2881, 16
      %v2898 = vpop.permute.xlu0 %2897
      %2899 = vrot.lane.b32.xlu0 %v2882, 16
      %v2900 = vpop.permute.xlu0 %2899
      %2901 = vrot.lane.b32.xlu0 %v2883, 16
      %v2902 = vpop.permute.xlu0 %2901
      %2903 = vrot.lane.b32.xlu0 %v2884, 16
      %v2904 = vpop.permute.xlu0 %2903
      %2905 = vrot.lane.b32.xlu0 %v2885, 16
      %v2906 = vpop.permute.xlu0 %2905
      %2907 = vrot.lane.b32.xlu0 %v2886, 16
      %v2908 = vpop.permute.xlu0 %2907
      %2909 = vrot.lane.b32.xlu0 %v2887, 16
      %v2910 = vpop.permute.xlu0 %2909
      %vm2911 = vcmask 130048
      %v2912 = vsel %vm2911, %v2898, %v2900
      %v2913 = vsel %vm2911, %v2900, %v2902
      %v2914 = vsel %vm2911, %v2902, %v2904
      %v2915 = vsel %vm2911, %v2904, %v2906
      %v2916 = vsel %vm2911, %v2906, %v2908
      %v2917 = vsel %vm2911, %v2908, %v2910
      %v2919 = vsel %vm365, %v2889, 0
      %v2922 = vsel %vm254, %v2912, 0
      %v2925 = vsel %vm254, %v2913, 0
      %v2928 = vsel %vm254, %v2914, 0
      %v2931 = vsel %vm254, %v2915, 0
      %v2934 = vsel %vm254, %v2916, 0
      %v2937 = vsel %vm254, %v2917, 0
      %v2940 = vsel %vm254, %v2910, 0
      %2942 = vmatpush.bf16.msra.mxu0 0
      %2943 = vmatpush.bf16.msra.mxu0 0
      %2944 = vmatpush.bf16.msra.mxu0 0
      %2945 = vmatpush.bf16.msra.mxu0 0
      %2946 = vmatpush.bf16.msra.mxu0 0
      %2947 = vmatpush.bf16.msra.mxu0 0
      %2948 = vmatpush.bf16.msra.mxu0 0
      %2949 = vmatpush.bf16.msra.mxu0 %v2922
      %2950 = vmatmul.bf16.gmra.mxu0 %v2919
      %v2951 = vpop.f32.mrf.mxu0
      %v2952 = vadd.f32 0.0, %v2951
      %v2953 = vpop.f32.mrf.mxu0
      %2954 = vdwg.mxu0
      %2955 = vmatpush.bf16.msra.mxu0 0
      %2956 = vmatpush.bf16.msra.mxu0 0
      %2957 = vmatpush.bf16.msra.mxu0 0
      %2958 = vmatpush.bf16.msra.mxu0 0
      %2959 = vmatpush.bf16.msra.mxu0 0
      %2960 = vmatpush.bf16.msra.mxu0 0
      %2961 = vmatpush.bf16.msra.mxu0 0
      %2962 = vmatpush.bf16.msra.mxu0 %v2925
      %2963 = vmatmul.bf16.gmra.mxu0 %v2919
      %v2964 = vpop.f32.mrf.mxu0
      %v2965 = vadd.f32 0.0, %v2964
      %v2966 = vpop.f32.mrf.mxu0
      %2967 = vdwg.mxu0
      %2968 = vmatpush.bf16.msra.mxu0 0
      %2969 = vmatpush.bf16.msra.mxu0 0
      %2970 = vmatpush.bf16.msra.mxu0 0
      %2971 = vmatpush.bf16.msra.mxu0 0
      %2972 = vmatpush.bf16.msra.mxu0 0
      %2973 = vmatpush.bf16.msra.mxu0 0
      %2974 = vmatpush.bf16.msra.mxu0 0
      %2975 = vmatpush.bf16.msra.mxu0 %v2928
      %2976 = vmatmul.bf16.gmra.mxu0 %v2919
      %v2977 = vpop.f32.mrf.mxu0
      %v2978 = vadd.f32 0.0, %v2977
      %v2979 = vpop.f32.mrf.mxu0
      %2980 = vdwg.mxu0
      %2981 = vmatpush.bf16.msra.mxu0 0
      %2982 = vmatpush.bf16.msra.mxu0 0
      %2983 = vmatpush.bf16.msra.mxu0 0
      %2984 = vmatpush.bf16.msra.mxu0 0
      %2985 = vmatpush.bf16.msra.mxu0 0
      %2986 = vmatpush.bf16.msra.mxu0 0
      %2987 = vmatpush.bf16.msra.mxu0 0
      %2988 = vmatpush.bf16.msra.mxu0 %v2931
      %2989 = vmatmul.bf16.gmra.mxu0 %v2919
      %v2990 = vpop.f32.mrf.mxu0
      %v2991 = vadd.f32 0.0, %v2990
      %v2992 = vpop.f32.mrf.mxu0
      %2993 = vdwg.mxu0
      %2994 = vmatpush.bf16.msra.mxu0 0
      %2995 = vmatpush.bf16.msra.mxu0 0
      %2996 = vmatpush.bf16.msra.mxu0 0
      %2997 = vmatpush.bf16.msra.mxu0 0
      %2998 = vmatpush.bf16.msra.mxu0 0
      %2999 = vmatpush.bf16.msra.mxu0 0
      %3000 = vmatpush.bf16.msra.mxu0 0
      %3001 = vmatpush.bf16.msra.mxu0 %v2934
      %3002 = vmatmul.bf16.gmra.mxu0 %v2919
      %v3003 = vpop.f32.mrf.mxu0
      %v3004 = vadd.f32 0.0, %v3003
      %v3005 = vpop.f32.mrf.mxu0
      %3006 = vdwg.mxu0
      %3007 = vmatpush.bf16.msra.mxu0 0
      %3008 = vmatpush.bf16.msra.mxu0 0
      %3009 = vmatpush.bf16.msra.mxu0 0
      %3010 = vmatpush.bf16.msra.mxu0 0
      %3011 = vmatpush.bf16.msra.mxu0 0
      %3012 = vmatpush.bf16.msra.mxu0 0
      %3013 = vmatpush.bf16.msra.mxu0 0
      %3014 = vmatpush.bf16.msra.mxu0 %v2937
      %3015 = vmatmul.bf16.gmra.mxu0 %v2919
      %v3016 = vpop.f32.mrf.mxu0
      %v3017 = vadd.f32 0.0, %v3016
      %v3018 = vpop.f32.mrf.mxu0
      %3019 = vdwg.mxu0
      %3020 = vmatpush.bf16.msra.mxu0 0
      %3021 = vmatpush.bf16.msra.mxu0 0
      %3022 = vmatpush.bf16.msra.mxu0 0
      %3023 = vmatpush.bf16.msra.mxu0 0
      %3024 = vmatpush.bf16.msra.mxu0 0
      %3025 = vmatpush.bf16.msra.mxu0 0
      %3026 = vmatpush.bf16.msra.mxu0 0
      %3027 = vmatpush.bf16.msra.mxu0 %v2940
      %3028 = vmatmul.bf16.gmra.mxu0 %v2919
      %v3029 = vpop.f32.mrf.mxu0
      %v3030 = vadd.f32 0.0, %v3029
      %v3031 = vpop.f32.mrf.mxu0
      %3032 = vdwg.mxu0
      %v3033 = vadd.f32 %v2845, %v2952
      %v3034 = vadd.f32 %v2846, %v2965
      %v3035 = vadd.f32 %v2847, %v2978
      %v3036 = vadd.f32 %v2848, %v2991
      %v3037 = vadd.f32 %v2849, %v3004
      %v3038 = vadd.f32 %v2850, %v3017
      %v3039 = vadd.f32 %v2851, %v3030
      %v3040 = vld [vmem:[%s246] sm:$0xff]
      %v3041 = vld [vmem:[%s246 + $0x8] sm:$0xff]
      %v3042 = vld [vmem:[%s246 + $0x10] sm:$0xff]
      %v3043 = vld [vmem:[%s246 + $0x18] sm:$0xff]
      %3048 = vst [vmem:[#allocation1] ss:$2 sm:$0xff] %v3040
      %s3049 = scalar_lea.vmem [#allocation1], 16
      %3050 = vst [vmem:[%s3049] ss:$2 sm:$0xff] %v3041
      %s3051 = scalar_lea.vmem [#allocation1], 32
      %3052 = vst [vmem:[%s3051] ss:$2 sm:$0xff] %v3042
      %s3053 = scalar_lea.vmem [#allocation1], 48
      %3054 = vst [vmem:[%s3053] ss:$2 sm:$0xff] %v3043
      %v3055 = vld.sshfl [vmem:[#allocation1] sm:$0xff pattern:$0x75316420]
      %v3056 = vld.sshfl [vmem:[#allocation1 + $0x8] sm:$0xff pattern:$0x75316420]
      %v3057 = vld.sshfl [vmem:[#allocation1 + $0x10] sm:$0xff pattern:$0x75316420]
      %v3058 = vld.sshfl [vmem:[#allocation1 + $0x18] sm:$0xff pattern:$0x75316420]
      %v3059 = vld.sshfl [vmem:[#allocation1 + $0x20] sm:$0xff pattern:$0x75316420]
      %v3060 = vld.sshfl [vmem:[#allocation1 + $0x28] sm:$0xff pattern:$0x75316420]
      %v3061 = vld.sshfl [vmem:[#allocation1 + $0x30] sm:$0xff pattern:$0x75316420]
      %v3062 = vld.sshfl [vmem:[#allocation1 + $0x38] sm:$0xff pattern:$0x75316420]
      %v3071 = vpack.c.bf16 %v3055, %v3055
      %v3072 = vpack.c.bf16 %v3056, %v3056
      %v3073 = vpack.c.bf16 %v3057, %v3057
      %v3074 = vpack.c.bf16 %v3058, %v3058
      %v3075 = vpack.c.bf16 %v3059, %v3059
      %v3076 = vpack.c.bf16 %v3060, %v3060
      %v3077 = vpack.c.bf16 %v3061, %v3061
      %v3078 = vpack.c.bf16 %v3062, %v3062
      %s3079 = scalar_lea.vmem %s1, 30
      %v3080 = vld [vmem:[%s3079] sm:$0x3]
      %3089 = vrot.lane.b32.xlu0 %v3071, 8
      %v3090 = vpop.permute.xlu0 %3089
      %3091 = vrot.lane.b32.xlu0 %v3072, 8
      %v3092 = vpop.permute.xlu0 %3091
      %3093 = vrot.lane.b32.xlu0 %v3073, 8
      %v3094 = vpop.permute.xlu0 %3093
      %3095 = vrot.lane.b32.xlu0 %v3074, 8
      %v3096 = vpop.permute.xlu0 %3095
      %3097 = vrot.lane.b32.xlu0 %v3075, 8
      %v3098 = vpop.permute.xlu0 %3097
      %3099 = vrot.lane.b32.xlu0 %v3076, 8
      %v3100 = vpop.permute.xlu0 %3099
      %3101 = vrot.lane.b32.xlu0 %v3077, 8
      %v3102 = vpop.permute.xlu0 %3101
      %3103 = vrot.lane.b32.xlu0 %v3078, 8
      %v3104 = vpop.permute.xlu0 %3103
      %vm3105 = vcmask 64512
      %v3106 = vsel %vm3105, %v3090, %v3092
      %v3107 = vsel %vm3105, %v3092, %v3094
      %v3108 = vsel %vm3105, %v3094, %v3096
      %v3109 = vsel %vm3105, %v3096, %v3098
      %v3110 = vsel %vm3105, %v3098, %v3100
      %v3111 = vsel %vm3105, %v3100, %v3102
      %v3112 = vsel %vm3105, %v3102, %v3104
      %v3114 = vsel %vm365, %v3080, 0
      %v3117 = vsel %vm254, %v3106, 0
      %v3120 = vsel %vm254, %v3107, 0
      %v3123 = vsel %vm254, %v3108, 0
      %v3126 = vsel %vm254, %v3109, 0
      %v3129 = vsel %vm254, %v3110, 0
      %v3132 = vsel %vm254, %v3111, 0
      %v3135 = vsel %vm254, %v3112, 0
      %3137 = vmatpush.bf16.msra.mxu0 0
      %3138 = vmatpush.bf16.msra.mxu0 0
      %3139 = vmatpush.bf16.msra.mxu0 0
      %3140 = vmatpush.bf16.msra.mxu0 0
      %3141 = vmatpush.bf16.msra.mxu0 0
      %3142 = vmatpush.bf16.msra.mxu0 0
      %3143 = vmatpush.bf16.msra.mxu0 0
      %3144 = vmatpush.bf16.msra.mxu0 %v3117
      %3145 = vmatmul.bf16.gmra.mxu0 %v3114
      %v3146 = vpop.f32.mrf.mxu0
      %v3147 = vadd.f32 0.0, %v3146
      %v3148 = vpop.f32.mrf.mxu0
      %3149 = vdwg.mxu0
      %3150 = vmatpush.bf16.msra.mxu0 0
      %3151 = vmatpush.bf16.msra.mxu0 0
      %3152 = vmatpush.bf16.msra.mxu0 0
      %3153 = vmatpush.bf16.msra.mxu0 0
      %3154 = vmatpush.bf16.msra.mxu0 0
      %3155 = vmatpush.bf16.msra.mxu0 0
      %3156 = vmatpush.bf16.msra.mxu0 0
      %3157 = vmatpush.bf16.msra.mxu0 %v3120
      %3158 = vmatmul.bf16.gmra.mxu0 %v3114
      %v3159 = vpop.f32.mrf.mxu0
      %v3160 = vadd.f32 0.0, %v3159
      %v3161 = vpop.f32.mrf.mxu0
      %3162 = vdwg.mxu0
      %3163 = vmatpush.bf16.msra.mxu0 0
      %3164 = vmatpush.bf16.msra.mxu0 0
      %3165 = vmatpush.bf16.msra.mxu0 0
      %3166 = vmatpush.bf16.msra.mxu0 0
      %3167 = vmatpush.bf16.msra.mxu0 0
      %3168 = vmatpush.bf16.msra.mxu0 0
      %3169 = vmatpush.bf16.msra.mxu0 0
      %3170 = vmatpush.bf16.msra.mxu0 %v3123
      %3171 = vmatmul.bf16.gmra.mxu0 %v3114
      %v3172 = vpop.f32.mrf.mxu0
      %v3173 = vadd.f32 0.0, %v3172
      %v3174 = vpop.f32.mrf.mxu0
      %3175 = vdwg.mxu0
      %3176 = vmatpush.bf16.msra.mxu0 0
      %3177 = vmatpush.bf16.msra.mxu0 0
      %3178 = vmatpush.bf16.msra.mxu0 0
      %3179 = vmatpush.bf16.msra.mxu0 0
      %3180 = vmatpush.bf16.msra.mxu0 0
      %3181 = vmatpush.bf16.msra.mxu0 0
      %3182 = vmatpush.bf16.msra.mxu0 0
      %3183 = vmatpush.bf16.msra.mxu0 %v3126
      %3184 = vmatmul.bf16.gmra.mxu0 %v3114
      %v3185 = vpop.f32.mrf.mxu0
      %v3186 = vadd.f32 0.0, %v3185
      %v3187 = vpop.f32.mrf.mxu0
      %3188 = vdwg.mxu0
      %3189 = vmatpush.bf16.msra.mxu0 0
      %3190 = vmatpush.bf16.msra.mxu0 0
      %3191 = vmatpush.bf16.msra.mxu0 0
      %3192 = vmatpush.bf16.msra.mxu0 0
      %3193 = vmatpush.bf16.msra.mxu0 0
      %3194 = vmatpush.bf16.msra.mxu0 0
      %3195 = vmatpush.bf16.msra.mxu0 0
      %3196 = vmatpush.bf16.msra.mxu0 %v3129
      %3197 = vmatmul.bf16.gmra.mxu0 %v3114
      %v3198 = vpop.f32.mrf.mxu0
      %v3199 = vadd.f32 0.0, %v3198
      %v3200 = vpop.f32.mrf.mxu0
      %3201 = vdwg.mxu0
      %3202 = vmatpush.bf16.msra.mxu0 0
      %3203 = vmatpush.bf16.msra.mxu0 0
      %3204 = vmatpush.bf16.msra.mxu0 0
      %3205 = vmatpush.bf16.msra.mxu0 0
      %3206 = vmatpush.bf16.msra.mxu0 0
      %3207 = vmatpush.bf16.msra.mxu0 0
      %3208 = vmatpush.bf16.msra.mxu0 0
      %3209 = vmatpush.bf16.msra.mxu0 %v3132
      %3210 = vmatmul.bf16.gmra.mxu0 %v3114
      %v3211 = vpop.f32.mrf.mxu0
      %v3212 = vadd.f32 0.0, %v3211
      %v3213 = vpop.f32.mrf.mxu0
      %3214 = vdwg.mxu0
      %3215 = vmatpush.bf16.msra.mxu0 0
      %3216 = vmatpush.bf16.msra.mxu0 0
      %3217 = vmatpush.bf16.msra.mxu0 0
      %3218 = vmatpush.bf16.msra.mxu0 0
      %3219 = vmatpush.bf16.msra.mxu0 0
      %3220 = vmatpush.bf16.msra.mxu0 0
      %3221 = vmatpush.bf16.msra.mxu0 0
      %3222 = vmatpush.bf16.msra.mxu0 %v3135
      %3223 = vmatmul.bf16.gmra.mxu0 %v3114
      %v3224 = vpop.f32.mrf.mxu0
      %v3225 = vadd.f32 0.0, %v3224
      %v3226 = vpop.f32.mrf.mxu0
      %3227 = vdwg.mxu0
      %v3228 = vadd.f32 %v3033, %v3147
      %v3229 = vadd.f32 %v3034, %v3160
      %v3230 = vadd.f32 %v3035, %v3173
      %v3231 = vadd.f32 %v3036, %v3186
      %v3232 = vadd.f32 %v3037, %v3199
      %v3233 = vadd.f32 %v3038, %v3212
      %v3234 = vadd.f32 %v3039, %v3225
      %v3235 = vld [vmem:[%s246] sm:$0xff]
      %v3236 = vld [vmem:[%s246 + $0x8] sm:$0xff]
      %v3237 = vld [vmem:[%s246 + $0x10] sm:$0xff]
      %v3238 = vld [vmem:[%s246 + $0x18] sm:$0xff]
      %3243 = vst [vmem:[#allocation1] ss:$2 sm:$0xff] %v3235
      %s3244 = scalar_lea.vmem [#allocation1], 16
      %3245 = vst [vmem:[%s3244] ss:$2 sm:$0xff] %v3236
      %s3246 = scalar_lea.vmem [#allocation1], 32
      %3247 = vst [vmem:[%s3246] ss:$2 sm:$0xff] %v3237
      %s3248 = scalar_lea.vmem [#allocation1], 48
      %3249 = vst [vmem:[%s3248] ss:$2 sm:$0xff] %v3238
      %v3250 = vld.sshfl [vmem:[#allocation1] sm:$0xff pattern:$0x75316420]
      %v3251 = vld.sshfl [vmem:[#allocation1 + $0x8] sm:$0xff pattern:$0x75316420]
      %v3252 = vld.sshfl [vmem:[#allocation1 + $0x10] sm:$0xff pattern:$0x75316420]
      %v3253 = vld.sshfl [vmem:[#allocation1 + $0x18] sm:$0xff pattern:$0x75316420]
      %v3254 = vld.sshfl [vmem:[#allocation1 + $0x20] sm:$0xff pattern:$0x75316420]
      %v3255 = vld.sshfl [vmem:[#allocation1 + $0x28] sm:$0xff pattern:$0x75316420]
      %v3256 = vld.sshfl [vmem:[#allocation1 + $0x30] sm:$0xff pattern:$0x75316420]
      %v3257 = vld.sshfl [vmem:[#allocation1 + $0x38] sm:$0xff pattern:$0x75316420]
      %v3266 = vpack.c.bf16 %v3250, %v3250
      %v3267 = vpack.c.bf16 %v3251, %v3251
      %v3268 = vpack.c.bf16 %v3252, %v3252
      %v3269 = vpack.c.bf16 %v3253, %v3253
      %v3270 = vpack.c.bf16 %v3254, %v3254
      %v3271 = vpack.c.bf16 %v3255, %v3255
      %v3272 = vpack.c.bf16 %v3256, %v3256
      %v3273 = vpack.c.bf16 %v3257, %v3257
      %s3274 = scalar_lea.vmem %s1, 32
      %v3275 = vld [vmem:[%s3274] sm:$0x3]
      %3284 = vrot.lane.b32.xlu0 %v3266, 7
      %v3285 = vpop.permute.xlu0 %3284
      %3286 = vrot.lane.b32.xlu0 %v3267, 7
      %v3287 = vpop.permute.xlu0 %3286
      %3288 = vrot.lane.b32.xlu0 %v3268, 7
      %v3289 = vpop.permute.xlu0 %3288
      %3290 = vrot.lane.b32.xlu0 %v3269, 7
      %v3291 = vpop.permute.xlu0 %3290
      %3292 = vrot.lane.b32.xlu0 %v3270, 7
      %v3293 = vpop.permute.xlu0 %3292
      %3294 = vrot.lane.b32.xlu0 %v3271, 7
      %v3295 = vpop.permute.xlu0 %3294
      %3296 = vrot.lane.b32.xlu0 %v3272, 7
      %v3297 = vpop.permute.xlu0 %3296
      %3298 = vrot.lane.b32.xlu0 %v3273, 7
      %v3299 = vpop.permute.xlu0 %3298
      %vm3300 = vcmask 56320
      %v3301 = vsel %vm3300, %v3285, %v3287
      %v3302 = vsel %vm3300, %v3287, %v3289
      %v3303 = vsel %vm3300, %v3289, %v3291
      %v3304 = vsel %vm3300, %v3291, %v3293
      %v3305 = vsel %vm3300, %v3293, %v3295
      %v3306 = vsel %vm3300, %v3295, %v3297
      %v3307 = vsel %vm3300, %v3297, %v3299
      %v3309 = vsel %vm365, %v3275, 0
      %v3312 = vsel %vm254, %v3301, 0
      %v3315 = vsel %vm254, %v3302, 0
      %v3318 = vsel %vm254, %v3303, 0
      %v3321 = vsel %vm254, %v3304, 0
      %v3324 = vsel %vm254, %v3305, 0
      %v3327 = vsel %vm254, %v3306, 0
      %v3330 = vsel %vm254, %v3307, 0
      %3332 = vmatpush.bf16.msra.mxu0 0
      %3333 = vmatpush.bf16.msra.mxu0 0
      %3334 = vmatpush.bf16.msra.mxu0 0
      %3335 = vmatpush.bf16.msra.mxu0 0
      %3336 = vmatpush.bf16.msra.mxu0 0
      %3337 = vmatpush.bf16.msra.mxu0 0
      %3338 = vmatpush.bf16.msra.mxu0 0
      %3339 = vmatpush.bf16.msra.mxu0 %v3312
      %3340 = vmatmul.bf16.gmra.mxu0 %v3309
      %v3341 = vpop.f32.mrf.mxu0
      %v3342 = vadd.f32 0.0, %v3341
      %v3343 = vpop.f32.mrf.mxu0
      %3344 = vdwg.mxu0
      %3345 = vmatpush.bf16.msra.mxu0 0
      %3346 = vmatpush.bf16.msra.mxu0 0
      %3347 = vmatpush.bf16.msra.mxu0 0
      %3348 = vmatpush.bf16.msra.mxu0 0
      %3349 = vmatpush.bf16.msra.mxu0 0
      %3350 = vmatpush.bf16.msra.mxu0 0
      %3351 = vmatpush.bf16.msra.mxu0 0
      %3352 = vmatpush.bf16.msra.mxu0 %v3315
      %3353 = vmatmul.bf16.gmra.mxu0 %v3309
      %v3354 = vpop.f32.mrf.mxu0
      %v3355 = vadd.f32 0.0, %v3354
      %v3356 = vpop.f32.mrf.mxu0
      %3357 = vdwg.mxu0
      %3358 = vmatpush.bf16.msra.mxu0 0
      %3359 = vmatpush.bf16.msra.mxu0 0
      %3360 = vmatpush.bf16.msra.mxu0 0
      %3361 = vmatpush.bf16.msra.mxu0 0
      %3362 = vmatpush.bf16.msra.mxu0 0
      %3363 = vmatpush.bf16.msra.mxu0 0
      %3364 = vmatpush.bf16.msra.mxu0 0
      %3365 = vmatpush.bf16.msra.mxu0 %v3318
      %3366 = vmatmul.bf16.gmra.mxu0 %v3309
      %v3367 = vpop.f32.mrf.mxu0
      %v3368 = vadd.f32 0.0, %v3367
      %v3369 = vpop.f32.mrf.mxu0
      %3370 = vdwg.mxu0
      %3371 = vmatpush.bf16.msra.mxu0 0
      %3372 = vmatpush.bf16.msra.mxu0 0
      %3373 = vmatpush.bf16.msra.mxu0 0
      %3374 = vmatpush.bf16.msra.mxu0 0
      %3375 = vmatpush.bf16.msra.mxu0 0
      %3376 = vmatpush.bf16.msra.mxu0 0
      %3377 = vmatpush.bf16.msra.mxu0 0
      %3378 = vmatpush.bf16.msra.mxu0 %v3321
      %3379 = vmatmul.bf16.gmra.mxu0 %v3309
      %v3380 = vpop.f32.mrf.mxu0
      %v3381 = vadd.f32 0.0, %v3380
      %v3382 = vpop.f32.mrf.mxu0
      %3383 = vdwg.mxu0
      %3384 = vmatpush.bf16.msra.mxu0 0
      %3385 = vmatpush.bf16.msra.mxu0 0
      %3386 = vmatpush.bf16.msra.mxu0 0
      %3387 = vmatpush.bf16.msra.mxu0 0
      %3388 = vmatpush.bf16.msra.mxu0 0
      %3389 = vmatpush.bf16.msra.mxu0 0
      %3390 = vmatpush.bf16.msra.mxu0 0
      %3391 = vmatpush.bf16.msra.mxu0 %v3324
      %3392 = vmatmul.bf16.gmra.mxu0 %v3309
      %v3393 = vpop.f32.mrf.mxu0
      %v3394 = vadd.f32 0.0, %v3393
      %v3395 = vpop.f32.mrf.mxu0
      %3396 = vdwg.mxu0
      %3397 = vmatpush.bf16.msra.mxu0 0
      %3398 = vmatpush.bf16.msra.mxu0 0
      %3399 = vmatpush.bf16.msra.mxu0 0
      %3400 = vmatpush.bf16.msra.mxu0 0
      %3401 = vmatpush.bf16.msra.mxu0 0
      %3402 = vmatpush.bf16.msra.mxu0 0
      %3403 = vmatpush.bf16.msra.mxu0 0
      %3404 = vmatpush.bf16.msra.mxu0 %v3327
      %3405 = vmatmul.bf16.gmra.mxu0 %v3309
      %v3406 = vpop.f32.mrf.mxu0
      %v3407 = vadd.f32 0.0, %v3406
      %v3408 = vpop.f32.mrf.mxu0
      %3409 = vdwg.mxu0
      %3410 = vmatpush.bf16.msra.mxu0 0
      %3411 = vmatpush.bf16.msra.mxu0 0
      %3412 = vmatpush.bf16.msra.mxu0 0
      %3413 = vmatpush.bf16.msra.mxu0 0
      %3414 = vmatpush.bf16.msra.mxu0 0
      %3415 = vmatpush.bf16.msra.mxu0 0
      %3416 = vmatpush.bf16.msra.mxu0 0
      %3417 = vmatpush.bf16.msra.mxu0 %v3330
      %3418 = vmatmul.bf16.gmra.mxu0 %v3309
      %v3419 = vpop.f32.mrf.mxu0
      %v3420 = vadd.f32 0.0, %v3419
      %v3421 = vpop.f32.mrf.mxu0
      %3422 = vdwg.mxu0
      %v3423 = vadd.f32 %v3228, %v3342
      %v3424 = vadd.f32 %v3229, %v3355
      %v3425 = vadd.f32 %v3230, %v3368
      %v3426 = vadd.f32 %v3231, %v3381
      %v3427 = vadd.f32 %v3232, %v3394
      %v3428 = vadd.f32 %v3233, %v3407
      %v3429 = vadd.f32 %v3234, %v3420
      %v3430 = vld [vmem:[%s246] sm:$0xff]
      %v3431 = vld [vmem:[%s246 + $0x8] sm:$0xff]
      %v3432 = vld [vmem:[%s246 + $0x10] sm:$0xff]
      %v3433 = vld [vmem:[%s246 + $0x18] sm:$0xff]
      %3438 = vst [vmem:[#allocation1] ss:$2 sm:$0xff] %v3430
      %s3439 = scalar_lea.vmem [#allocation1], 16
      %3440 = vst [vmem:[%s3439] ss:$2 sm:$0xff] %v3431
      %s3441 = scalar_lea.vmem [#allocation1], 32
      %3442 = vst [vmem:[%s3441] ss:$2 sm:$0xff] %v3432
      %s3443 = scalar_lea.vmem [#allocation1], 48
      %3444 = vst [vmem:[%s3443] ss:$2 sm:$0xff] %v3433
      %v3445 = vld.sshfl [vmem:[#allocation1] sm:$0xff pattern:$0x75316420]
      %v3446 = vld.sshfl [vmem:[#allocation1 + $0x8] sm:$0xff pattern:$0x75316420]
      %v3447 = vld.sshfl [vmem:[#allocation1 + $0x10] sm:$0xff pattern:$0x75316420]
      %v3448 = vld.sshfl [vmem:[#allocation1 + $0x18] sm:$0xff pattern:$0x75316420]
      %v3449 = vld.sshfl [vmem:[#allocation1 + $0x20] sm:$0xff pattern:$0x75316420]
      %v3450 = vld.sshfl [vmem:[#allocation1 + $0x28] sm:$0xff pattern:$0x75316420]
      %v3451 = vld.sshfl [vmem:[#allocation1 + $0x30] sm:$0xff pattern:$0x75316420]
      %v3452 = vld.sshfl [vmem:[#allocation1 + $0x38] sm:$0xff pattern:$0x75316420]
      %v3461 = vpack.c.bf16 %v3445, %v3445
      %v3462 = vpack.c.bf16 %v3446, %v3446
      %v3463 = vpack.c.bf16 %v3447, %v3447
      %v3464 = vpack.c.bf16 %v3448, %v3448
      %v3465 = vpack.c.bf16 %v3449, %v3449
      %v3466 = vpack.c.bf16 %v3450, %v3450
      %v3467 = vpack.c.bf16 %v3451, %v3451
      %v3468 = vpack.c.bf16 %v3452, %v3452
      %s3469 = scalar_lea.vmem %s1, 34
      %v3470 = vld [vmem:[%s3469] sm:$0x3]
      %3479 = vrot.lane.b32.xlu0 %v3461, 6
      %v3480 = vpop.permute.xlu0 %3479
      %3481 = vrot.lane.b32.xlu0 %v3462, 6
      %v3482 = vpop.permute.xlu0 %3481
      %3483 = vrot.lane.b32.xlu0 %v3463, 6
      %v3484 = vpop.permute.xlu0 %3483
      %3485 = vrot.lane.b32.xlu0 %v3464, 6
      %v3486 = vpop.permute.xlu0 %3485
      %3487 = vrot.lane.b32.xlu0 %v3465, 6
      %v3488 = vpop.permute.xlu0 %3487
      %3489 = vrot.lane.b32.xlu0 %v3466, 6
      %v3490 = vpop.permute.xlu0 %3489
      %3491 = vrot.lane.b32.xlu0 %v3467, 6
      %v3492 = vpop.permute.xlu0 %3491
      %3493 = vrot.lane.b32.xlu0 %v3468, 6
      %v3494 = vpop.permute.xlu0 %3493
      %vm3495 = vcmask 48128
      %v3496 = vsel %vm3495, %v3480, %v3482
      %v3497 = vsel %vm3495, %v3482, %v3484
      %v3498 = vsel %vm3495, %v3484, %v3486
      %v3499 = vsel %vm3495, %v3486, %v3488
      %v3500 = vsel %vm3495, %v3488, %v3490
      %v3501 = vsel %vm3495, %v3490, %v3492
      %v3502 = vsel %vm3495, %v3492, %v3494
      %v3504 = vsel %vm365, %v3470, 0
      %v3507 = vsel %vm254, %v3496, 0
      %v3510 = vsel %vm254, %v3497, 0
      %v3513 = vsel %vm254, %v3498, 0
      %v3516 = vsel %vm254, %v3499, 0
      %v3519 = vsel %vm254, %v3500, 0
      %v3522 = vsel %vm254, %v3501, 0
      %v3525 = vsel %vm254, %v3502, 0
      %3527 = vmatpush.bf16.msra.mxu0 0
      %3528 = vmatpush.bf16.msra.mxu0 0
      %3529 = vmatpush.bf16.msra.mxu0 0
      %3530 = vmatpush.bf16.msra.mxu0 0
      %3531 = vmatpush.bf16.msra.mxu0 0
      %3532 = vmatpush.bf16.msra.mxu0 0
      %3533 = vmatpush.bf16.msra.mxu0 0
      %3534 = vmatpush.bf16.msra.mxu0 %v3507
      %3535 = vmatmul.bf16.gmra.mxu0 %v3504
      %v3536 = vpop.f32.mrf.mxu0
      %v3537 = vadd.f32 0.0, %v3536
      %v3538 = vpop.f32.mrf.mxu0
      %3539 = vdwg.mxu0
      %3540 = vmatpush.bf16.msra.mxu0 0
      %3541 = vmatpush.bf16.msra.mxu0 0
      %3542 = vmatpush.bf16.msra.mxu0 0
      %3543 = vmatpush.bf16.msra.mxu0 0
      %3544 = vmatpush.bf16.msra.mxu0 0
      %3545 = vmatpush.bf16.msra.mxu0 0
      %3546 = vmatpush.bf16.msra.mxu0 0
      %3547 = vmatpush.bf16.msra.mxu0 %v3510
      %3548 = vmatmul.bf16.gmra.mxu0 %v3504
      %v3549 = vpop.f32.mrf.mxu0
      %v3550 = vadd.f32 0.0, %v3549
      %v3551 = vpop.f32.mrf.mxu0
      %3552 = vdwg.mxu0
      %3553 = vmatpush.bf16.msra.mxu0 0
      %3554 = vmatpush.bf16.msra.mxu0 0
      %3555 = vmatpush.bf16.msra.mxu0 0
      %3556 = vmatpush.bf16.msra.mxu0 0
      %3557 = vmatpush.bf16.msra.mxu0 0
      %3558 = vmatpush.bf16.msra.mxu0 0
      %3559 = vmatpush.bf16.msra.mxu0 0
      %3560 = vmatpush.bf16.msra.mxu0 %v3513
      %3561 = vmatmul.bf16.gmra.mxu0 %v3504
      %v3562 = vpop.f32.mrf.mxu0
      %v3563 = vadd.f32 0.0, %v3562
      %v3564 = vpop.f32.mrf.mxu0
      %3565 = vdwg.mxu0
      %3566 = vmatpush.bf16.msra.mxu0 0
      %3567 = vmatpush.bf16.msra.mxu0 0
      %3568 = vmatpush.bf16.msra.mxu0 0
      %3569 = vmatpush.bf16.msra.mxu0 0
      %3570 = vmatpush.bf16.msra.mxu0 0
      %3571 = vmatpush.bf16.msra.mxu0 0
      %3572 = vmatpush.bf16.msra.mxu0 0
      %3573 = vmatpush.bf16.msra.mxu0 %v3516
      %3574 = vmatmul.bf16.gmra.mxu0 %v3504
      %v3575 = vpop.f32.mrf.mxu0
      %v3576 = vadd.f32 0.0, %v3575
      %v3577 = vpop.f32.mrf.mxu0
      %3578 = vdwg.mxu0
      %3579 = vmatpush.bf16.msra.mxu0 0
      %3580 = vmatpush.bf16.msra.mxu0 0
      %3581 = vmatpush.bf16.msra.mxu0 0
      %3582 = vmatpush.bf16.msra.mxu0 0
      %3583 = vmatpush.bf16.msra.mxu0 0
      %3584 = vmatpush.bf16.msra.mxu0 0
      %3585 = vmatpush.bf16.msra.mxu0 0
      %3586 = vmatpush.bf16.msra.mxu0 %v3519
      %3587 = vmatmul.bf16.gmra.mxu0 %v3504
      %v3588 = vpop.f32.mrf.mxu0
      %v3589 = vadd.f32 0.0, %v3588
      %v3590 = vpop.f32.mrf.mxu0
      %3591 = vdwg.mxu0
      %3592 = vmatpush.bf16.msra.mxu0 0
      %3593 = vmatpush.bf16.msra.mxu0 0
      %3594 = vmatpush.bf16.msra.mxu0 0
      %3595 = vmatpush.bf16.msra.mxu0 0
      %3596 = vmatpush.bf16.msra.mxu0 0
      %3597 = vmatpush.bf16.msra.mxu0 0
      %3598 = vmatpush.bf16.msra.mxu0 0
      %3599 = vmatpush.bf16.msra.mxu0 %v3522
      %3600 = vmatmul.bf16.gmra.mxu0 %v3504
      %v3601 = vpop.f32.mrf.mxu0
      %v3602 = vadd.f32 0.0, %v3601
      %v3603 = vpop.f32.mrf.mxu0
      %3604 = vdwg.mxu0
      %3605 = vmatpush.bf16.msra.mxu0 0
      %3606 = vmatpush.bf16.msra.mxu0 0
      %3607 = vmatpush.bf16.msra.mxu0 0
      %3608 = vmatpush.bf16.msra.mxu0 0
      %3609 = vmatpush.bf16.msra.mxu0 0
      %3610 = vmatpush.bf16.msra.mxu0 0
      %3611 = vmatpush.bf16.msra.mxu0 0
      %3612 = vmatpush.bf16.msra.mxu0 %v3525
      %3613 = vmatmul.bf16.gmra.mxu0 %v3504
      %v3614 = vpop.f32.mrf.mxu0
      %v3615 = vadd.f32 0.0, %v3614
      %v3616 = vpop.f32.mrf.mxu0
      %3617 = vdwg.mxu0
      %v3618 = vadd.f32 %v3423, %v3537
      %v3619 = vadd.f32 %v3424, %v3550
      %v3620 = vadd.f32 %v3425, %v3563
      %v3621 = vadd.f32 %v3426, %v3576
      %v3622 = vadd.f32 %v3427, %v3589
      %v3623 = vadd.f32 %v3428, %v3602
      %v3624 = vadd.f32 %v3429, %v3615
      %v3625 = vld [vmem:[%s246 + $0x4] sm:$0xff]
      %v3626 = vld [vmem:[%s246 + $0xc] sm:$0xff]
      %v3627 = vld [vmem:[%s246 + $0x14] sm:$0xff]
      %v3628 = vld [vmem:[%s246 + $0x1c] sm:$0xf]
      %3633 = vst [vmem:[#allocation1] ss:$2 sm:$0xff] %v3625
      %s3634 = scalar_lea.vmem [#allocation1], 16
      %3635 = vst [vmem:[%s3634] ss:$2 sm:$0xff] %v3626
      %s3636 = scalar_lea.vmem [#allocation1], 32
      %3637 = vst [vmem:[%s3636] ss:$2 sm:$0xff] %v3627
      %s3638 = scalar_lea.vmem [#allocation1], 48
      %3639 = vst [vmem:[%s3638] ss:$2 sm:$0xff] %v3628
      %v3640 = vld.sshfl [vmem:[#allocation1] sm:$0xff pattern:$0x75316420]
      %v3641 = vld.sshfl [vmem:[#allocation1 + $0x8] sm:$0xff pattern:$0x75316420]
      %v3642 = vld.sshfl [vmem:[#allocation1 + $0x10] sm:$0xff pattern:$0x75316420]
      %v3643 = vld.sshfl [vmem:[#allocation1 + $0x18] sm:$0xff pattern:$0x75316420]
      %v3644 = vld.sshfl [vmem:[#allocation1 + $0x20] sm:$0xff pattern:$0x75316420]
      %v3645 = vld.sshfl [vmem:[#allocation1 + $0x28] sm:$0xff pattern:$0x75316420]
      %v3646 = vld.sshfl [vmem:[#allocation1 + $0x30] sm:$0xff pattern:$0x75316420]
      %v3654 = vpack.c.bf16 %v3640, %v3640
      %v3655 = vpack.c.bf16 %v3641, %v3641
      %v3656 = vpack.c.bf16 %v3642, %v3642
      %v3657 = vpack.c.bf16 %v3643, %v3643
      %v3658 = vpack.c.bf16 %v3644, %v3644
      %v3659 = vpack.c.bf16 %v3645, %v3645
      %v3660 = vpack.c.bf16 %v3646, %v3646
      %s3661 = scalar_lea.vmem %s1, 36
      %v3662 = vld [vmem:[%s3661] sm:$0x3]
      %3670 = vrot.lane.b32.xlu0 %v3654, 56
      %v3671 = vpop.permute.xlu0 %3670
      %3672 = vrot.lane.b32.xlu0 %v3655, 56
      %v3673 = vpop.permute.xlu0 %3672
      %3674 = vrot.lane.b32.xlu0 %v3656, 56
      %v3675 = vpop.permute.xlu0 %3674
      %3676 = vrot.lane.b32.xlu0 %v3657, 56
      %v3677 = vpop.permute.xlu0 %3676
      %3678 = vrot.lane.b32.xlu0 %v3658, 56
      %v3679 = vpop.permute.xlu0 %3678
      %3680 = vrot.lane.b32.xlu0 %v3659, 56
      %v3681 = vpop.permute.xlu0 %3680
      %3682 = vrot.lane.b32.xlu0 %v3660, 56
      %v3683 = vpop.permute.xlu0 %3682
      %vm3684 = vcmask 457728
      %v3685 = vsel %vm3684, %v3671, %v3673
      %v3686 = vsel %vm3684, %v3673, %v3675
      %v3687 = vsel %vm3684, %v3675, %v3677
      %v3688 = vsel %vm3684, %v3677, %v3679
      %v3689 = vsel %vm3684, %v3679, %v3681
      %v3690 = vsel %vm3684, %v3681, %v3683
      %v3692 = vsel %vm365, %v3662, 0
      %v3695 = vsel %vm254, %v3685, 0
      %v3698 = vsel %vm254, %v3686, 0
      %v3701 = vsel %vm254, %v3687, 0
      %v3704 = vsel %vm254, %v3688, 0
      %v3707 = vsel %vm254, %v3689, 0
      %v3710 = vsel %vm254, %v3690, 0
      %v3713 = vsel %vm254, %v3683, 0
      %3715 = vmatpush.bf16.msra.mxu0 0
      %3716 = vmatpush.bf16.msra.mxu0 0
      %3717 = vmatpush.bf16.msra.mxu0 0
      %3718 = vmatpush.bf16.msra.mxu0 0
      %3719 = vmatpush.bf16.msra.mxu0 0
      %3720 = vmatpush.bf16.msra.mxu0 0
      %3721 = vmatpush.bf16.msra.mxu0 0
      %3722 = vmatpush.bf16.msra.mxu0 %v3695
      %3723 = vmatmul.bf16.gmra.mxu0 %v3692
      %v3724 = vpop.f32.mrf.mxu0
      %v3725 = vadd.f32 0.0, %v3724
      %v3726 = vpop.f32.mrf.mxu0
      %3727 = vdwg.mxu0
      %3728 = vmatpush.bf16.msra.mxu0 0
      %3729 = vmatpush.bf16.msra.mxu0 0
      %3730 = vmatpush.bf16.msra.mxu0 0
      %3731 = vmatpush.bf16.msra.mxu0 0
      %3732 = vmatpush.bf16.msra.mxu0 0
      %3733 = vmatpush.bf16.msra.mxu0 0
      %3734 = vmatpush.bf16.msra.mxu0 0
      %3735 = vmatpush.bf16.msra.mxu0 %v3698
      %3736 = vmatmul.bf16.gmra.mxu0 %v3692
      %v3737 = vpop.f32.mrf.mxu0
      %v3738 = vadd.f32 0.0, %v3737
      %v3739 = vpop.f32.mrf.mxu0
      %3740 = vdwg.mxu0
      %3741 = vmatpush.bf16.msra.mxu0 0
      %3742 = vmatpush.bf16.msra.mxu0 0
      %3743 = vmatpush.bf16.msra.mxu0 0
      %3744 = vmatpush.bf16.msra.mxu0 0
      %3745 = vmatpush.bf16.msra.mxu0 0
      %3746 = vmatpush.bf16.msra.mxu0 0
      %3747 = vmatpush.bf16.msra.mxu0 0
      %3748 = vmatpush.bf16.msra.mxu0 %v3701
      %3749 = vmatmul.bf16.gmra.mxu0 %v3692
      %v3750 = vpop.f32.mrf.mxu0
      %v3751 = vadd.f32 0.0, %v3750
      %v3752 = vpop.f32.mrf.mxu0
      %3753 = vdwg.mxu0
      %3754 = vmatpush.bf16.msra.mxu0 0
      %3755 = vmatpush.bf16.msra.mxu0 0
      %3756 = vmatpush.bf16.msra.mxu0 0
      %3757 = vmatpush.bf16.msra.mxu0 0
      %3758 = vmatpush.bf16.msra.mxu0 0
      %3759 = vmatpush.bf16.msra.mxu0 0
      %3760 = vmatpush.bf16.msra.mxu0 0
      %3761 = vmatpush.bf16.msra.mxu0 %v3704
      %3762 = vmatmul.bf16.gmra.mxu0 %v3692
      %v3763 = vpop.f32.mrf.mxu0
      %v3764 = vadd.f32 0.0, %v3763
      %v3765 = vpop.f32.mrf.mxu0
      %3766 = vdwg.mxu0
      %3767 = vmatpush.bf16.msra.mxu0 0
      %3768 = vmatpush.bf16.msra.mxu0 0
      %3769 = vmatpush.bf16.msra.mxu0 0
      %3770 = vmatpush.bf16.msra.mxu0 0
      %3771 = vmatpush.bf16.msra.mxu0 0
      %3772 = vmatpush.bf16.msra.mxu0 0
      %3773 = vmatpush.bf16.msra.mxu0 0
      %3774 = vmatpush.bf16.msra.mxu0 %v3707
      %3775 = vmatmul.bf16.gmra.mxu0 %v3692
      %v3776 = vpop.f32.mrf.mxu0
      %v3777 = vadd.f32 0.0, %v3776
      %v3778 = vpop.f32.mrf.mxu0
      %3779 = vdwg.mxu0
      %3780 = vmatpush.bf16.msra.mxu0 0
      %3781 = vmatpush.bf16.msra.mxu0 0
      %3782 = vmatpush.bf16.msra.mxu0 0
      %3783 = vmatpush.bf16.msra.mxu0 0
      %3784 = vmatpush.bf16.msra.mxu0 0
      %3785 = vmatpush.bf16.msra.mxu0 0
      %3786 = vmatpush.bf16.msra.mxu0 0
      %3787 = vmatpush.bf16.msra.mxu0 %v3710
      %3788 = vmatmul.bf16.gmra.mxu0 %v3692
      %v3789 = vpop.f32.mrf.mxu0
      %v3790 = vadd.f32 0.0, %v3789
      %v3791 = vpop.f32.mrf.mxu0
      %3792 = vdwg.mxu0
      %3793 = vmatpush.bf16.msra.mxu0 0
      %3794 = vmatpush.bf16.msra.mxu0 0
      %3795 = vmatpush.bf16.msra.mxu0 0
      %3796 = vmatpush.bf16.msra.mxu0 0
      %3797 = vmatpush.bf16.msra.mxu0 0
      %3798 = vmatpush.bf16.msra.mxu0 0
      %3799 = vmatpush.bf16.msra.mxu0 0
      %3800 = vmatpush.bf16.msra.mxu0 %v3713
      %3801 = vmatmul.bf16.gmra.mxu0 %v3692
      %v3802 = vpop.f32.mrf.mxu0
      %v3803 = vadd.f32 0.0, %v3802
      %v3804 = vpop.f32.mrf.mxu0
      %3805 = vdwg.mxu0
      %v3806 = vadd.f32 %v3618, %v3725
      %v3807 = vadd.f32 %v3619, %v3738
      %v3808 = vadd.f32 %v3620, %v3751
      %v3809 = vadd.f32 %v3621, %v3764
      %v3810 = vadd.f32 %v3622, %v3777
      %v3811 = vadd.f32 %v3623, %v3790
      %v3812 = vadd.f32 %v3624, %v3803
      %v3813 = vld [vmem:[%s246 + $0x4] sm:$0xff]
      %v3814 = vld [vmem:[%s246 + $0xc] sm:$0xff]
      %v3815 = vld [vmem:[%s246 + $0x14] sm:$0xff]
      %v3816 = vld [vmem:[%s246 + $0x1c] sm:$0xf]
      %3821 = vst [vmem:[#allocation1] ss:$2 sm:$0xff] %v3813
      %s3822 = scalar_lea.vmem [#allocation1], 16
      %3823 = vst [vmem:[%s3822] ss:$2 sm:$0xff] %v3814
      %s3824 = scalar_lea.vmem [#allocation1], 32
      %3825 = vst [vmem:[%s3824] ss:$2 sm:$0xff] %v3815
      %s3826 = scalar_lea.vmem [#allocation1], 48
      %3827 = vst [vmem:[%s3826] ss:$2 sm:$0xff] %v3816
      %v3828 = vld.sshfl [vmem:[#allocation1] sm:$0xff pattern:$0x75316420]
      %v3829 = vld.sshfl [vmem:[#allocation1 + $0x8] sm:$0xff pattern:$0x75316420]
      %v3830 = vld.sshfl [vmem:[#allocation1 + $0x10] sm:$0xff pattern:$0x75316420]
      %v3831 = vld.sshfl [vmem:[#allocation1 + $0x18] sm:$0xff pattern:$0x75316420]
      %v3832 = vld.sshfl [vmem:[#allocation1 + $0x20] sm:$0xff pattern:$0x75316420]
      %v3833 = vld.sshfl [vmem:[#allocation1 + $0x28] sm:$0xff pattern:$0x75316420]
      %v3834 = vld.sshfl [vmem:[#allocation1 + $0x30] sm:$0xff pattern:$0x75316420]
      %v3842 = vpack.c.bf16 %v3828, %v3828
      %v3843 = vpack.c.bf16 %v3829, %v3829
      %v3844 = vpack.c.bf16 %v3830, %v3830
      %v3845 = vpack.c.bf16 %v3831, %v3831
      %v3846 = vpack.c.bf16 %v3832, %v3832
      %v3847 = vpack.c.bf16 %v3833, %v3833
      %v3848 = vpack.c.bf16 %v3834, %v3834
      %s3849 = scalar_lea.vmem %s1, 38
      %v3850 = vld [vmem:[%s3849] sm:$0x3]
      %3858 = vrot.lane.b32.xlu0 %v3842, 55
      %v3859 = vpop.permute.xlu0 %3858
      %3860 = vrot.lane.b32.xlu0 %v3843, 55
      %v3861 = vpop.permute.xlu0 %3860
      %3862 = vrot.lane.b32.xlu0 %v3844, 55
      %v3863 = vpop.permute.xlu0 %3862
      %3864 = vrot.lane.b32.xlu0 %v3845, 55
      %v3865 = vpop.permute.xlu0 %3864
      %3866 = vrot.lane.b32.xlu0 %v3846, 55
      %v3867 = vpop.permute.xlu0 %3866
      %3868 = vrot.lane.b32.xlu0 %v3847, 55
      %v3869 = vpop.permute.xlu0 %3868
      %3870 = vrot.lane.b32.xlu0 %v3848, 55
      %v3871 = vpop.permute.xlu0 %3870
      %vm3872 = vcmask 449536
      %v3873 = vsel %vm3872, %v3859, %v3861
      %v3874 = vsel %vm3872, %v3861, %v3863
      %v3875 = vsel %vm3872, %v3863, %v3865
      %v3876 = vsel %vm3872, %v3865, %v3867
      %v3877 = vsel %vm3872, %v3867, %v3869
      %v3878 = vsel %vm3872, %v3869, %v3871
      %v3880 = vsel %vm365, %v3850, 0
      %v3883 = vsel %vm254, %v3873, 0
      %v3886 = vsel %vm254, %v3874, 0
      %v3889 = vsel %vm254, %v3875, 0
      %v3892 = vsel %vm254, %v3876, 0
      %v3895 = vsel %vm254, %v3877, 0
      %v3898 = vsel %vm254, %v3878, 0
      %v3901 = vsel %vm254, %v3871, 0
      %3903 = vmatpush.bf16.msra.mxu0 0
      %3904 = vmatpush.bf16.msra.mxu0 0
      %3905 = vmatpush.bf16.msra.mxu0 0
      %3906 = vmatpush.bf16.msra.mxu0 0
      %3907 = vmatpush.bf16.msra.mxu0 0
      %3908 = vmatpush.bf16.msra.mxu0 0
      %3909 = vmatpush.bf16.msra.mxu0 0
      %3910 = vmatpush.bf16.msra.mxu0 %v3883
      %3911 = vmatmul.bf16.gmra.mxu0 %v3880
      %v3912 = vpop.f32.mrf.mxu0
      %v3913 = vadd.f32 0.0, %v3912
      %v3914 = vpop.f32.mrf.mxu0
      %3915 = vdwg.mxu0
      %3916 = vmatpush.bf16.msra.mxu0 0
      %3917 = vmatpush.bf16.msra.mxu0 0
      %3918 = vmatpush.bf16.msra.mxu0 0
      %3919 = vmatpush.bf16.msra.mxu0 0
      %3920 = vmatpush.bf16.msra.mxu0 0
      %3921 = vmatpush.bf16.msra.mxu0 0
      %3922 = vmatpush.bf16.msra.mxu0 0
      %3923 = vmatpush.bf16.msra.mxu0 %v3886
      %3924 = vmatmul.bf16.gmra.mxu0 %v3880
      %v3925 = vpop.f32.mrf.mxu0
      %v3926 = vadd.f32 0.0, %v3925
      %v3927 = vpop.f32.mrf.mxu0
      %3928 = vdwg.mxu0
      %3929 = vmatpush.bf16.msra.mxu0 0
      %3930 = vmatpush.bf16.msra.mxu0 0
      %3931 = vmatpush.bf16.msra.mxu0 0
      %3932 = vmatpush.bf16.msra.mxu0 0
      %3933 = vmatpush.bf16.msra.mxu0 0
      %3934 = vmatpush.bf16.msra.mxu0 0
      %3935 = vmatpush.bf16.msra.mxu0 0
      %3936 = vmatpush.bf16.msra.mxu0 %v3889
      %3937 = vmatmul.bf16.gmra.mxu0 %v3880
      %v3938 = vpop.f32.mrf.mxu0
      %v3939 = vadd.f32 0.0, %v3938
      %v3940 = vpop.f32.mrf.mxu0
      %3941 = vdwg.mxu0
      %3942 = vmatpush.bf16.msra.mxu0 0
      %3943 = vmatpush.bf16.msra.mxu0 0
      %3944 = vmatpush.bf16.msra.mxu0 0
      %3945 = vmatpush.bf16.msra.mxu0 0
      %3946 = vmatpush.bf16.msra.mxu0 0
      %3947 = vmatpush.bf16.msra.mxu0 0
      %3948 = vmatpush.bf16.msra.mxu0 0
      %3949 = vmatpush.bf16.msra.mxu0 %v3892
      %3950 = vmatmul.bf16.gmra.mxu0 %v3880
      %v3951 = vpop.f32.mrf.mxu0
      %v3952 = vadd.f32 0.0, %v3951
      %v3953 = vpop.f32.mrf.mxu0
      %3954 = vdwg.mxu0
      %3955 = vmatpush.bf16.msra.mxu0 0
      %3956 = vmatpush.bf16.msra.mxu0 0
      %3957 = vmatpush.bf16.msra.mxu0 0
      %3958 = vmatpush.bf16.msra.mxu0 0
      %3959 = vmatpush.bf16.msra.mxu0 0
      %3960 = vmatpush.bf16.msra.mxu0 0
      %3961 = vmatpush.bf16.msra.mxu0 0
      %3962 = vmatpush.bf16.msra.mxu0 %v3895
      %3963 = vmatmul.bf16.gmra.mxu0 %v3880
      %v3964 = vpop.f32.mrf.mxu0
      %v3965 = vadd.f32 0.0, %v3964
      %v3966 = vpop.f32.mrf.mxu0
      %3967 = vdwg.mxu0
      %3968 = vmatpush.bf16.msra.mxu0 0
      %3969 = vmatpush.bf16.msra.mxu0 0
      %3970 = vmatpush.bf16.msra.mxu0 0
      %3971 = vmatpush.bf16.msra.mxu0 0
      %3972 = vmatpush.bf16.msra.mxu0 0
      %3973 = vmatpush.bf16.msra.mxu0 0
      %3974 = vmatpush.bf16.msra.mxu0 0
      %3975 = vmatpush.bf16.msra.mxu0 %v3898
      %3976 = vmatmul.bf16.gmra.mxu0 %v3880
      %v3977 = vpop.f32.mrf.mxu0
      %v3978 = vadd.f32 0.0, %v3977
      %v3979 = vpop.f32.mrf.mxu0
      %3980 = vdwg.mxu0
      %3981 = vmatpush.bf16.msra.mxu0 0
      %3982 = vmatpush.bf16.msra.mxu0 0
      %3983 = vmatpush.bf16.msra.mxu0 0
      %3984 = vmatpush.bf16.msra.mxu0 0
      %3985 = vmatpush.bf16.msra.mxu0 0
      %3986 = vmatpush.bf16.msra.mxu0 0
      %3987 = vmatpush.bf16.msra.mxu0 0
      %3988 = vmatpush.bf16.msra.mxu0 %v3901
      %3989 = vmatmul.bf16.gmra.mxu0 %v3880
      %v3990 = vpop.f32.mrf.mxu0
      %v3991 = vadd.f32 0.0, %v3990
      %v3992 = vpop.f32.mrf.mxu0
      %3993 = vdwg.mxu0
      %v3994 = vadd.f32 %v3806, %v3913
      %v3995 = vadd.f32 %v3807, %v3926
      %v3996 = vadd.f32 %v3808, %v3939
      %v3997 = vadd.f32 %v3809, %v3952
      %v3998 = vadd.f32 %v3810, %v3965
      %v3999 = vadd.f32 %v3811, %v3978
      %v4000 = vadd.f32 %v3812, %v3991
      %v4001 = vld [vmem:[%s246 + $0x4] sm:$0xff]
      %v4002 = vld [vmem:[%s246 + $0xc] sm:$0xff]
      %v4003 = vld [vmem:[%s246 + $0x14] sm:$0xff]
      %v4004 = vld [vmem:[%s246 + $0x1c] sm:$0xf]
      %4009 = vst [vmem:[#allocation1] ss:$2 sm:$0xff] %v4001
      %s4010 = scalar_lea.vmem [#allocation1], 16
      %4011 = vst [vmem:[%s4010] ss:$2 sm:$0xff] %v4002
      %s4012 = scalar_lea.vmem [#allocation1], 32
      %4013 = vst [vmem:[%s4012] ss:$2 sm:$0xff] %v4003
      %s4014 = scalar_lea.vmem [#allocation1], 48
      %4015 = vst [vmem:[%s4014] ss:$2 sm:$0xff] %v4004
      %v4016 = vld.sshfl [vmem:[#allocation1] sm:$0xff pattern:$0x75316420]
      %v4017 = vld.sshfl [vmem:[#allocation1 + $0x8] sm:$0xff pattern:$0x75316420]
      %v4018 = vld.sshfl [vmem:[#allocation1 + $0x10] sm:$0xff pattern:$0x75316420]
      %v4019 = vld.sshfl [vmem:[#allocation1 + $0x18] sm:$0xff pattern:$0x75316420]
      %v4020 = vld.sshfl [vmem:[#allocation1 + $0x20] sm:$0xff pattern:$0x75316420]
      %v4021 = vld.sshfl [vmem:[#allocation1 + $0x28] sm:$0xff pattern:$0x75316420]
      %v4022 = vld.sshfl [vmem:[#allocation1 + $0x30] sm:$0xff pattern:$0x75316420]
      %v4030 = vpack.c.bf16 %v4016, %v4016
      %v4031 = vpack.c.bf16 %v4017, %v4017
      %v4032 = vpack.c.bf16 %v4018, %v4018
      %v4033 = vpack.c.bf16 %v4019, %v4019
      %v4034 = vpack.c.bf16 %v4020, %v4020
      %v4035 = vpack.c.bf16 %v4021, %v4021
      %v4036 = vpack.c.bf16 %v4022, %v4022
      %s4037 = scalar_lea.vmem %s1, 40
      %v4038 = vld [vmem:[%s4037] sm:$0x3]
      %4046 = vrot.lane.b32.xlu0 %v4030, 54
      %v4047 = vpop.permute.xlu0 %4046
      %4048 = vrot.lane.b32.xlu0 %v4031, 54
      %v4049 = vpop.permute.xlu0 %4048
      %4050 = vrot.lane.b32.xlu0 %v4032, 54
      %v4051 = vpop.permute.xlu0 %4050
      %4052 = vrot.lane.b32.xlu0 %v4033, 54
      %v4053 = vpop.permute.xlu0 %4052
      %4054 = vrot.lane.b32.xlu0 %v4034, 54
      %v4055 = vpop.permute.xlu0 %4054
      %4056 = vrot.lane.b32.xlu0 %v4035, 54
      %v4057 = vpop.permute.xlu0 %4056
      %4058 = vrot.lane.b32.xlu0 %v4036, 54
      %v4059 = vpop.permute.xlu0 %4058
      %vm4060 = vcmask 441344
      %v4061 = vsel %vm4060, %v4047, %v4049
      %v4062 = vsel %vm4060, %v4049, %v4051
      %v4063 = vsel %vm4060, %v4051, %v4053
      %v4064 = vsel %vm4060, %v4053, %v4055
      %v4065 = vsel %vm4060, %v4055, %v4057
      %v4066 = vsel %vm4060, %v4057, %v4059
      %v4068 = vsel %vm365, %v4038, 0
      %v4071 = vsel %vm254, %v4061, 0
      %v4074 = vsel %vm254, %v4062, 0
      %v4077 = vsel %vm254, %v4063, 0
      %v4080 = vsel %vm254, %v4064, 0
      %v4083 = vsel %vm254, %v4065, 0
      %v4086 = vsel %vm254, %v4066, 0
      %v4089 = vsel %vm254, %v4059, 0
      %4091 = vmatpush.bf16.msra.mxu0 0
      %4092 = vmatpush.bf16.msra.mxu0 0
      %4093 = vmatpush.bf16.msra.mxu0 0
      %4094 = vmatpush.bf16.msra.mxu0 0
      %4095 = vmatpush.bf16.msra.mxu0 0
      %4096 = vmatpush.bf16.msra.mxu0 0
      %4097 = vmatpush.bf16.msra.mxu0 0
      %4098 = vmatpush.bf16.msra.mxu0 %v4071
      %4099 = vmatmul.bf16.gmra.mxu0 %v4068
      %v4100 = vpop.f32.mrf.mxu0
      %v4101 = vadd.f32 0.0, %v4100
      %v4102 = vpop.f32.mrf.mxu0
      %4103 = vdwg.mxu0
      %4104 = vmatpush.bf16.msra.mxu0 0
      %4105 = vmatpush.bf16.msra.mxu0 0
      %4106 = vmatpush.bf16.msra.mxu0 0
      %4107 = vmatpush.bf16.msra.mxu0 0
      %4108 = vmatpush.bf16.msra.mxu0 0
      %4109 = vmatpush.bf16.msra.mxu0 0
      %4110 = vmatpush.bf16.msra.mxu0 0
      %4111 = vmatpush.bf16.msra.mxu0 %v4074
      %4112 = vmatmul.bf16.gmra.mxu0 %v4068
      %v4113 = vpop.f32.mrf.mxu0
      %v4114 = vadd.f32 0.0, %v4113
      %v4115 = vpop.f32.mrf.mxu0
      %4116 = vdwg.mxu0
      %4117 = vmatpush.bf16.msra.mxu0 0
      %4118 = vmatpush.bf16.msra.mxu0 0
      %4119 = vmatpush.bf16.msra.mxu0 0
      %4120 = vmatpush.bf16.msra.mxu0 0
      %4121 = vmatpush.bf16.msra.mxu0 0
      %4122 = vmatpush.bf16.msra.mxu0 0
      %4123 = vmatpush.bf16.msra.mxu0 0
      %4124 = vmatpush.bf16.msra.mxu0 %v4077
      %4125 = vmatmul.bf16.gmra.mxu0 %v4068
      %v4126 = vpop.f32.mrf.mxu0
      %v4127 = vadd.f32 0.0, %v4126
      %v4128 = vpop.f32.mrf.mxu0
      %4129 = vdwg.mxu0
      %4130 = vmatpush.bf16.msra.mxu0 0
      %4131 = vmatpush.bf16.msra.mxu0 0
      %4132 = vmatpush.bf16.msra.mxu0 0
      %4133 = vmatpush.bf16.msra.mxu0 0
      %4134 = vmatpush.bf16.msra.mxu0 0
      %4135 = vmatpush.bf16.msra.mxu0 0
      %4136 = vmatpush.bf16.msra.mxu0 0
      %4137 = vmatpush.bf16.msra.mxu0 %v4080
      %4138 = vmatmul.bf16.gmra.mxu0 %v4068
      %v4139 = vpop.f32.mrf.mxu0
      %v4140 = vadd.f32 0.0, %v4139
      %v4141 = vpop.f32.mrf.mxu0
      %4142 = vdwg.mxu0
      %4143 = vmatpush.bf16.msra.mxu0 0
      %4144 = vmatpush.bf16.msra.mxu0 0
      %4145 = vmatpush.bf16.msra.mxu0 0
      %4146 = vmatpush.bf16.msra.mxu0 0
      %4147 = vmatpush.bf16.msra.mxu0 0
      %4148 = vmatpush.bf16.msra.mxu0 0
      %4149 = vmatpush.bf16.msra.mxu0 0
      %4150 = vmatpush.bf16.msra.mxu0 %v4083
      %4151 = vmatmul.bf16.gmra.mxu0 %v4068
      %v4152 = vpop.f32.mrf.mxu0
      %v4153 = vadd.f32 0.0, %v4152
      %v4154 = vpop.f32.mrf.mxu0
      %4155 = vdwg.mxu0
      %4156 = vmatpush.bf16.msra.mxu0 0
      %4157 = vmatpush.bf16.msra.mxu0 0
      %4158 = vmatpush.bf16.msra.mxu0 0
      %4159 = vmatpush.bf16.msra.mxu0 0
      %4160 = vmatpush.bf16.msra.mxu0 0
      %4161 = vmatpush.bf16.msra.mxu0 0
      %4162 = vmatpush.bf16.msra.mxu0 0
      %4163 = vmatpush.bf16.msra.mxu0 %v4086
      %4164 = vmatmul.bf16.gmra.mxu0 %v4068
      %v4165 = vpop.f32.mrf.mxu0
      %v4166 = vadd.f32 0.0, %v4165
      %v4167 = vpop.f32.mrf.mxu0
      %4168 = vdwg.mxu0
      %4169 = vmatpush.bf16.msra.mxu0 0
      %4170 = vmatpush.bf16.msra.mxu0 0
      %4171 = vmatpush.bf16.msra.mxu0 0
      %4172 = vmatpush.bf16.msra.mxu0 0
      %4173 = vmatpush.bf16.msra.mxu0 0
      %4174 = vmatpush.bf16.msra.mxu0 0
      %4175 = vmatpush.bf16.msra.mxu0 0
      %4176 = vmatpush.bf16.msra.mxu0 %v4089
      %4177 = vmatmul.bf16.gmra.mxu0 %v4068
      %v4178 = vpop.f32.mrf.mxu0
      %v4179 = vadd.f32 0.0, %v4178
      %v4180 = vpop.f32.mrf.mxu0
      %4181 = vdwg.mxu0
      %v4182 = vadd.f32 %v3994, %v4101
      %v4183 = vadd.f32 %v3995, %v4114
      %v4184 = vadd.f32 %v3996, %v4127
      %v4185 = vadd.f32 %v3997, %v4140
      %v4186 = vadd.f32 %v3998, %v4153
      %v4187 = vadd.f32 %v3999, %v4166
      %v4188 = vadd.f32 %v4000, %v4179
      %v4189 = vld [vmem:[%s246 + $0x4] sm:$0xff]
      %v4190 = vld [vmem:[%s246 + $0xc] sm:$0xff]
      %v4191 = vld [vmem:[%s246 + $0x14] sm:$0xff]
      %v4192 = vld [vmem:[%s246 + $0x1c] sm:$0xf]
      %4197 = vst [vmem:[#allocation1] ss:$2 sm:$0xff] %v4189
      %s4198 = scalar_lea.vmem [#allocation1], 16
      %4199 = vst [vmem:[%s4198] ss:$2 sm:$0xff] %v4190
      %s4200 = scalar_lea.vmem [#allocation1], 32
      %4201 = vst [vmem:[%s4200] ss:$2 sm:$0xff] %v4191
      %s4202 = scalar_lea.vmem [#allocation1], 48
      %4203 = vst [vmem:[%s4202] ss:$2 sm:$0xff] %v4192
      %v4204 = vld.sshfl [vmem:[#allocation1] sm:$0xff pattern:$0x75316420]
      %v4205 = vld.sshfl [vmem:[#allocation1 + $0x8] sm:$0xff pattern:$0x75316420]
      %v4206 = vld.sshfl [vmem:[#allocation1 + $0x10] sm:$0xff pattern:$0x75316420]
      %v4207 = vld.sshfl [vmem:[#allocation1 + $0x18] sm:$0xff pattern:$0x75316420]
      %v4208 = vld.sshfl [vmem:[#allocation1 + $0x20] sm:$0xff pattern:$0x75316420]
      %v4209 = vld.sshfl [vmem:[#allocation1 + $0x28] sm:$0xff pattern:$0x75316420]
      %v4210 = vld.sshfl [vmem:[#allocation1 + $0x30] sm:$0xff pattern:$0x75316420]
      %v4218 = vpack.c.bf16 %v4204, %v4204
      %v4219 = vpack.c.bf16 %v4205, %v4205
      %v4220 = vpack.c.bf16 %v4206, %v4206
      %v4221 = vpack.c.bf16 %v4207, %v4207
      %v4222 = vpack.c.bf16 %v4208, %v4208
      %v4223 = vpack.c.bf16 %v4209, %v4209
      %v4224 = vpack.c.bf16 %v4210, %v4210
      %s4225 = scalar_lea.vmem %s1, 42
      %v4226 = vld [vmem:[%s4225] sm:$0x3]
      %4234 = vrot.lane.b32.xlu0 %v4218, 46
      %v4235 = vpop.permute.xlu0 %4234
      %4236 = vrot.lane.b32.xlu0 %v4219, 46
      %v4237 = vpop.permute.xlu0 %4236
      %4238 = vrot.lane.b32.xlu0 %v4220, 46
      %v4239 = vpop.permute.xlu0 %4238
      %4240 = vrot.lane.b32.xlu0 %v4221, 46
      %v4241 = vpop.permute.xlu0 %4240
      %4242 = vrot.lane.b32.xlu0 %v4222, 46
      %v4243 = vpop.permute.xlu0 %4242
      %4244 = vrot.lane.b32.xlu0 %v4223, 46
      %v4245 = vpop.permute.xlu0 %4244
      %4246 = vrot.lane.b32.xlu0 %v4224, 46
      %v4247 = vpop.permute.xlu0 %4246
      %vm4248 = vcmask 375808
      %v4249 = vsel %vm4248, %v4235, %v4237
      %v4250 = vsel %vm4248, %v4237, %v4239
      %v4251 = vsel %vm4248, %v4239, %v4241
      %v4252 = vsel %vm4248, %v4241, %v4243
      %v4253 = vsel %vm4248, %v4243, %v4245
      %v4254 = vsel %vm4248, %v4245, %v4247
      %v4256 = vsel %vm365, %v4226, 0
      %v4259 = vsel %vm254, %v4249, 0
      %v4262 = vsel %vm254, %v4250, 0
      %v4265 = vsel %vm254, %v4251, 0
      %v4268 = vsel %vm254, %v4252, 0
      %v4271 = vsel %vm254, %v4253, 0
      %v4274 = vsel %vm254, %v4254, 0
      %v4277 = vsel %vm254, %v4247, 0
      %4279 = vmatpush.bf16.msra.mxu0 0
      %4280 = vmatpush.bf16.msra.mxu0 0
      %4281 = vmatpush.bf16.msra.mxu0 0
      %4282 = vmatpush.bf16.msra.mxu0 0
      %4283 = vmatpush.bf16.msra.mxu0 0
      %4284 = vmatpush.bf16.msra.mxu0 0
      %4285 = vmatpush.bf16.msra.mxu0 0
      %4286 = vmatpush.bf16.msra.mxu0 %v4259
      %4287 = vmatmul.bf16.gmra.mxu0 %v4256
      %v4288 = vpop.f32.mrf.mxu0
      %v4289 = vadd.f32 0.0, %v4288
      %v4290 = vpop.f32.mrf.mxu0
      %4291 = vdwg.mxu0
      %4292 = vmatpush.bf16.msra.mxu0 0
      %4293 = vmatpush.bf16.msra.mxu0 0
      %4294 = vmatpush.bf16.msra.mxu0 0
      %4295 = vmatpush.bf16.msra.mxu0 0
      %4296 = vmatpush.bf16.msra.mxu0 0
      %4297 = vmatpush.bf16.msra.mxu0 0
      %4298 = vmatpush.bf16.msra.mxu0 0
      %4299 = vmatpush.bf16.msra.mxu0 %v4262
      %4300 = vmatmul.bf16.gmra.mxu0 %v4256
      %v4301 = vpop.f32.mrf.mxu0
      %v4302 = vadd.f32 0.0, %v4301
      %v4303 = vpop.f32.mrf.mxu0
      %4304 = vdwg.mxu0
      %4305 = vmatpush.bf16.msra.mxu0 0
      %4306 = vmatpush.bf16.msra.mxu0 0
      %4307 = vmatpush.bf16.msra.mxu0 0
      %4308 = vmatpush.bf16.msra.mxu0 0
      %4309 = vmatpush.bf16.msra.mxu0 0
      %4310 = vmatpush.bf16.msra.mxu0 0
      %4311 = vmatpush.bf16.msra.mxu0 0
      %4312 = vmatpush.bf16.msra.mxu0 %v4265
      %4313 = vmatmul.bf16.gmra.mxu0 %v4256
      %v4314 = vpop.f32.mrf.mxu0
      %v4315 = vadd.f32 0.0, %v4314
      %v4316 = vpop.f32.mrf.mxu0
      %4317 = vdwg.mxu0
      %4318 = vmatpush.bf16.msra.mxu0 0
      %4319 = vmatpush.bf16.msra.mxu0 0
      %4320 = vmatpush.bf16.msra.mxu0 0
      %4321 = vmatpush.bf16.msra.mxu0 0
      %4322 = vmatpush.bf16.msra.mxu0 0
      %4323 = vmatpush.bf16.msra.mxu0 0
      %4324 = vmatpush.bf16.msra.mxu0 0
      %4325 = vmatpush.bf16.msra.mxu0 %v4268
      %4326 = vmatmul.bf16.gmra.mxu0 %v4256
      %v4327 = vpop.f32.mrf.mxu0
      %v4328 = vadd.f32 0.0, %v4327
      %v4329 = vpop.f32.mrf.mxu0
      %4330 = vdwg.mxu0
      %4331 = vmatpush.bf16.msra.mxu0 0
      %4332 = vmatpush.bf16.msra.mxu0 0
      %4333 = vmatpush.bf16.msra.mxu0 0
      %4334 = vmatpush.bf16.msra.mxu0 0
      %4335 = vmatpush.bf16.msra.mxu0 0
      %4336 = vmatpush.bf16.msra.mxu0 0
      %4337 = vmatpush.bf16.msra.mxu0 0
      %4338 = vmatpush.bf16.msra.mxu0 %v4271
      %4339 = vmatmul.bf16.gmra.mxu0 %v4256
      %v4340 = vpop.f32.mrf.mxu0
      %v4341 = vadd.f32 0.0, %v4340
      %v4342 = vpop.f32.mrf.mxu0
      %4343 = vdwg.mxu0
      %4344 = vmatpush.bf16.msra.mxu0 0
      %4345 = vmatpush.bf16.msra.mxu0 0
      %4346 = vmatpush.bf16.msra.mxu0 0
      %4347 = vmatpush.bf16.msra.mxu0 0
      %4348 = vmatpush.bf16.msra.mxu0 0
      %4349 = vmatpush.bf16.msra.mxu0 0
      %4350 = vmatpush.bf16.msra.mxu0 0
      %4351 = vmatpush.bf16.msra.mxu0 %v4274
      %4352 = vmatmul.bf16.gmra.mxu0 %v4256
      %v4353 = vpop.f32.mrf.mxu0
      %v4354 = vadd.f32 0.0, %v4353
      %v4355 = vpop.f32.mrf.mxu0
      %4356 = vdwg.mxu0
      %4357 = vmatpush.bf16.msra.mxu0 0
      %4358 = vmatpush.bf16.msra.mxu0 0
      %4359 = vmatpush.bf16.msra.mxu0 0
      %4360 = vmatpush.bf16.msra.mxu0 0
      %4361 = vmatpush.bf16.msra.mxu0 0
      %4362 = vmatpush.bf16.msra.mxu0 0
      %4363 = vmatpush.bf16.msra.mxu0 0
      %4364 = vmatpush.bf16.msra.mxu0 %v4277
      %4365 = vmatmul.bf16.gmra.mxu0 %v4256
      %v4366 = vpop.f32.mrf.mxu0
      %v4367 = vadd.f32 0.0, %v4366
      %v4368 = vpop.f32.mrf.mxu0
      %4369 = vdwg.mxu0
      %v4370 = vadd.f32 %v4182, %v4289
      %v4371 = vadd.f32 %v4183, %v4302
      %v4372 = vadd.f32 %v4184, %v4315
      %v4373 = vadd.f32 %v4185, %v4328
      %v4374 = vadd.f32 %v4186, %v4341
      %v4375 = vadd.f32 %v4187, %v4354
      %v4376 = vadd.f32 %v4188, %v4367
      %v4377 = vld [vmem:[%s246 + $0x4] sm:$0xff]
      %v4378 = vld [vmem:[%s246 + $0xc] sm:$0xff]
      %v4379 = vld [vmem:[%s246 + $0x14] sm:$0xff]
      %v4380 = vld [vmem:[%s246 + $0x1c] sm:$0xf]
      %4385 = vst [vmem:[#allocation1] ss:$2 sm:$0xff] %v4377
      %s4386 = scalar_lea.vmem [#allocation1], 16
      %4387 = vst [vmem:[%s4386] ss:$2 sm:$0xff] %v4378
      %s4388 = scalar_lea.vmem [#allocation1], 32
      %4389 = vst [vmem:[%s4388] ss:$2 sm:$0xff] %v4379
      %s4390 = scalar_lea.vmem [#allocation1], 48
      %4391 = vst [vmem:[%s4390] ss:$2 sm:$0xff] %v4380
      %v4392 = vld.sshfl [vmem:[#allocation1] sm:$0xff pattern:$0x75316420]
      %v4393 = vld.sshfl [vmem:[#allocation1 + $0x8] sm:$0xff pattern:$0x75316420]
      %v4394 = vld.sshfl [vmem:[#allocation1 + $0x10] sm:$0xff pattern:$0x75316420]
      %v4395 = vld.sshfl [vmem:[#allocation1 + $0x18] sm:$0xff pattern:$0x75316420]
      %v4396 = vld.sshfl [vmem:[#allocation1 + $0x20] sm:$0xff pattern:$0x75316420]
      %v4397 = vld.sshfl [vmem:[#allocation1 + $0x28] sm:$0xff pattern:$0x75316420]
      %v4398 = vld.sshfl [vmem:[#allocation1 + $0x30] sm:$0xff pattern:$0x75316420]
      %v4406 = vpack.c.bf16 %v4392, %v4392
      %v4407 = vpack.c.bf16 %v4393, %v4393
      %v4408 = vpack.c.bf16 %v4394, %v4394
      %v4409 = vpack.c.bf16 %v4395, %v4395
      %v4410 = vpack.c.bf16 %v4396, %v4396
      %v4411 = vpack.c.bf16 %v4397, %v4397
      %v4412 = vpack.c.bf16 %v4398, %v4398
      %s4413 = scalar_lea.vmem %s1, 44
      %v4414 = vld [vmem:[%s4413] sm:$0x3]
      %4422 = vrot.lane.b32.xlu0 %v4406, 45
      %v4423 = vpop.permute.xlu0 %4422
      %4424 = vrot.lane.b32.xlu0 %v4407, 45
      %v4425 = vpop.permute.xlu0 %4424
      %4426 = vrot.lane.b32.xlu0 %v4408, 45
      %v4427 = vpop.permute.xlu0 %4426
      %4428 = vrot.lane.b32.xlu0 %v4409, 45
      %v4429 = vpop.permute.xlu0 %4428
      %4430 = vrot.lane.b32.xlu0 %v4410, 45
      %v4431 = vpop.permute.xlu0 %4430
      %4432 = vrot.lane.b32.xlu0 %v4411, 45
      %v4433 = vpop.permute.xlu0 %4432
      %4434 = vrot.lane.b32.xlu0 %v4412, 45
      %v4435 = vpop.permute.xlu0 %4434
      %vm4436 = vcmask 367616
      %v4437 = vsel %vm4436, %v4423, %v4425
      %v4438 = vsel %vm4436, %v4425, %v4427
      %v4439 = vsel %vm4436, %v4427, %v4429
      %v4440 = vsel %vm4436, %v4429, %v4431
      %v4441 = vsel %vm4436, %v4431, %v4433
      %v4442 = vsel %vm4436, %v4433, %v4435
      %v4444 = vsel %vm365, %v4414, 0
      %v4447 = vsel %vm254, %v4437, 0
      %v4450 = vsel %vm254, %v4438, 0
      %v4453 = vsel %vm254, %v4439, 0
      %v4456 = vsel %vm254, %v4440, 0
      %v4459 = vsel %vm254, %v4441, 0
      %v4462 = vsel %vm254, %v4442, 0
      %v4465 = vsel %vm254, %v4435, 0
      %4467 = vmatpush.bf16.msra.mxu0 0
      %4468 = vmatpush.bf16.msra.mxu0 0
      %4469 = vmatpush.bf16.msra.mxu0 0
      %4470 = vmatpush.bf16.msra.mxu0 0
      %4471 = vmatpush.bf16.msra.mxu0 0
      %4472 = vmatpush.bf16.msra.mxu0 0
      %4473 = vmatpush.bf16.msra.mxu0 0
      %4474 = vmatpush.bf16.msra.mxu0 %v4447
      %4475 = vmatmul.bf16.gmra.mxu0 %v4444
      %v4476 = vpop.f32.mrf.mxu0
      %v4477 = vadd.f32 0.0, %v4476
      %v4478 = vpop.f32.mrf.mxu0
      %4479 = vdwg.mxu0
      %4480 = vmatpush.bf16.msra.mxu0 0
      %4481 = vmatpush.bf16.msra.mxu0 0
      %4482 = vmatpush.bf16.msra.mxu0 0
      %4483 = vmatpush.bf16.msra.mxu0 0
      %4484 = vmatpush.bf16.msra.mxu0 0
      %4485 = vmatpush.bf16.msra.mxu0 0
      %4486 = vmatpush.bf16.msra.mxu0 0
      %4487 = vmatpush.bf16.msra.mxu0 %v4450
      %4488 = vmatmul.bf16.gmra.mxu0 %v4444
      %v4489 = vpop.f32.mrf.mxu0
      %v4490 = vadd.f32 0.0, %v4489
      %v4491 = vpop.f32.mrf.mxu0
      %4492 = vdwg.mxu0
      %4493 = vmatpush.bf16.msra.mxu0 0
      %4494 = vmatpush.bf16.msra.mxu0 0
      %4495 = vmatpush.bf16.msra.mxu0 0
      %4496 = vmatpush.bf16.msra.mxu0 0
      %4497 = vmatpush.bf16.msra.mxu0 0
      %4498 = vmatpush.bf16.msra.mxu0 0
      %4499 = vmatpush.bf16.msra.mxu0 0
      %4500 = vmatpush.bf16.msra.mxu0 %v4453
      %4501 = vmatmul.bf16.gmra.mxu0 %v4444
      %v4502 = vpop.f32.mrf.mxu0
      %v4503 = vadd.f32 0.0, %v4502
      %v4504 = vpop.f32.mrf.mxu0
      %4505 = vdwg.mxu0
      %4506 = vmatpush.bf16.msra.mxu0 0
      %4507 = vmatpush.bf16.msra.mxu0 0
      %4508 = vmatpush.bf16.msra.mxu0 0
      %4509 = vmatpush.bf16.msra.mxu0 0
      %4510 = vmatpush.bf16.msra.mxu0 0
      %4511 = vmatpush.bf16.msra.mxu0 0
      %4512 = vmatpush.bf16.msra.mxu0 0
      %4513 = vmatpush.bf16.msra.mxu0 %v4456
      %4514 = vmatmul.bf16.gmra.mxu0 %v4444
      %v4515 = vpop.f32.mrf.mxu0
      %v4516 = vadd.f32 0.0, %v4515
      %v4517 = vpop.f32.mrf.mxu0
      %4518 = vdwg.mxu0
      %4519 = vmatpush.bf16.msra.mxu0 0
      %4520 = vmatpush.bf16.msra.mxu0 0
      %4521 = vmatpush.bf16.msra.mxu0 0
      %4522 = vmatpush.bf16.msra.mxu0 0
      %4523 = vmatpush.bf16.msra.mxu0 0
      %4524 = vmatpush.bf16.msra.mxu0 0
      %4525 = vmatpush.bf16.msra.mxu0 0
      %4526 = vmatpush.bf16.msra.mxu0 %v4459
      %4527 = vmatmul.bf16.gmra.mxu0 %v4444
      %v4528 = vpop.f32.mrf.mxu0
      %v4529 = vadd.f32 0.0, %v4528
      %v4530 = vpop.f32.mrf.mxu0
      %4531 = vdwg.mxu0
      %4532 = vmatpush.bf16.msra.mxu0 0
      %4533 = vmatpush.bf16.msra.mxu0 0
      %4534 = vmatpush.bf16.msra.mxu0 0
      %4535 = vmatpush.bf16.msra.mxu0 0
      %4536 = vmatpush.bf16.msra.mxu0 0
      %4537 = vmatpush.bf16.msra.mxu0 0
      %4538 = vmatpush.bf16.msra.mxu0 0
      %4539 = vmatpush.bf16.msra.mxu0 %v4462
      %4540 = vmatmul.bf16.gmra.mxu0 %v4444
      %v4541 = vpop.f32.mrf.mxu0
      %v4542 = vadd.f32 0.0, %v4541
      %v4543 = vpop.f32.mrf.mxu0
      %4544 = vdwg.mxu0
      %4545 = vmatpush.bf16.msra.mxu0 0
      %4546 = vmatpush.bf16.msra.mxu0 0
      %4547 = vmatpush.bf16.msra.mxu0 0
      %4548 = vmatpush.bf16.msra.mxu0 0
      %4549 = vmatpush.bf16.msra.mxu0 0
      %4550 = vmatpush.bf16.msra.mxu0 0
      %4551 = vmatpush.bf16.msra.mxu0 0
      %4552 = vmatpush.bf16.msra.mxu0 %v4465
      %4553 = vmatmul.bf16.gmra.mxu0 %v4444
      %v4554 = vpop.f32.mrf.mxu0
      %v4555 = vadd.f32 0.0, %v4554
      %v4556 = vpop.f32.mrf.mxu0
      %4557 = vdwg.mxu0
      %v4558 = vadd.f32 %v4370, %v4477
      %v4559 = vadd.f32 %v4371, %v4490
      %v4560 = vadd.f32 %v4372, %v4503
      %v4561 = vadd.f32 %v4373, %v4516
      %v4562 = vadd.f32 %v4374, %v4529
      %v4563 = vadd.f32 %v4375, %v4542
      %v4564 = vadd.f32 %v4376, %v4555
      %v4565 = vld [vmem:[%s246 + $0x4] sm:$0xff]
      %v4566 = vld [vmem:[%s246 + $0xc] sm:$0xff]
      %v4567 = vld [vmem:[%s246 + $0x14] sm:$0xff]
      %v4568 = vld [vmem:[%s246 + $0x1c] sm:$0xf]
      %4573 = vst [vmem:[#allocation1] ss:$2 sm:$0xff] %v4565
      %s4574 = scalar_lea.vmem [#allocation1], 16
      %4575 = vst [vmem:[%s4574] ss:$2 sm:$0xff] %v4566
      %s4576 = scalar_lea.vmem [#allocation1], 32
      %4577 = vst [vmem:[%s4576] ss:$2 sm:$0xff] %v4567
      %s4578 = scalar_lea.vmem [#allocation1], 48
      %4579 = vst [vmem:[%s4578] ss:$2 sm:$0xff] %v4568
      %v4580 = vld.sshfl [vmem:[#allocation1] sm:$0xff pattern:$0x75316420]
      %v4581 = vld.sshfl [vmem:[#allocation1 + $0x8] sm:$0xff pattern:$0x75316420]
      %v4582 = vld.sshfl [vmem:[#allocation1 + $0x10] sm:$0xff pattern:$0x75316420]
      %v4583 = vld.sshfl [vmem:[#allocation1 + $0x18] sm:$0xff pattern:$0x75316420]
      %v4584 = vld.sshfl [vmem:[#allocation1 + $0x20] sm:$0xff pattern:$0x75316420]
      %v4585 = vld.sshfl [vmem:[#allocation1 + $0x28] sm:$0xff pattern:$0x75316420]
      %v4586 = vld.sshfl [vmem:[#allocation1 + $0x30] sm:$0xff pattern:$0x75316420]
      %v4594 = vpack.c.bf16 %v4580, %v4580
      %v4595 = vpack.c.bf16 %v4581, %v4581
      %v4596 = vpack.c.bf16 %v4582, %v4582
      %v4597 = vpack.c.bf16 %v4583, %v4583
      %v4598 = vpack.c.bf16 %v4584, %v4584
      %v4599 = vpack.c.bf16 %v4585, %v4585
      %v4600 = vpack.c.bf16 %v4586, %v4586
      %s4601 = scalar_lea.vmem %s1, 46
      %v4602 = vld [vmem:[%s4601] sm:$0x3]
      %4610 = vrot.lane.b32.xlu0 %v4594, 44
      %v4611 = vpop.permute.xlu0 %4610
      %4612 = vrot.lane.b32.xlu0 %v4595, 44
      %v4613 = vpop.permute.xlu0 %4612
      %4614 = vrot.lane.b32.xlu0 %v4596, 44
      %v4615 = vpop.permute.xlu0 %4614
      %4616 = vrot.lane.b32.xlu0 %v4597, 44
      %v4617 = vpop.permute.xlu0 %4616
      %4618 = vrot.lane.b32.xlu0 %v4598, 44
      %v4619 = vpop.permute.xlu0 %4618
      %4620 = vrot.lane.b32.xlu0 %v4599, 44
      %v4621 = vpop.permute.xlu0 %4620
      %4622 = vrot.lane.b32.xlu0 %v4600, 44
      %v4623 = vpop.permute.xlu0 %4622
      %vm4624 = vcmask 359424
      %v4625 = vsel %vm4624, %v4611, %v4613
      %v4626 = vsel %vm4624, %v4613, %v4615
      %v4627 = vsel %vm4624, %v4615, %v4617
      %v4628 = vsel %vm4624, %v4617, %v4619
      %v4629 = vsel %vm4624, %v4619, %v4621
      %v4630 = vsel %vm4624, %v4621, %v4623
      %v4632 = vsel %vm365, %v4602, 0
      %v4635 = vsel %vm254, %v4625, 0
      %v4638 = vsel %vm254, %v4626, 0
      %v4641 = vsel %vm254, %v4627, 0
      %v4644 = vsel %vm254, %v4628, 0
      %v4647 = vsel %vm254, %v4629, 0
      %v4650 = vsel %vm254, %v4630, 0
      %v4653 = vsel %vm254, %v4623, 0
      %4655 = vmatpush.bf16.msra.mxu0 0
      %4656 = vmatpush.bf16.msra.mxu0 0
      %4657 = vmatpush.bf16.msra.mxu0 0
      %4658 = vmatpush.bf16.msra.mxu0 0
      %4659 = vmatpush.bf16.msra.mxu0 0
      %4660 = vmatpush.bf16.msra.mxu0 0
      %4661 = vmatpush.bf16.msra.mxu0 0
      %4662 = vmatpush.bf16.msra.mxu0 %v4635
      %4663 = vmatmul.bf16.gmra.mxu0 %v4632
      %v4664 = vpop.f32.mrf.mxu0
      %v4665 = vadd.f32 0.0, %v4664
      %v4666 = vpop.f32.mrf.mxu0
      %4667 = vdwg.mxu0
      %4668 = vmatpush.bf16.msra.mxu0 0
      %4669 = vmatpush.bf16.msra.mxu0 0
      %4670 = vmatpush.bf16.msra.mxu0 0
      %4671 = vmatpush.bf16.msra.mxu0 0
      %4672 = vmatpush.bf16.msra.mxu0 0
      %4673 = vmatpush.bf16.msra.mxu0 0
      %4674 = vmatpush.bf16.msra.mxu0 0
      %4675 = vmatpush.bf16.msra.mxu0 %v4638
      %4676 = vmatmul.bf16.gmra.mxu0 %v4632
      %v4677 = vpop.f32.mrf.mxu0
      %v4678 = vadd.f32 0.0, %v4677
      %v4679 = vpop.f32.mrf.mxu0
      %4680 = vdwg.mxu0
      %4681 = vmatpush.bf16.msra.mxu0 0
      %4682 = vmatpush.bf16.msra.mxu0 0
      %4683 = vmatpush.bf16.msra.mxu0 0
      %4684 = vmatpush.bf16.msra.mxu0 0
      %4685 = vmatpush.bf16.msra.mxu0 0
      %4686 = vmatpush.bf16.msra.mxu0 0
      %4687 = vmatpush.bf16.msra.mxu0 0
      %4688 = vmatpush.bf16.msra.mxu0 %v4641
      %4689 = vmatmul.bf16.gmra.mxu0 %v4632
      %v4690 = vpop.f32.mrf.mxu0
      %v4691 = vadd.f32 0.0, %v4690
      %v4692 = vpop.f32.mrf.mxu0
      %4693 = vdwg.mxu0
      %4694 = vmatpush.bf16.msra.mxu0 0
      %4695 = vmatpush.bf16.msra.mxu0 0
      %4696 = vmatpush.bf16.msra.mxu0 0
      %4697 = vmatpush.bf16.msra.mxu0 0
      %4698 = vmatpush.bf16.msra.mxu0 0
      %4699 = vmatpush.bf16.msra.mxu0 0
      %4700 = vmatpush.bf16.msra.mxu0 0
      %4701 = vmatpush.bf16.msra.mxu0 %v4644
      %4702 = vmatmul.bf16.gmra.mxu0 %v4632
      %v4703 = vpop.f32.mrf.mxu0
      %v4704 = vadd.f32 0.0, %v4703
      %v4705 = vpop.f32.mrf.mxu0
      %4706 = vdwg.mxu0
      %4707 = vmatpush.bf16.msra.mxu0 0
      %4708 = vmatpush.bf16.msra.mxu0 0
      %4709 = vmatpush.bf16.msra.mxu0 0
      %4710 = vmatpush.bf16.msra.mxu0 0
      %4711 = vmatpush.bf16.msra.mxu0 0
      %4712 = vmatpush.bf16.msra.mxu0 0
      %4713 = vmatpush.bf16.msra.mxu0 0
      %4714 = vmatpush.bf16.msra.mxu0 %v4647
      %4715 = vmatmul.bf16.gmra.mxu0 %v4632
      %v4716 = vpop.f32.mrf.mxu0
      %v4717 = vadd.f32 0.0, %v4716
      %v4718 = vpop.f32.mrf.mxu0
      %4719 = vdwg.mxu0
      %4720 = vmatpush.bf16.msra.mxu0 0
      %4721 = vmatpush.bf16.msra.mxu0 0
      %4722 = vmatpush.bf16.msra.mxu0 0
      %4723 = vmatpush.bf16.msra.mxu0 0
      %4724 = vmatpush.bf16.msra.mxu0 0
      %4725 = vmatpush.bf16.msra.mxu0 0
      %4726 = vmatpush.bf16.msra.mxu0 0
      %4727 = vmatpush.bf16.msra.mxu0 %v4650
      %4728 = vmatmul.bf16.gmra.mxu0 %v4632
      %v4729 = vpop.f32.mrf.mxu0
      %v4730 = vadd.f32 0.0, %v4729
      %v4731 = vpop.f32.mrf.mxu0
      %4732 = vdwg.mxu0
      %4733 = vmatpush.bf16.msra.mxu0 0
      %4734 = vmatpush.bf16.msra.mxu0 0
      %4735 = vmatpush.bf16.msra.mxu0 0
      %4736 = vmatpush.bf16.msra.mxu0 0
      %4737 = vmatpush.bf16.msra.mxu0 0
      %4738 = vmatpush.bf16.msra.mxu0 0
      %4739 = vmatpush.bf16.msra.mxu0 0
      %4740 = vmatpush.bf16.msra.mxu0 %v4653
      %4741 = vmatmul.bf16.gmra.mxu0 %v4632
      %v4742 = vpop.f32.mrf.mxu0
      %v4743 = vadd.f32 0.0, %v4742
      %v4744 = vpop.f32.mrf.mxu0
      %4745 = vdwg.mxu0
      %v4746 = vadd.f32 %v4558, %v4665
      %v4747 = vadd.f32 %v4559, %v4678
      %v4748 = vadd.f32 %v4560, %v4691
      %v4749 = vadd.f32 %v4561, %v4704
      %v4750 = vadd.f32 %v4562, %v4717
      %v4751 = vadd.f32 %v4563, %v4730
      %v4752 = vadd.f32 %v4564, %v4743
      %v4753 = vld [vmem:[%s246 + $0x4] sm:$0xff]
      %v4754 = vld [vmem:[%s246 + $0xc] sm:$0xff]
      %v4755 = vld [vmem:[%s246 + $0x14] sm:$0xff]
      %v4756 = vld [vmem:[%s246 + $0x1c] sm:$0xf]
      %4761 = vst [vmem:[#allocation1] ss:$2 sm:$0xff] %v4753
      %s4762 = scalar_lea.vmem [#allocation1], 16
      %4763 = vst [vmem:[%s4762] ss:$2 sm:$0xff] %v4754
      %s4764 = scalar_lea.vmem [#allocation1], 32
      %4765 = vst [vmem:[%s4764] ss:$2 sm:$0xff] %v4755
      %s4766 = scalar_lea.vmem [#allocation1], 48
      %4767 = vst [vmem:[%s4766] ss:$2 sm:$0xff] %v4756
      %v4768 = vld.sshfl [vmem:[#allocation1] sm:$0xff pattern:$0x75316420]
      %v4769 = vld.sshfl [vmem:[#allocation1 + $0x8] sm:$0xff pattern:$0x75316420]
      %v4770 = vld.sshfl [vmem:[#allocation1 + $0x10] sm:$0xff pattern:$0x75316420]
      %v4771 = vld.sshfl [vmem:[#allocation1 + $0x18] sm:$0xff pattern:$0x75316420]
      %v4772 = vld.sshfl [vmem:[#allocation1 + $0x20] sm:$0xff pattern:$0x75316420]
      %v4773 = vld.sshfl [vmem:[#allocation1 + $0x28] sm:$0xff pattern:$0x75316420]
      %v4774 = vld.sshfl [vmem:[#allocation1 + $0x30] sm:$0xff pattern:$0x75316420]
      %v4782 = vpack.c.bf16 %v4768, %v4768
      %v4783 = vpack.c.bf16 %v4769, %v4769
      %v4784 = vpack.c.bf16 %v4770, %v4770
      %v4785 = vpack.c.bf16 %v4771, %v4771
      %v4786 = vpack.c.bf16 %v4772, %v4772
      %v4787 = vpack.c.bf16 %v4773, %v4773
      %v4788 = vpack.c.bf16 %v4774, %v4774
      %s4789 = scalar_lea.vmem %s1, 48
      %v4790 = vld [vmem:[%s4789] sm:$0x3]
      %4798 = vrot.lane.b32.xlu0 %v4782, 36
      %v4799 = vpop.permute.xlu0 %4798
      %4800 = vrot.lane.b32.xlu0 %v4783, 36
      %v4801 = vpop.permute.xlu0 %4800
      %4802 = vrot.lane.b32.xlu0 %v4784, 36
      %v4803 = vpop.permute.xlu0 %4802
      %4804 = vrot.lane.b32.xlu0 %v4785, 36
      %v4805 = vpop.permute.xlu0 %4804
      %4806 = vrot.lane.b32.xlu0 %v4786, 36
      %v4807 = vpop.permute.xlu0 %4806
      %4808 = vrot.lane.b32.xlu0 %v4787, 36
      %v4809 = vpop.permute.xlu0 %4808
      %4810 = vrot.lane.b32.xlu0 %v4788, 36
      %v4811 = vpop.permute.xlu0 %4810
      %vm4812 = vcmask 293888
      %v4813 = vsel %vm4812, %v4799, %v4801
      %v4814 = vsel %vm4812, %v4801, %v4803
      %v4815 = vsel %vm4812, %v4803, %v4805
      %v4816 = vsel %vm4812, %v4805, %v4807
      %v4817 = vsel %vm4812, %v4807, %v4809
      %v4818 = vsel %vm4812, %v4809, %v4811
      %v4820 = vsel %vm365, %v4790, 0
      %v4823 = vsel %vm254, %v4813, 0
      %v4826 = vsel %vm254, %v4814, 0
      %v4829 = vsel %vm254, %v4815, 0
      %v4832 = vsel %vm254, %v4816, 0
      %v4835 = vsel %vm254, %v4817, 0
      %v4838 = vsel %vm254, %v4818, 0
      %v4841 = vsel %vm254, %v4811, 0
      %4843 = vmatpush.bf16.msra.mxu0 0
      %4844 = vmatpush.bf16.msra.mxu0 0
      %4845 = vmatpush.bf16.msra.mxu0 0
      %4846 = vmatpush.bf16.msra.mxu0 0
      %4847 = vmatpush.bf16.msra.mxu0 0
      %4848 = vmatpush.bf16.msra.mxu0 0
      %4849 = vmatpush.bf16.msra.mxu0 0
      %4850 = vmatpush.bf16.msra.mxu0 %v4823
      %4851 = vmatmul.bf16.gmra.mxu0 %v4820
      %v4852 = vpop.f32.mrf.mxu0
      %v4853 = vadd.f32 0.0, %v4852
      %v4854 = vpop.f32.mrf.mxu0
      %4855 = vdwg.mxu0
      %4856 = vmatpush.bf16.msra.mxu0 0
      %4857 = vmatpush.bf16.msra.mxu0 0
      %4858 = vmatpush.bf16.msra.mxu0 0
      %4859 = vmatpush.bf16.msra.mxu0 0
      %4860 = vmatpush.bf16.msra.mxu0 0
      %4861 = vmatpush.bf16.msra.mxu0 0
      %4862 = vmatpush.bf16.msra.mxu0 0
      %4863 = vmatpush.bf16.msra.mxu0 %v4826
      %4864 = vmatmul.bf16.gmra.mxu0 %v4820
      %v4865 = vpop.f32.mrf.mxu0
      %v4866 = vadd.f32 0.0, %v4865
      %v4867 = vpop.f32.mrf.mxu0
      %4868 = vdwg.mxu0
      %4869 = vmatpush.bf16.msra.mxu0 0
      %4870 = vmatpush.bf16.msra.mxu0 0
      %4871 = vmatpush.bf16.msra.mxu0 0
      %4872 = vmatpush.bf16.msra.mxu0 0
      %4873 = vmatpush.bf16.msra.mxu0 0
      %4874 = vmatpush.bf16.msra.mxu0 0
      %4875 = vmatpush.bf16.msra.mxu0 0
      %4876 = vmatpush.bf16.msra.mxu0 %v4829
      %4877 = vmatmul.bf16.gmra.mxu0 %v4820
      %v4878 = vpop.f32.mrf.mxu0
      %v4879 = vadd.f32 0.0, %v4878
      %v4880 = vpop.f32.mrf.mxu0
      %4881 = vdwg.mxu0
      %4882 = vmatpush.bf16.msra.mxu0 0
      %4883 = vmatpush.bf16.msra.mxu0 0
      %4884 = vmatpush.bf16.msra.mxu0 0
      %4885 = vmatpush.bf16.msra.mxu0 0
      %4886 = vmatpush.bf16.msra.mxu0 0
      %4887 = vmatpush.bf16.msra.mxu0 0
      %4888 = vmatpush.bf16.msra.mxu0 0
      %4889 = vmatpush.bf16.msra.mxu0 %v4832
      %4890 = vmatmul.bf16.gmra.mxu0 %v4820
      %v4891 = vpop.f32.mrf.mxu0
      %v4892 = vadd.f32 0.0, %v4891
      %v4893 = vpop.f32.mrf.mxu0
      %4894 = vdwg.mxu0
      %4895 = vmatpush.bf16.msra.mxu0 0
      %4896 = vmatpush.bf16.msra.mxu0 0
      %4897 = vmatpush.bf16.msra.mxu0 0
      %4898 = vmatpush.bf16.msra.mxu0 0
      %4899 = vmatpush.bf16.msra.mxu0 0
      %4900 = vmatpush.bf16.msra.mxu0 0
      %4901 = vmatpush.bf16.msra.mxu0 0
      %4902 = vmatpush.bf16.msra.mxu0 %v4835
      %4903 = vmatmul.bf16.gmra.mxu0 %v4820
      %v4904 = vpop.f32.mrf.mxu0
      %v4905 = vadd.f32 0.0, %v4904
      %v4906 = vpop.f32.mrf.mxu0
      %4907 = vdwg.mxu0
      %4908 = vmatpush.bf16.msra.mxu0 0
      %4909 = vmatpush.bf16.msra.mxu0 0
      %4910 = vmatpush.bf16.msra.mxu0 0
      %4911 = vmatpush.bf16.msra.mxu0 0
      %4912 = vmatpush.bf16.msra.mxu0 0
      %4913 = vmatpush.bf16.msra.mxu0 0
      %4914 = vmatpush.bf16.msra.mxu0 0
      %4915 = vmatpush.bf16.msra.mxu0 %v4838
      %4916 = vmatmul.bf16.gmra.mxu0 %v4820
      %v4917 = vpop.f32.mrf.mxu0
      %v4918 = vadd.f32 0.0, %v4917
      %v4919 = vpop.f32.mrf.mxu0
      %4920 = vdwg.mxu0
      %4921 = vmatpush.bf16.msra.mxu0 0
      %4922 = vmatpush.bf16.msra.mxu0 0
      %4923 = vmatpush.bf16.msra.mxu0 0
      %4924 = vmatpush.bf16.msra.mxu0 0
      %4925 = vmatpush.bf16.msra.mxu0 0
      %4926 = vmatpush.bf16.msra.mxu0 0
      %4927 = vmatpush.bf16.msra.mxu0 0
      %4928 = vmatpush.bf16.msra.mxu0 %v4841
      %4929 = vmatmul.bf16.gmra.mxu0 %v4820
      %v4930 = vpop.f32.mrf.mxu0
      %v4931 = vadd.f32 0.0, %v4930
      %v4932 = vpop.f32.mrf.mxu0
      %4933 = vdwg.mxu0
      %v4934 = vadd.f32 %v4746, %v4853
      %v4935 = vadd.f32 %v4747, %v4866
      %v4936 = vadd.f32 %v4748, %v4879
      %v4937 = vadd.f32 %v4749, %v4892
      %v4938 = vadd.f32 %v4750, %v4905
      %v4939 = vadd.f32 %v4751, %v4918
      %v4940 = vadd.f32 %v4752, %v4931
      %v4941 = vld [vmem:[%s246 + $0x4] sm:$0xff]
      %v4942 = vld [vmem:[%s246 + $0xc] sm:$0xff]
      %v4943 = vld [vmem:[%s246 + $0x14] sm:$0xff]
      %v4944 = vld [vmem:[%s246 + $0x1c] sm:$0xf]
      %4949 = vst [vmem:[#allocation1] ss:$2 sm:$0xff] %v4941
      %s4950 = scalar_lea.vmem [#allocation1], 16
      %4951 = vst [vmem:[%s4950] ss:$2 sm:$0xff] %v4942
      %s4952 = scalar_lea.vmem [#allocation1], 32
      %4953 = vst [vmem:[%s4952] ss:$2 sm:$0xff] %v4943
      %s4954 = scalar_lea.vmem [#allocation1], 48
      %4955 = vst [vmem:[%s4954] ss:$2 sm:$0xff] %v4944
      %v4956 = vld.sshfl [vmem:[#allocation1] sm:$0xff pattern:$0x75316420]
      %v4957 = vld.sshfl [vmem:[#allocation1 + $0x8] sm:$0xff pattern:$0x75316420]
      %v4958 = vld.sshfl [vmem:[#allocation1 + $0x10] sm:$0xff pattern:$0x75316420]
      %v4959 = vld.sshfl [vmem:[#allocation1 + $0x18] sm:$0xff pattern:$0x75316420]
      %v4960 = vld.sshfl [vmem:[#allocation1 + $0x20] sm:$0xff pattern:$0x75316420]
      %v4961 = vld.sshfl [vmem:[#allocation1 + $0x28] sm:$0xff pattern:$0x75316420]
      %v4962 = vld.sshfl [vmem:[#allocation1 + $0x30] sm:$0xff pattern:$0x75316420]
      %v4970 = vpack.c.bf16 %v4956, %v4956
      %v4971 = vpack.c.bf16 %v4957, %v4957
      %v4972 = vpack.c.bf16 %v4958, %v4958
      %v4973 = vpack.c.bf16 %v4959, %v4959
      %v4974 = vpack.c.bf16 %v4960, %v4960
      %v4975 = vpack.c.bf16 %v4961, %v4961
      %v4976 = vpack.c.bf16 %v4962, %v4962
      %s4977 = scalar_lea.vmem %s1, 50
      %v4978 = vld [vmem:[%s4977] sm:$0x3]
      %4986 = vrot.lane.b32.xlu0 %v4970, 35
      %v4987 = vpop.permute.xlu0 %4986
      %4988 = vrot.lane.b32.xlu0 %v4971, 35
      %v4989 = vpop.permute.xlu0 %4988
      %4990 = vrot.lane.b32.xlu0 %v4972, 35
      %v4991 = vpop.permute.xlu0 %4990
      %4992 = vrot.lane.b32.xlu0 %v4973, 35
      %v4993 = vpop.permute.xlu0 %4992
      %4994 = vrot.lane.b32.xlu0 %v4974, 35
      %v4995 = vpop.permute.xlu0 %4994
      %4996 = vrot.lane.b32.xlu0 %v4975, 35
      %v4997 = vpop.permute.xlu0 %4996
      %4998 = vrot.lane.b32.xlu0 %v4976, 35
      %v4999 = vpop.permute.xlu0 %4998
      %vm5000 = vcmask 285696
      %v5001 = vsel %vm5000, %v4987, %v4989
      %v5002 = vsel %vm5000, %v4989, %v4991
      %v5003 = vsel %vm5000, %v4991, %v4993
      %v5004 = vsel %vm5000, %v4993, %v4995
      %v5005 = vsel %vm5000, %v4995, %v4997
      %v5006 = vsel %vm5000, %v4997, %v4999
      %v5008 = vsel %vm365, %v4978, 0
      %v5011 = vsel %vm254, %v5001, 0
      %v5014 = vsel %vm254, %v5002, 0
      %v5017 = vsel %vm254, %v5003, 0
      %v5020 = vsel %vm254, %v5004, 0
      %v5023 = vsel %vm254, %v5005, 0
      %v5026 = vsel %vm254, %v5006, 0
      %v5029 = vsel %vm254, %v4999, 0
      %5031 = vmatpush.bf16.msra.mxu0 0
      %5032 = vmatpush.bf16.msra.mxu0 0
      %5033 = vmatpush.bf16.msra.mxu0 0
      %5034 = vmatpush.bf16.msra.mxu0 0
      %5035 = vmatpush.bf16.msra.mxu0 0
      %5036 = vmatpush.bf16.msra.mxu0 0
      %5037 = vmatpush.bf16.msra.mxu0 0
      %5038 = vmatpush.bf16.msra.mxu0 %v5011
      %5039 = vmatmul.bf16.gmra.mxu0 %v5008
      %v5040 = vpop.f32.mrf.mxu0
      %v5041 = vadd.f32 0.0, %v5040
      %v5042 = vpop.f32.mrf.mxu0
      %5043 = vdwg.mxu0
      %5044 = vmatpush.bf16.msra.mxu0 0
      %5045 = vmatpush.bf16.msra.mxu0 0
      %5046 = vmatpush.bf16.msra.mxu0 0
      %5047 = vmatpush.bf16.msra.mxu0 0
      %5048 = vmatpush.bf16.msra.mxu0 0
      %5049 = vmatpush.bf16.msra.mxu0 0
      %5050 = vmatpush.bf16.msra.mxu0 0
      %5051 = vmatpush.bf16.msra.mxu0 %v5014
      %5052 = vmatmul.bf16.gmra.mxu0 %v5008
      %v5053 = vpop.f32.mrf.mxu0
      %v5054 = vadd.f32 0.0, %v5053
      %v5055 = vpop.f32.mrf.mxu0
      %5056 = vdwg.mxu0
      %5057 = vmatpush.bf16.msra.mxu0 0
      %5058 = vmatpush.bf16.msra.mxu0 0
      %5059 = vmatpush.bf16.msra.mxu0 0
      %5060 = vmatpush.bf16.msra.mxu0 0
      %5061 = vmatpush.bf16.msra.mxu0 0
      %5062 = vmatpush.bf16.msra.mxu0 0
      %5063 = vmatpush.bf16.msra.mxu0 0
      %5064 = vmatpush.bf16.msra.mxu0 %v5017
      %5065 = vmatmul.bf16.gmra.mxu0 %v5008
      %v5066 = vpop.f32.mrf.mxu0
      %v5067 = vadd.f32 0.0, %v5066
      %v5068 = vpop.f32.mrf.mxu0
      %5069 = vdwg.mxu0
      %5070 = vmatpush.bf16.msra.mxu0 0
      %5071 = vmatpush.bf16.msra.mxu0 0
      %5072 = vmatpush.bf16.msra.mxu0 0
      %5073 = vmatpush.bf16.msra.mxu0 0
      %5074 = vmatpush.bf16.msra.mxu0 0
      %5075 = vmatpush.bf16.msra.mxu0 0
      %5076 = vmatpush.bf16.msra.mxu0 0
      %5077 = vmatpush.bf16.msra.mxu0 %v5020
      %5078 = vmatmul.bf16.gmra.mxu0 %v5008
      %v5079 = vpop.f32.mrf.mxu0
      %v5080 = vadd.f32 0.0, %v5079
      %v5081 = vpop.f32.mrf.mxu0
      %5082 = vdwg.mxu0
      %5083 = vmatpush.bf16.msra.mxu0 0
      %5084 = vmatpush.bf16.msra.mxu0 0
      %5085 = vmatpush.bf16.msra.mxu0 0
      %5086 = vmatpush.bf16.msra.mxu0 0
      %5087 = vmatpush.bf16.msra.mxu0 0
      %5088 = vmatpush.bf16.msra.mxu0 0
      %5089 = vmatpush.bf16.msra.mxu0 0
      %5090 = vmatpush.bf16.msra.mxu0 %v5023
      %5091 = vmatmul.bf16.gmra.mxu0 %v5008
      %v5092 = vpop.f32.mrf.mxu0
      %v5093 = vadd.f32 0.0, %v5092
      %v5094 = vpop.f32.mrf.mxu0
      %5095 = vdwg.mxu0
      %5096 = vmatpush.bf16.msra.mxu0 0
      %5097 = vmatpush.bf16.msra.mxu0 0
      %5098 = vmatpush.bf16.msra.mxu0 0
      %5099 = vmatpush.bf16.msra.mxu0 0
      %5100 = vmatpush.bf16.msra.mxu0 0
      %5101 = vmatpush.bf16.msra.mxu0 0
      %5102 = vmatpush.bf16.msra.mxu0 0
      %5103 = vmatpush.bf16.msra.mxu0 %v5026
      %5104 = vmatmul.bf16.gmra.mxu0 %v5008
      %v5105 = vpop.f32.mrf.mxu0
      %v5106 = vadd.f32 0.0, %v5105
      %v5107 = vpop.f32.mrf.mxu0
      %5108 = vdwg.mxu0
      %5109 = vmatpush.bf16.msra.mxu0 0
      %5110 = vmatpush.bf16.msra.mxu0 0
      %5111 = vmatpush.bf16.msra.mxu0 0
      %5112 = vmatpush.bf16.msra.mxu0 0
      %5113 = vmatpush.bf16.msra.mxu0 0
      %5114 = vmatpush.bf16.msra.mxu0 0
      %5115 = vmatpush.bf16.msra.mxu0 0
      %5116 = vmatpush.bf16.msra.mxu0 %v5029
      %5117 = vmatmul.bf16.gmra.mxu0 %v5008
      %v5118 = vpop.f32.mrf.mxu0
      %v5119 = vadd.f32 0.0, %v5118
      %v5120 = vpop.f32.mrf.mxu0
      %5121 = vdwg.mxu0
      %v5122 = vadd.f32 %v4934, %v5041
      %v5123 = vadd.f32 %v4935, %v5054
      %v5124 = vadd.f32 %v4936, %v5067
      %v5125 = vadd.f32 %v4937, %v5080
      %v5126 = vadd.f32 %v4938, %v5093
      %v5127 = vadd.f32 %v4939, %v5106
      %v5128 = vadd.f32 %v4940, %v5119
      %v5129 = vld [vmem:[%s246 + $0x4] sm:$0xff]
      %v5130 = vld [vmem:[%s246 + $0xc] sm:$0xff]
      %v5131 = vld [vmem:[%s246 + $0x14] sm:$0xff]
      %v5132 = vld [vmem:[%s246 + $0x1c] sm:$0xf]
      %5137 = vst [vmem:[#allocation1] ss:$2 sm:$0xff] %v5129
      %s5138 = scalar_lea.vmem [#allocation1], 16
      %5139 = vst [vmem:[%s5138] ss:$2 sm:$0xff] %v5130
      %s5140 = scalar_lea.vmem [#allocation1], 32
      %5141 = vst [vmem:[%s5140] ss:$2 sm:$0xff] %v5131
      %s5142 = scalar_lea.vmem [#allocation1], 48
      %5143 = vst [vmem:[%s5142] ss:$2 sm:$0xff] %v5132
      %v5144 = vld.sshfl [vmem:[#allocation1] sm:$0xff pattern:$0x75316420]
      %v5145 = vld.sshfl [vmem:[#allocation1 + $0x8] sm:$0xff pattern:$0x75316420]
      %v5146 = vld.sshfl [vmem:[#allocation1 + $0x10] sm:$0xff pattern:$0x75316420]
      %v5147 = vld.sshfl [vmem:[#allocation1 + $0x18] sm:$0xff pattern:$0x75316420]
      %v5148 = vld.sshfl [vmem:[#allocation1 + $0x20] sm:$0xff pattern:$0x75316420]
      %v5149 = vld.sshfl [vmem:[#allocation1 + $0x28] sm:$0xff pattern:$0x75316420]
      %v5150 = vld.sshfl [vmem:[#allocation1 + $0x30] sm:$0xff pattern:$0x75316420]
      %v5158 = vpack.c.bf16 %v5144, %v5144
      %v5159 = vpack.c.bf16 %v5145, %v5145
      %v5160 = vpack.c.bf16 %v5146, %v5146
      %v5161 = vpack.c.bf16 %v5147, %v5147
      %v5162 = vpack.c.bf16 %v5148, %v5148
      %v5163 = vpack.c.bf16 %v5149, %v5149
      %v5164 = vpack.c.bf16 %v5150, %v5150
      %s5165 = scalar_lea.vmem %s1, 52
      %v5166 = vld [vmem:[%s5165] sm:$0x3]
      %5174 = vrot.lane.b32.xlu0 %v5158, 34
      %v5175 = vpop.permute.xlu0 %5174
      %5176 = vrot.lane.b32.xlu0 %v5159, 34
      %v5177 = vpop.permute.xlu0 %5176
      %5178 = vrot.lane.b32.xlu0 %v5160, 34
      %v5179 = vpop.permute.xlu0 %5178
      %5180 = vrot.lane.b32.xlu0 %v5161, 34
      %v5181 = vpop.permute.xlu0 %5180
      %5182 = vrot.lane.b32.xlu0 %v5162, 34
      %v5183 = vpop.permute.xlu0 %5182
      %5184 = vrot.lane.b32.xlu0 %v5163, 34
      %v5185 = vpop.permute.xlu0 %5184
      %5186 = vrot.lane.b32.xlu0 %v5164, 34
      %v5187 = vpop.permute.xlu0 %5186
      %vm5188 = vcmask 277504
      %v5189 = vsel %vm5188, %v5175, %v5177
      %v5190 = vsel %vm5188, %v5177, %v5179
      %v5191 = vsel %vm5188, %v5179, %v5181
      %v5192 = vsel %vm5188, %v5181, %v5183
      %v5193 = vsel %vm5188, %v5183, %v5185
      %v5194 = vsel %vm5188, %v5185, %v5187
      %v5196 = vsel %vm365, %v5166, 0
      %v5199 = vsel %vm254, %v5189, 0
      %v5202 = vsel %vm254, %v5190, 0
      %v5205 = vsel %vm254, %v5191, 0
      %v5208 = vsel %vm254, %v5192, 0
      %v5211 = vsel %vm254, %v5193, 0
      %v5214 = vsel %vm254, %v5194, 0
      %v5217 = vsel %vm254, %v5187, 0
      %5219 = vmatpush.bf16.msra.mxu0 0
      %5220 = vmatpush.bf16.msra.mxu0 0
      %5221 = vmatpush.bf16.msra.mxu0 0
      %5222 = vmatpush.bf16.msra.mxu0 0
      %5223 = vmatpush.bf16.msra.mxu0 0
      %5224 = vmatpush.bf16.msra.mxu0 0
      %5225 = vmatpush.bf16.msra.mxu0 0
      %5226 = vmatpush.bf16.msra.mxu0 %v5199
      %5227 = vmatmul.bf16.gmra.mxu0 %v5196
      %v5228 = vpop.f32.mrf.mxu0
      %v5229 = vadd.f32 0.0, %v5228
      %v5230 = vpop.f32.mrf.mxu0
      %5231 = vdwg.mxu0
      %5232 = vmatpush.bf16.msra.mxu0 0
      %5233 = vmatpush.bf16.msra.mxu0 0
      %5234 = vmatpush.bf16.msra.mxu0 0
      %5235 = vmatpush.bf16.msra.mxu0 0
      %5236 = vmatpush.bf16.msra.mxu0 0
      %5237 = vmatpush.bf16.msra.mxu0 0
      %5238 = vmatpush.bf16.msra.mxu0 0
      %5239 = vmatpush.bf16.msra.mxu0 %v5202
      %5240 = vmatmul.bf16.gmra.mxu0 %v5196
      %v5241 = vpop.f32.mrf.mxu0
      %v5242 = vadd.f32 0.0, %v5241
      %v5243 = vpop.f32.mrf.mxu0
      %5244 = vdwg.mxu0
      %5245 = vmatpush.bf16.msra.mxu0 0
      %5246 = vmatpush.bf16.msra.mxu0 0
      %5247 = vmatpush.bf16.msra.mxu0 0
      %5248 = vmatpush.bf16.msra.mxu0 0
      %5249 = vmatpush.bf16.msra.mxu0 0
      %5250 = vmatpush.bf16.msra.mxu0 0
      %5251 = vmatpush.bf16.msra.mxu0 0
      %5252 = vmatpush.bf16.msra.mxu0 %v5205
      %5253 = vmatmul.bf16.gmra.mxu0 %v5196
      %v5254 = vpop.f32.mrf.mxu0
      %v5255 = vadd.f32 0.0, %v5254
      %v5256 = vpop.f32.mrf.mxu0
      %5257 = vdwg.mxu0
      %5258 = vmatpush.bf16.msra.mxu0 0
      %5259 = vmatpush.bf16.msra.mxu0 0
      %5260 = vmatpush.bf16.msra.mxu0 0
      %5261 = vmatpush.bf16.msra.mxu0 0
      %5262 = vmatpush.bf16.msra.mxu0 0
      %5263 = vmatpush.bf16.msra.mxu0 0
      %5264 = vmatpush.bf16.msra.mxu0 0
      %5265 = vmatpush.bf16.msra.mxu0 %v5208
      %5266 = vmatmul.bf16.gmra.mxu0 %v5196
      %v5267 = vpop.f32.mrf.mxu0
      %v5268 = vadd.f32 0.0, %v5267
      %v5269 = vpop.f32.mrf.mxu0
      %5270 = vdwg.mxu0
      %5271 = vmatpush.bf16.msra.mxu0 0
      %5272 = vmatpush.bf16.msra.mxu0 0
      %5273 = vmatpush.bf16.msra.mxu0 0
      %5274 = vmatpush.bf16.msra.mxu0 0
      %5275 = vmatpush.bf16.msra.mxu0 0
      %5276 = vmatpush.bf16.msra.mxu0 0
      %5277 = vmatpush.bf16.msra.mxu0 0
      %5278 = vmatpush.bf16.msra.mxu0 %v5211
      %5279 = vmatmul.bf16.gmra.mxu0 %v5196
      %v5280 = vpop.f32.mrf.mxu0
      %v5281 = vadd.f32 0.0, %v5280
      %v5282 = vpop.f32.mrf.mxu0
      %5283 = vdwg.mxu0
      %5284 = vmatpush.bf16.msra.mxu0 0
      %5285 = vmatpush.bf16.msra.mxu0 0
      %5286 = vmatpush.bf16.msra.mxu0 0
      %5287 = vmatpush.bf16.msra.mxu0 0
      %5288 = vmatpush.bf16.msra.mxu0 0
      %5289 = vmatpush.bf16.msra.mxu0 0
      %5290 = vmatpush.bf16.msra.mxu0 0
      %5291 = vmatpush.bf16.msra.mxu0 %v5214
      %5292 = vmatmul.bf16.gmra.mxu0 %v5196
      %v5293 = vpop.f32.mrf.mxu0
      %v5294 = vadd.f32 0.0, %v5293
      %v5295 = vpop.f32.mrf.mxu0
      %5296 = vdwg.mxu0
      %5297 = vmatpush.bf16.msra.mxu0 0
      %5298 = vmatpush.bf16.msra.mxu0 0
      %5299 = vmatpush.bf16.msra.mxu0 0
      %5300 = vmatpush.bf16.msra.mxu0 0
      %5301 = vmatpush.bf16.msra.mxu0 0
      %5302 = vmatpush.bf16.msra.mxu0 0
      %5303 = vmatpush.bf16.msra.mxu0 0
      %5304 = vmatpush.bf16.msra.mxu0 %v5217
      %5305 = vmatmul.bf16.gmra.mxu0 %v5196
      %v5306 = vpop.f32.mrf.mxu0
      %v5307 = vadd.f32 0.0, %v5306
      %v5308 = vpop.f32.mrf.mxu0
      %5309 = vdwg.mxu0
      %v5310 = vadd.f32 %v5122, %v5229
      %v5311 = vadd.f32 %v5123, %v5242
      %v5312 = vadd.f32 %v5124, %v5255
      %v5313 = vadd.f32 %v5125, %v5268
      %v5314 = vadd.f32 %v5126, %v5281
      %v5315 = vadd.f32 %v5127, %v5294
      %v5316 = vadd.f32 %v5128, %v5307
      %v5317 = vld [vmem:[%s3] sm:$0xf]
      %5319 = vset.pattern.permute.xlu0 0
      %5320 = vperm.xlu0 %5319, %v5317
      %v5321 = vpop.permute.xlu0 %5320
      %v5323 = vadd.f32 %v5310, %v5321
      %v5324 = vadd.f32 %v5311, %v5321
      %v5325 = vadd.f32 %v5312, %v5321
      %v5326 = vadd.f32 %v5313, %v5321
      %v5327 = vadd.f32 %v5314, %v5321
      %v5328 = vadd.f32 %v5315, %v5321
      %v5329 = vadd.f32 %v5316, %v5321
      %v5330 = vmax.f32 %v5323, 0.0
      %v5331 = vmax.f32 %v5324, 0.0
      %v5332 = vmax.f32 %v5325, 0.0
      %v5333 = vmax.f32 %v5326, 0.0
      %v5334 = vmax.f32 %v5327, 0.0
      %v5335 = vmax.f32 %v5328, 0.0
      %v5336 = vmax.f32 %v5329, 0.0
      %v5337 = vld [vmem:[%s5] sm:$0x7f]
      %v5339 = vperm.slane %v5337, 0
      %v5340 = vperm.slane %v5337, 1
      %v5341 = vperm.slane %v5337, 2
      %v5342 = vperm.slane %v5337, 3
      %v5343 = vperm.slane %v5337, 4
      %v5344 = vperm.slane %v5337, 5
      %v5345 = vperm.slane %v5337, 6
      %v5353 = vmul.f32 %v5330, %v5339
      %v5354 = vmul.f32 %v5331, %v5340
      %v5355 = vmul.f32 %v5332, %v5341
      %v5356 = vmul.f32 %v5333, %v5342
      %v5357 = vmul.f32 %v5334, %v5343
      %v5358 = vmul.f32 %v5335, %v5344
      %v5359 = vmul.f32 %v5336, %v5345
      %v5360 = vpack.c.bf16 %v5354, %v5353
      %v5361 = vpack.c.bf16 %v5356, %v5355
      %v5362 = vpack.c.bf16 %v5358, %v5357
      %v5363 = vpack.c.bf16 %v5359, %v5359
      %v5368 = vrot.slane %v5360, 2
      %v5369 = vrot.slane %v5361, 4
      %v5370 = vrot.slane %v5361, 6
      %v5371 = vrot.slane %v5362, 2
      %v5372 = vrot.slane %v5363, 4
      %v5373 = vrot.slane %v5363, 6
      %v5376 = vsel %vm254, %v5360, %v5368
      %v5379 = vsel %vm257, %v5369, %v5370
      %vm5380 = vcmask 1043456
      %v5381 = vsel %vm5380, %v5376, %v5379
      %v5385 = vsel %vm254, %v5362, %v5371
      %v5388 = vsel %vm257, %v5372, %v5373
      %v5389 = vsel %vm5380, %v5385, %v5388
      %5391 = vrot.lane.b32.xlu0 %v5381, 111
      %v5392 = vpop.permute.xlu0 %5391
      %5393 = vrot.lane.b32.xlu0 %v5389, 111
      %v5394 = vpop.permute.xlu0 %5393
      %v5395 = vrot.slane %v5392, 6
      %v5396 = vrot.slane %v5394, 6
      %vm5397 = vcmask 908288
      %v5398 = vsel %vm5397, %v5395, %v5392
      %vm5399 = vcmask 1041408
      %v5400 = vsel %vm5399, %v5395, %v5396
      %v5401 = vsel %vm5397, %v5400, %v5394
      %vm5404 = vcmask 1042296
      %vm5405 = vmor %vm255, %vm5404
      %vm5406 = vmor %vm257, %vm5405
      %vm5407 = vcmask 1047558
      %vm5408 = vmor %vm5407, %vm5406
      %5409 = vst.msk [vmem:[#allocation2] sm:$0xff] %vm5408, %v5398
      %vm5410 = vcmask 988164
      %vm5411 = vmor %vm5410, %vm256
      %5412 = vst.msk [vmem:[#allocation2 + $0x8] sm:$0x3f] %vm5411, %v5401
      %v5413 = vld [vmem:[#allocation2] sm:$0xff]
      %v5414 = vld [vmem:[#allocation2 + $0x8] sm:$0x3f]
      %v5415 = vld [vmem:[%s2] sm:$0x3]
      %s5416 = scalar_lea.vmem %s2, 2
      %v5417 = vld [vmem:[%s5416] sm:$0x3]
      %5419 = vst [vmem:[#allocation1] ss:$4 sm:$0xff] %v5413
      %s5421 = scalar_lea.vmem [#allocation1], 32
      %5422 = vst [vmem:[%s5421] ss:$4 sm:$0xff] %v5414
      %v5423 = vld.sshfl [vmem:[#allocation1] sm:$0xff pattern:$0x73625140]
      %v5425 = vld.sshfl [vmem:[#allocation1 + $0x8] sm:$0xff pattern:$0x73625140]
      %v5427 = vld.sshfl [vmem:[#allocation1 + $0x10] sm:$0xff pattern:$0x73625140]
      %v5429 = vld.sshfl [vmem:[#allocation1 + $0x18] sm:$0xff pattern:$0x73625140]
      %v5431 = vld.sshfl [vmem:[#allocation1 + $0x20] sm:$0xff pattern:$0x73625140]
      %v5433 = vld.sshfl [vmem:[#allocation1 + $0x28] sm:$0xff pattern:$0x73625140]
      %v5435 = vld.sshfl [vmem:[#allocation1 + $0x30] sm:$0xff pattern:$0x73625140]
      %5437 = vrot.lane.b32.xlu0 %v5423, 127
      %v5438 = vpop.permute.xlu0 %5437
      %5439 = vrot.lane.b32.xlu0 %v5425, 127
      %v5440 = vpop.permute.xlu0 %5439
      %5441 = vrot.lane.b32.xlu0 %v5427, 127
      %v5442 = vpop.permute.xlu0 %5441
      %5443 = vrot.lane.b32.xlu0 %v5429, 127
      %v5444 = vpop.permute.xlu0 %5443
      %5445 = vrot.lane.b32.xlu0 %v5431, 127
      %v5446 = vpop.permute.xlu0 %5445
      %5447 = vrot.lane.b32.xlu0 %v5433, 127
      %v5448 = vpop.permute.xlu0 %5447
      %5449 = vrot.lane.b32.xlu0 %v5435, 127
      %v5450 = vpop.permute.xlu0 %5449
      %v5451 = vsel %vm358, %v5438, %v5440
      %v5452 = vsel %vm358, %v5440, %v5442
      %v5453 = vsel %vm358, %v5442, %v5444
      %v5454 = vsel %vm358, %v5444, %v5446
      %v5455 = vsel %vm358, %v5446, %v5448
      %v5456 = vsel %vm358, %v5448, %v5450
      %v5458 = vsel %vm365, %v5417, 0
      %v5461 = vsel %vm254, %v5451, 0
      %v5464 = vsel %vm254, %v5452, 0
      %v5467 = vsel %vm254, %v5453, 0
      %v5470 = vsel %vm254, %v5454, 0
      %v5473 = vsel %vm254, %v5455, 0
      %v5476 = vsel %vm254, %v5456, 0
      %v5479 = vsel %vm254, %v5450, 0
      %5481 = vmatpush.bf16.msra.mxu0 0
      %5482 = vmatpush.bf16.msra.mxu0 0
      %5483 = vmatpush.bf16.msra.mxu0 0
      %5484 = vmatpush.bf16.msra.mxu0 0
      %5485 = vmatpush.bf16.msra.mxu0 0
      %5486 = vmatpush.bf16.msra.mxu0 0
      %5487 = vmatpush.bf16.msra.mxu0 0
      %5488 = vmatpush.bf16.msra.mxu0 %v5461
      %5489 = vmatmul.bf16.gmra.mxu0 %v5458
      %v5490 = vpop.f32.mrf.mxu0
      %v5491 = vadd.f32 0.0, %v5490
      %v5492 = vpop.f32.mrf.mxu0
      %5493 = vdwg.mxu0
      %5494 = vmatpush.bf16.msra.mxu0 0
      %5495 = vmatpush.bf16.msra.mxu0 0
      %5496 = vmatpush.bf16.msra.mxu0 0
      %5497 = vmatpush.bf16.msra.mxu0 0
      %5498 = vmatpush.bf16.msra.mxu0 0
      %5499 = vmatpush.bf16.msra.mxu0 0
      %5500 = vmatpush.bf16.msra.mxu0 0
      %5501 = vmatpush.bf16.msra.mxu0 %v5464
      %5502 = vmatmul.bf16.gmra.mxu0 %v5458
      %v5503 = vpop.f32.mrf.mxu0
      %v5504 = vadd.f32 0.0, %v5503
      %v5505 = vpop.f32.mrf.mxu0
      %5506 = vdwg.mxu0
      %5507 = vmatpush.bf16.msra.mxu0 0
      %5508 = vmatpush.bf16.msra.mxu0 0
      %5509 = vmatpush.bf16.msra.mxu0 0
      %5510 = vmatpush.bf16.msra.mxu0 0
      %5511 = vmatpush.bf16.msra.mxu0 0
      %5512 = vmatpush.bf16.msra.mxu0 0
      %5513 = vmatpush.bf16.msra.mxu0 0
      %5514 = vmatpush.bf16.msra.mxu0 %v5467
      %5515 = vmatmul.bf16.gmra.mxu0 %v5458
      %v5516 = vpop.f32.mrf.mxu0
      %v5517 = vadd.f32 0.0, %v5516
      %v5518 = vpop.f32.mrf.mxu0
      %5519 = vdwg.mxu0
      %5520 = vmatpush.bf16.msra.mxu0 0
      %5521 = vmatpush.bf16.msra.mxu0 0
      %5522 = vmatpush.bf16.msra.mxu0 0
      %5523 = vmatpush.bf16.msra.mxu0 0
      %5524 = vmatpush.bf16.msra.mxu0 0
      %5525 = vmatpush.bf16.msra.mxu0 0
      %5526 = vmatpush.bf16.msra.mxu0 0
      %5527 = vmatpush.bf16.msra.mxu0 %v5470
      %5528 = vmatmul.bf16.gmra.mxu0 %v5458
      %v5529 = vpop.f32.mrf.mxu0
      %v5530 = vadd.f32 0.0, %v5529
      %v5531 = vpop.f32.mrf.mxu0
      %5532 = vdwg.mxu0
      %5533 = vmatpush.bf16.msra.mxu0 0
      %5534 = vmatpush.bf16.msra.mxu0 0
      %5535 = vmatpush.bf16.msra.mxu0 0
      %5536 = vmatpush.bf16.msra.mxu0 0
      %5537 = vmatpush.bf16.msra.mxu0 0
      %5538 = vmatpush.bf16.msra.mxu0 0
      %5539 = vmatpush.bf16.msra.mxu0 0
      %5540 = vmatpush.bf16.msra.mxu0 %v5473
      %5541 = vmatmul.bf16.gmra.mxu0 %v5458
      %v5542 = vpop.f32.mrf.mxu0
      %v5543 = vadd.f32 0.0, %v5542
      %v5544 = vpop.f32.mrf.mxu0
      %5545 = vdwg.mxu0
      %5546 = vmatpush.bf16.msra.mxu0 0
      %5547 = vmatpush.bf16.msra.mxu0 0
      %5548 = vmatpush.bf16.msra.mxu0 0
      %5549 = vmatpush.bf16.msra.mxu0 0
      %5550 = vmatpush.bf16.msra.mxu0 0
      %5551 = vmatpush.bf16.msra.mxu0 0
      %5552 = vmatpush.bf16.msra.mxu0 0
      %5553 = vmatpush.bf16.msra.mxu0 %v5476
      %5554 = vmatmul.bf16.gmra.mxu0 %v5458
      %v5555 = vpop.f32.mrf.mxu0
      %v5556 = vadd.f32 0.0, %v5555
      %v5557 = vpop.f32.mrf.mxu0
      %5558 = vdwg.mxu0
      %5559 = vmatpush.bf16.msra.mxu0 0
      %5560 = vmatpush.bf16.msra.mxu0 0
      %5561 = vmatpush.bf16.msra.mxu0 0
      %5562 = vmatpush.bf16.msra.mxu0 0
      %5563 = vmatpush.bf16.msra.mxu0 0
      %5564 = vmatpush.bf16.msra.mxu0 0
      %5565 = vmatpush.bf16.msra.mxu0 0
      %5566 = vmatpush.bf16.msra.mxu0 %v5479
      %5567 = vmatmul.bf16.gmra.mxu0 %v5458
      %v5568 = vpop.f32.mrf.mxu0
      %v5569 = vadd.f32 0.0, %v5568
      %v5570 = vpop.f32.mrf.mxu0
      %5571 = vdwg.mxu0
      %5572 = vst [vmem:[#allocation1] ss:$4 sm:$0xff] %v5413
      %s5573 = scalar_lea.vmem [#allocation1], 32
      %5574 = vst [vmem:[%s5573] ss:$4 sm:$0xff] %v5414
      %v5575 = vld.sshfl [vmem:[#allocation1] sm:$0xff pattern:$0x73625140]
      %v5576 = vld.sshfl [vmem:[#allocation1 + $0x8] sm:$0xff pattern:$0x73625140]
      %v5577 = vld.sshfl [vmem:[#allocation1 + $0x10] sm:$0xff pattern:$0x73625140]
      %v5578 = vld.sshfl [vmem:[#allocation1 + $0x18] sm:$0xff pattern:$0x73625140]
      %v5579 = vld.sshfl [vmem:[#allocation1 + $0x20] sm:$0xff pattern:$0x73625140]
      %v5580 = vld.sshfl [vmem:[#allocation1 + $0x28] sm:$0xff pattern:$0x73625140]
      %v5581 = vld.sshfl [vmem:[#allocation1 + $0x30] sm:$0xff pattern:$0x73625140]
      %v5583 = vsel %vm365, %v5415, 0
      %v5585 = vsel %vm254, %v5575, 0
      %v5587 = vsel %vm254, %v5576, 0
      %v5589 = vsel %vm254, %v5577, 0
      %v5591 = vsel %vm254, %v5578, 0
      %v5593 = vsel %vm254, %v5579, 0
      %v5595 = vsel %vm254, %v5580, 0
      %v5597 = vsel %vm254, %v5581, 0
      %5599 = vmatpush.bf16.msra.mxu0 0
      %5600 = vmatpush.bf16.msra.mxu0 0
      %5601 = vmatpush.bf16.msra.mxu0 0
      %5602 = vmatpush.bf16.msra.mxu0 0
      %5603 = vmatpush.bf16.msra.mxu0 0
      %5604 = vmatpush.bf16.msra.mxu0 0
      %5605 = vmatpush.bf16.msra.mxu0 0
      %5606 = vmatpush.bf16.msra.mxu0 %v5585
      %5607 = vmatmul.bf16.gmra.mxu0 %v5583
      %v5608 = vpop.f32.mrf.mxu0
      %v5609 = vadd.f32 %v5491, %v5608
      %v5610 = vpop.f32.mrf.mxu0
      %5611 = vdwg.mxu0
      %5612 = vmatpush.bf16.msra.mxu0 0
      %5613 = vmatpush.bf16.msra.mxu0 0
      %5614 = vmatpush.bf16.msra.mxu0 0
      %5615 = vmatpush.bf16.msra.mxu0 0
      %5616 = vmatpush.bf16.msra.mxu0 0
      %5617 = vmatpush.bf16.msra.mxu0 0
      %5618 = vmatpush.bf16.msra.mxu0 0
      %5619 = vmatpush.bf16.msra.mxu0 %v5587
      %5620 = vmatmul.bf16.gmra.mxu0 %v5583
      %v5621 = vpop.f32.mrf.mxu0
      %v5622 = vadd.f32 %v5504, %v5621
      %v5623 = vpop.f32.mrf.mxu0
      %5624 = vdwg.mxu0
      %5625 = vmatpush.bf16.msra.mxu0 0
      %5626 = vmatpush.bf16.msra.mxu0 0
      %5627 = vmatpush.bf16.msra.mxu0 0
      %5628 = vmatpush.bf16.msra.mxu0 0
      %5629 = vmatpush.bf16.msra.mxu0 0
      %5630 = vmatpush.bf16.msra.mxu0 0
      %5631 = vmatpush.bf16.msra.mxu0 0
      %5632 = vmatpush.bf16.msra.mxu0 %v5589
      %5633 = vmatmul.bf16.gmra.mxu0 %v5583
      %v5634 = vpop.f32.mrf.mxu0
      %v5635 = vadd.f32 %v5517, %v5634
      %v5636 = vpop.f32.mrf.mxu0
      %5637 = vdwg.mxu0
      %5638 = vmatpush.bf16.msra.mxu0 0
      %5639 = vmatpush.bf16.msra.mxu0 0
      %5640 = vmatpush.bf16.msra.mxu0 0
      %5641 = vmatpush.bf16.msra.mxu0 0
      %5642 = vmatpush.bf16.msra.mxu0 0
      %5643 = vmatpush.bf16.msra.mxu0 0
      %5644 = vmatpush.bf16.msra.mxu0 0
      %5645 = vmatpush.bf16.msra.mxu0 %v5591
      %5646 = vmatmul.bf16.gmra.mxu0 %v5583
      %v5647 = vpop.f32.mrf.mxu0
      %v5648 = vadd.f32 %v5530, %v5647
      %v5649 = vpop.f32.mrf.mxu0
      %5650 = vdwg.mxu0
      %5651 = vmatpush.bf16.msra.mxu0 0
      %5652 = vmatpush.bf16.msra.mxu0 0
      %5653 = vmatpush.bf16.msra.mxu0 0
      %5654 = vmatpush.bf16.msra.mxu0 0
      %5655 = vmatpush.bf16.msra.mxu0 0
      %5656 = vmatpush.bf16.msra.mxu0 0
      %5657 = vmatpush.bf16.msra.mxu0 0
      %5658 = vmatpush.bf16.msra.mxu0 %v5593
      %5659 = vmatmul.bf16.gmra.mxu0 %v5583
      %v5660 = vpop.f32.mrf.mxu0
      %v5661 = vadd.f32 %v5543, %v5660
      %v5662 = vpop.f32.mrf.mxu0
      %5663 = vdwg.mxu0
      %5664 = vmatpush.bf16.msra.mxu0 0
      %5665 = vmatpush.bf16.msra.mxu0 0
      %5666 = vmatpush.bf16.msra.mxu0 0
      %5667 = vmatpush.bf16.msra.mxu0 0
      %5668 = vmatpush.bf16.msra.mxu0 0
      %5669 = vmatpush.bf16.msra.mxu0 0
      %5670 = vmatpush.bf16.msra.mxu0 0
      %5671 = vmatpush.bf16.msra.mxu0 %v5595
      %5672 = vmatmul.bf16.gmra.mxu0 %v5583
      %v5673 = vpop.f32.mrf.mxu0
      %v5674 = vadd.f32 %v5556, %v5673
      %v5675 = vpop.f32.mrf.mxu0
      %5676 = vdwg.mxu0
      %5677 = vmatpush.bf16.msra.mxu0 0
      %5678 = vmatpush.bf16.msra.mxu0 0
      %5679 = vmatpush.bf16.msra.mxu0 0
      %5680 = vmatpush.bf16.msra.mxu0 0
      %5681 = vmatpush.bf16.msra.mxu0 0
      %5682 = vmatpush.bf16.msra.mxu0 0
      %5683 = vmatpush.bf16.msra.mxu0 0
      %5684 = vmatpush.bf16.msra.mxu0 %v5597
      %5685 = vmatmul.bf16.gmra.mxu0 %v5583
      %v5686 = vpop.f32.mrf.mxu0
      %v5687 = vadd.f32 %v5569, %v5686
      %v5688 = vpop.f32.mrf.mxu0
      %5689 = vdwg.mxu0
      %v5690 = vld [vmem:[#allocation2] sm:$0xff]
      %v5691 = vld [vmem:[#allocation2 + $0x8] sm:$0x3f]
      %s5692 = scalar_lea.vmem %s2, 4
      %v5693 = vld [vmem:[%s5692] sm:$0x3]
      %5695 = vst [vmem:[#allocation1] ss:$4 sm:$0xff] %v5690
      %s5697 = scalar_lea.vmem [#allocation1], 32
      %5698 = vst [vmem:[%s5697] ss:$4 sm:$0xff] %v5691
      %v5699 = vld.sshfl [vmem:[#allocation1] sm:$0xff pattern:$0x73625140]
      %v5701 = vld.sshfl [vmem:[#allocation1 + $0x8] sm:$0xff pattern:$0x73625140]
      %v5703 = vld.sshfl [vmem:[#allocation1 + $0x10] sm:$0xff pattern:$0x73625140]
      %v5705 = vld.sshfl [vmem:[#allocation1 + $0x18] sm:$0xff pattern:$0x73625140]
      %v5707 = vld.sshfl [vmem:[#allocation1 + $0x20] sm:$0xff pattern:$0x73625140]
      %v5709 = vld.sshfl [vmem:[#allocation1 + $0x28] sm:$0xff pattern:$0x73625140]
      %v5711 = vld.sshfl [vmem:[#allocation1 + $0x30] sm:$0xff pattern:$0x73625140]
      %5713 = vrot.lane.b32.xlu0 %v5699, 126
      %v5714 = vpop.permute.xlu0 %5713
      %5715 = vrot.lane.b32.xlu0 %v5701, 126
      %v5716 = vpop.permute.xlu0 %5715
      %5717 = vrot.lane.b32.xlu0 %v5703, 126
      %v5718 = vpop.permute.xlu0 %5717
      %5719 = vrot.lane.b32.xlu0 %v5705, 126
      %v5720 = vpop.permute.xlu0 %5719
      %5721 = vrot.lane.b32.xlu0 %v5707, 126
      %v5722 = vpop.permute.xlu0 %5721
      %5723 = vrot.lane.b32.xlu0 %v5709, 126
      %v5724 = vpop.permute.xlu0 %5723
      %5725 = vrot.lane.b32.xlu0 %v5711, 126
      %v5726 = vpop.permute.xlu0 %5725
      %v5727 = vsel %vm655, %v5714, %v5716
      %v5728 = vsel %vm655, %v5716, %v5718
      %v5729 = vsel %vm655, %v5718, %v5720
      %v5730 = vsel %vm655, %v5720, %v5722
      %v5731 = vsel %vm655, %v5722, %v5724
      %v5732 = vsel %vm655, %v5724, %v5726
      %v5734 = vsel %vm365, %v5693, 0
      %v5737 = vsel %vm254, %v5727, 0
      %v5740 = vsel %vm254, %v5728, 0
      %v5743 = vsel %vm254, %v5729, 0
      %v5746 = vsel %vm254, %v5730, 0
      %v5749 = vsel %vm254, %v5731, 0
      %v5752 = vsel %vm254, %v5732, 0
      %v5755 = vsel %vm254, %v5726, 0
      %5757 = vmatpush.bf16.msra.mxu0 0
      %5758 = vmatpush.bf16.msra.mxu0 0
      %5759 = vmatpush.bf16.msra.mxu0 0
      %5760 = vmatpush.bf16.msra.mxu0 0
      %5761 = vmatpush.bf16.msra.mxu0 0
      %5762 = vmatpush.bf16.msra.mxu0 0
      %5763 = vmatpush.bf16.msra.mxu0 0
      %5764 = vmatpush.bf16.msra.mxu0 %v5737
      %5765 = vmatmul.bf16.gmra.mxu0 %v5734
      %v5766 = vpop.f32.mrf.mxu0
      %v5767 = vadd.f32 0.0, %v5766
      %v5768 = vpop.f32.mrf.mxu0
      %5769 = vdwg.mxu0
      %5770 = vmatpush.bf16.msra.mxu0 0
      %5771 = vmatpush.bf16.msra.mxu0 0
      %5772 = vmatpush.bf16.msra.mxu0 0
      %5773 = vmatpush.bf16.msra.mxu0 0
      %5774 = vmatpush.bf16.msra.mxu0 0
      %5775 = vmatpush.bf16.msra.mxu0 0
      %5776 = vmatpush.bf16.msra.mxu0 0
      %5777 = vmatpush.bf16.msra.mxu0 %v5740
      %5778 = vmatmul.bf16.gmra.mxu0 %v5734
      %v5779 = vpop.f32.mrf.mxu0
      %v5780 = vadd.f32 0.0, %v5779
      %v5781 = vpop.f32.mrf.mxu0
      %5782 = vdwg.mxu0
      %5783 = vmatpush.bf16.msra.mxu0 0
      %5784 = vmatpush.bf16.msra.mxu0 0
      %5785 = vmatpush.bf16.msra.mxu0 0
      %5786 = vmatpush.bf16.msra.mxu0 0
      %5787 = vmatpush.bf16.msra.mxu0 0
      %5788 = vmatpush.bf16.msra.mxu0 0
      %5789 = vmatpush.bf16.msra.mxu0 0
      %5790 = vmatpush.bf16.msra.mxu0 %v5743
      %5791 = vmatmul.bf16.gmra.mxu0 %v5734
      %v5792 = vpop.f32.mrf.mxu0
      %v5793 = vadd.f32 0.0, %v5792
      %v5794 = vpop.f32.mrf.mxu0
      %5795 = vdwg.mxu0
      %5796 = vmatpush.bf16.msra.mxu0 0
      %5797 = vmatpush.bf16.msra.mxu0 0
      %5798 = vmatpush.bf16.msra.mxu0 0
      %5799 = vmatpush.bf16.msra.mxu0 0
      %5800 = vmatpush.bf16.msra.mxu0 0
      %5801 = vmatpush.bf16.msra.mxu0 0
      %5802 = vmatpush.bf16.msra.mxu0 0
      %5803 = vmatpush.bf16.msra.mxu0 %v5746
      %5804 = vmatmul.bf16.gmra.mxu0 %v5734
      %v5805 = vpop.f32.mrf.mxu0
      %v5806 = vadd.f32 0.0, %v5805
      %v5807 = vpop.f32.mrf.mxu0
      %5808 = vdwg.mxu0
      %5809 = vmatpush.bf16.msra.mxu0 0
      %5810 = vmatpush.bf16.msra.mxu0 0
      %5811 = vmatpush.bf16.msra.mxu0 0
      %5812 = vmatpush.bf16.msra.mxu0 0
      %5813 = vmatpush.bf16.msra.mxu0 0
      %5814 = vmatpush.bf16.msra.mxu0 0
      %5815 = vmatpush.bf16.msra.mxu0 0
      %5816 = vmatpush.bf16.msra.mxu0 %v5749
      %5817 = vmatmul.bf16.gmra.mxu0 %v5734
      %v5818 = vpop.f32.mrf.mxu0
      %v5819 = vadd.f32 0.0, %v5818
      %v5820 = vpop.f32.mrf.mxu0
      %5821 = vdwg.mxu0
      %5822 = vmatpush.bf16.msra.mxu0 0
      %5823 = vmatpush.bf16.msra.mxu0 0
      %5824 = vmatpush.bf16.msra.mxu0 0
      %5825 = vmatpush.bf16.msra.mxu0 0
      %5826 = vmatpush.bf16.msra.mxu0 0
      %5827 = vmatpush.bf16.msra.mxu0 0
      %5828 = vmatpush.bf16.msra.mxu0 0
      %5829 = vmatpush.bf16.msra.mxu0 %v5752
      %5830 = vmatmul.bf16.gmra.mxu0 %v5734
      %v5831 = vpop.f32.mrf.mxu0
      %v5832 = vadd.f32 0.0, %v5831
      %v5833 = vpop.f32.mrf.mxu0
      %5834 = vdwg.mxu0
      %5835 = vmatpush.bf16.msra.mxu0 0
      %5836 = vmatpush.bf16.msra.mxu0 0
      %5837 = vmatpush.bf16.msra.mxu0 0
      %5838 = vmatpush.bf16.msra.mxu0 0
      %5839 = vmatpush.bf16.msra.mxu0 0
      %5840 = vmatpush.bf16.msra.mxu0 0
      %5841 = vmatpush.bf16.msra.mxu0 0
      %5842 = vmatpush.bf16.msra.mxu0 %v5755
      %5843 = vmatmul.bf16.gmra.mxu0 %v5734
      %v5844 = vpop.f32.mrf.mxu0
      %v5845 = vadd.f32 0.0, %v5844
      %v5846 = vpop.f32.mrf.mxu0
      %5847 = vdwg.mxu0
      %v5848 = vadd.f32 %v5609, %v5767
      %v5849 = vadd.f32 %v5622, %v5780
      %v5850 = vadd.f32 %v5635, %v5793
      %v5851 = vadd.f32 %v5648, %v5806
      %v5852 = vadd.f32 %v5661, %v5819
      %v5853 = vadd.f32 %v5674, %v5832
      %v5854 = vadd.f32 %v5687, %v5845
      %v5855 = vld [vmem:[#allocation2] sm:$0xff]
      %v5856 = vld [vmem:[#allocation2 + $0x8] sm:$0x3f]
      %s5857 = scalar_lea.vmem %s2, 6
      %v5858 = vld [vmem:[%s5857] sm:$0x3]
      %5860 = vst [vmem:[#allocation1] ss:$4 sm:$0xff] %v5855
      %s5862 = scalar_lea.vmem [#allocation1], 32
      %5863 = vst [vmem:[%s5862] ss:$4 sm:$0xff] %v5856
      %v5864 = vld.sshfl [vmem:[#allocation1] sm:$0xff pattern:$0x73625140]
      %v5866 = vld.sshfl [vmem:[#allocation1 + $0x8] sm:$0xff pattern:$0x73625140]
      %v5868 = vld.sshfl [vmem:[#allocation1 + $0x10] sm:$0xff pattern:$0x73625140]
      %v5870 = vld.sshfl [vmem:[#allocation1 + $0x18] sm:$0xff pattern:$0x73625140]
      %v5872 = vld.sshfl [vmem:[#allocation1 + $0x20] sm:$0xff pattern:$0x73625140]
      %v5874 = vld.sshfl [vmem:[#allocation1 + $0x28] sm:$0xff pattern:$0x73625140]
      %v5876 = vld.sshfl [vmem:[#allocation1 + $0x30] sm:$0xff pattern:$0x73625140]
      %5878 = vrot.lane.b32.xlu0 %v5864, 118
      %v5879 = vpop.permute.xlu0 %5878
      %5880 = vrot.lane.b32.xlu0 %v5866, 118
      %v5881 = vpop.permute.xlu0 %5880
      %5882 = vrot.lane.b32.xlu0 %v5868, 118
      %v5883 = vpop.permute.xlu0 %5882
      %5884 = vrot.lane.b32.xlu0 %v5870, 118
      %v5885 = vpop.permute.xlu0 %5884
      %5886 = vrot.lane.b32.xlu0 %v5872, 118
      %v5887 = vpop.permute.xlu0 %5886
      %5888 = vrot.lane.b32.xlu0 %v5874, 118
      %v5889 = vpop.permute.xlu0 %5888
      %5890 = vrot.lane.b32.xlu0 %v5876, 118
      %v5891 = vpop.permute.xlu0 %5890
      %v5892 = vsel %vm843, %v5879, %v5881
      %v5893 = vsel %vm843, %v5881, %v5883
      %v5894 = vsel %vm843, %v5883, %v5885
      %v5895 = vsel %vm843, %v5885, %v5887
      %v5896 = vsel %vm843, %v5887, %v5889
      %v5897 = vsel %vm843, %v5889, %v5891
      %v5899 = vsel %vm365, %v5858, 0
      %v5902 = vsel %vm254, %v5892, 0
      %v5905 = vsel %vm254, %v5893, 0
      %v5908 = vsel %vm254, %v5894, 0
      %v5911 = vsel %vm254, %v5895, 0
      %v5914 = vsel %vm254, %v5896, 0
      %v5917 = vsel %vm254, %v5897, 0
      %v5920 = vsel %vm254, %v5891, 0
      %5922 = vmatpush.bf16.msra.mxu0 0
      %5923 = vmatpush.bf16.msra.mxu0 0
      %5924 = vmatpush.bf16.msra.mxu0 0
      %5925 = vmatpush.bf16.msra.mxu0 0
      %5926 = vmatpush.bf16.msra.mxu0 0
      %5927 = vmatpush.bf16.msra.mxu0 0
      %5928 = vmatpush.bf16.msra.mxu0 0
      %5929 = vmatpush.bf16.msra.mxu0 %v5902
      %5930 = vmatmul.bf16.gmra.mxu0 %v5899
      %v5931 = vpop.f32.mrf.mxu0
      %v5932 = vadd.f32 0.0, %v5931
      %v5933 = vpop.f32.mrf.mxu0
      %5934 = vdwg.mxu0
      %5935 = vmatpush.bf16.msra.mxu0 0
      %5936 = vmatpush.bf16.msra.mxu0 0
      %5937 = vmatpush.bf16.msra.mxu0 0
      %5938 = vmatpush.bf16.msra.mxu0 0
      %5939 = vmatpush.bf16.msra.mxu0 0
      %5940 = vmatpush.bf16.msra.mxu0 0
      %5941 = vmatpush.bf16.msra.mxu0 0
      %5942 = vmatpush.bf16.msra.mxu0 %v5905
      %5943 = vmatmul.bf16.gmra.mxu0 %v5899
      %v5944 = vpop.f32.mrf.mxu0
      %v5945 = vadd.f32 0.0, %v5944
      %v5946 = vpop.f32.mrf.mxu0
      %5947 = vdwg.mxu0
      %5948 = vmatpush.bf16.msra.mxu0 0
      %5949 = vmatpush.bf16.msra.mxu0 0
      %5950 = vmatpush.bf16.msra.mxu0 0
      %5951 = vmatpush.bf16.msra.mxu0 0
      %5952 = vmatpush.bf16.msra.mxu0 0
      %5953 = vmatpush.bf16.msra.mxu0 0
      %5954 = vmatpush.bf16.msra.mxu0 0
      %5955 = vmatpush.bf16.msra.mxu0 %v5908
      %5956 = vmatmul.bf16.gmra.mxu0 %v5899
      %v5957 = vpop.f32.mrf.mxu0
      %v5958 = vadd.f32 0.0, %v5957
      %v5959 = vpop.f32.mrf.mxu0
      %5960 = vdwg.mxu0
      %5961 = vmatpush.bf16.msra.mxu0 0
      %5962 = vmatpush.bf16.msra.mxu0 0
      %5963 = vmatpush.bf16.msra.mxu0 0
      %5964 = vmatpush.bf16.msra.mxu0 0
      %5965 = vmatpush.bf16.msra.mxu0 0
      %5966 = vmatpush.bf16.msra.mxu0 0
      %5967 = vmatpush.bf16.msra.mxu0 0
      %5968 = vmatpush.bf16.msra.mxu0 %v5911
      %5969 = vmatmul.bf16.gmra.mxu0 %v5899
      %v5970 = vpop.f32.mrf.mxu0
      %v5971 = vadd.f32 0.0, %v5970
      %v5972 = vpop.f32.mrf.mxu0
      %5973 = vdwg.mxu0
      %5974 = vmatpush.bf16.msra.mxu0 0
      %5975 = vmatpush.bf16.msra.mxu0 0
      %5976 = vmatpush.bf16.msra.mxu0 0
      %5977 = vmatpush.bf16.msra.mxu0 0
      %5978 = vmatpush.bf16.msra.mxu0 0
      %5979 = vmatpush.bf16.msra.mxu0 0
      %5980 = vmatpush.bf16.msra.mxu0 0
      %5981 = vmatpush.bf16.msra.mxu0 %v5914
      %5982 = vmatmul.bf16.gmra.mxu0 %v5899
      %v5983 = vpop.f32.mrf.mxu0
      %v5984 = vadd.f32 0.0, %v5983
      %v5985 = vpop.f32.mrf.mxu0
      %5986 = vdwg.mxu0
      %5987 = vmatpush.bf16.msra.mxu0 0
      %5988 = vmatpush.bf16.msra.mxu0 0
      %5989 = vmatpush.bf16.msra.mxu0 0
      %5990 = vmatpush.bf16.msra.mxu0 0
      %5991 = vmatpush.bf16.msra.mxu0 0
      %5992 = vmatpush.bf16.msra.mxu0 0
      %5993 = vmatpush.bf16.msra.mxu0 0
      %5994 = vmatpush.bf16.msra.mxu0 %v5917
      %5995 = vmatmul.bf16.gmra.mxu0 %v5899
      %v5996 = vpop.f32.mrf.mxu0
      %v5997 = vadd.f32 0.0, %v5996
      %v5998 = vpop.f32.mrf.mxu0
      %5999 = vdwg.mxu0
      %6000 = vmatpush.bf16.msra.mxu0 0
      %6001 = vmatpush.bf16.msra.mxu0 0
      %6002 = vmatpush.bf16.msra.mxu0 0
      %6003 = vmatpush.bf16.msra.mxu0 0
      %6004 = vmatpush.bf16.msra.mxu0 0
      %6005 = vmatpush.bf16.msra.mxu0 0
      %6006 = vmatpush.bf16.msra.mxu0 0
      %6007 = vmatpush.bf16.msra.mxu0 %v5920
      %6008 = vmatmul.bf16.gmra.mxu0 %v5899
      %v6009 = vpop.f32.mrf.mxu0
      %v6010 = vadd.f32 0.0, %v6009
      %v6011 = vpop.f32.mrf.mxu0
      %6012 = vdwg.mxu0
      %v6013 = vadd.f32 %v5848, %v5932
      %v6014 = vadd.f32 %v5849, %v5945
      %v6015 = vadd.f32 %v5850, %v5958
      %v6016 = vadd.f32 %v5851, %v5971
      %v6017 = vadd.f32 %v5852, %v5984
      %v6018 = vadd.f32 %v5853, %v5997
      %v6019 = vadd.f32 %v5854, %v6010
      %v6020 = vld [vmem:[#allocation2] sm:$0xff]
      %v6021 = vld [vmem:[#allocation2 + $0x8] sm:$0x3f]
      %s6022 = scalar_lea.vmem %s2, 8
      %v6023 = vld [vmem:[%s6022] sm:$0x3]
      %6025 = vst [vmem:[#allocation1] ss:$4 sm:$0xff] %v6020
      %s6027 = scalar_lea.vmem [#allocation1], 32
      %6028 = vst [vmem:[%s6027] ss:$4 sm:$0xff] %v6021
      %v6029 = vld.sshfl [vmem:[#allocation1] sm:$0xff pattern:$0x73625140]
      %v6031 = vld.sshfl [vmem:[#allocation1 + $0x8] sm:$0xff pattern:$0x73625140]
      %v6033 = vld.sshfl [vmem:[#allocation1 + $0x10] sm:$0xff pattern:$0x73625140]
      %v6035 = vld.sshfl [vmem:[#allocation1 + $0x18] sm:$0xff pattern:$0x73625140]
      %v6037 = vld.sshfl [vmem:[#allocation1 + $0x20] sm:$0xff pattern:$0x73625140]
      %v6039 = vld.sshfl [vmem:[#allocation1 + $0x28] sm:$0xff pattern:$0x73625140]
      %v6041 = vld.sshfl [vmem:[#allocation1 + $0x30] sm:$0xff pattern:$0x73625140]
      %6043 = vrot.lane.b32.xlu0 %v6029, 117
      %v6044 = vpop.permute.xlu0 %6043
      %6045 = vrot.lane.b32.xlu0 %v6031, 117
      %v6046 = vpop.permute.xlu0 %6045
      %6047 = vrot.lane.b32.xlu0 %v6033, 117
      %v6048 = vpop.permute.xlu0 %6047
      %6049 = vrot.lane.b32.xlu0 %v6035, 117
      %v6050 = vpop.permute.xlu0 %6049
      %6051 = vrot.lane.b32.xlu0 %v6037, 117
      %v6052 = vpop.permute.xlu0 %6051
      %6053 = vrot.lane.b32.xlu0 %v6039, 117
      %v6054 = vpop.permute.xlu0 %6053
      %6055 = vrot.lane.b32.xlu0 %v6041, 117
      %v6056 = vpop.permute.xlu0 %6055
      %v6057 = vsel %vm1031, %v6044, %v6046
      %v6058 = vsel %vm1031, %v6046, %v6048
      %v6059 = vsel %vm1031, %v6048, %v6050
      %v6060 = vsel %vm1031, %v6050, %v6052
      %v6061 = vsel %vm1031, %v6052, %v6054
      %v6062 = vsel %vm1031, %v6054, %v6056
      %v6064 = vsel %vm365, %v6023, 0
      %v6067 = vsel %vm254, %v6057, 0
      %v6070 = vsel %vm254, %v6058, 0
      %v6073 = vsel %vm254, %v6059, 0
      %v6076 = vsel %vm254, %v6060, 0
      %v6079 = vsel %vm254, %v6061, 0
      %v6082 = vsel %vm254, %v6062, 0
      %v6085 = vsel %vm254, %v6056, 0
      %6087 = vmatpush.bf16.msra.mxu0 0
      %6088 = vmatpush.bf16.msra.mxu0 0
      %6089 = vmatpush.bf16.msra.mxu0 0
      %6090 = vmatpush.bf16.msra.mxu0 0
      %6091 = vmatpush.bf16.msra.mxu0 0
      %6092 = vmatpush.bf16.msra.mxu0 0
      %6093 = vmatpush.bf16.msra.mxu0 0
      %6094 = vmatpush.bf16.msra.mxu0 %v6067
      %6095 = vmatmul.bf16.gmra.mxu0 %v6064
      %v6096 = vpop.f32.mrf.mxu0
      %v6097 = vadd.f32 0.0, %v6096
      %v6098 = vpop.f32.mrf.mxu0
      %6099 = vdwg.mxu0
      %6100 = vmatpush.bf16.msra.mxu0 0
      %6101 = vmatpush.bf16.msra.mxu0 0
      %6102 = vmatpush.bf16.msra.mxu0 0
      %6103 = vmatpush.bf16.msra.mxu0 0
      %6104 = vmatpush.bf16.msra.mxu0 0
      %6105 = vmatpush.bf16.msra.mxu0 0
      %6106 = vmatpush.bf16.msra.mxu0 0
      %6107 = vmatpush.bf16.msra.mxu0 %v6070
      %6108 = vmatmul.bf16.gmra.mxu0 %v6064
      %v6109 = vpop.f32.mrf.mxu0
      %v6110 = vadd.f32 0.0, %v6109
      %v6111 = vpop.f32.mrf.mxu0
      %6112 = vdwg.mxu0
      %6113 = vmatpush.bf16.msra.mxu0 0
      %6114 = vmatpush.bf16.msra.mxu0 0
      %6115 = vmatpush.bf16.msra.mxu0 0
      %6116 = vmatpush.bf16.msra.mxu0 0
      %6117 = vmatpush.bf16.msra.mxu0 0
      %6118 = vmatpush.bf16.msra.mxu0 0
      %6119 = vmatpush.bf16.msra.mxu0 0
      %6120 = vmatpush.bf16.msra.mxu0 %v6073
      %6121 = vmatmul.bf16.gmra.mxu0 %v6064
      %v6122 = vpop.f32.mrf.mxu0
      %v6123 = vadd.f32 0.0, %v6122
      %v6124 = vpop.f32.mrf.mxu0
      %6125 = vdwg.mxu0
      %6126 = vmatpush.bf16.msra.mxu0 0
      %6127 = vmatpush.bf16.msra.mxu0 0
      %6128 = vmatpush.bf16.msra.mxu0 0
      %6129 = vmatpush.bf16.msra.mxu0 0
      %6130 = vmatpush.bf16.msra.mxu0 0
      %6131 = vmatpush.bf16.msra.mxu0 0
      %6132 = vmatpush.bf16.msra.mxu0 0
      %6133 = vmatpush.bf16.msra.mxu0 %v6076
      %6134 = vmatmul.bf16.gmra.mxu0 %v6064
      %v6135 = vpop.f32.mrf.mxu0
      %v6136 = vadd.f32 0.0, %v6135
      %v6137 = vpop.f32.mrf.mxu0
      %6138 = vdwg.mxu0
      %6139 = vmatpush.bf16.msra.mxu0 0
      %6140 = vmatpush.bf16.msra.mxu0 0
      %6141 = vmatpush.bf16.msra.mxu0 0
      %6142 = vmatpush.bf16.msra.mxu0 0
      %6143 = vmatpush.bf16.msra.mxu0 0
      %6144 = vmatpush.bf16.msra.mxu0 0
      %6145 = vmatpush.bf16.msra.mxu0 0
      %6146 = vmatpush.bf16.msra.mxu0 %v6079
      %6147 = vmatmul.bf16.gmra.mxu0 %v6064
      %v6148 = vpop.f32.mrf.mxu0
      %v6149 = vadd.f32 0.0, %v6148
      %v6150 = vpop.f32.mrf.mxu0
      %6151 = vdwg.mxu0
      %6152 = vmatpush.bf16.msra.mxu0 0
      %6153 = vmatpush.bf16.msra.mxu0 0
      %6154 = vmatpush.bf16.msra.mxu0 0
      %6155 = vmatpush.bf16.msra.mxu0 0
      %6156 = vmatpush.bf16.msra.mxu0 0
      %6157 = vmatpush.bf16.msra.mxu0 0
      %6158 = vmatpush.bf16.msra.mxu0 0
      %6159 = vmatpush.bf16.msra.mxu0 %v6082
      %6160 = vmatmul.bf16.gmra.mxu0 %v6064
      %v6161 = vpop.f32.mrf.mxu0
      %v6162 = vadd.f32 0.0, %v6161
      %v6163 = vpop.f32.mrf.mxu0
      %6164 = vdwg.mxu0
      %6165 = vmatpush.bf16.msra.mxu0 0
      %6166 = vmatpush.bf16.msra.mxu0 0
      %6167 = vmatpush.bf16.msra.mxu0 0
      %6168 = vmatpush.bf16.msra.mxu0 0
      %6169 = vmatpush.bf16.msra.mxu0 0
      %6170 = vmatpush.bf16.msra.mxu0 0
      %6171 = vmatpush.bf16.msra.mxu0 0
      %6172 = vmatpush.bf16.msra.mxu0 %v6085
      %6173 = vmatmul.bf16.gmra.mxu0 %v6064
      %v6174 = vpop.f32.mrf.mxu0
      %v6175 = vadd.f32 0.0, %v6174
      %v6176 = vpop.f32.mrf.mxu0
      %6177 = vdwg.mxu0
      %v6178 = vadd.f32 %v6013, %v6097
      %v6179 = vadd.f32 %v6014, %v6110
      %v6180 = vadd.f32 %v6015, %v6123
      %v6181 = vadd.f32 %v6016, %v6136
      %v6182 = vadd.f32 %v6017, %v6149
      %v6183 = vadd.f32 %v6018, %v6162
      %v6184 = vadd.f32 %v6019, %v6175
      %v6185 = vld [vmem:[#allocation2] sm:$0xff]
      %v6186 = vld [vmem:[#allocation2 + $0x8] sm:$0x3f]
      %s6187 = scalar_lea.vmem %s2, 10
      %v6188 = vld [vmem:[%s6187] sm:$0x3]
      %6190 = vst [vmem:[#allocation1] ss:$4 sm:$0xff] %v6185
      %s6192 = scalar_lea.vmem [#allocation1], 32
      %6193 = vst [vmem:[%s6192] ss:$4 sm:$0xff] %v6186
      %v6194 = vld.sshfl [vmem:[#allocation1] sm:$0xff pattern:$0x73625140]
      %v6196 = vld.sshfl [vmem:[#allocation1 + $0x8] sm:$0xff pattern:$0x73625140]
      %v6198 = vld.sshfl [vmem:[#allocation1 + $0x10] sm:$0xff pattern:$0x73625140]
      %v6200 = vld.sshfl [vmem:[#allocation1 + $0x18] sm:$0xff pattern:$0x73625140]
      %v6202 = vld.sshfl [vmem:[#allocation1 + $0x20] sm:$0xff pattern:$0x73625140]
      %v6204 = vld.sshfl [vmem:[#allocation1 + $0x28] sm:$0xff pattern:$0x73625140]
      %v6206 = vld.sshfl [vmem:[#allocation1 + $0x30] sm:$0xff pattern:$0x73625140]
      %6208 = vrot.lane.b32.xlu0 %v6194, 116
      %v6209 = vpop.permute.xlu0 %6208
      %6210 = vrot.lane.b32.xlu0 %v6196, 116
      %v6211 = vpop.permute.xlu0 %6210
      %6212 = vrot.lane.b32.xlu0 %v6198, 116
      %v6213 = vpop.permute.xlu0 %6212
      %6214 = vrot.lane.b32.xlu0 %v6200, 116
      %v6215 = vpop.permute.xlu0 %6214
      %6216 = vrot.lane.b32.xlu0 %v6202, 116
      %v6217 = vpop.permute.xlu0 %6216
      %6218 = vrot.lane.b32.xlu0 %v6204, 116
      %v6219 = vpop.permute.xlu0 %6218
      %6220 = vrot.lane.b32.xlu0 %v6206, 116
      %v6221 = vpop.permute.xlu0 %6220
      %v6222 = vsel %vm1219, %v6209, %v6211
      %v6223 = vsel %vm1219, %v6211, %v6213
      %v6224 = vsel %vm1219, %v6213, %v6215
      %v6225 = vsel %vm1219, %v6215, %v6217
      %v6226 = vsel %vm1219, %v6217, %v6219
      %v6227 = vsel %vm1219, %v6219, %v6221
      %v6229 = vsel %vm365, %v6188, 0
      %v6232 = vsel %vm254, %v6222, 0
      %v6235 = vsel %vm254, %v6223, 0
      %v6238 = vsel %vm254, %v6224, 0
      %v6241 = vsel %vm254, %v6225, 0
      %v6244 = vsel %vm254, %v6226, 0
      %v6247 = vsel %vm254, %v6227, 0
      %v6250 = vsel %vm254, %v6221, 0
      %6252 = vmatpush.bf16.msra.mxu0 0
      %6253 = vmatpush.bf16.msra.mxu0 0
      %6254 = vmatpush.bf16.msra.mxu0 0
      %6255 = vmatpush.bf16.msra.mxu0 0
      %6256 = vmatpush.bf16.msra.mxu0 0
      %6257 = vmatpush.bf16.msra.mxu0 0
      %6258 = vmatpush.bf16.msra.mxu0 0
      %6259 = vmatpush.bf16.msra.mxu0 %v6232
      %6260 = vmatmul.bf16.gmra.mxu0 %v6229
      %v6261 = vpop.f32.mrf.mxu0
      %v6262 = vadd.f32 0.0, %v6261
      %v6263 = vpop.f32.mrf.mxu0
      %6264 = vdwg.mxu0
      %6265 = vmatpush.bf16.msra.mxu0 0
      %6266 = vmatpush.bf16.msra.mxu0 0
      %6267 = vmatpush.bf16.msra.mxu0 0
      %6268 = vmatpush.bf16.msra.mxu0 0
      %6269 = vmatpush.bf16.msra.mxu0 0
      %6270 = vmatpush.bf16.msra.mxu0 0
      %6271 = vmatpush.bf16.msra.mxu0 0
      %6272 = vmatpush.bf16.msra.mxu0 %v6235
      %6273 = vmatmul.bf16.gmra.mxu0 %v6229
      %v6274 = vpop.f32.mrf.mxu0
      %v6275 = vadd.f32 0.0, %v6274
      %v6276 = vpop.f32.mrf.mxu0
      %6277 = vdwg.mxu0
      %6278 = vmatpush.bf16.msra.mxu0 0
      %6279 = vmatpush.bf16.msra.mxu0 0
      %6280 = vmatpush.bf16.msra.mxu0 0
      %6281 = vmatpush.bf16.msra.mxu0 0
      %6282 = vmatpush.bf16.msra.mxu0 0
      %6283 = vmatpush.bf16.msra.mxu0 0
      %6284 = vmatpush.bf16.msra.mxu0 0
      %6285 = vmatpush.bf16.msra.mxu0 %v6238
      %6286 = vmatmul.bf16.gmra.mxu0 %v6229
      %v6287 = vpop.f32.mrf.mxu0
      %v6288 = vadd.f32 0.0, %v6287
      %v6289 = vpop.f32.mrf.mxu0
      %6290 = vdwg.mxu0
      %6291 = vmatpush.bf16.msra.mxu0 0
      %6292 = vmatpush.bf16.msra.mxu0 0
      %6293 = vmatpush.bf16.msra.mxu0 0
      %6294 = vmatpush.bf16.msra.mxu0 0
      %6295 = vmatpush.bf16.msra.mxu0 0
      %6296 = vmatpush.bf16.msra.mxu0 0
      %6297 = vmatpush.bf16.msra.mxu0 0
      %6298 = vmatpush.bf16.msra.mxu0 %v6241
      %6299 = vmatmul.bf16.gmra.mxu0 %v6229
      %v6300 = vpop.f32.mrf.mxu0
      %v6301 = vadd.f32 0.0, %v6300
      %v6302 = vpop.f32.mrf.mxu0
      %6303 = vdwg.mxu0
      %6304 = vmatpush.bf16.msra.mxu0 0
      %6305 = vmatpush.bf16.msra.mxu0 0
      %6306 = vmatpush.bf16.msra.mxu0 0
      %6307 = vmatpush.bf16.msra.mxu0 0
      %6308 = vmatpush.bf16.msra.mxu0 0
      %6309 = vmatpush.bf16.msra.mxu0 0
      %6310 = vmatpush.bf16.msra.mxu0 0
      %6311 = vmatpush.bf16.msra.mxu0 %v6244
      %6312 = vmatmul.bf16.gmra.mxu0 %v6229
      %v6313 = vpop.f32.mrf.mxu0
      %v6314 = vadd.f32 0.0, %v6313
      %v6315 = vpop.f32.mrf.mxu0
      %6316 = vdwg.mxu0
      %6317 = vmatpush.bf16.msra.mxu0 0
      %6318 = vmatpush.bf16.msra.mxu0 0
      %6319 = vmatpush.bf16.msra.mxu0 0
      %6320 = vmatpush.bf16.msra.mxu0 0
      %6321 = vmatpush.bf16.msra.mxu0 0
      %6322 = vmatpush.bf16.msra.mxu0 0
      %6323 = vmatpush.bf16.msra.mxu0 0
      %6324 = vmatpush.bf16.msra.mxu0 %v6247
      %6325 = vmatmul.bf16.gmra.mxu0 %v6229
      %v6326 = vpop.f32.mrf.mxu0
      %v6327 = vadd.f32 0.0, %v6326
      %v6328 = vpop.f32.mrf.mxu0
      %6329 = vdwg.mxu0
      %6330 = vmatpush.bf16.msra.mxu0 0
      %6331 = vmatpush.bf16.msra.mxu0 0
      %6332 = vmatpush.bf16.msra.mxu0 0
      %6333 = vmatpush.bf16.msra.mxu0 0
      %6334 = vmatpush.bf16.msra.mxu0 0
      %6335 = vmatpush.bf16.msra.mxu0 0
      %6336 = vmatpush.bf16.msra.mxu0 0
      %6337 = vmatpush.bf16.msra.mxu0 %v6250
      %6338 = vmatmul.bf16.gmra.mxu0 %v6229
      %v6339 = vpop.f32.mrf.mxu0
      %v6340 = vadd.f32 0.0, %v6339
      %v6341 = vpop.f32.mrf.mxu0
      %6342 = vdwg.mxu0
      %v6343 = vadd.f32 %v6178, %v6262
      %v6344 = vadd.f32 %v6179, %v6275
      %v6345 = vadd.f32 %v6180, %v6288
      %v6346 = vadd.f32 %v6181, %v6301
      %v6347 = vadd.f32 %v6182, %v6314
      %v6348 = vadd.f32 %v6183, %v6327
      %v6349 = vadd.f32 %v6184, %v6340
      %v6350 = vld [vmem:[#allocation2] sm:$0xff]
      %v6351 = vld [vmem:[#allocation2 + $0x8] sm:$0x3f]
      %s6352 = scalar_lea.vmem %s2, 12
      %v6353 = vld [vmem:[%s6352] sm:$0x3]
      %6355 = vst [vmem:[#allocation1] ss:$4 sm:$0xff] %v6350
      %s6357 = scalar_lea.vmem [#allocation1], 32
      %6358 = vst [vmem:[%s6357] ss:$4 sm:$0xff] %v6351
      %v6359 = vld.sshfl [vmem:[#allocation1] sm:$0xff pattern:$0x73625140]
      %v6361 = vld.sshfl [vmem:[#allocation1 + $0x8] sm:$0xff pattern:$0x73625140]
      %v6363 = vld.sshfl [vmem:[#allocation1 + $0x10] sm:$0xff pattern:$0x73625140]
      %v6365 = vld.sshfl [vmem:[#allocation1 + $0x18] sm:$0xff pattern:$0x73625140]
      %v6367 = vld.sshfl [vmem:[#allocation1 + $0x20] sm:$0xff pattern:$0x73625140]
      %v6369 = vld.sshfl [vmem:[#allocation1 + $0x28] sm:$0xff pattern:$0x73625140]
      %v6371 = vld.sshfl [vmem:[#allocation1 + $0x30] sm:$0xff pattern:$0x73625140]
      %6373 = vrot.lane.b32.xlu0 %v6359, 108
      %v6374 = vpop.permute.xlu0 %6373
      %6375 = vrot.lane.b32.xlu0 %v6361, 108
      %v6376 = vpop.permute.xlu0 %6375
      %6377 = vrot.lane.b32.xlu0 %v6363, 108
      %v6378 = vpop.permute.xlu0 %6377
      %6379 = vrot.lane.b32.xlu0 %v6365, 108
      %v6380 = vpop.permute.xlu0 %6379
      %6381 = vrot.lane.b32.xlu0 %v6367, 108
      %v6382 = vpop.permute.xlu0 %6381
      %6383 = vrot.lane.b32.xlu0 %v6369, 108
      %v6384 = vpop.permute.xlu0 %6383
      %6385 = vrot.lane.b32.xlu0 %v6371, 108
      %v6386 = vpop.permute.xlu0 %6385
      %v6387 = vsel %vm1407, %v6374, %v6376
      %v6388 = vsel %vm1407, %v6376, %v6378
      %v6389 = vsel %vm1407, %v6378, %v6380
      %v6390 = vsel %vm1407, %v6380, %v6382
      %v6391 = vsel %vm1407, %v6382, %v6384
      %v6392 = vsel %vm1407, %v6384, %v6386
      %v6394 = vsel %vm365, %v6353, 0
      %v6397 = vsel %vm254, %v6387, 0
      %v6400 = vsel %vm254, %v6388, 0
      %v6403 = vsel %vm254, %v6389, 0
      %v6406 = vsel %vm254, %v6390, 0
      %v6409 = vsel %vm254, %v6391, 0
      %v6412 = vsel %vm254, %v6392, 0
      %v6415 = vsel %vm254, %v6386, 0
      %6417 = vmatpush.bf16.msra.mxu0 0
      %6418 = vmatpush.bf16.msra.mxu0 0
      %6419 = vmatpush.bf16.msra.mxu0 0
      %6420 = vmatpush.bf16.msra.mxu0 0
      %6421 = vmatpush.bf16.msra.mxu0 0
      %6422 = vmatpush.bf16.msra.mxu0 0
      %6423 = vmatpush.bf16.msra.mxu0 0
      %6424 = vmatpush.bf16.msra.mxu0 %v6397
      %6425 = vmatmul.bf16.gmra.mxu0 %v6394
      %v6426 = vpop.f32.mrf.mxu0
      %v6427 = vadd.f32 0.0, %v6426
      %v6428 = vpop.f32.mrf.mxu0
      %6429 = vdwg.mxu0
      %6430 = vmatpush.bf16.msra.mxu0 0
      %6431 = vmatpush.bf16.msra.mxu0 0
      %6432 = vmatpush.bf16.msra.mxu0 0
      %6433 = vmatpush.bf16.msra.mxu0 0
      %6434 = vmatpush.bf16.msra.mxu0 0
      %6435 = vmatpush.bf16.msra.mxu0 0
      %6436 = vmatpush.bf16.msra.mxu0 0
      %6437 = vmatpush.bf16.msra.mxu0 %v6400
      %6438 = vmatmul.bf16.gmra.mxu0 %v6394
      %v6439 = vpop.f32.mrf.mxu0
      %v6440 = vadd.f32 0.0, %v6439
      %v6441 = vpop.f32.mrf.mxu0
      %6442 = vdwg.mxu0
      %6443 = vmatpush.bf16.msra.mxu0 0
      %6444 = vmatpush.bf16.msra.mxu0 0
      %6445 = vmatpush.bf16.msra.mxu0 0
      %6446 = vmatpush.bf16.msra.mxu0 0
      %6447 = vmatpush.bf16.msra.mxu0 0
      %6448 = vmatpush.bf16.msra.mxu0 0
      %6449 = vmatpush.bf16.msra.mxu0 0
      %6450 = vmatpush.bf16.msra.mxu0 %v6403
      %6451 = vmatmul.bf16.gmra.mxu0 %v6394
      %v6452 = vpop.f32.mrf.mxu0
      %v6453 = vadd.f32 0.0, %v6452
      %v6454 = vpop.f32.mrf.mxu0
      %6455 = vdwg.mxu0
      %6456 = vmatpush.bf16.msra.mxu0 0
      %6457 = vmatpush.bf16.msra.mxu0 0
      %6458 = vmatpush.bf16.msra.mxu0 0
      %6459 = vmatpush.bf16.msra.mxu0 0
      %6460 = vmatpush.bf16.msra.mxu0 0
      %6461 = vmatpush.bf16.msra.mxu0 0
      %6462 = vmatpush.bf16.msra.mxu0 0
      %6463 = vmatpush.bf16.msra.mxu0 %v6406
      %6464 = vmatmul.bf16.gmra.mxu0 %v6394
      %v6465 = vpop.f32.mrf.mxu0
      %v6466 = vadd.f32 0.0, %v6465
      %v6467 = vpop.f32.mrf.mxu0
      %6468 = vdwg.mxu0
      %6469 = vmatpush.bf16.msra.mxu0 0
      %6470 = vmatpush.bf16.msra.mxu0 0
      %6471 = vmatpush.bf16.msra.mxu0 0
      %6472 = vmatpush.bf16.msra.mxu0 0
      %6473 = vmatpush.bf16.msra.mxu0 0
      %6474 = vmatpush.bf16.msra.mxu0 0
      %6475 = vmatpush.bf16.msra.mxu0 0
      %6476 = vmatpush.bf16.msra.mxu0 %v6409
      %6477 = vmatmul.bf16.gmra.mxu0 %v6394
      %v6478 = vpop.f32.mrf.mxu0
      %v6479 = vadd.f32 0.0, %v6478
      %v6480 = vpop.f32.mrf.mxu0
      %6481 = vdwg.mxu0
      %6482 = vmatpush.bf16.msra.mxu0 0
      %6483 = vmatpush.bf16.msra.mxu0 0
      %6484 = vmatpush.bf16.msra.mxu0 0
      %6485 = vmatpush.bf16.msra.mxu0 0
      %6486 = vmatpush.bf16.msra.mxu0 0
      %6487 = vmatpush.bf16.msra.mxu0 0
      %6488 = vmatpush.bf16.msra.mxu0 0
      %6489 = vmatpush.bf16.msra.mxu0 %v6412
      %6490 = vmatmul.bf16.gmra.mxu0 %v6394
      %v6491 = vpop.f32.mrf.mxu0
      %v6492 = vadd.f32 0.0, %v6491
      %v6493 = vpop.f32.mrf.mxu0
      %6494 = vdwg.mxu0
      %6495 = vmatpush.bf16.msra.mxu0 0
      %6496 = vmatpush.bf16.msra.mxu0 0
      %6497 = vmatpush.bf16.msra.mxu0 0
      %6498 = vmatpush.bf16.msra.mxu0 0
      %6499 = vmatpush.bf16.msra.mxu0 0
      %6500 = vmatpush.bf16.msra.mxu0 0
      %6501 = vmatpush.bf16.msra.mxu0 0
      %6502 = vmatpush.bf16.msra.mxu0 %v6415
      %6503 = vmatmul.bf16.gmra.mxu0 %v6394
      %v6504 = vpop.f32.mrf.mxu0
      %v6505 = vadd.f32 0.0, %v6504
      %v6506 = vpop.f32.mrf.mxu0
      %6507 = vdwg.mxu0
      %v6508 = vadd.f32 %v6343, %v6427
      %v6509 = vadd.f32 %v6344, %v6440
      %v6510 = vadd.f32 %v6345, %v6453
      %v6511 = vadd.f32 %v6346, %v6466
      %v6512 = vadd.f32 %v6347, %v6479
      %v6513 = vadd.f32 %v6348, %v6492
      %v6514 = vadd.f32 %v6349, %v6505
      %v6515 = vld [vmem:[#allocation2] sm:$0xff]
      %v6516 = vld [vmem:[#allocation2 + $0x8] sm:$0x3f]
      %s6517 = scalar_lea.vmem %s2, 14
      %v6518 = vld [vmem:[%s6517] sm:$0x3]
      %6520 = vst [vmem:[#allocation1] ss:$4 sm:$0xff] %v6515
      %s6522 = scalar_lea.vmem [#allocation1], 32
      %6523 = vst [vmem:[%s6522] ss:$4 sm:$0xff] %v6516
      %v6524 = vld.sshfl [vmem:[#allocation1] sm:$0xff pattern:$0x73625140]
      %v6526 = vld.sshfl [vmem:[#allocation1 + $0x8] sm:$0xff pattern:$0x73625140]
      %v6528 = vld.sshfl [vmem:[#allocation1 + $0x10] sm:$0xff pattern:$0x73625140]
      %v6530 = vld.sshfl [vmem:[#allocation1 + $0x18] sm:$0xff pattern:$0x73625140]
      %v6532 = vld.sshfl [vmem:[#allocation1 + $0x20] sm:$0xff pattern:$0x73625140]
      %v6534 = vld.sshfl [vmem:[#allocation1 + $0x28] sm:$0xff pattern:$0x73625140]
      %v6536 = vld.sshfl [vmem:[#allocation1 + $0x30] sm:$0xff pattern:$0x73625140]
      %6538 = vrot.lane.b32.xlu0 %v6524, 107
      %v6539 = vpop.permute.xlu0 %6538
      %6540 = vrot.lane.b32.xlu0 %v6526, 107
      %v6541 = vpop.permute.xlu0 %6540
      %6542 = vrot.lane.b32.xlu0 %v6528, 107
      %v6543 = vpop.permute.xlu0 %6542
      %6544 = vrot.lane.b32.xlu0 %v6530, 107
      %v6545 = vpop.permute.xlu0 %6544
      %6546 = vrot.lane.b32.xlu0 %v6532, 107
      %v6547 = vpop.permute.xlu0 %6546
      %6548 = vrot.lane.b32.xlu0 %v6534, 107
      %v6549 = vpop.permute.xlu0 %6548
      %6550 = vrot.lane.b32.xlu0 %v6536, 107
      %v6551 = vpop.permute.xlu0 %6550
      %v6552 = vsel %vm1595, %v6539, %v6541
      %v6553 = vsel %vm1595, %v6541, %v6543
      %v6554 = vsel %vm1595, %v6543, %v6545
      %v6555 = vsel %vm1595, %v6545, %v6547
      %v6556 = vsel %vm1595, %v6547, %v6549
      %v6557 = vsel %vm1595, %v6549, %v6551
      %v6559 = vsel %vm365, %v6518, 0
      %v6562 = vsel %vm254, %v6552, 0
      %v6565 = vsel %vm254, %v6553, 0
      %v6568 = vsel %vm254, %v6554, 0
      %v6571 = vsel %vm254, %v6555, 0
      %v6574 = vsel %vm254, %v6556, 0
      %v6577 = vsel %vm254, %v6557, 0
      %v6580 = vsel %vm254, %v6551, 0
      %6582 = vmatpush.bf16.msra.mxu0 0
      %6583 = vmatpush.bf16.msra.mxu0 0
      %6584 = vmatpush.bf16.msra.mxu0 0
      %6585 = vmatpush.bf16.msra.mxu0 0
      %6586 = vmatpush.bf16.msra.mxu0 0
      %6587 = vmatpush.bf16.msra.mxu0 0
      %6588 = vmatpush.bf16.msra.mxu0 0
      %6589 = vmatpush.bf16.msra.mxu0 %v6562
      %6590 = vmatmul.bf16.gmra.mxu0 %v6559
      %v6591 = vpop.f32.mrf.mxu0
      %v6592 = vadd.f32 0.0, %v6591
      %v6593 = vpop.f32.mrf.mxu0
      %6594 = vdwg.mxu0
      %6595 = vmatpush.bf16.msra.mxu0 0
      %6596 = vmatpush.bf16.msra.mxu0 0
      %6597 = vmatpush.bf16.msra.mxu0 0
      %6598 = vmatpush.bf16.msra.mxu0 0
      %6599 = vmatpush.bf16.msra.mxu0 0
      %6600 = vmatpush.bf16.msra.mxu0 0
      %6601 = vmatpush.bf16.msra.mxu0 0
      %6602 = vmatpush.bf16.msra.mxu0 %v6565
      %6603 = vmatmul.bf16.gmra.mxu0 %v6559
      %v6604 = vpop.f32.mrf.mxu0
      %v6605 = vadd.f32 0.0, %v6604
      %v6606 = vpop.f32.mrf.mxu0
      %6607 = vdwg.mxu0
      %6608 = vmatpush.bf16.msra.mxu0 0
      %6609 = vmatpush.bf16.msra.mxu0 0
      %6610 = vmatpush.bf16.msra.mxu0 0
      %6611 = vmatpush.bf16.msra.mxu0 0
      %6612 = vmatpush.bf16.msra.mxu0 0
      %6613 = vmatpush.bf16.msra.mxu0 0
      %6614 = vmatpush.bf16.msra.mxu0 0
      %6615 = vmatpush.bf16.msra.mxu0 %v6568
      %6616 = vmatmul.bf16.gmra.mxu0 %v6559
      %v6617 = vpop.f32.mrf.mxu0
      %v6618 = vadd.f32 0.0, %v6617
      %v6619 = vpop.f32.mrf.mxu0
      %6620 = vdwg.mxu0
      %6621 = vmatpush.bf16.msra.mxu0 0
      %6622 = vmatpush.bf16.msra.mxu0 0
      %6623 = vmatpush.bf16.msra.mxu0 0
      %6624 = vmatpush.bf16.msra.mxu0 0
      %6625 = vmatpush.bf16.msra.mxu0 0
      %6626 = vmatpush.bf16.msra.mxu0 0
      %6627 = vmatpush.bf16.msra.mxu0 0
      %6628 = vmatpush.bf16.msra.mxu0 %v6571
      %6629 = vmatmul.bf16.gmra.mxu0 %v6559
      %v6630 = vpop.f32.mrf.mxu0
      %v6631 = vadd.f32 0.0, %v6630
      %v6632 = vpop.f32.mrf.mxu0
      %6633 = vdwg.mxu0
      %6634 = vmatpush.bf16.msra.mxu0 0
      %6635 = vmatpush.bf16.msra.mxu0 0
      %6636 = vmatpush.bf16.msra.mxu0 0
      %6637 = vmatpush.bf16.msra.mxu0 0
      %6638 = vmatpush.bf16.msra.mxu0 0
      %6639 = vmatpush.bf16.msra.mxu0 0
      %6640 = vmatpush.bf16.msra.mxu0 0
      %6641 = vmatpush.bf16.msra.mxu0 %v6574
      %6642 = vmatmul.bf16.gmra.mxu0 %v6559
      %v6643 = vpop.f32.mrf.mxu0
      %v6644 = vadd.f32 0.0, %v6643
      %v6645 = vpop.f32.mrf.mxu0
      %6646 = vdwg.mxu0
      %6647 = vmatpush.bf16.msra.mxu0 0
      %6648 = vmatpush.bf16.msra.mxu0 0
      %6649 = vmatpush.bf16.msra.mxu0 0
      %6650 = vmatpush.bf16.msra.mxu0 0
      %6651 = vmatpush.bf16.msra.mxu0 0
      %6652 = vmatpush.bf16.msra.mxu0 0
      %6653 = vmatpush.bf16.msra.mxu0 0
      %6654 = vmatpush.bf16.msra.mxu0 %v6577
      %6655 = vmatmul.bf16.gmra.mxu0 %v6559
      %v6656 = vpop.f32.mrf.mxu0
      %v6657 = vadd.f32 0.0, %v6656
      %v6658 = vpop.f32.mrf.mxu0
      %6659 = vdwg.mxu0
      %6660 = vmatpush.bf16.msra.mxu0 0
      %6661 = vmatpush.bf16.msra.mxu0 0
      %6662 = vmatpush.bf16.msra.mxu0 0
      %6663 = vmatpush.bf16.msra.mxu0 0
      %6664 = vmatpush.bf16.msra.mxu0 0
      %6665 = vmatpush.bf16.msra.mxu0 0
      %6666 = vmatpush.bf16.msra.mxu0 0
      %6667 = vmatpush.bf16.msra.mxu0 %v6580
      %6668 = vmatmul.bf16.gmra.mxu0 %v6559
      %v6669 = vpop.f32.mrf.mxu0
      %v6670 = vadd.f32 0.0, %v6669
      %v6671 = vpop.f32.mrf.mxu0
      %6672 = vdwg.mxu0
      %v6673 = vadd.f32 %v6508, %v6592
      %v6674 = vadd.f32 %v6509, %v6605
      %v6675 = vadd.f32 %v6510, %v6618
      %v6676 = vadd.f32 %v6511, %v6631
      %v6677 = vadd.f32 %v6512, %v6644
      %v6678 = vadd.f32 %v6513, %v6657
      %v6679 = vadd.f32 %v6514, %v6670
      %v6680 = vld [vmem:[#allocation2] sm:$0xff]
      %v6681 = vld [vmem:[#allocation2 + $0x8] sm:$0x3f]
      %s6682 = scalar_lea.vmem %s2, 16
      %v6683 = vld [vmem:[%s6682] sm:$0x3]
      %6685 = vst [vmem:[#allocation1] ss:$4 sm:$0xff] %v6680
      %s6687 = scalar_lea.vmem [#allocation1], 32
      %6688 = vst [vmem:[%s6687] ss:$4 sm:$0xff] %v6681
      %v6689 = vld.sshfl [vmem:[#allocation1] sm:$0xff pattern:$0x73625140]
      %v6691 = vld.sshfl [vmem:[#allocation1 + $0x8] sm:$0xff pattern:$0x73625140]
      %v6693 = vld.sshfl [vmem:[#allocation1 + $0x10] sm:$0xff pattern:$0x73625140]
      %v6695 = vld.sshfl [vmem:[#allocation1 + $0x18] sm:$0xff pattern:$0x73625140]
      %v6697 = vld.sshfl [vmem:[#allocation1 + $0x20] sm:$0xff pattern:$0x73625140]
      %v6699 = vld.sshfl [vmem:[#allocation1 + $0x28] sm:$0xff pattern:$0x73625140]
      %v6701 = vld.sshfl [vmem:[#allocation1 + $0x30] sm:$0xff pattern:$0x73625140]
      %6703 = vrot.lane.b32.xlu0 %v6689, 106
      %v6704 = vpop.permute.xlu0 %6703
      %6705 = vrot.lane.b32.xlu0 %v6691, 106
      %v6706 = vpop.permute.xlu0 %6705
      %6707 = vrot.lane.b32.xlu0 %v6693, 106
      %v6708 = vpop.permute.xlu0 %6707
      %6709 = vrot.lane.b32.xlu0 %v6695, 106
      %v6710 = vpop.permute.xlu0 %6709
      %6711 = vrot.lane.b32.xlu0 %v6697, 106
      %v6712 = vpop.permute.xlu0 %6711
      %6713 = vrot.lane.b32.xlu0 %v6699, 106
      %v6714 = vpop.permute.xlu0 %6713
      %6715 = vrot.lane.b32.xlu0 %v6701, 106
      %v6716 = vpop.permute.xlu0 %6715
      %v6717 = vsel %vm1783, %v6704, %v6706
      %v6718 = vsel %vm1783, %v6706, %v6708
      %v6719 = vsel %vm1783, %v6708, %v6710
      %v6720 = vsel %vm1783, %v6710, %v6712
      %v6721 = vsel %vm1783, %v6712, %v6714
      %v6722 = vsel %vm1783, %v6714, %v6716
      %v6724 = vsel %vm365, %v6683, 0
      %v6727 = vsel %vm254, %v6717, 0
      %v6730 = vsel %vm254, %v6718, 0
      %v6733 = vsel %vm254, %v6719, 0
      %v6736 = vsel %vm254, %v6720, 0
      %v6739 = vsel %vm254, %v6721, 0
      %v6742 = vsel %vm254, %v6722, 0
      %v6745 = vsel %vm254, %v6716, 0
      %6747 = vmatpush.bf16.msra.mxu0 0
      %6748 = vmatpush.bf16.msra.mxu0 0
      %6749 = vmatpush.bf16.msra.mxu0 0
      %6750 = vmatpush.bf16.msra.mxu0 0
      %6751 = vmatpush.bf16.msra.mxu0 0
      %6752 = vmatpush.bf16.msra.mxu0 0
      %6753 = vmatpush.bf16.msra.mxu0 0
      %6754 = vmatpush.bf16.msra.mxu0 %v6727
      %6755 = vmatmul.bf16.gmra.mxu0 %v6724
      %v6756 = vpop.f32.mrf.mxu0
      %v6757 = vadd.f32 0.0, %v6756
      %v6758 = vpop.f32.mrf.mxu0
      %6759 = vdwg.mxu0
      %6760 = vmatpush.bf16.msra.mxu0 0
      %6761 = vmatpush.bf16.msra.mxu0 0
      %6762 = vmatpush.bf16.msra.mxu0 0
      %6763 = vmatpush.bf16.msra.mxu0 0
      %6764 = vmatpush.bf16.msra.mxu0 0
      %6765 = vmatpush.bf16.msra.mxu0 0
      %6766 = vmatpush.bf16.msra.mxu0 0
      %6767 = vmatpush.bf16.msra.mxu0 %v6730
      %6768 = vmatmul.bf16.gmra.mxu0 %v6724
      %v6769 = vpop.f32.mrf.mxu0
      %v6770 = vadd.f32 0.0, %v6769
      %v6771 = vpop.f32.mrf.mxu0
      %6772 = vdwg.mxu0
      %6773 = vmatpush.bf16.msra.mxu0 0
      %6774 = vmatpush.bf16.msra.mxu0 0
      %6775 = vmatpush.bf16.msra.mxu0 0
      %6776 = vmatpush.bf16.msra.mxu0 0
      %6777 = vmatpush.bf16.msra.mxu0 0
      %6778 = vmatpush.bf16.msra.mxu0 0
      %6779 = vmatpush.bf16.msra.mxu0 0
      %6780 = vmatpush.bf16.msra.mxu0 %v6733
      %6781 = vmatmul.bf16.gmra.mxu0 %v6724
      %v6782 = vpop.f32.mrf.mxu0
      %v6783 = vadd.f32 0.0, %v6782
      %v6784 = vpop.f32.mrf.mxu0
      %6785 = vdwg.mxu0
      %6786 = vmatpush.bf16.msra.mxu0 0
      %6787 = vmatpush.bf16.msra.mxu0 0
      %6788 = vmatpush.bf16.msra.mxu0 0
      %6789 = vmatpush.bf16.msra.mxu0 0
      %6790 = vmatpush.bf16.msra.mxu0 0
      %6791 = vmatpush.bf16.msra.mxu0 0
      %6792 = vmatpush.bf16.msra.mxu0 0
      %6793 = vmatpush.bf16.msra.mxu0 %v6736
      %6794 = vmatmul.bf16.gmra.mxu0 %v6724
      %v6795 = vpop.f32.mrf.mxu0
      %v6796 = vadd.f32 0.0, %v6795
      %v6797 = vpop.f32.mrf.mxu0
      %6798 = vdwg.mxu0
      %6799 = vmatpush.bf16.msra.mxu0 0
      %6800 = vmatpush.bf16.msra.mxu0 0
      %6801 = vmatpush.bf16.msra.mxu0 0
      %6802 = vmatpush.bf16.msra.mxu0 0
      %6803 = vmatpush.bf16.msra.mxu0 0
      %6804 = vmatpush.bf16.msra.mxu0 0
      %6805 = vmatpush.bf16.msra.mxu0 0
      %6806 = vmatpush.bf16.msra.mxu0 %v6739
      %6807 = vmatmul.bf16.gmra.mxu0 %v6724
      %v6808 = vpop.f32.mrf.mxu0
      %v6809 = vadd.f32 0.0, %v6808
      %v6810 = vpop.f32.mrf.mxu0
      %6811 = vdwg.mxu0
      %6812 = vmatpush.bf16.msra.mxu0 0
      %6813 = vmatpush.bf16.msra.mxu0 0
      %6814 = vmatpush.bf16.msra.mxu0 0
      %6815 = vmatpush.bf16.msra.mxu0 0
      %6816 = vmatpush.bf16.msra.mxu0 0
      %6817 = vmatpush.bf16.msra.mxu0 0
      %6818 = vmatpush.bf16.msra.mxu0 0
      %6819 = vmatpush.bf16.msra.mxu0 %v6742
      %6820 = vmatmul.bf16.gmra.mxu0 %v6724
      %v6821 = vpop.f32.mrf.mxu0
      %v6822 = vadd.f32 0.0, %v6821
      %v6823 = vpop.f32.mrf.mxu0
      %6824 = vdwg.mxu0
      %6825 = vmatpush.bf16.msra.mxu0 0
      %6826 = vmatpush.bf16.msra.mxu0 0
      %6827 = vmatpush.bf16.msra.mxu0 0
      %6828 = vmatpush.bf16.msra.mxu0 0
      %6829 = vmatpush.bf16.msra.mxu0 0
      %6830 = vmatpush.bf16.msra.mxu0 0
      %6831 = vmatpush.bf16.msra.mxu0 0
      %6832 = vmatpush.bf16.msra.mxu0 %v6745
      %6833 = vmatmul.bf16.gmra.mxu0 %v6724
      %v6834 = vpop.f32.mrf.mxu0
      %v6835 = vadd.f32 0.0, %v6834
      %v6836 = vpop.f32.mrf.mxu0
      %6837 = vdwg.mxu0
      %v6838 = vadd.f32 %v6673, %v6757
      %v6839 = vadd.f32 %v6674, %v6770
      %v6840 = vadd.f32 %v6675, %v6783
      %v6841 = vadd.f32 %v6676, %v6796
      %v6842 = vadd.f32 %v6677, %v6809
      %v6843 = vadd.f32 %v6678, %v6822
      %v6844 = vadd.f32 %v6679, %v6835
      %v6845 = vld [vmem:[#allocation2] sm:$0xff]
      %v6846 = vld [vmem:[#allocation2 + $0x8] sm:$0x3f]
      %s6847 = scalar_lea.vmem %s2, 18
      %v6848 = vld [vmem:[%s6847] sm:$0x3]
      %6850 = vst [vmem:[#allocation1] ss:$4 sm:$0xff] %v6845
      %s6852 = scalar_lea.vmem [#allocation1], 32
      %6853 = vst [vmem:[%s6852] ss:$4 sm:$0xff] %v6846
      %v6854 = vld.sshfl [vmem:[#allocation1] sm:$0xff pattern:$0x73625140]
      %v6856 = vld.sshfl [vmem:[#allocation1 + $0x8] sm:$0xff pattern:$0x73625140]
      %v6858 = vld.sshfl [vmem:[#allocation1 + $0x10] sm:$0xff pattern:$0x73625140]
      %v6860 = vld.sshfl [vmem:[#allocation1 + $0x18] sm:$0xff pattern:$0x73625140]
      %v6862 = vld.sshfl [vmem:[#allocation1 + $0x20] sm:$0xff pattern:$0x73625140]
      %v6864 = vld.sshfl [vmem:[#allocation1 + $0x28] sm:$0xff pattern:$0x73625140]
      %v6866 = vld.sshfl [vmem:[#allocation1 + $0x30] sm:$0xff pattern:$0x73625140]
      %6868 = vrot.lane.b32.xlu0 %v6854, 28
      %v6869 = vpop.permute.xlu0 %6868
      %6870 = vrot.lane.b32.xlu0 %v6856, 28
      %v6871 = vpop.permute.xlu0 %6870
      %6872 = vrot.lane.b32.xlu0 %v6858, 28
      %v6873 = vpop.permute.xlu0 %6872
      %6874 = vrot.lane.b32.xlu0 %v6860, 28
      %v6875 = vpop.permute.xlu0 %6874
      %6876 = vrot.lane.b32.xlu0 %v6862, 28
      %v6877 = vpop.permute.xlu0 %6876
      %6878 = vrot.lane.b32.xlu0 %v6864, 28
      %v6879 = vpop.permute.xlu0 %6878
      %6880 = vrot.lane.b32.xlu0 %v6866, 28
      %v6881 = vpop.permute.xlu0 %6880
      %v6882 = vsel %vm1971, %v6869, %v6871
      %v6883 = vsel %vm1971, %v6871, %v6873
      %v6884 = vsel %vm1971, %v6873, %v6875
      %v6885 = vsel %vm1971, %v6875, %v6877
      %v6886 = vsel %vm1971, %v6877, %v6879
      %v6887 = vsel %vm1971, %v6879, %v6881
      %v6889 = vsel %vm365, %v6848, 0
      %v6892 = vsel %vm254, %v6882, 0
      %v6895 = vsel %vm254, %v6883, 0
      %v6898 = vsel %vm254, %v6884, 0
      %v6901 = vsel %vm254, %v6885, 0
      %v6904 = vsel %vm254, %v6886, 0
      %v6907 = vsel %vm254, %v6887, 0
      %v6910 = vsel %vm254, %v6881, 0
      %6912 = vmatpush.bf16.msra.mxu0 0
      %6913 = vmatpush.bf16.msra.mxu0 0
      %6914 = vmatpush.bf16.msra.mxu0 0
      %6915 = vmatpush.bf16.msra.mxu0 0
      %6916 = vmatpush.bf16.msra.mxu0 0
      %6917 = vmatpush.bf16.msra.mxu0 0
      %6918 = vmatpush.bf16.msra.mxu0 0
      %6919 = vmatpush.bf16.msra.mxu0 %v6892
      %6920 = vmatmul.bf16.gmra.mxu0 %v6889
      %v6921 = vpop.f32.mrf.mxu0
      %v6922 = vadd.f32 0.0, %v6921
      %v6923 = vpop.f32.mrf.mxu0
      %6924 = vdwg.mxu0
      %6925 = vmatpush.bf16.msra.mxu0 0
      %6926 = vmatpush.bf16.msra.mxu0 0
      %6927 = vmatpush.bf16.msra.mxu0 0
      %6928 = vmatpush.bf16.msra.mxu0 0
      %6929 = vmatpush.bf16.msra.mxu0 0
      %6930 = vmatpush.bf16.msra.mxu0 0
      %6931 = vmatpush.bf16.msra.mxu0 0
      %6932 = vmatpush.bf16.msra.mxu0 %v6895
      %6933 = vmatmul.bf16.gmra.mxu0 %v6889
      %v6934 = vpop.f32.mrf.mxu0
      %v6935 = vadd.f32 0.0, %v6934
      %v6936 = vpop.f32.mrf.mxu0
      %6937 = vdwg.mxu0
      %6938 = vmatpush.bf16.msra.mxu0 0
      %6939 = vmatpush.bf16.msra.mxu0 0
      %6940 = vmatpush.bf16.msra.mxu0 0
      %6941 = vmatpush.bf16.msra.mxu0 0
      %6942 = vmatpush.bf16.msra.mxu0 0
      %6943 = vmatpush.bf16.msra.mxu0 0
      %6944 = vmatpush.bf16.msra.mxu0 0
      %6945 = vmatpush.bf16.msra.mxu0 %v6898
      %6946 = vmatmul.bf16.gmra.mxu0 %v6889
      %v6947 = vpop.f32.mrf.mxu0
      %v6948 = vadd.f32 0.0, %v6947
      %v6949 = vpop.f32.mrf.mxu0
      %6950 = vdwg.mxu0
      %6951 = vmatpush.bf16.msra.mxu0 0
      %6952 = vmatpush.bf16.msra.mxu0 0
      %6953 = vmatpush.bf16.msra.mxu0 0
      %6954 = vmatpush.bf16.msra.mxu0 0
      %6955 = vmatpush.bf16.msra.mxu0 0
      %6956 = vmatpush.bf16.msra.mxu0 0
      %6957 = vmatpush.bf16.msra.mxu0 0
      %6958 = vmatpush.bf16.msra.mxu0 %v6901
      %6959 = vmatmul.bf16.gmra.mxu0 %v6889
      %v6960 = vpop.f32.mrf.mxu0
      %v6961 = vadd.f32 0.0, %v6960
      %v6962 = vpop.f32.mrf.mxu0
      %6963 = vdwg.mxu0
      %6964 = vmatpush.bf16.msra.mxu0 0
      %6965 = vmatpush.bf16.msra.mxu0 0
      %6966 = vmatpush.bf16.msra.mxu0 0
      %6967 = vmatpush.bf16.msra.mxu0 0
      %6968 = vmatpush.bf16.msra.mxu0 0
      %6969 = vmatpush.bf16.msra.mxu0 0
      %6970 = vmatpush.bf16.msra.mxu0 0
      %6971 = vmatpush.bf16.msra.mxu0 %v6904
      %6972 = vmatmul.bf16.gmra.mxu0 %v6889
      %v6973 = vpop.f32.mrf.mxu0
      %v6974 = vadd.f32 0.0, %v6973
      %v6975 = vpop.f32.mrf.mxu0
      %6976 = vdwg.mxu0
      %6977 = vmatpush.bf16.msra.mxu0 0
      %6978 = vmatpush.bf16.msra.mxu0 0
      %6979 = vmatpush.bf16.msra.mxu0 0
      %6980 = vmatpush.bf16.msra.mxu0 0
      %6981 = vmatpush.bf16.msra.mxu0 0
      %6982 = vmatpush.bf16.msra.mxu0 0
      %6983 = vmatpush.bf16.msra.mxu0 0
      %6984 = vmatpush.bf16.msra.mxu0 %v6907
      %6985 = vmatmul.bf16.gmra.mxu0 %v6889
      %v6986 = vpop.f32.mrf.mxu0
      %v6987 = vadd.f32 0.0, %v6986
      %v6988 = vpop.f32.mrf.mxu0
      %6989 = vdwg.mxu0
      %6990 = vmatpush.bf16.msra.mxu0 0
      %6991 = vmatpush.bf16.msra.mxu0 0
      %6992 = vmatpush.bf16.msra.mxu0 0
      %6993 = vmatpush.bf16.msra.mxu0 0
      %6994 = vmatpush.bf16.msra.mxu0 0
      %6995 = vmatpush.bf16.msra.mxu0 0
      %6996 = vmatpush.bf16.msra.mxu0 0
      %6997 = vmatpush.bf16.msra.mxu0 %v6910
      %6998 = vmatmul.bf16.gmra.mxu0 %v6889
      %v6999 = vpop.f32.mrf.mxu0
      %v7000 = vadd.f32 0.0, %v6999
      %v7001 = vpop.f32.mrf.mxu0
      %7002 = vdwg.mxu0
      %v7003 = vadd.f32 %v6838, %v6922
      %v7004 = vadd.f32 %v6839, %v6935
      %v7005 = vadd.f32 %v6840, %v6948
      %v7006 = vadd.f32 %v6841, %v6961
      %v7007 = vadd.f32 %v6842, %v6974
      %v7008 = vadd.f32 %v6843, %v6987
      %v7009 = vadd.f32 %v6844, %v7000
      %v7010 = vld [vmem:[#allocation2] sm:$0xff]
      %v7011 = vld [vmem:[#allocation2 + $0x8] sm:$0x3f]
      %s7012 = scalar_lea.vmem %s2, 20
      %v7013 = vld [vmem:[%s7012] sm:$0x3]
      %7015 = vst [vmem:[#allocation1] ss:$4 sm:$0xff] %v7010
      %s7017 = scalar_lea.vmem [#allocation1], 32
      %7018 = vst [vmem:[%s7017] ss:$4 sm:$0xff] %v7011
      %v7019 = vld.sshfl [vmem:[#allocation1] sm:$0xff pattern:$0x73625140]
      %v7021 = vld.sshfl [vmem:[#allocation1 + $0x8] sm:$0xff pattern:$0x73625140]
      %v7023 = vld.sshfl [vmem:[#allocation1 + $0x10] sm:$0xff pattern:$0x73625140]
      %v7025 = vld.sshfl [vmem:[#allocation1 + $0x18] sm:$0xff pattern:$0x73625140]
      %v7027 = vld.sshfl [vmem:[#allocation1 + $0x20] sm:$0xff pattern:$0x73625140]
      %v7029 = vld.sshfl [vmem:[#allocation1 + $0x28] sm:$0xff pattern:$0x73625140]
      %v7031 = vld.sshfl [vmem:[#allocation1 + $0x30] sm:$0xff pattern:$0x73625140]
      %7033 = vrot.lane.b32.xlu0 %v7019, 27
      %v7034 = vpop.permute.xlu0 %7033
      %7035 = vrot.lane.b32.xlu0 %v7021, 27
      %v7036 = vpop.permute.xlu0 %7035
      %7037 = vrot.lane.b32.xlu0 %v7023, 27
      %v7038 = vpop.permute.xlu0 %7037
      %7039 = vrot.lane.b32.xlu0 %v7025, 27
      %v7040 = vpop.permute.xlu0 %7039
      %7041 = vrot.lane.b32.xlu0 %v7027, 27
      %v7042 = vpop.permute.xlu0 %7041
      %7043 = vrot.lane.b32.xlu0 %v7029, 27
      %v7044 = vpop.permute.xlu0 %7043
      %7045 = vrot.lane.b32.xlu0 %v7031, 27
      %v7046 = vpop.permute.xlu0 %7045
      %v7047 = vsel %vm2159, %v7034, %v7036
      %v7048 = vsel %vm2159, %v7036, %v7038
      %v7049 = vsel %vm2159, %v7038, %v7040
      %v7050 = vsel %vm2159, %v7040, %v7042
      %v7051 = vsel %vm2159, %v7042, %v7044
      %v7052 = vsel %vm2159, %v7044, %v7046
      %v7054 = vsel %vm365, %v7013, 0
      %v7057 = vsel %vm254, %v7047, 0
      %v7060 = vsel %vm254, %v7048, 0
      %v7063 = vsel %vm254, %v7049, 0
      %v7066 = vsel %vm254, %v7050, 0
      %v7069 = vsel %vm254, %v7051, 0
      %v7072 = vsel %vm254, %v7052, 0
      %v7075 = vsel %vm254, %v7046, 0
      %7077 = vmatpush.bf16.msra.mxu0 0
      %7078 = vmatpush.bf16.msra.mxu0 0
      %7079 = vmatpush.bf16.msra.mxu0 0
      %7080 = vmatpush.bf16.msra.mxu0 0
      %7081 = vmatpush.bf16.msra.mxu0 0
      %7082 = vmatpush.bf16.msra.mxu0 0
      %7083 = vmatpush.bf16.msra.mxu0 0
      %7084 = vmatpush.bf16.msra.mxu0 %v7057
      %7085 = vmatmul.bf16.gmra.mxu0 %v7054
      %v7086 = vpop.f32.mrf.mxu0
      %v7087 = vadd.f32 0.0, %v7086
      %v7088 = vpop.f32.mrf.mxu0
      %7089 = vdwg.mxu0
      %7090 = vmatpush.bf16.msra.mxu0 0
      %7091 = vmatpush.bf16.msra.mxu0 0
      %7092 = vmatpush.bf16.msra.mxu0 0
      %7093 = vmatpush.bf16.msra.mxu0 0
      %7094 = vmatpush.bf16.msra.mxu0 0
      %7095 = vmatpush.bf16.msra.mxu0 0
      %7096 = vmatpush.bf16.msra.mxu0 0
      %7097 = vmatpush.bf16.msra.mxu0 %v7060
      %7098 = vmatmul.bf16.gmra.mxu0 %v7054
      %v7099 = vpop.f32.mrf.mxu0
      %v7100 = vadd.f32 0.0, %v7099
      %v7101 = vpop.f32.mrf.mxu0
      %7102 = vdwg.mxu0
      %7103 = vmatpush.bf16.msra.mxu0 0
      %7104 = vmatpush.bf16.msra.mxu0 0
      %7105 = vmatpush.bf16.msra.mxu0 0
      %7106 = vmatpush.bf16.msra.mxu0 0
      %7107 = vmatpush.bf16.msra.mxu0 0
      %7108 = vmatpush.bf16.msra.mxu0 0
      %7109 = vmatpush.bf16.msra.mxu0 0
      %7110 = vmatpush.bf16.msra.mxu0 %v7063
      %7111 = vmatmul.bf16.gmra.mxu0 %v7054
      %v7112 = vpop.f32.mrf.mxu0
      %v7113 = vadd.f32 0.0, %v7112
      %v7114 = vpop.f32.mrf.mxu0
      %7115 = vdwg.mxu0
      %7116 = vmatpush.bf16.msra.mxu0 0
      %7117 = vmatpush.bf16.msra.mxu0 0
      %7118 = vmatpush.bf16.msra.mxu0 0
      %7119 = vmatpush.bf16.msra.mxu0 0
      %7120 = vmatpush.bf16.msra.mxu0 0
      %7121 = vmatpush.bf16.msra.mxu0 0
      %7122 = vmatpush.bf16.msra.mxu0 0
      %7123 = vmatpush.bf16.msra.mxu0 %v7066
      %7124 = vmatmul.bf16.gmra.mxu0 %v7054
      %v7125 = vpop.f32.mrf.mxu0
      %v7126 = vadd.f32 0.0, %v7125
      %v7127 = vpop.f32.mrf.mxu0
      %7128 = vdwg.mxu0
      %7129 = vmatpush.bf16.msra.mxu0 0
      %7130 = vmatpush.bf16.msra.mxu0 0
      %7131 = vmatpush.bf16.msra.mxu0 0
      %7132 = vmatpush.bf16.msra.mxu0 0
      %7133 = vmatpush.bf16.msra.mxu0 0
      %7134 = vmatpush.bf16.msra.mxu0 0
      %7135 = vmatpush.bf16.msra.mxu0 0
      %7136 = vmatpush.bf16.msra.mxu0 %v7069
      %7137 = vmatmul.bf16.gmra.mxu0 %v7054
      %v7138 = vpop.f32.mrf.mxu0
      %v7139 = vadd.f32 0.0, %v7138
      %v7140 = vpop.f32.mrf.mxu0
      %7141 = vdwg.mxu0
      %7142 = vmatpush.bf16.msra.mxu0 0
      %7143 = vmatpush.bf16.msra.mxu0 0
      %7144 = vmatpush.bf16.msra.mxu0 0
      %7145 = vmatpush.bf16.msra.mxu0 0
      %7146 = vmatpush.bf16.msra.mxu0 0
      %7147 = vmatpush.bf16.msra.mxu0 0
      %7148 = vmatpush.bf16.msra.mxu0 0
      %7149 = vmatpush.bf16.msra.mxu0 %v7072
      %7150 = vmatmul.bf16.gmra.mxu0 %v7054
      %v7151 = vpop.f32.mrf.mxu0
      %v7152 = vadd.f32 0.0, %v7151
      %v7153 = vpop.f32.mrf.mxu0
      %7154 = vdwg.mxu0
      %7155 = vmatpush.bf16.msra.mxu0 0
      %7156 = vmatpush.bf16.msra.mxu0 0
      %7157 = vmatpush.bf16.msra.mxu0 0
      %7158 = vmatpush.bf16.msra.mxu0 0
      %7159 = vmatpush.bf16.msra.mxu0 0
      %7160 = vmatpush.bf16.msra.mxu0 0
      %7161 = vmatpush.bf16.msra.mxu0 0
      %7162 = vmatpush.bf16.msra.mxu0 %v7075
      %7163 = vmatmul.bf16.gmra.mxu0 %v7054
      %v7164 = vpop.f32.mrf.mxu0
      %v7165 = vadd.f32 0.0, %v7164
      %v7166 = vpop.f32.mrf.mxu0
      %7167 = vdwg.mxu0
      %v7168 = vadd.f32 %v7003, %v7087
      %v7169 = vadd.f32 %v7004, %v7100
      %v7170 = vadd.f32 %v7005, %v7113
      %v7171 = vadd.f32 %v7006, %v7126
      %v7172 = vadd.f32 %v7007, %v7139
      %v7173 = vadd.f32 %v7008, %v7152
      %v7174 = vadd.f32 %v7009, %v7165
      %v7175 = vld [vmem:[#allocation2] sm:$0xff]
      %v7176 = vld [vmem:[#allocation2 + $0x8] sm:$0x3f]
      %s7177 = scalar_lea.vmem %s2, 22
      %v7178 = vld [vmem:[%s7177] sm:$0x3]
      %7180 = vst [vmem:[#allocation1] ss:$4 sm:$0xff] %v7175
      %s7182 = scalar_lea.vmem [#allocation1], 32
      %7183 = vst [vmem:[%s7182] ss:$4 sm:$0xff] %v7176
      %v7184 = vld.sshfl [vmem:[#allocation1] sm:$0xff pattern:$0x73625140]
      %v7186 = vld.sshfl [vmem:[#allocation1 + $0x8] sm:$0xff pattern:$0x73625140]
      %v7188 = vld.sshfl [vmem:[#allocation1 + $0x10] sm:$0xff pattern:$0x73625140]
      %v7190 = vld.sshfl [vmem:[#allocation1 + $0x18] sm:$0xff pattern:$0x73625140]
      %v7192 = vld.sshfl [vmem:[#allocation1 + $0x20] sm:$0xff pattern:$0x73625140]
      %v7194 = vld.sshfl [vmem:[#allocation1 + $0x28] sm:$0xff pattern:$0x73625140]
      %v7196 = vld.sshfl [vmem:[#allocation1 + $0x30] sm:$0xff pattern:$0x73625140]
      %7198 = vrot.lane.b32.xlu0 %v7184, 26
      %v7199 = vpop.permute.xlu0 %7198
      %7200 = vrot.lane.b32.xlu0 %v7186, 26
      %v7201 = vpop.permute.xlu0 %7200
      %7202 = vrot.lane.b32.xlu0 %v7188, 26
      %v7203 = vpop.permute.xlu0 %7202
      %7204 = vrot.lane.b32.xlu0 %v7190, 26
      %v7205 = vpop.permute.xlu0 %7204
      %7206 = vrot.lane.b32.xlu0 %v7192, 26
      %v7207 = vpop.permute.xlu0 %7206
      %7208 = vrot.lane.b32.xlu0 %v7194, 26
      %v7209 = vpop.permute.xlu0 %7208
      %7210 = vrot.lane.b32.xlu0 %v7196, 26
      %v7211 = vpop.permute.xlu0 %7210
      %v7212 = vsel %vm2347, %v7199, %v7201
      %v7213 = vsel %vm2347, %v7201, %v7203
      %v7214 = vsel %vm2347, %v7203, %v7205
      %v7215 = vsel %vm2347, %v7205, %v7207
      %v7216 = vsel %vm2347, %v7207, %v7209
      %v7217 = vsel %vm2347, %v7209, %v7211
      %v7219 = vsel %vm365, %v7178, 0
      %v7222 = vsel %vm254, %v7212, 0
      %v7225 = vsel %vm254, %v7213, 0
      %v7228 = vsel %vm254, %v7214, 0
      %v7231 = vsel %vm254, %v7215, 0
      %v7234 = vsel %vm254, %v7216, 0
      %v7237 = vsel %vm254, %v7217, 0
      %v7240 = vsel %vm254, %v7211, 0
      %7242 = vmatpush.bf16.msra.mxu0 0
      %7243 = vmatpush.bf16.msra.mxu0 0
      %7244 = vmatpush.bf16.msra.mxu0 0
      %7245 = vmatpush.bf16.msra.mxu0 0
      %7246 = vmatpush.bf16.msra.mxu0 0
      %7247 = vmatpush.bf16.msra.mxu0 0
      %7248 = vmatpush.bf16.msra.mxu0 0
      %7249 = vmatpush.bf16.msra.mxu0 %v7222
      %7250 = vmatmul.bf16.gmra.mxu0 %v7219
      %v7251 = vpop.f32.mrf.mxu0
      %v7252 = vadd.f32 0.0, %v7251
      %v7253 = vpop.f32.mrf.mxu0
      %7254 = vdwg.mxu0
      %7255 = vmatpush.bf16.msra.mxu0 0
      %7256 = vmatpush.bf16.msra.mxu0 0
      %7257 = vmatpush.bf16.msra.mxu0 0
      %7258 = vmatpush.bf16.msra.mxu0 0
      %7259 = vmatpush.bf16.msra.mxu0 0
      %7260 = vmatpush.bf16.msra.mxu0 0
      %7261 = vmatpush.bf16.msra.mxu0 0
      %7262 = vmatpush.bf16.msra.mxu0 %v7225
      %7263 = vmatmul.bf16.gmra.mxu0 %v7219
      %v7264 = vpop.f32.mrf.mxu0
      %v7265 = vadd.f32 0.0, %v7264
      %v7266 = vpop.f32.mrf.mxu0
      %7267 = vdwg.mxu0
      %7268 = vmatpush.bf16.msra.mxu0 0
      %7269 = vmatpush.bf16.msra.mxu0 0
      %7270 = vmatpush.bf16.msra.mxu0 0
      %7271 = vmatpush.bf16.msra.mxu0 0
      %7272 = vmatpush.bf16.msra.mxu0 0
      %7273 = vmatpush.bf16.msra.mxu0 0
      %7274 = vmatpush.bf16.msra.mxu0 0
      %7275 = vmatpush.bf16.msra.mxu0 %v7228
      %7276 = vmatmul.bf16.gmra.mxu0 %v7219
      %v7277 = vpop.f32.mrf.mxu0
      %v7278 = vadd.f32 0.0, %v7277
      %v7279 = vpop.f32.mrf.mxu0
      %7280 = vdwg.mxu0
      %7281 = vmatpush.bf16.msra.mxu0 0
      %7282 = vmatpush.bf16.msra.mxu0 0
      %7283 = vmatpush.bf16.msra.mxu0 0
      %7284 = vmatpush.bf16.msra.mxu0 0
      %7285 = vmatpush.bf16.msra.mxu0 0
      %7286 = vmatpush.bf16.msra.mxu0 0
      %7287 = vmatpush.bf16.msra.mxu0 0
      %7288 = vmatpush.bf16.msra.mxu0 %v7231
      %7289 = vmatmul.bf16.gmra.mxu0 %v7219
      %v7290 = vpop.f32.mrf.mxu0
      %v7291 = vadd.f32 0.0, %v7290
      %v7292 = vpop.f32.mrf.mxu0
      %7293 = vdwg.mxu0
      %7294 = vmatpush.bf16.msra.mxu0 0
      %7295 = vmatpush.bf16.msra.mxu0 0
      %7296 = vmatpush.bf16.msra.mxu0 0
      %7297 = vmatpush.bf16.msra.mxu0 0
      %7298 = vmatpush.bf16.msra.mxu0 0
      %7299 = vmatpush.bf16.msra.mxu0 0
      %7300 = vmatpush.bf16.msra.mxu0 0
      %7301 = vmatpush.bf16.msra.mxu0 %v7234
      %7302 = vmatmul.bf16.gmra.mxu0 %v7219
      %v7303 = vpop.f32.mrf.mxu0
      %v7304 = vadd.f32 0.0, %v7303
      %v7305 = vpop.f32.mrf.mxu0
      %7306 = vdwg.mxu0
      %7307 = vmatpush.bf16.msra.mxu0 0
      %7308 = vmatpush.bf16.msra.mxu0 0
      %7309 = vmatpush.bf16.msra.mxu0 0
      %7310 = vmatpush.bf16.msra.mxu0 0
      %7311 = vmatpush.bf16.msra.mxu0 0
      %7312 = vmatpush.bf16.msra.mxu0 0
      %7313 = vmatpush.bf16.msra.mxu0 0
      %7314 = vmatpush.bf16.msra.mxu0 %v7237
      %7315 = vmatmul.bf16.gmra.mxu0 %v7219
      %v7316 = vpop.f32.mrf.mxu0
      %v7317 = vadd.f32 0.0, %v7316
      %v7318 = vpop.f32.mrf.mxu0
      %7319 = vdwg.mxu0
      %7320 = vmatpush.bf16.msra.mxu0 0
      %7321 = vmatpush.bf16.msra.mxu0 0
      %7322 = vmatpush.bf16.msra.mxu0 0
      %7323 = vmatpush.bf16.msra.mxu0 0
      %7324 = vmatpush.bf16.msra.mxu0 0
      %7325 = vmatpush.bf16.msra.mxu0 0
      %7326 = vmatpush.bf16.msra.mxu0 0
      %7327 = vmatpush.bf16.msra.mxu0 %v7240
      %7328 = vmatmul.bf16.gmra.mxu0 %v7219
      %v7329 = vpop.f32.mrf.mxu0
      %v7330 = vadd.f32 0.0, %v7329
      %v7331 = vpop.f32.mrf.mxu0
      %7332 = vdwg.mxu0
      %v7333 = vadd.f32 %v7168, %v7252
      %v7334 = vadd.f32 %v7169, %v7265
      %v7335 = vadd.f32 %v7170, %v7278
      %v7336 = vadd.f32 %v7171, %v7291
      %v7337 = vadd.f32 %v7172, %v7304
      %v7338 = vadd.f32 %v7173, %v7317
      %v7339 = vadd.f32 %v7174, %v7330
      %v7340 = vld [vmem:[#allocation2] sm:$0xff]
      %v7341 = vld [vmem:[#allocation2 + $0x8] sm:$0x3f]
      %s7342 = scalar_lea.vmem %s2, 24
      %v7343 = vld [vmem:[%s7342] sm:$0x3]
      %7345 = vst [vmem:[#allocation1] ss:$4 sm:$0xff] %v7340
      %s7347 = scalar_lea.vmem [#allocation1], 32
      %7348 = vst [vmem:[%s7347] ss:$4 sm:$0xff] %v7341
      %v7349 = vld.sshfl [vmem:[#allocation1] sm:$0xff pattern:$0x73625140]
      %v7351 = vld.sshfl [vmem:[#allocation1 + $0x8] sm:$0xff pattern:$0x73625140]
      %v7353 = vld.sshfl [vmem:[#allocation1 + $0x10] sm:$0xff pattern:$0x73625140]
      %v7355 = vld.sshfl [vmem:[#allocation1 + $0x18] sm:$0xff pattern:$0x73625140]
      %v7357 = vld.sshfl [vmem:[#allocation1 + $0x20] sm:$0xff pattern:$0x73625140]
      %v7359 = vld.sshfl [vmem:[#allocation1 + $0x28] sm:$0xff pattern:$0x73625140]
      %v7361 = vld.sshfl [vmem:[#allocation1 + $0x30] sm:$0xff pattern:$0x73625140]
      %7363 = vrot.lane.b32.xlu0 %v7349, 18
      %v7364 = vpop.permute.xlu0 %7363
      %7365 = vrot.lane.b32.xlu0 %v7351, 18
      %v7366 = vpop.permute.xlu0 %7365
      %7367 = vrot.lane.b32.xlu0 %v7353, 18
      %v7368 = vpop.permute.xlu0 %7367
      %7369 = vrot.lane.b32.xlu0 %v7355, 18
      %v7370 = vpop.permute.xlu0 %7369
      %7371 = vrot.lane.b32.xlu0 %v7357, 18
      %v7372 = vpop.permute.xlu0 %7371
      %7373 = vrot.lane.b32.xlu0 %v7359, 18
      %v7374 = vpop.permute.xlu0 %7373
      %7375 = vrot.lane.b32.xlu0 %v7361, 18
      %v7376 = vpop.permute.xlu0 %7375
      %v7377 = vsel %vm2535, %v7364, %v7366
      %v7378 = vsel %vm2535, %v7366, %v7368
      %v7379 = vsel %vm2535, %v7368, %v7370
      %v7380 = vsel %vm2535, %v7370, %v7372
      %v7381 = vsel %vm2535, %v7372, %v7374
      %v7382 = vsel %vm2535, %v7374, %v7376
      %v7384 = vsel %vm365, %v7343, 0
      %v7387 = vsel %vm254, %v7377, 0
      %v7390 = vsel %vm254, %v7378, 0
      %v7393 = vsel %vm254, %v7379, 0
      %v7396 = vsel %vm254, %v7380, 0
      %v7399 = vsel %vm254, %v7381, 0
      %v7402 = vsel %vm254, %v7382, 0
      %v7405 = vsel %vm254, %v7376, 0
      %7407 = vmatpush.bf16.msra.mxu0 0
      %7408 = vmatpush.bf16.msra.mxu0 0
      %7409 = vmatpush.bf16.msra.mxu0 0
      %7410 = vmatpush.bf16.msra.mxu0 0
      %7411 = vmatpush.bf16.msra.mxu0 0
      %7412 = vmatpush.bf16.msra.mxu0 0
      %7413 = vmatpush.bf16.msra.mxu0 0
      %7414 = vmatpush.bf16.msra.mxu0 %v7387
      %7415 = vmatmul.bf16.gmra.mxu0 %v7384
      %v7416 = vpop.f32.mrf.mxu0
      %v7417 = vadd.f32 0.0, %v7416
      %v7418 = vpop.f32.mrf.mxu0
      %7419 = vdwg.mxu0
      %7420 = vmatpush.bf16.msra.mxu0 0
      %7421 = vmatpush.bf16.msra.mxu0 0
      %7422 = vmatpush.bf16.msra.mxu0 0
      %7423 = vmatpush.bf16.msra.mxu0 0
      %7424 = vmatpush.bf16.msra.mxu0 0
      %7425 = vmatpush.bf16.msra.mxu0 0
      %7426 = vmatpush.bf16.msra.mxu0 0
      %7427 = vmatpush.bf16.msra.mxu0 %v7390
      %7428 = vmatmul.bf16.gmra.mxu0 %v7384
      %v7429 = vpop.f32.mrf.mxu0
      %v7430 = vadd.f32 0.0, %v7429
      %v7431 = vpop.f32.mrf.mxu0
      %7432 = vdwg.mxu0
      %7433 = vmatpush.bf16.msra.mxu0 0
      %7434 = vmatpush.bf16.msra.mxu0 0
      %7435 = vmatpush.bf16.msra.mxu0 0
      %7436 = vmatpush.bf16.msra.mxu0 0
      %7437 = vmatpush.bf16.msra.mxu0 0
      %7438 = vmatpush.bf16.msra.mxu0 0
      %7439 = vmatpush.bf16.msra.mxu0 0
      %7440 = vmatpush.bf16.msra.mxu0 %v7393
      %7441 = vmatmul.bf16.gmra.mxu0 %v7384
      %v7442 = vpop.f32.mrf.mxu0
      %v7443 = vadd.f32 0.0, %v7442
      %v7444 = vpop.f32.mrf.mxu0
      %7445 = vdwg.mxu0
      %7446 = vmatpush.bf16.msra.mxu0 0
      %7447 = vmatpush.bf16.msra.mxu0 0
      %7448 = vmatpush.bf16.msra.mxu0 0
      %7449 = vmatpush.bf16.msra.mxu0 0
      %7450 = vmatpush.bf16.msra.mxu0 0
      %7451 = vmatpush.bf16.msra.mxu0 0
      %7452 = vmatpush.bf16.msra.mxu0 0
      %7453 = vmatpush.bf16.msra.mxu0 %v7396
      %7454 = vmatmul.bf16.gmra.mxu0 %v7384
      %v7455 = vpop.f32.mrf.mxu0
      %v7456 = vadd.f32 0.0, %v7455
      %v7457 = vpop.f32.mrf.mxu0
      %7458 = vdwg.mxu0
      %7459 = vmatpush.bf16.msra.mxu0 0
      %7460 = vmatpush.bf16.msra.mxu0 0
      %7461 = vmatpush.bf16.msra.mxu0 0
      %7462 = vmatpush.bf16.msra.mxu0 0
      %7463 = vmatpush.bf16.msra.mxu0 0
      %7464 = vmatpush.bf16.msra.mxu0 0
      %7465 = vmatpush.bf16.msra.mxu0 0
      %7466 = vmatpush.bf16.msra.mxu0 %v7399
      %7467 = vmatmul.bf16.gmra.mxu0 %v7384
      %v7468 = vpop.f32.mrf.mxu0
      %v7469 = vadd.f32 0.0, %v7468
      %v7470 = vpop.f32.mrf.mxu0
      %7471 = vdwg.mxu0
      %7472 = vmatpush.bf16.msra.mxu0 0
      %7473 = vmatpush.bf16.msra.mxu0 0
      %7474 = vmatpush.bf16.msra.mxu0 0
      %7475 = vmatpush.bf16.msra.mxu0 0
      %7476 = vmatpush.bf16.msra.mxu0 0
      %7477 = vmatpush.bf16.msra.mxu0 0
      %7478 = vmatpush.bf16.msra.mxu0 0
      %7479 = vmatpush.bf16.msra.mxu0 %v7402
      %7480 = vmatmul.bf16.gmra.mxu0 %v7384
      %v7481 = vpop.f32.mrf.mxu0
      %v7482 = vadd.f32 0.0, %v7481
      %v7483 = vpop.f32.mrf.mxu0
      %7484 = vdwg.mxu0
      %7485 = vmatpush.bf16.msra.mxu0 0
      %7486 = vmatpush.bf16.msra.mxu0 0
      %7487 = vmatpush.bf16.msra.mxu0 0
      %7488 = vmatpush.bf16.msra.mxu0 0
      %7489 = vmatpush.bf16.msra.mxu0 0
      %7490 = vmatpush.bf16.msra.mxu0 0
      %7491 = vmatpush.bf16.msra.mxu0 0
      %7492 = vmatpush.bf16.msra.mxu0 %v7405
      %7493 = vmatmul.bf16.gmra.mxu0 %v7384
      %v7494 = vpop.f32.mrf.mxu0
      %v7495 = vadd.f32 0.0, %v7494
      %v7496 = vpop.f32.mrf.mxu0
      %7497 = vdwg.mxu0
      %v7498 = vadd.f32 %v7333, %v7417
      %v7499 = vadd.f32 %v7334, %v7430
      %v7500 = vadd.f32 %v7335, %v7443
      %v7501 = vadd.f32 %v7336, %v7456
      %v7502 = vadd.f32 %v7337, %v7469
      %v7503 = vadd.f32 %v7338, %v7482
      %v7504 = vadd.f32 %v7339, %v7495
      %v7505 = vld [vmem:[#allocation2] sm:$0xff]
      %v7506 = vld [vmem:[#allocation2 + $0x8] sm:$0x3f]
      %s7507 = scalar_lea.vmem %s2, 26
      %v7508 = vld [vmem:[%s7507] sm:$0x3]
      %7510 = vst [vmem:[#allocation1] ss:$4 sm:$0xff] %v7505
      %s7512 = scalar_lea.vmem [#allocation1], 32
      %7513 = vst [vmem:[%s7512] ss:$4 sm:$0xff] %v7506
      %v7514 = vld.sshfl [vmem:[#allocation1] sm:$0xff pattern:$0x73625140]
      %v7516 = vld.sshfl [vmem:[#allocation1 + $0x8] sm:$0xff pattern:$0x73625140]
      %v7518 = vld.sshfl [vmem:[#allocation1 + $0x10] sm:$0xff pattern:$0x73625140]
      %v7520 = vld.sshfl [vmem:[#allocation1 + $0x18] sm:$0xff pattern:$0x73625140]
      %v7522 = vld.sshfl [vmem:[#allocation1 + $0x20] sm:$0xff pattern:$0x73625140]
      %v7524 = vld.sshfl [vmem:[#allocation1 + $0x28] sm:$0xff pattern:$0x73625140]
      %v7526 = vld.sshfl [vmem:[#allocation1 + $0x30] sm:$0xff pattern:$0x73625140]
      %7528 = vrot.lane.b32.xlu0 %v7514, 17
      %v7529 = vpop.permute.xlu0 %7528
      %7530 = vrot.lane.b32.xlu0 %v7516, 17
      %v7531 = vpop.permute.xlu0 %7530
      %7532 = vrot.lane.b32.xlu0 %v7518, 17
      %v7533 = vpop.permute.xlu0 %7532
      %7534 = vrot.lane.b32.xlu0 %v7520, 17
      %v7535 = vpop.permute.xlu0 %7534
      %7536 = vrot.lane.b32.xlu0 %v7522, 17
      %v7537 = vpop.permute.xlu0 %7536
      %7538 = vrot.lane.b32.xlu0 %v7524, 17
      %v7539 = vpop.permute.xlu0 %7538
      %7540 = vrot.lane.b32.xlu0 %v7526, 17
      %v7541 = vpop.permute.xlu0 %7540
      %v7542 = vsel %vm2723, %v7529, %v7531
      %v7543 = vsel %vm2723, %v7531, %v7533
      %v7544 = vsel %vm2723, %v7533, %v7535
      %v7545 = vsel %vm2723, %v7535, %v7537
      %v7546 = vsel %vm2723, %v7537, %v7539
      %v7547 = vsel %vm2723, %v7539, %v7541
      %v7549 = vsel %vm365, %v7508, 0
      %v7552 = vsel %vm254, %v7542, 0
      %v7555 = vsel %vm254, %v7543, 0
      %v7558 = vsel %vm254, %v7544, 0
      %v7561 = vsel %vm254, %v7545, 0
      %v7564 = vsel %vm254, %v7546, 0
      %v7567 = vsel %vm254, %v7547, 0
      %v7570 = vsel %vm254, %v7541, 0
      %7572 = vmatpush.bf16.msra.mxu0 0
      %7573 = vmatpush.bf16.msra.mxu0 0
      %7574 = vmatpush.bf16.msra.mxu0 0
      %7575 = vmatpush.bf16.msra.mxu0 0
      %7576 = vmatpush.bf16.msra.mxu0 0
      %7577 = vmatpush.bf16.msra.mxu0 0
      %7578 = vmatpush.bf16.msra.mxu0 0
      %7579 = vmatpush.bf16.msra.mxu0 %v7552
      %7580 = vmatmul.bf16.gmra.mxu0 %v7549
      %v7581 = vpop.f32.mrf.mxu0
      %v7582 = vadd.f32 0.0, %v7581
      %v7583 = vpop.f32.mrf.mxu0
      %7584 = vdwg.mxu0
      %7585 = vmatpush.bf16.msra.mxu0 0
      %7586 = vmatpush.bf16.msra.mxu0 0
      %7587 = vmatpush.bf16.msra.mxu0 0
      %7588 = vmatpush.bf16.msra.mxu0 0
      %7589 = vmatpush.bf16.msra.mxu0 0
      %7590 = vmatpush.bf16.msra.mxu0 0
      %7591 = vmatpush.bf16.msra.mxu0 0
      %7592 = vmatpush.bf16.msra.mxu0 %v7555
      %7593 = vmatmul.bf16.gmra.mxu0 %v7549
      %v7594 = vpop.f32.mrf.mxu0
      %v7595 = vadd.f32 0.0, %v7594
      %v7596 = vpop.f32.mrf.mxu0
      %7597 = vdwg.mxu0
      %7598 = vmatpush.bf16.msra.mxu0 0
      %7599 = vmatpush.bf16.msra.mxu0 0
      %7600 = vmatpush.bf16.msra.mxu0 0
      %7601 = vmatpush.bf16.msra.mxu0 0
      %7602 = vmatpush.bf16.msra.mxu0 0
      %7603 = vmatpush.bf16.msra.mxu0 0
      %7604 = vmatpush.bf16.msra.mxu0 0
      %7605 = vmatpush.bf16.msra.mxu0 %v7558
      %7606 = vmatmul.bf16.gmra.mxu0 %v7549
      %v7607 = vpop.f32.mrf.mxu0
      %v7608 = vadd.f32 0.0, %v7607
      %v7609 = vpop.f32.mrf.mxu0
      %7610 = vdwg.mxu0
      %7611 = vmatpush.bf16.msra.mxu0 0
      %7612 = vmatpush.bf16.msra.mxu0 0
      %7613 = vmatpush.bf16.msra.mxu0 0
      %7614 = vmatpush.bf16.msra.mxu0 0
      %7615 = vmatpush.bf16.msra.mxu0 0
      %7616 = vmatpush.bf16.msra.mxu0 0
      %7617 = vmatpush.bf16.msra.mxu0 0
      %7618 = vmatpush.bf16.msra.mxu0 %v7561
      %7619 = vmatmul.bf16.gmra.mxu0 %v7549
      %v7620 = vpop.f32.mrf.mxu0
      %v7621 = vadd.f32 0.0, %v7620
      %v7622 = vpop.f32.mrf.mxu0
      %7623 = vdwg.mxu0
      %7624 = vmatpush.bf16.msra.mxu0 0
      %7625 = vmatpush.bf16.msra.mxu0 0
      %7626 = vmatpush.bf16.msra.mxu0 0
      %7627 = vmatpush.bf16.msra.mxu0 0
      %7628 = vmatpush.bf16.msra.mxu0 0
      %7629 = vmatpush.bf16.msra.mxu0 0
      %7630 = vmatpush.bf16.msra.mxu0 0
      %7631 = vmatpush.bf16.msra.mxu0 %v7564
      %7632 = vmatmul.bf16.gmra.mxu0 %v7549
      %v7633 = vpop.f32.mrf.mxu0
      %v7634 = vadd.f32 0.0, %v7633
      %v7635 = vpop.f32.mrf.mxu0
      %7636 = vdwg.mxu0
      %7637 = vmatpush.bf16.msra.mxu0 0
      %7638 = vmatpush.bf16.msra.mxu0 0
      %7639 = vmatpush.bf16.msra.mxu0 0
      %7640 = vmatpush.bf16.msra.mxu0 0
      %7641 = vmatpush.bf16.msra.mxu0 0
      %7642 = vmatpush.bf16.msra.mxu0 0
      %7643 = vmatpush.bf16.msra.mxu0 0
      %7644 = vmatpush.bf16.msra.mxu0 %v7567
      %7645 = vmatmul.bf16.gmra.mxu0 %v7549
      %v7646 = vpop.f32.mrf.mxu0
      %v7647 = vadd.f32 0.0, %v7646
      %v7648 = vpop.f32.mrf.mxu0
      %7649 = vdwg.mxu0
      %7650 = vmatpush.bf16.msra.mxu0 0
      %7651 = vmatpush.bf16.msra.mxu0 0
      %7652 = vmatpush.bf16.msra.mxu0 0
      %7653 = vmatpush.bf16.msra.mxu0 0
      %7654 = vmatpush.bf16.msra.mxu0 0
      %7655 = vmatpush.bf16.msra.mxu0 0
      %7656 = vmatpush.bf16.msra.mxu0 0
      %7657 = vmatpush.bf16.msra.mxu0 %v7570
      %7658 = vmatmul.bf16.gmra.mxu0 %v7549
      %v7659 = vpop.f32.mrf.mxu0
      %v7660 = vadd.f32 0.0, %v7659
      %v7661 = vpop.f32.mrf.mxu0
      %7662 = vdwg.mxu0
      %v7663 = vadd.f32 %v7498, %v7582
      %v7664 = vadd.f32 %v7499, %v7595
      %v7665 = vadd.f32 %v7500, %v7608
      %v7666 = vadd.f32 %v7501, %v7621
      %v7667 = vadd.f32 %v7502, %v7634
      %v7668 = vadd.f32 %v7503, %v7647
      %v7669 = vadd.f32 %v7504, %v7660
      %v7670 = vld [vmem:[#allocation2] sm:$0xff]
      %v7671 = vld [vmem:[#allocation2 + $0x8] sm:$0x3f]
      %s7672 = scalar_lea.vmem %s2, 28
      %v7673 = vld [vmem:[%s7672] sm:$0x3]
      %7675 = vst [vmem:[#allocation1] ss:$4 sm:$0xff] %v7670
      %s7677 = scalar_lea.vmem [#allocation1], 32
      %7678 = vst [vmem:[%s7677] ss:$4 sm:$0xff] %v7671
      %v7679 = vld.sshfl [vmem:[#allocation1] sm:$0xff pattern:$0x73625140]
      %v7681 = vld.sshfl [vmem:[#allocation1 + $0x8] sm:$0xff pattern:$0x73625140]
      %v7683 = vld.sshfl [vmem:[#allocation1 + $0x10] sm:$0xff pattern:$0x73625140]
      %v7685 = vld.sshfl [vmem:[#allocation1 + $0x18] sm:$0xff pattern:$0x73625140]
      %v7687 = vld.sshfl [vmem:[#allocation1 + $0x20] sm:$0xff pattern:$0x73625140]
      %v7689 = vld.sshfl [vmem:[#allocation1 + $0x28] sm:$0xff pattern:$0x73625140]
      %v7691 = vld.sshfl [vmem:[#allocation1 + $0x30] sm:$0xff pattern:$0x73625140]
      %7693 = vrot.lane.b32.xlu0 %v7679, 16
      %v7694 = vpop.permute.xlu0 %7693
      %7695 = vrot.lane.b32.xlu0 %v7681, 16
      %v7696 = vpop.permute.xlu0 %7695
      %7697 = vrot.lane.b32.xlu0 %v7683, 16
      %v7698 = vpop.permute.xlu0 %7697
      %7699 = vrot.lane.b32.xlu0 %v7685, 16
      %v7700 = vpop.permute.xlu0 %7699
      %7701 = vrot.lane.b32.xlu0 %v7687, 16
      %v7702 = vpop.permute.xlu0 %7701
      %7703 = vrot.lane.b32.xlu0 %v7689, 16
      %v7704 = vpop.permute.xlu0 %7703
      %7705 = vrot.lane.b32.xlu0 %v7691, 16
      %v7706 = vpop.permute.xlu0 %7705
      %v7707 = vsel %vm2911, %v7694, %v7696
      %v7708 = vsel %vm2911, %v7696, %v7698
      %v7709 = vsel %vm2911, %v7698, %v7700
      %v7710 = vsel %vm2911, %v7700, %v7702
      %v7711 = vsel %vm2911, %v7702, %v7704
      %v7712 = vsel %vm2911, %v7704, %v7706
      %v7714 = vsel %vm365, %v7673, 0
      %v7717 = vsel %vm254, %v7707, 0
      %v7720 = vsel %vm254, %v7708, 0
      %v7723 = vsel %vm254, %v7709, 0
      %v7726 = vsel %vm254, %v7710, 0
      %v7729 = vsel %vm254, %v7711, 0
      %v7732 = vsel %vm254, %v7712, 0
      %v7735 = vsel %vm254, %v7706, 0
      %7737 = vmatpush.bf16.msra.mxu0 0
      %7738 = vmatpush.bf16.msra.mxu0 0
      %7739 = vmatpush.bf16.msra.mxu0 0
      %7740 = vmatpush.bf16.msra.mxu0 0
      %7741 = vmatpush.bf16.msra.mxu0 0
      %7742 = vmatpush.bf16.msra.mxu0 0
      %7743 = vmatpush.bf16.msra.mxu0 0
      %7744 = vmatpush.bf16.msra.mxu0 %v7717
      %7745 = vmatmul.bf16.gmra.mxu0 %v7714
      %v7746 = vpop.f32.mrf.mxu0
      %v7747 = vadd.f32 0.0, %v7746
      %v7748 = vpop.f32.mrf.mxu0
      %7749 = vdwg.mxu0
      %7750 = vmatpush.bf16.msra.mxu0 0
      %7751 = vmatpush.bf16.msra.mxu0 0
      %7752 = vmatpush.bf16.msra.mxu0 0
      %7753 = vmatpush.bf16.msra.mxu0 0
      %7754 = vmatpush.bf16.msra.mxu0 0
      %7755 = vmatpush.bf16.msra.mxu0 0
      %7756 = vmatpush.bf16.msra.mxu0 0
      %7757 = vmatpush.bf16.msra.mxu0 %v7720
      %7758 = vmatmul.bf16.gmra.mxu0 %v7714
      %v7759 = vpop.f32.mrf.mxu0
      %v7760 = vadd.f32 0.0, %v7759
      %v7761 = vpop.f32.mrf.mxu0
      %7762 = vdwg.mxu0
      %7763 = vmatpush.bf16.msra.mxu0 0
      %7764 = vmatpush.bf16.msra.mxu0 0
      %7765 = vmatpush.bf16.msra.mxu0 0
      %7766 = vmatpush.bf16.msra.mxu0 0
      %7767 = vmatpush.bf16.msra.mxu0 0
      %7768 = vmatpush.bf16.msra.mxu0 0
      %7769 = vmatpush.bf16.msra.mxu0 0
      %7770 = vmatpush.bf16.msra.mxu0 %v7723
      %7771 = vmatmul.bf16.gmra.mxu0 %v7714
      %v7772 = vpop.f32.mrf.mxu0
      %v7773 = vadd.f32 0.0, %v7772
      %v7774 = vpop.f32.mrf.mxu0
      %7775 = vdwg.mxu0
      %7776 = vmatpush.bf16.msra.mxu0 0
      %7777 = vmatpush.bf16.msra.mxu0 0
      %7778 = vmatpush.bf16.msra.mxu0 0
      %7779 = vmatpush.bf16.msra.mxu0 0
      %7780 = vmatpush.bf16.msra.mxu0 0
      %7781 = vmatpush.bf16.msra.mxu0 0
      %7782 = vmatpush.bf16.msra.mxu0 0
      %7783 = vmatpush.bf16.msra.mxu0 %v7726
      %7784 = vmatmul.bf16.gmra.mxu0 %v7714
      %v7785 = vpop.f32.mrf.mxu0
      %v7786 = vadd.f32 0.0, %v7785
      %v7787 = vpop.f32.mrf.mxu0
      %7788 = vdwg.mxu0
      %7789 = vmatpush.bf16.msra.mxu0 0
      %7790 = vmatpush.bf16.msra.mxu0 0
      %7791 = vmatpush.bf16.msra.mxu0 0
      %7792 = vmatpush.bf16.msra.mxu0 0
      %7793 = vmatpush.bf16.msra.mxu0 0
      %7794 = vmatpush.bf16.msra.mxu0 0
      %7795 = vmatpush.bf16.msra.mxu0 0
      %7796 = vmatpush.bf16.msra.mxu0 %v7729
      %7797 = vmatmul.bf16.gmra.mxu0 %v7714
      %v7798 = vpop.f32.mrf.mxu0
      %v7799 = vadd.f32 0.0, %v7798
      %v7800 = vpop.f32.mrf.mxu0
      %7801 = vdwg.mxu0
      %7802 = vmatpush.bf16.msra.mxu0 0
      %7803 = vmatpush.bf16.msra.mxu0 0
      %7804 = vmatpush.bf16.msra.mxu0 0
      %7805 = vmatpush.bf16.msra.mxu0 0
      %7806 = vmatpush.bf16.msra.mxu0 0
      %7807 = vmatpush.bf16.msra.mxu0 0
      %7808 = vmatpush.bf16.msra.mxu0 0
      %7809 = vmatpush.bf16.msra.mxu0 %v7732
      %7810 = vmatmul.bf16.gmra.mxu0 %v7714
      %v7811 = vpop.f32.mrf.mxu0
      %v7812 = vadd.f32 0.0, %v7811
      %v7813 = vpop.f32.mrf.mxu0
      %7814 = vdwg.mxu0
      %7815 = vmatpush.bf16.msra.mxu0 0
      %7816 = vmatpush.bf16.msra.mxu0 0
      %7817 = vmatpush.bf16.msra.mxu0 0
      %7818 = vmatpush.bf16.msra.mxu0 0
      %7819 = vmatpush.bf16.msra.mxu0 0
      %7820 = vmatpush.bf16.msra.mxu0 0
      %7821 = vmatpush.bf16.msra.mxu0 0
      %7822 = vmatpush.bf16.msra.mxu0 %v7735
      %7823 = vmatmul.bf16.gmra.mxu0 %v7714
      %v7824 = vpop.f32.mrf.mxu0
      %v7825 = vadd.f32 0.0, %v7824
      %v7826 = vpop.f32.mrf.mxu0
      %7827 = vdwg.mxu0
      %v7828 = vadd.f32 %v7663, %v7747
      %v7829 = vadd.f32 %v7664, %v7760
      %v7830 = vadd.f32 %v7665, %v7773
      %v7831 = vadd.f32 %v7666, %v7786
      %v7832 = vadd.f32 %v7667, %v7799
      %v7833 = vadd.f32 %v7668, %v7812
      %v7834 = vadd.f32 %v7669, %v7825
      %v7835 = vld [vmem:[#allocation2] sm:$0xff]
      %v7836 = vld [vmem:[#allocation2 + $0x8] sm:$0xff]
      %s7837 = scalar_lea.vmem %s2, 30
      %v7838 = vld [vmem:[%s7837] sm:$0x3]
      %7840 = vst [vmem:[#allocation1] ss:$4 sm:$0xff] %v7835
      %s7842 = scalar_lea.vmem [#allocation1], 32
      %7843 = vst [vmem:[%s7842] ss:$4 sm:$0xff] %v7836
      %v7844 = vld.sshfl [vmem:[#allocation1] sm:$0xff pattern:$0x73625140]
      %v7846 = vld.sshfl [vmem:[#allocation1 + $0x8] sm:$0xff pattern:$0x73625140]
      %v7848 = vld.sshfl [vmem:[#allocation1 + $0x10] sm:$0xff pattern:$0x73625140]
      %v7850 = vld.sshfl [vmem:[#allocation1 + $0x18] sm:$0xff pattern:$0x73625140]
      %v7852 = vld.sshfl [vmem:[#allocation1 + $0x20] sm:$0xff pattern:$0x73625140]
      %v7854 = vld.sshfl [vmem:[#allocation1 + $0x28] sm:$0xff pattern:$0x73625140]
      %v7856 = vld.sshfl [vmem:[#allocation1 + $0x30] sm:$0xff pattern:$0x73625140]
      %v7858 = vld.sshfl [vmem:[#allocation1 + $0x38] sm:$0xff pattern:$0x73625140]
      %7860 = vrot.lane.b32.xlu0 %v7844, 8
      %v7861 = vpop.permute.xlu0 %7860
      %7862 = vrot.lane.b32.xlu0 %v7846, 8
      %v7863 = vpop.permute.xlu0 %7862
      %7864 = vrot.lane.b32.xlu0 %v7848, 8
      %v7865 = vpop.permute.xlu0 %7864
      %7866 = vrot.lane.b32.xlu0 %v7850, 8
      %v7867 = vpop.permute.xlu0 %7866
      %7868 = vrot.lane.b32.xlu0 %v7852, 8
      %v7869 = vpop.permute.xlu0 %7868
      %7870 = vrot.lane.b32.xlu0 %v7854, 8
      %v7871 = vpop.permute.xlu0 %7870
      %7872 = vrot.lane.b32.xlu0 %v7856, 8
      %v7873 = vpop.permute.xlu0 %7872
      %7874 = vrot.lane.b32.xlu0 %v7858, 8
      %v7875 = vpop.permute.xlu0 %7874
      %v7876 = vsel %vm3105, %v7861, %v7863
      %v7877 = vsel %vm3105, %v7863, %v7865
      %v7878 = vsel %vm3105, %v7865, %v7867
      %v7879 = vsel %vm3105, %v7867, %v7869
      %v7880 = vsel %vm3105, %v7869, %v7871
      %v7881 = vsel %vm3105, %v7871, %v7873
      %v7882 = vsel %vm3105, %v7873, %v7875
      %v7884 = vsel %vm365, %v7838, 0
      %v7887 = vsel %vm254, %v7876, 0
      %v7890 = vsel %vm254, %v7877, 0
      %v7893 = vsel %vm254, %v7878, 0
      %v7896 = vsel %vm254, %v7879, 0
      %v7899 = vsel %vm254, %v7880, 0
      %v7902 = vsel %vm254, %v7881, 0
      %v7905 = vsel %vm254, %v7882, 0
      %7907 = vmatpush.bf16.msra.mxu0 0
      %7908 = vmatpush.bf16.msra.mxu0 0
      %7909 = vmatpush.bf16.msra.mxu0 0
      %7910 = vmatpush.bf16.msra.mxu0 0
      %7911 = vmatpush.bf16.msra.mxu0 0
      %7912 = vmatpush.bf16.msra.mxu0 0
      %7913 = vmatpush.bf16.msra.mxu0 0
      %7914 = vmatpush.bf16.msra.mxu0 %v7887
      %7915 = vmatmul.bf16.gmra.mxu0 %v7884
      %v7916 = vpop.f32.mrf.mxu0
      %v7917 = vadd.f32 0.0, %v7916
      %v7918 = vpop.f32.mrf.mxu0
      %7919 = vdwg.mxu0
      %7920 = vmatpush.bf16.msra.mxu0 0
      %7921 = vmatpush.bf16.msra.mxu0 0
      %7922 = vmatpush.bf16.msra.mxu0 0
      %7923 = vmatpush.bf16.msra.mxu0 0
      %7924 = vmatpush.bf16.msra.mxu0 0
      %7925 = vmatpush.bf16.msra.mxu0 0
      %7926 = vmatpush.bf16.msra.mxu0 0
      %7927 = vmatpush.bf16.msra.mxu0 %v7890
      %7928 = vmatmul.bf16.gmra.mxu0 %v7884
      %v7929 = vpop.f32.mrf.mxu0
      %v7930 = vadd.f32 0.0, %v7929
      %v7931 = vpop.f32.mrf.mxu0
      %7932 = vdwg.mxu0
      %7933 = vmatpush.bf16.msra.mxu0 0
      %7934 = vmatpush.bf16.msra.mxu0 0
      %7935 = vmatpush.bf16.msra.mxu0 0
      %7936 = vmatpush.bf16.msra.mxu0 0
      %7937 = vmatpush.bf16.msra.mxu0 0
      %7938 = vmatpush.bf16.msra.mxu0 0
      %7939 = vmatpush.bf16.msra.mxu0 0
      %7940 = vmatpush.bf16.msra.mxu0 %v7893
      %7941 = vmatmul.bf16.gmra.mxu0 %v7884
      %v7942 = vpop.f32.mrf.mxu0
      %v7943 = vadd.f32 0.0, %v7942
      %v7944 = vpop.f32.mrf.mxu0
      %7945 = vdwg.mxu0
      %7946 = vmatpush.bf16.msra.mxu0 0
      %7947 = vmatpush.bf16.msra.mxu0 0
      %7948 = vmatpush.bf16.msra.mxu0 0
      %7949 = vmatpush.bf16.msra.mxu0 0
      %7950 = vmatpush.bf16.msra.mxu0 0
      %7951 = vmatpush.bf16.msra.mxu0 0
      %7952 = vmatpush.bf16.msra.mxu0 0
      %7953 = vmatpush.bf16.msra.mxu0 %v7896
      %7954 = vmatmul.bf16.gmra.mxu0 %v7884
      %v7955 = vpop.f32.mrf.mxu0
      %v7956 = vadd.f32 0.0, %v7955
      %v7957 = vpop.f32.mrf.mxu0
      %7958 = vdwg.mxu0
      %7959 = vmatpush.bf16.msra.mxu0 0
      %7960 = vmatpush.bf16.msra.mxu0 0
      %7961 = vmatpush.bf16.msra.mxu0 0
      %7962 = vmatpush.bf16.msra.mxu0 0
      %7963 = vmatpush.bf16.msra.mxu0 0
      %7964 = vmatpush.bf16.msra.mxu0 0
      %7965 = vmatpush.bf16.msra.mxu0 0
      %7966 = vmatpush.bf16.msra.mxu0 %v7899
      %7967 = vmatmul.bf16.gmra.mxu0 %v7884
      %v7968 = vpop.f32.mrf.mxu0
      %v7969 = vadd.f32 0.0, %v7968
      %v7970 = vpop.f32.mrf.mxu0
      %7971 = vdwg.mxu0
      %7972 = vmatpush.bf16.msra.mxu0 0
      %7973 = vmatpush.bf16.msra.mxu0 0
      %7974 = vmatpush.bf16.msra.mxu0 0
      %7975 = vmatpush.bf16.msra.mxu0 0
      %7976 = vmatpush.bf16.msra.mxu0 0
      %7977 = vmatpush.bf16.msra.mxu0 0
      %7978 = vmatpush.bf16.msra.mxu0 0
      %7979 = vmatpush.bf16.msra.mxu0 %v7902
      %7980 = vmatmul.bf16.gmra.mxu0 %v7884
      %v7981 = vpop.f32.mrf.mxu0
      %v7982 = vadd.f32 0.0, %v7981
      %v7983 = vpop.f32.mrf.mxu0
      %7984 = vdwg.mxu0
      %7985 = vmatpush.bf16.msra.mxu0 0
      %7986 = vmatpush.bf16.msra.mxu0 0
      %7987 = vmatpush.bf16.msra.mxu0 0
      %7988 = vmatpush.bf16.msra.mxu0 0
      %7989 = vmatpush.bf16.msra.mxu0 0
      %7990 = vmatpush.bf16.msra.mxu0 0
      %7991 = vmatpush.bf16.msra.mxu0 0
      %7992 = vmatpush.bf16.msra.mxu0 %v7905
      %7993 = vmatmul.bf16.gmra.mxu0 %v7884
      %v7994 = vpop.f32.mrf.mxu0
      %v7995 = vadd.f32 0.0, %v7994
      %v7996 = vpop.f32.mrf.mxu0
      %7997 = vdwg.mxu0
      %v7998 = vadd.f32 %v7828, %v7917
      %v7999 = vadd.f32 %v7829, %v7930
      %v8000 = vadd.f32 %v7830, %v7943
      %v8001 = vadd.f32 %v7831, %v7956
      %v8002 = vadd.f32 %v7832, %v7969
      %v8003 = vadd.f32 %v7833, %v7982
      %v8004 = vadd.f32 %v7834, %v7995
      %v8005 = vld [vmem:[#allocation2] sm:$0xff]
      %v8006 = vld [vmem:[#allocation2 + $0x8] sm:$0xff]
      %s8007 = scalar_lea.vmem %s2, 32
      %v8008 = vld [vmem:[%s8007] sm:$0x3]
      %8010 = vst [vmem:[#allocation1] ss:$4 sm:$0xff] %v8005
      %s8012 = scalar_lea.vmem [#allocation1], 32
      %8013 = vst [vmem:[%s8012] ss:$4 sm:$0xff] %v8006
      %v8014 = vld.sshfl [vmem:[#allocation1] sm:$0xff pattern:$0x73625140]
      %v8016 = vld.sshfl [vmem:[#allocation1 + $0x8] sm:$0xff pattern:$0x73625140]
      %v8018 = vld.sshfl [vmem:[#allocation1 + $0x10] sm:$0xff pattern:$0x73625140]
      %v8020 = vld.sshfl [vmem:[#allocation1 + $0x18] sm:$0xff pattern:$0x73625140]
      %v8022 = vld.sshfl [vmem:[#allocation1 + $0x20] sm:$0xff pattern:$0x73625140]
      %v8024 = vld.sshfl [vmem:[#allocation1 + $0x28] sm:$0xff pattern:$0x73625140]
      %v8026 = vld.sshfl [vmem:[#allocation1 + $0x30] sm:$0xff pattern:$0x73625140]
      %v8028 = vld.sshfl [vmem:[#allocation1 + $0x38] sm:$0xff pattern:$0x73625140]
      %8030 = vrot.lane.b32.xlu0 %v8014, 7
      %v8031 = vpop.permute.xlu0 %8030
      %8032 = vrot.lane.b32.xlu0 %v8016, 7
      %v8033 = vpop.permute.xlu0 %8032
      %8034 = vrot.lane.b32.xlu0 %v8018, 7
      %v8035 = vpop.permute.xlu0 %8034
      %8036 = vrot.lane.b32.xlu0 %v8020, 7
      %v8037 = vpop.permute.xlu0 %8036
      %8038 = vrot.lane.b32.xlu0 %v8022, 7
      %v8039 = vpop.permute.xlu0 %8038
      %8040 = vrot.lane.b32.xlu0 %v8024, 7
      %v8041 = vpop.permute.xlu0 %8040
      %8042 = vrot.lane.b32.xlu0 %v8026, 7
      %v8043 = vpop.permute.xlu0 %8042
      %8044 = vrot.lane.b32.xlu0 %v8028, 7
      %v8045 = vpop.permute.xlu0 %8044
      %v8046 = vsel %vm3300, %v8031, %v8033
      %v8047 = vsel %vm3300, %v8033, %v8035
      %v8048 = vsel %vm3300, %v8035, %v8037
      %v8049 = vsel %vm3300, %v8037, %v8039
      %v8050 = vsel %vm3300, %v8039, %v8041
      %v8051 = vsel %vm3300, %v8041, %v8043
      %v8052 = vsel %vm3300, %v8043, %v8045
      %v8054 = vsel %vm365, %v8008, 0
      %v8057 = vsel %vm254, %v8046, 0
      %v8060 = vsel %vm254, %v8047, 0
      %v8063 = vsel %vm254, %v8048, 0
      %v8066 = vsel %vm254, %v8049, 0
      %v8069 = vsel %vm254, %v8050, 0
      %v8072 = vsel %vm254, %v8051, 0
      %v8075 = vsel %vm254, %v8052, 0
      %8077 = vmatpush.bf16.msra.mxu0 0
      %8078 = vmatpush.bf16.msra.mxu0 0
      %8079 = vmatpush.bf16.msra.mxu0 0
      %8080 = vmatpush.bf16.msra.mxu0 0
      %8081 = vmatpush.bf16.msra.mxu0 0
      %8082 = vmatpush.bf16.msra.mxu0 0
      %8083 = vmatpush.bf16.msra.mxu0 0
      %8084 = vmatpush.bf16.msra.mxu0 %v8057
      %8085 = vmatmul.bf16.gmra.mxu0 %v8054
      %v8086 = vpop.f32.mrf.mxu0
      %v8087 = vadd.f32 0.0, %v8086
      %v8088 = vpop.f32.mrf.mxu0
      %8089 = vdwg.mxu0
      %8090 = vmatpush.bf16.msra.mxu0 0
      %8091 = vmatpush.bf16.msra.mxu0 0
      %8092 = vmatpush.bf16.msra.mxu0 0
      %8093 = vmatpush.bf16.msra.mxu0 0
      %8094 = vmatpush.bf16.msra.mxu0 0
      %8095 = vmatpush.bf16.msra.mxu0 0
      %8096 = vmatpush.bf16.msra.mxu0 0
      %8097 = vmatpush.bf16.msra.mxu0 %v8060
      %8098 = vmatmul.bf16.gmra.mxu0 %v8054
      %v8099 = vpop.f32.mrf.mxu0
      %v8100 = vadd.f32 0.0, %v8099
      %v8101 = vpop.f32.mrf.mxu0
      %8102 = vdwg.mxu0
      %8103 = vmatpush.bf16.msra.mxu0 0
      %8104 = vmatpush.bf16.msra.mxu0 0
      %8105 = vmatpush.bf16.msra.mxu0 0
      %8106 = vmatpush.bf16.msra.mxu0 0
      %8107 = vmatpush.bf16.msra.mxu0 0
      %8108 = vmatpush.bf16.msra.mxu0 0
      %8109 = vmatpush.bf16.msra.mxu0 0
      %8110 = vmatpush.bf16.msra.mxu0 %v8063
      %8111 = vmatmul.bf16.gmra.mxu0 %v8054
      %v8112 = vpop.f32.mrf.mxu0
      %v8113 = vadd.f32 0.0, %v8112
      %v8114 = vpop.f32.mrf.mxu0
      %8115 = vdwg.mxu0
      %8116 = vmatpush.bf16.msra.mxu0 0
      %8117 = vmatpush.bf16.msra.mxu0 0
      %8118 = vmatpush.bf16.msra.mxu0 0
      %8119 = vmatpush.bf16.msra.mxu0 0
      %8120 = vmatpush.bf16.msra.mxu0 0
      %8121 = vmatpush.bf16.msra.mxu0 0
      %8122 = vmatpush.bf16.msra.mxu0 0
      %8123 = vmatpush.bf16.msra.mxu0 %v8066
      %8124 = vmatmul.bf16.gmra.mxu0 %v8054
      %v8125 = vpop.f32.mrf.mxu0
      %v8126 = vadd.f32 0.0, %v8125
      %v8127 = vpop.f32.mrf.mxu0
      %8128 = vdwg.mxu0
      %8129 = vmatpush.bf16.msra.mxu0 0
      %8130 = vmatpush.bf16.msra.mxu0 0
      %8131 = vmatpush.bf16.msra.mxu0 0
      %8132 = vmatpush.bf16.msra.mxu0 0
      %8133 = vmatpush.bf16.msra.mxu0 0
      %8134 = vmatpush.bf16.msra.mxu0 0
      %8135 = vmatpush.bf16.msra.mxu0 0
      %8136 = vmatpush.bf16.msra.mxu0 %v8069
      %8137 = vmatmul.bf16.gmra.mxu0 %v8054
      %v8138 = vpop.f32.mrf.mxu0
      %v8139 = vadd.f32 0.0, %v8138
      %v8140 = vpop.f32.mrf.mxu0
      %8141 = vdwg.mxu0
      %8142 = vmatpush.bf16.msra.mxu0 0
      %8143 = vmatpush.bf16.msra.mxu0 0
      %8144 = vmatpush.bf16.msra.mxu0 0
      %8145 = vmatpush.bf16.msra.mxu0 0
      %8146 = vmatpush.bf16.msra.mxu0 0
      %8147 = vmatpush.bf16.msra.mxu0 0
      %8148 = vmatpush.bf16.msra.mxu0 0
      %8149 = vmatpush.bf16.msra.mxu0 %v8072
      %8150 = vmatmul.bf16.gmra.mxu0 %v8054
      %v8151 = vpop.f32.mrf.mxu0
      %v8152 = vadd.f32 0.0, %v8151
      %v8153 = vpop.f32.mrf.mxu0
      %8154 = vdwg.mxu0
      %8155 = vmatpush.bf16.msra.mxu0 0
      %8156 = vmatpush.bf16.msra.mxu0 0
      %8157 = vmatpush.bf16.msra.mxu0 0
      %8158 = vmatpush.bf16.msra.mxu0 0
      %8159 = vmatpush.bf16.msra.mxu0 0
      %8160 = vmatpush.bf16.msra.mxu0 0
      %8161 = vmatpush.bf16.msra.mxu0 0
      %8162 = vmatpush.bf16.msra.mxu0 %v8075
      %8163 = vmatmul.bf16.gmra.mxu0 %v8054
      %v8164 = vpop.f32.mrf.mxu0
      %v8165 = vadd.f32 0.0, %v8164
      %v8166 = vpop.f32.mrf.mxu0
      %8167 = vdwg.mxu0
      %v8168 = vadd.f32 %v7998, %v8087
      %v8169 = vadd.f32 %v7999, %v8100
      %v8170 = vadd.f32 %v8000, %v8113
      %v8171 = vadd.f32 %v8001, %v8126
      %v8172 = vadd.f32 %v8002, %v8139
      %v8173 = vadd.f32 %v8003, %v8152
      %v8174 = vadd.f32 %v8004, %v8165
      %v8175 = vld [vmem:[#allocation2] sm:$0xff]
      %v8176 = vld [vmem:[#allocation2 + $0x8] sm:$0xff]
      %s8177 = scalar_lea.vmem %s2, 34
      %v8178 = vld [vmem:[%s8177] sm:$0x3]
      %8180 = vst [vmem:[#allocation1] ss:$4 sm:$0xff] %v8175
      %s8182 = scalar_lea.vmem [#allocation1], 32
      %8183 = vst [vmem:[%s8182] ss:$4 sm:$0xff] %v8176
      %v8184 = vld.sshfl [vmem:[#allocation1] sm:$0xff pattern:$0x73625140]
      %v8186 = vld.sshfl [vmem:[#allocation1 + $0x8] sm:$0xff pattern:$0x73625140]
      %v8188 = vld.sshfl [vmem:[#allocation1 + $0x10] sm:$0xff pattern:$0x73625140]
      %v8190 = vld.sshfl [vmem:[#allocation1 + $0x18] sm:$0xff pattern:$0x73625140]
      %v8192 = vld.sshfl [vmem:[#allocation1 + $0x20] sm:$0xff pattern:$0x73625140]
      %v8194 = vld.sshfl [vmem:[#allocation1 + $0x28] sm:$0xff pattern:$0x73625140]
      %v8196 = vld.sshfl [vmem:[#allocation1 + $0x30] sm:$0xff pattern:$0x73625140]
      %v8198 = vld.sshfl [vmem:[#allocation1 + $0x38] sm:$0xff pattern:$0x73625140]
      %8200 = vrot.lane.b32.xlu0 %v8184, 6
      %v8201 = vpop.permute.xlu0 %8200
      %8202 = vrot.lane.b32.xlu0 %v8186, 6
      %v8203 = vpop.permute.xlu0 %8202
      %8204 = vrot.lane.b32.xlu0 %v8188, 6
      %v8205 = vpop.permute.xlu0 %8204
      %8206 = vrot.lane.b32.xlu0 %v8190, 6
      %v8207 = vpop.permute.xlu0 %8206
      %8208 = vrot.lane.b32.xlu0 %v8192, 6
      %v8209 = vpop.permute.xlu0 %8208
      %8210 = vrot.lane.b32.xlu0 %v8194, 6
      %v8211 = vpop.permute.xlu0 %8210
      %8212 = vrot.lane.b32.xlu0 %v8196, 6
      %v8213 = vpop.permute.xlu0 %8212
      %8214 = vrot.lane.b32.xlu0 %v8198, 6
      %v8215 = vpop.permute.xlu0 %8214
      %v8216 = vsel %vm3495, %v8201, %v8203
      %v8217 = vsel %vm3495, %v8203, %v8205
      %v8218 = vsel %vm3495, %v8205, %v8207
      %v8219 = vsel %vm3495, %v8207, %v8209
      %v8220 = vsel %vm3495, %v8209, %v8211
      %v8221 = vsel %vm3495, %v8211, %v8213
      %v8222 = vsel %vm3495, %v8213, %v8215
      %v8224 = vsel %vm365, %v8178, 0
      %v8227 = vsel %vm254, %v8216, 0
      %v8230 = vsel %vm254, %v8217, 0
      %v8233 = vsel %vm254, %v8218, 0
      %v8236 = vsel %vm254, %v8219, 0
      %v8239 = vsel %vm254, %v8220, 0
      %v8242 = vsel %vm254, %v8221, 0
      %v8245 = vsel %vm254, %v8222, 0
      %8247 = vmatpush.bf16.msra.mxu0 0
      %8248 = vmatpush.bf16.msra.mxu0 0
      %8249 = vmatpush.bf16.msra.mxu0 0
      %8250 = vmatpush.bf16.msra.mxu0 0
      %8251 = vmatpush.bf16.msra.mxu0 0
      %8252 = vmatpush.bf16.msra.mxu0 0
      %8253 = vmatpush.bf16.msra.mxu0 0
      %8254 = vmatpush.bf16.msra.mxu0 %v8227
      %8255 = vmatmul.bf16.gmra.mxu0 %v8224
      %v8256 = vpop.f32.mrf.mxu0
      %v8257 = vadd.f32 0.0, %v8256
      %v8258 = vpop.f32.mrf.mxu0
      %8259 = vdwg.mxu0
      %8260 = vmatpush.bf16.msra.mxu0 0
      %8261 = vmatpush.bf16.msra.mxu0 0
      %8262 = vmatpush.bf16.msra.mxu0 0
      %8263 = vmatpush.bf16.msra.mxu0 0
      %8264 = vmatpush.bf16.msra.mxu0 0
      %8265 = vmatpush.bf16.msra.mxu0 0
      %8266 = vmatpush.bf16.msra.mxu0 0
      %8267 = vmatpush.bf16.msra.mxu0 %v8230
      %8268 = vmatmul.bf16.gmra.mxu0 %v8224
      %v8269 = vpop.f32.mrf.mxu0
      %v8270 = vadd.f32 0.0, %v8269
      %v8271 = vpop.f32.mrf.mxu0
      %8272 = vdwg.mxu0
      %8273 = vmatpush.bf16.msra.mxu0 0
      %8274 = vmatpush.bf16.msra.mxu0 0
      %8275 = vmatpush.bf16.msra.mxu0 0
      %8276 = vmatpush.bf16.msra.mxu0 0
      %8277 = vmatpush.bf16.msra.mxu0 0
      %8278 = vmatpush.bf16.msra.mxu0 0
      %8279 = vmatpush.bf16.msra.mxu0 0
      %8280 = vmatpush.bf16.msra.mxu0 %v8233
      %8281 = vmatmul.bf16.gmra.mxu0 %v8224
      %v8282 = vpop.f32.mrf.mxu0
      %v8283 = vadd.f32 0.0, %v8282
      %v8284 = vpop.f32.mrf.mxu0
      %8285 = vdwg.mxu0
      %8286 = vmatpush.bf16.msra.mxu0 0
      %8287 = vmatpush.bf16.msra.mxu0 0
      %8288 = vmatpush.bf16.msra.mxu0 0
      %8289 = vmatpush.bf16.msra.mxu0 0
      %8290 = vmatpush.bf16.msra.mxu0 0
      %8291 = vmatpush.bf16.msra.mxu0 0
      %8292 = vmatpush.bf16.msra.mxu0 0
      %8293 = vmatpush.bf16.msra.mxu0 %v8236
      %8294 = vmatmul.bf16.gmra.mxu0 %v8224
      %v8295 = vpop.f32.mrf.mxu0
      %v8296 = vadd.f32 0.0, %v8295
      %v8297 = vpop.f32.mrf.mxu0
      %8298 = vdwg.mxu0
      %8299 = vmatpush.bf16.msra.mxu0 0
      %8300 = vmatpush.bf16.msra.mxu0 0
      %8301 = vmatpush.bf16.msra.mxu0 0
      %8302 = vmatpush.bf16.msra.mxu0 0
      %8303 = vmatpush.bf16.msra.mxu0 0
      %8304 = vmatpush.bf16.msra.mxu0 0
      %8305 = vmatpush.bf16.msra.mxu0 0
      %8306 = vmatpush.bf16.msra.mxu0 %v8239
      %8307 = vmatmul.bf16.gmra.mxu0 %v8224
      %v8308 = vpop.f32.mrf.mxu0
      %v8309 = vadd.f32 0.0, %v8308
      %v8310 = vpop.f32.mrf.mxu0
      %8311 = vdwg.mxu0
      %8312 = vmatpush.bf16.msra.mxu0 0
      %8313 = vmatpush.bf16.msra.mxu0 0
      %8314 = vmatpush.bf16.msra.mxu0 0
      %8315 = vmatpush.bf16.msra.mxu0 0
      %8316 = vmatpush.bf16.msra.mxu0 0
      %8317 = vmatpush.bf16.msra.mxu0 0
      %8318 = vmatpush.bf16.msra.mxu0 0
      %8319 = vmatpush.bf16.msra.mxu0 %v8242
      %8320 = vmatmul.bf16.gmra.mxu0 %v8224
      %v8321 = vpop.f32.mrf.mxu0
      %v8322 = vadd.f32 0.0, %v8321
      %v8323 = vpop.f32.mrf.mxu0
      %8324 = vdwg.mxu0
      %8325 = vmatpush.bf16.msra.mxu0 0
      %8326 = vmatpush.bf16.msra.mxu0 0
      %8327 = vmatpush.bf16.msra.mxu0 0
      %8328 = vmatpush.bf16.msra.mxu0 0
      %8329 = vmatpush.bf16.msra.mxu0 0
      %8330 = vmatpush.bf16.msra.mxu0 0
      %8331 = vmatpush.bf16.msra.mxu0 0
      %8332 = vmatpush.bf16.msra.mxu0 %v8245
      %8333 = vmatmul.bf16.gmra.mxu0 %v8224
      %v8334 = vpop.f32.mrf.mxu0
      %v8335 = vadd.f32 0.0, %v8334
      %v8336 = vpop.f32.mrf.mxu0
      %8337 = vdwg.mxu0
      %v8338 = vadd.f32 %v8168, %v8257
      %v8339 = vadd.f32 %v8169, %v8270
      %v8340 = vadd.f32 %v8170, %v8283
      %v8341 = vadd.f32 %v8171, %v8296
      %v8342 = vadd.f32 %v8172, %v8309
      %v8343 = vadd.f32 %v8173, %v8322
      %v8344 = vadd.f32 %v8174, %v8335
      %v8345 = vld [vmem:[#allocation2 + $0x2] sm:$0xff]
      %v8346 = vld [vmem:[#allocation2 + $0xa] sm:$0x3f]
      %s8347 = scalar_lea.vmem %s2, 36
      %v8348 = vld [vmem:[%s8347] sm:$0x3]
      %8350 = vst [vmem:[#allocation1] ss:$4 sm:$0xff] %v8345
      %s8352 = scalar_lea.vmem [#allocation1], 32
      %8353 = vst [vmem:[%s8352] ss:$4 sm:$0xff] %v8346
      %v8354 = vld.sshfl [vmem:[#allocation1] sm:$0xff pattern:$0x73625140]
      %v8356 = vld.sshfl [vmem:[#allocation1 + $0x8] sm:$0xff pattern:$0x73625140]
      %v8358 = vld.sshfl [vmem:[#allocation1 + $0x10] sm:$0xff pattern:$0x73625140]
      %v8360 = vld.sshfl [vmem:[#allocation1 + $0x18] sm:$0xff pattern:$0x73625140]
      %v8362 = vld.sshfl [vmem:[#allocation1 + $0x20] sm:$0xff pattern:$0x73625140]
      %v8364 = vld.sshfl [vmem:[#allocation1 + $0x28] sm:$0xff pattern:$0x73625140]
      %v8366 = vld.sshfl [vmem:[#allocation1 + $0x30] sm:$0xff pattern:$0x73625140]
      %8368 = vrot.lane.b32.xlu0 %v8354, 56
      %v8369 = vpop.permute.xlu0 %8368
      %8370 = vrot.lane.b32.xlu0 %v8356, 56
      %v8371 = vpop.permute.xlu0 %8370
      %8372 = vrot.lane.b32.xlu0 %v8358, 56
      %v8373 = vpop.permute.xlu0 %8372
      %8374 = vrot.lane.b32.xlu0 %v8360, 56
      %v8375 = vpop.permute.xlu0 %8374
      %8376 = vrot.lane.b32.xlu0 %v8362, 56
      %v8377 = vpop.permute.xlu0 %8376
      %8378 = vrot.lane.b32.xlu0 %v8364, 56
      %v8379 = vpop.permute.xlu0 %8378
      %8380 = vrot.lane.b32.xlu0 %v8366, 56
      %v8381 = vpop.permute.xlu0 %8380
      %v8382 = vsel %vm3684, %v8369, %v8371
      %v8383 = vsel %vm3684, %v8371, %v8373
      %v8384 = vsel %vm3684, %v8373, %v8375
      %v8385 = vsel %vm3684, %v8375, %v8377
      %v8386 = vsel %vm3684, %v8377, %v8379
      %v8387 = vsel %vm3684, %v8379, %v8381
      %v8389 = vsel %vm365, %v8348, 0
      %v8392 = vsel %vm254, %v8382, 0
      %v8395 = vsel %vm254, %v8383, 0
      %v8398 = vsel %vm254, %v8384, 0
      %v8401 = vsel %vm254, %v8385, 0
      %v8404 = vsel %vm254, %v8386, 0
      %v8407 = vsel %vm254, %v8387, 0
      %v8410 = vsel %vm254, %v8381, 0
      %8412 = vmatpush.bf16.msra.mxu0 0
      %8413 = vmatpush.bf16.msra.mxu0 0
      %8414 = vmatpush.bf16.msra.mxu0 0
      %8415 = vmatpush.bf16.msra.mxu0 0
      %8416 = vmatpush.bf16.msra.mxu0 0
      %8417 = vmatpush.bf16.msra.mxu0 0
      %8418 = vmatpush.bf16.msra.mxu0 0
      %8419 = vmatpush.bf16.msra.mxu0 %v8392
      %8420 = vmatmul.bf16.gmra.mxu0 %v8389
      %v8421 = vpop.f32.mrf.mxu0
      %v8422 = vadd.f32 0.0, %v8421
      %v8423 = vpop.f32.mrf.mxu0
      %8424 = vdwg.mxu0
      %8425 = vmatpush.bf16.msra.mxu0 0
      %8426 = vmatpush.bf16.msra.mxu0 0
      %8427 = vmatpush.bf16.msra.mxu0 0
      %8428 = vmatpush.bf16.msra.mxu0 0
      %8429 = vmatpush.bf16.msra.mxu0 0
      %8430 = vmatpush.bf16.msra.mxu0 0
      %8431 = vmatpush.bf16.msra.mxu0 0
      %8432 = vmatpush.bf16.msra.mxu0 %v8395
      %8433 = vmatmul.bf16.gmra.mxu0 %v8389
      %v8434 = vpop.f32.mrf.mxu0
      %v8435 = vadd.f32 0.0, %v8434
      %v8436 = vpop.f32.mrf.mxu0
      %8437 = vdwg.mxu0
      %8438 = vmatpush.bf16.msra.mxu0 0
      %8439 = vmatpush.bf16.msra.mxu0 0
      %8440 = vmatpush.bf16.msra.mxu0 0
      %8441 = vmatpush.bf16.msra.mxu0 0
      %8442 = vmatpush.bf16.msra.mxu0 0
      %8443 = vmatpush.bf16.msra.mxu0 0
      %8444 = vmatpush.bf16.msra.mxu0 0
      %8445 = vmatpush.bf16.msra.mxu0 %v8398
      %8446 = vmatmul.bf16.gmra.mxu0 %v8389
      %v8447 = vpop.f32.mrf.mxu0
      %v8448 = vadd.f32 0.0, %v8447
      %v8449 = vpop.f32.mrf.mxu0
      %8450 = vdwg.mxu0
      %8451 = vmatpush.bf16.msra.mxu0 0
      %8452 = vmatpush.bf16.msra.mxu0 0
      %8453 = vmatpush.bf16.msra.mxu0 0
      %8454 = vmatpush.bf16.msra.mxu0 0
      %8455 = vmatpush.bf16.msra.mxu0 0
      %8456 = vmatpush.bf16.msra.mxu0 0
      %8457 = vmatpush.bf16.msra.mxu0 0
      %8458 = vmatpush.bf16.msra.mxu0 %v8401
      %8459 = vmatmul.bf16.gmra.mxu0 %v8389
      %v8460 = vpop.f32.mrf.mxu0
      %v8461 = vadd.f32 0.0, %v8460
      %v8462 = vpop.f32.mrf.mxu0
      %8463 = vdwg.mxu0
      %8464 = vmatpush.bf16.msra.mxu0 0
      %8465 = vmatpush.bf16.msra.mxu0 0
      %8466 = vmatpush.bf16.msra.mxu0 0
      %8467 = vmatpush.bf16.msra.mxu0 0
      %8468 = vmatpush.bf16.msra.mxu0 0
      %8469 = vmatpush.bf16.msra.mxu0 0
      %8470 = vmatpush.bf16.msra.mxu0 0
      %8471 = vmatpush.bf16.msra.mxu0 %v8404
      %8472 = vmatmul.bf16.gmra.mxu0 %v8389
      %v8473 = vpop.f32.mrf.mxu0
      %v8474 = vadd.f32 0.0, %v8473
      %v8475 = vpop.f32.mrf.mxu0
      %8476 = vdwg.mxu0
      %8477 = vmatpush.bf16.msra.mxu0 0
      %8478 = vmatpush.bf16.msra.mxu0 0
      %8479 = vmatpush.bf16.msra.mxu0 0
      %8480 = vmatpush.bf16.msra.mxu0 0
      %8481 = vmatpush.bf16.msra.mxu0 0
      %8482 = vmatpush.bf16.msra.mxu0 0
      %8483 = vmatpush.bf16.msra.mxu0 0
      %8484 = vmatpush.bf16.msra.mxu0 %v8407
      %8485 = vmatmul.bf16.gmra.mxu0 %v8389
      %v8486 = vpop.f32.mrf.mxu0
      %v8487 = vadd.f32 0.0, %v8486
      %v8488 = vpop.f32.mrf.mxu0
      %8489 = vdwg.mxu0
      %8490 = vmatpush.bf16.msra.mxu0 0
      %8491 = vmatpush.bf16.msra.mxu0 0
      %8492 = vmatpush.bf16.msra.mxu0 0
      %8493 = vmatpush.bf16.msra.mxu0 0
      %8494 = vmatpush.bf16.msra.mxu0 0
      %8495 = vmatpush.bf16.msra.mxu0 0
      %8496 = vmatpush.bf16.msra.mxu0 0
      %8497 = vmatpush.bf16.msra.mxu0 %v8410
      %8498 = vmatmul.bf16.gmra.mxu0 %v8389
      %v8499 = vpop.f32.mrf.mxu0
      %v8500 = vadd.f32 0.0, %v8499
      %v8501 = vpop.f32.mrf.mxu0
      %8502 = vdwg.mxu0
      %v8503 = vadd.f32 %v8338, %v8422
      %v8504 = vadd.f32 %v8339, %v8435
      %v8505 = vadd.f32 %v8340, %v8448
      %v8506 = vadd.f32 %v8341, %v8461
      %v8507 = vadd.f32 %v8342, %v8474
      %v8508 = vadd.f32 %v8343, %v8487
      %v8509 = vadd.f32 %v8344, %v8500
      %v8510 = vld [vmem:[#allocation2 + $0x2] sm:$0xff]
      %v8511 = vld [vmem:[#allocation2 + $0xa] sm:$0x3f]
      %s8512 = scalar_lea.vmem %s2, 38
      %v8513 = vld [vmem:[%s8512] sm:$0x3]
      %8515 = vst [vmem:[#allocation1] ss:$4 sm:$0xff] %v8510
      %s8517 = scalar_lea.vmem [#allocation1], 32
      %8518 = vst [vmem:[%s8517] ss:$4 sm:$0xff] %v8511
      %v8519 = vld.sshfl [vmem:[#allocation1] sm:$0xff pattern:$0x73625140]
      %v8521 = vld.sshfl [vmem:[#allocation1 + $0x8] sm:$0xff pattern:$0x73625140]
      %v8523 = vld.sshfl [vmem:[#allocation1 + $0x10] sm:$0xff pattern:$0x73625140]
      %v8525 = vld.sshfl [vmem:[#allocation1 + $0x18] sm:$0xff pattern:$0x73625140]
      %v8527 = vld.sshfl [vmem:[#allocation1 + $0x20] sm:$0xff pattern:$0x73625140]
      %v8529 = vld.sshfl [vmem:[#allocation1 + $0x28] sm:$0xff pattern:$0x73625140]
      %v8531 = vld.sshfl [vmem:[#allocation1 + $0x30] sm:$0xff pattern:$0x73625140]
      %8533 = vrot.lane.b32.xlu0 %v8519, 55
      %v8534 = vpop.permute.xlu0 %8533
      %8535 = vrot.lane.b32.xlu0 %v8521, 55
      %v8536 = vpop.permute.xlu0 %8535
      %8537 = vrot.lane.b32.xlu0 %v8523, 55
      %v8538 = vpop.permute.xlu0 %8537
      %8539 = vrot.lane.b32.xlu0 %v8525, 55
      %v8540 = vpop.permute.xlu0 %8539
      %8541 = vrot.lane.b32.xlu0 %v8527, 55
      %v8542 = vpop.permute.xlu0 %8541
      %8543 = vrot.lane.b32.xlu0 %v8529, 55
      %v8544 = vpop.permute.xlu0 %8543
      %8545 = vrot.lane.b32.xlu0 %v8531, 55
      %v8546 = vpop.permute.xlu0 %8545
      %v8547 = vsel %vm3872, %v8534, %v8536
      %v8548 = vsel %vm3872, %v8536, %v8538
      %v8549 = vsel %vm3872, %v8538, %v8540
      %v8550 = vsel %vm3872, %v8540, %v8542
      %v8551 = vsel %vm3872, %v8542, %v8544
      %v8552 = vsel %vm3872, %v8544, %v8546
      %v8554 = vsel %vm365, %v8513, 0
      %v8557 = vsel %vm254, %v8547, 0
      %v8560 = vsel %vm254, %v8548, 0
      %v8563 = vsel %vm254, %v8549, 0
      %v8566 = vsel %vm254, %v8550, 0
      %v8569 = vsel %vm254, %v8551, 0
      %v8572 = vsel %vm254, %v8552, 0
      %v8575 = vsel %vm254, %v8546, 0
      %8577 = vmatpush.bf16.msra.mxu0 0
      %8578 = vmatpush.bf16.msra.mxu0 0
      %8579 = vmatpush.bf16.msra.mxu0 0
      %8580 = vmatpush.bf16.msra.mxu0 0
      %8581 = vmatpush.bf16.msra.mxu0 0
      %8582 = vmatpush.bf16.msra.mxu0 0
      %8583 = vmatpush.bf16.msra.mxu0 0
      %8584 = vmatpush.bf16.msra.mxu0 %v8557
      %8585 = vmatmul.bf16.gmra.mxu0 %v8554
      %v8586 = vpop.f32.mrf.mxu0
      %v8587 = vadd.f32 0.0, %v8586
      %v8588 = vpop.f32.mrf.mxu0
      %8589 = vdwg.mxu0
      %8590 = vmatpush.bf16.msra.mxu0 0
      %8591 = vmatpush.bf16.msra.mxu0 0
      %8592 = vmatpush.bf16.msra.mxu0 0
      %8593 = vmatpush.bf16.msra.mxu0 0
      %8594 = vmatpush.bf16.msra.mxu0 0
      %8595 = vmatpush.bf16.msra.mxu0 0
      %8596 = vmatpush.bf16.msra.mxu0 0
      %8597 = vmatpush.bf16.msra.mxu0 %v8560
      %8598 = vmatmul.bf16.gmra.mxu0 %v8554
      %v8599 = vpop.f32.mrf.mxu0
      %v8600 = vadd.f32 0.0, %v8599
      %v8601 = vpop.f32.mrf.mxu0
      %8602 = vdwg.mxu0
      %8603 = vmatpush.bf16.msra.mxu0 0
      %8604 = vmatpush.bf16.msra.mxu0 0
      %8605 = vmatpush.bf16.msra.mxu0 0
      %8606 = vmatpush.bf16.msra.mxu0 0
      %8607 = vmatpush.bf16.msra.mxu0 0
      %8608 = vmatpush.bf16.msra.mxu0 0
      %8609 = vmatpush.bf16.msra.mxu0 0
      %8610 = vmatpush.bf16.msra.mxu0 %v8563
      %8611 = vmatmul.bf16.gmra.mxu0 %v8554
      %v8612 = vpop.f32.mrf.mxu0
      %v8613 = vadd.f32 0.0, %v8612
      %v8614 = vpop.f32.mrf.mxu0
      %8615 = vdwg.mxu0
      %8616 = vmatpush.bf16.msra.mxu0 0
      %8617 = vmatpush.bf16.msra.mxu0 0
      %8618 = vmatpush.bf16.msra.mxu0 0
      %8619 = vmatpush.bf16.msra.mxu0 0
      %8620 = vmatpush.bf16.msra.mxu0 0
      %8621 = vmatpush.bf16.msra.mxu0 0
      %8622 = vmatpush.bf16.msra.mxu0 0
      %8623 = vmatpush.bf16.msra.mxu0 %v8566
      %8624 = vmatmul.bf16.gmra.mxu0 %v8554
      %v8625 = vpop.f32.mrf.mxu0
      %v8626 = vadd.f32 0.0, %v8625
      %v8627 = vpop.f32.mrf.mxu0
      %8628 = vdwg.mxu0
      %8629 = vmatpush.bf16.msra.mxu0 0
      %8630 = vmatpush.bf16.msra.mxu0 0
      %8631 = vmatpush.bf16.msra.mxu0 0
      %8632 = vmatpush.bf16.msra.mxu0 0
      %8633 = vmatpush.bf16.msra.mxu0 0
      %8634 = vmatpush.bf16.msra.mxu0 0
      %8635 = vmatpush.bf16.msra.mxu0 0
      %8636 = vmatpush.bf16.msra.mxu0 %v8569
      %8637 = vmatmul.bf16.gmra.mxu0 %v8554
      %v8638 = vpop.f32.mrf.mxu0
      %v8639 = vadd.f32 0.0, %v8638
      %v8640 = vpop.f32.mrf.mxu0
      %8641 = vdwg.mxu0
      %8642 = vmatpush.bf16.msra.mxu0 0
      %8643 = vmatpush.bf16.msra.mxu0 0
      %8644 = vmatpush.bf16.msra.mxu0 0
      %8645 = vmatpush.bf16.msra.mxu0 0
      %8646 = vmatpush.bf16.msra.mxu0 0
      %8647 = vmatpush.bf16.msra.mxu0 0
      %8648 = vmatpush.bf16.msra.mxu0 0
      %8649 = vmatpush.bf16.msra.mxu0 %v8572
      %8650 = vmatmul.bf16.gmra.mxu0 %v8554
      %v8651 = vpop.f32.mrf.mxu0
      %v8652 = vadd.f32 0.0, %v8651
      %v8653 = vpop.f32.mrf.mxu0
      %8654 = vdwg.mxu0
      %8655 = vmatpush.bf16.msra.mxu0 0
      %8656 = vmatpush.bf16.msra.mxu0 0
      %8657 = vmatpush.bf16.msra.mxu0 0
      %8658 = vmatpush.bf16.msra.mxu0 0
      %8659 = vmatpush.bf16.msra.mxu0 0
      %8660 = vmatpush.bf16.msra.mxu0 0
      %8661 = vmatpush.bf16.msra.mxu0 0
      %8662 = vmatpush.bf16.msra.mxu0 %v8575
      %8663 = vmatmul.bf16.gmra.mxu0 %v8554
      %v8664 = vpop.f32.mrf.mxu0
      %v8665 = vadd.f32 0.0, %v8664
      %v8666 = vpop.f32.mrf.mxu0
      %8667 = vdwg.mxu0
      %v8668 = vadd.f32 %v8503, %v8587
      %v8669 = vadd.f32 %v8504, %v8600
      %v8670 = vadd.f32 %v8505, %v8613
      %v8671 = vadd.f32 %v8506, %v8626
      %v8672 = vadd.f32 %v8507, %v8639
      %v8673 = vadd.f32 %v8508, %v8652
      %v8674 = vadd.f32 %v8509, %v8665
      %v8675 = vld [vmem:[#allocation2 + $0x2] sm:$0xff]
      %v8676 = vld [vmem:[#allocation2 + $0xa] sm:$0x3f]
      %s8677 = scalar_lea.vmem %s2, 40
      %v8678 = vld [vmem:[%s8677] sm:$0x3]
      %8680 = vst [vmem:[#allocation1] ss:$4 sm:$0xff] %v8675
      %s8682 = scalar_lea.vmem [#allocation1], 32
      %8683 = vst [vmem:[%s8682] ss:$4 sm:$0xff] %v8676
      %v8684 = vld.sshfl [vmem:[#allocation1] sm:$0xff pattern:$0x73625140]
      %v8686 = vld.sshfl [vmem:[#allocation1 + $0x8] sm:$0xff pattern:$0x73625140]
      %v8688 = vld.sshfl [vmem:[#allocation1 + $0x10] sm:$0xff pattern:$0x73625140]
      %v8690 = vld.sshfl [vmem:[#allocation1 + $0x18] sm:$0xff pattern:$0x73625140]
      %v8692 = vld.sshfl [vmem:[#allocation1 + $0x20] sm:$0xff pattern:$0x73625140]
      %v8694 = vld.sshfl [vmem:[#allocation1 + $0x28] sm:$0xff pattern:$0x73625140]
      %v8696 = vld.sshfl [vmem:[#allocation1 + $0x30] sm:$0xff pattern:$0x73625140]
      %8698 = vrot.lane.b32.xlu0 %v8684, 54
      %v8699 = vpop.permute.xlu0 %8698
      %8700 = vrot.lane.b32.xlu0 %v8686, 54
      %v8701 = vpop.permute.xlu0 %8700
      %8702 = vrot.lane.b32.xlu0 %v8688, 54
      %v8703 = vpop.permute.xlu0 %8702
      %8704 = vrot.lane.b32.xlu0 %v8690, 54
      %v8705 = vpop.permute.xlu0 %8704
      %8706 = vrot.lane.b32.xlu0 %v8692, 54
      %v8707 = vpop.permute.xlu0 %8706
      %8708 = vrot.lane.b32.xlu0 %v8694, 54
      %v8709 = vpop.permute.xlu0 %8708
      %8710 = vrot.lane.b32.xlu0 %v8696, 54
      %v8711 = vpop.permute.xlu0 %8710
      %v8712 = vsel %vm4060, %v8699, %v8701
      %v8713 = vsel %vm4060, %v8701, %v8703
      %v8714 = vsel %vm4060, %v8703, %v8705
      %v8715 = vsel %vm4060, %v8705, %v8707
      %v8716 = vsel %vm4060, %v8707, %v8709
      %v8717 = vsel %vm4060, %v8709, %v8711
      %v8719 = vsel %vm365, %v8678, 0
      %v8722 = vsel %vm254, %v8712, 0
      %v8725 = vsel %vm254, %v8713, 0
      %v8728 = vsel %vm254, %v8714, 0
      %v8731 = vsel %vm254, %v8715, 0
      %v8734 = vsel %vm254, %v8716, 0
      %v8737 = vsel %vm254, %v8717, 0
      %v8740 = vsel %vm254, %v8711, 0
      %8742 = vmatpush.bf16.msra.mxu0 0
      %8743 = vmatpush.bf16.msra.mxu0 0
      %8744 = vmatpush.bf16.msra.mxu0 0
      %8745 = vmatpush.bf16.msra.mxu0 0
      %8746 = vmatpush.bf16.msra.mxu0 0
      %8747 = vmatpush.bf16.msra.mxu0 0
      %8748 = vmatpush.bf16.msra.mxu0 0
      %8749 = vmatpush.bf16.msra.mxu0 %v8722
      %8750 = vmatmul.bf16.gmra.mxu0 %v8719
      %v8751 = vpop.f32.mrf.mxu0
      %v8752 = vadd.f32 0.0, %v8751
      %v8753 = vpop.f32.mrf.mxu0
      %8754 = vdwg.mxu0
      %8755 = vmatpush.bf16.msra.mxu0 0
      %8756 = vmatpush.bf16.msra.mxu0 0
      %8757 = vmatpush.bf16.msra.mxu0 0
      %8758 = vmatpush.bf16.msra.mxu0 0
      %8759 = vmatpush.bf16.msra.mxu0 0
      %8760 = vmatpush.bf16.msra.mxu0 0
      %8761 = vmatpush.bf16.msra.mxu0 0
      %8762 = vmatpush.bf16.msra.mxu0 %v8725
      %8763 = vmatmul.bf16.gmra.mxu0 %v8719
      %v8764 = vpop.f32.mrf.mxu0
      %v8765 = vadd.f32 0.0, %v8764
      %v8766 = vpop.f32.mrf.mxu0
      %8767 = vdwg.mxu0
      %8768 = vmatpush.bf16.msra.mxu0 0
      %8769 = vmatpush.bf16.msra.mxu0 0
      %8770 = vmatpush.bf16.msra.mxu0 0
      %8771 = vmatpush.bf16.msra.mxu0 0
      %8772 = vmatpush.bf16.msra.mxu0 0
      %8773 = vmatpush.bf16.msra.mxu0 0
      %8774 = vmatpush.bf16.msra.mxu0 0
      %8775 = vmatpush.bf16.msra.mxu0 %v8728
      %8776 = vmatmul.bf16.gmra.mxu0 %v8719
      %v8777 = vpop.f32.mrf.mxu0
      %v8778 = vadd.f32 0.0, %v8777
      %v8779 = vpop.f32.mrf.mxu0
      %8780 = vdwg.mxu0
      %8781 = vmatpush.bf16.msra.mxu0 0
      %8782 = vmatpush.bf16.msra.mxu0 0
      %8783 = vmatpush.bf16.msra.mxu0 0
      %8784 = vmatpush.bf16.msra.mxu0 0
      %8785 = vmatpush.bf16.msra.mxu0 0
      %8786 = vmatpush.bf16.msra.mxu0 0
      %8787 = vmatpush.bf16.msra.mxu0 0
      %8788 = vmatpush.bf16.msra.mxu0 %v8731
      %8789 = vmatmul.bf16.gmra.mxu0 %v8719
      %v8790 = vpop.f32.mrf.mxu0
      %v8791 = vadd.f32 0.0, %v8790
      %v8792 = vpop.f32.mrf.mxu0
      %8793 = vdwg.mxu0
      %8794 = vmatpush.bf16.msra.mxu0 0
      %8795 = vmatpush.bf16.msra.mxu0 0
      %8796 = vmatpush.bf16.msra.mxu0 0
      %8797 = vmatpush.bf16.msra.mxu0 0
      %8798 = vmatpush.bf16.msra.mxu0 0
      %8799 = vmatpush.bf16.msra.mxu0 0
      %8800 = vmatpush.bf16.msra.mxu0 0
      %8801 = vmatpush.bf16.msra.mxu0 %v8734
      %8802 = vmatmul.bf16.gmra.mxu0 %v8719
      %v8803 = vpop.f32.mrf.mxu0
      %v8804 = vadd.f32 0.0, %v8803
      %v8805 = vpop.f32.mrf.mxu0
      %8806 = vdwg.mxu0
      %8807 = vmatpush.bf16.msra.mxu0 0
      %8808 = vmatpush.bf16.msra.mxu0 0
      %8809 = vmatpush.bf16.msra.mxu0 0
      %8810 = vmatpush.bf16.msra.mxu0 0
      %8811 = vmatpush.bf16.msra.mxu0 0
      %8812 = vmatpush.bf16.msra.mxu0 0
      %8813 = vmatpush.bf16.msra.mxu0 0
      %8814 = vmatpush.bf16.msra.mxu0 %v8737
      %8815 = vmatmul.bf16.gmra.mxu0 %v8719
      %v8816 = vpop.f32.mrf.mxu0
      %v8817 = vadd.f32 0.0, %v8816
      %v8818 = vpop.f32.mrf.mxu0
      %8819 = vdwg.mxu0
      %8820 = vmatpush.bf16.msra.mxu0 0
      %8821 = vmatpush.bf16.msra.mxu0 0
      %8822 = vmatpush.bf16.msra.mxu0 0
      %8823 = vmatpush.bf16.msra.mxu0 0
      %8824 = vmatpush.bf16.msra.mxu0 0
      %8825 = vmatpush.bf16.msra.mxu0 0
      %8826 = vmatpush.bf16.msra.mxu0 0
      %8827 = vmatpush.bf16.msra.mxu0 %v8740
      %8828 = vmatmul.bf16.gmra.mxu0 %v8719
      %v8829 = vpop.f32.mrf.mxu0
      %v8830 = vadd.f32 0.0, %v8829
      %v8831 = vpop.f32.mrf.mxu0
      %8832 = vdwg.mxu0
      %v8833 = vadd.f32 %v8668, %v8752
      %v8834 = vadd.f32 %v8669, %v8765
      %v8835 = vadd.f32 %v8670, %v8778
      %v8836 = vadd.f32 %v8671, %v8791
      %v8837 = vadd.f32 %v8672, %v8804
      %v8838 = vadd.f32 %v8673, %v8817
      %v8839 = vadd.f32 %v8674, %v8830
      %v8840 = vld [vmem:[#allocation2 + $0x2] sm:$0xff]
      %v8841 = vld [vmem:[#allocation2 + $0xa] sm:$0x3f]
      %s8842 = scalar_lea.vmem %s2, 42
      %v8843 = vld [vmem:[%s8842] sm:$0x3]
      %8845 = vst [vmem:[#allocation1] ss:$4 sm:$0xff] %v8840
      %s8847 = scalar_lea.vmem [#allocation1], 32
      %8848 = vst [vmem:[%s8847] ss:$4 sm:$0xff] %v8841
      %v8849 = vld.sshfl [vmem:[#allocation1] sm:$0xff pattern:$0x73625140]
      %v8851 = vld.sshfl [vmem:[#allocation1 + $0x8] sm:$0xff pattern:$0x73625140]
      %v8853 = vld.sshfl [vmem:[#allocation1 + $0x10] sm:$0xff pattern:$0x73625140]
      %v8855 = vld.sshfl [vmem:[#allocation1 + $0x18] sm:$0xff pattern:$0x73625140]
      %v8857 = vld.sshfl [vmem:[#allocation1 + $0x20] sm:$0xff pattern:$0x73625140]
      %v8859 = vld.sshfl [vmem:[#allocation1 + $0x28] sm:$0xff pattern:$0x73625140]
      %v8861 = vld.sshfl [vmem:[#allocation1 + $0x30] sm:$0xff pattern:$0x73625140]
      %8863 = vrot.lane.b32.xlu0 %v8849, 46
      %v8864 = vpop.permute.xlu0 %8863
      %8865 = vrot.lane.b32.xlu0 %v8851, 46
      %v8866 = vpop.permute.xlu0 %8865
      %8867 = vrot.lane.b32.xlu0 %v8853, 46
      %v8868 = vpop.permute.xlu0 %8867
      %8869 = vrot.lane.b32.xlu0 %v8855, 46
      %v8870 = vpop.permute.xlu0 %8869
      %8871 = vrot.lane.b32.xlu0 %v8857, 46
      %v8872 = vpop.permute.xlu0 %8871
      %8873 = vrot.lane.b32.xlu0 %v8859, 46
      %v8874 = vpop.permute.xlu0 %8873
      %8875 = vrot.lane.b32.xlu0 %v8861, 46
      %v8876 = vpop.permute.xlu0 %8875
      %v8877 = vsel %vm4248, %v8864, %v8866
      %v8878 = vsel %vm4248, %v8866, %v8868
      %v8879 = vsel %vm4248, %v8868, %v8870
      %v8880 = vsel %vm4248, %v8870, %v8872
      %v8881 = vsel %vm4248, %v8872, %v8874
      %v8882 = vsel %vm4248, %v8874, %v8876
      %v8884 = vsel %vm365, %v8843, 0
      %v8887 = vsel %vm254, %v8877, 0
      %v8890 = vsel %vm254, %v8878, 0
      %v8893 = vsel %vm254, %v8879, 0
      %v8896 = vsel %vm254, %v8880, 0
      %v8899 = vsel %vm254, %v8881, 0
      %v8902 = vsel %vm254, %v8882, 0
      %v8905 = vsel %vm254, %v8876, 0
      %8907 = vmatpush.bf16.msra.mxu0 0
      %8908 = vmatpush.bf16.msra.mxu0 0
      %8909 = vmatpush.bf16.msra.mxu0 0
      %8910 = vmatpush.bf16.msra.mxu0 0
      %8911 = vmatpush.bf16.msra.mxu0 0
      %8912 = vmatpush.bf16.msra.mxu0 0
      %8913 = vmatpush.bf16.msra.mxu0 0
      %8914 = vmatpush.bf16.msra.mxu0 %v8887
      %8915 = vmatmul.bf16.gmra.mxu0 %v8884
      %v8916 = vpop.f32.mrf.mxu0
      %v8917 = vadd.f32 0.0, %v8916
      %v8918 = vpop.f32.mrf.mxu0
      %8919 = vdwg.mxu0
      %8920 = vmatpush.bf16.msra.mxu0 0
      %8921 = vmatpush.bf16.msra.mxu0 0
      %8922 = vmatpush.bf16.msra.mxu0 0
      %8923 = vmatpush.bf16.msra.mxu0 0
      %8924 = vmatpush.bf16.msra.mxu0 0
      %8925 = vmatpush.bf16.msra.mxu0 0
      %8926 = vmatpush.bf16.msra.mxu0 0
      %8927 = vmatpush.bf16.msra.mxu0 %v8890
      %8928 = vmatmul.bf16.gmra.mxu0 %v8884
      %v8929 = vpop.f32.mrf.mxu0
      %v8930 = vadd.f32 0.0, %v8929
      %v8931 = vpop.f32.mrf.mxu0
      %8932 = vdwg.mxu0
      %8933 = vmatpush.bf16.msra.mxu0 0
      %8934 = vmatpush.bf16.msra.mxu0 0
      %8935 = vmatpush.bf16.msra.mxu0 0
      %8936 = vmatpush.bf16.msra.mxu0 0
      %8937 = vmatpush.bf16.msra.mxu0 0
      %8938 = vmatpush.bf16.msra.mxu0 0
      %8939 = vmatpush.bf16.msra.mxu0 0
      %8940 = vmatpush.bf16.msra.mxu0 %v8893
      %8941 = vmatmul.bf16.gmra.mxu0 %v8884
      %v8942 = vpop.f32.mrf.mxu0
      %v8943 = vadd.f32 0.0, %v8942
      %v8944 = vpop.f32.mrf.mxu0
      %8945 = vdwg.mxu0
      %8946 = vmatpush.bf16.msra.mxu0 0
      %8947 = vmatpush.bf16.msra.mxu0 0
      %8948 = vmatpush.bf16.msra.mxu0 0
      %8949 = vmatpush.bf16.msra.mxu0 0
      %8950 = vmatpush.bf16.msra.mxu0 0
      %8951 = vmatpush.bf16.msra.mxu0 0
      %8952 = vmatpush.bf16.msra.mxu0 0
      %8953 = vmatpush.bf16.msra.mxu0 %v8896
      %8954 = vmatmul.bf16.gmra.mxu0 %v8884
      %v8955 = vpop.f32.mrf.mxu0
      %v8956 = vadd.f32 0.0, %v8955
      %v8957 = vpop.f32.mrf.mxu0
      %8958 = vdwg.mxu0
      %8959 = vmatpush.bf16.msra.mxu0 0
      %8960 = vmatpush.bf16.msra.mxu0 0
      %8961 = vmatpush.bf16.msra.mxu0 0
      %8962 = vmatpush.bf16.msra.mxu0 0
      %8963 = vmatpush.bf16.msra.mxu0 0
      %8964 = vmatpush.bf16.msra.mxu0 0
      %8965 = vmatpush.bf16.msra.mxu0 0
      %8966 = vmatpush.bf16.msra.mxu0 %v8899
      %8967 = vmatmul.bf16.gmra.mxu0 %v8884
      %v8968 = vpop.f32.mrf.mxu0
      %v8969 = vadd.f32 0.0, %v8968
      %v8970 = vpop.f32.mrf.mxu0
      %8971 = vdwg.mxu0
      %8972 = vmatpush.bf16.msra.mxu0 0
      %8973 = vmatpush.bf16.msra.mxu0 0
      %8974 = vmatpush.bf16.msra.mxu0 0
      %8975 = vmatpush.bf16.msra.mxu0 0
      %8976 = vmatpush.bf16.msra.mxu0 0
      %8977 = vmatpush.bf16.msra.mxu0 0
      %8978 = vmatpush.bf16.msra.mxu0 0
      %8979 = vmatpush.bf16.msra.mxu0 %v8902
      %8980 = vmatmul.bf16.gmra.mxu0 %v8884
      %v8981 = vpop.f32.mrf.mxu0
      %v8982 = vadd.f32 0.0, %v8981
      %v8983 = vpop.f32.mrf.mxu0
      %8984 = vdwg.mxu0
      %8985 = vmatpush.bf16.msra.mxu0 0
      %8986 = vmatpush.bf16.msra.mxu0 0
      %8987 = vmatpush.bf16.msra.mxu0 0
      %8988 = vmatpush.bf16.msra.mxu0 0
      %8989 = vmatpush.bf16.msra.mxu0 0
      %8990 = vmatpush.bf16.msra.mxu0 0
      %8991 = vmatpush.bf16.msra.mxu0 0
      %8992 = vmatpush.bf16.msra.mxu0 %v8905
      %8993 = vmatmul.bf16.gmra.mxu0 %v8884
      %v8994 = vpop.f32.mrf.mxu0
      %v8995 = vadd.f32 0.0, %v8994
      %v8996 = vpop.f32.mrf.mxu0
      %8997 = vdwg.mxu0
      %v8998 = vadd.f32 %v8833, %v8917
      %v8999 = vadd.f32 %v8834, %v8930
      %v9000 = vadd.f32 %v8835, %v8943
      %v9001 = vadd.f32 %v8836, %v8956
      %v9002 = vadd.f32 %v8837, %v8969
      %v9003 = vadd.f32 %v8838, %v8982
      %v9004 = vadd.f32 %v8839, %v8995
      %v9005 = vld [vmem:[#allocation2 + $0x2] sm:$0xff]
      %v9006 = vld [vmem:[#allocation2 + $0xa] sm:$0x3f]
      %s9007 = scalar_lea.vmem %s2, 44
      %v9008 = vld [vmem:[%s9007] sm:$0x3]
      %9010 = vst [vmem:[#allocation1] ss:$4 sm:$0xff] %v9005
      %s9012 = scalar_lea.vmem [#allocation1], 32
      %9013 = vst [vmem:[%s9012] ss:$4 sm:$0xff] %v9006
      %v9014 = vld.sshfl [vmem:[#allocation1] sm:$0xff pattern:$0x73625140]
      %v9016 = vld.sshfl [vmem:[#allocation1 + $0x8] sm:$0xff pattern:$0x73625140]
      %v9018 = vld.sshfl [vmem:[#allocation1 + $0x10] sm:$0xff pattern:$0x73625140]
      %v9020 = vld.sshfl [vmem:[#allocation1 + $0x18] sm:$0xff pattern:$0x73625140]
      %v9022 = vld.sshfl [vmem:[#allocation1 + $0x20] sm:$0xff pattern:$0x73625140]
      %v9024 = vld.sshfl [vmem:[#allocation1 + $0x28] sm:$0xff pattern:$0x73625140]
      %v9026 = vld.sshfl [vmem:[#allocation1 + $0x30] sm:$0xff pattern:$0x73625140]
      %9028 = vrot.lane.b32.xlu0 %v9014, 45
      %v9029 = vpop.permute.xlu0 %9028
      %9030 = vrot.lane.b32.xlu0 %v9016, 45
      %v9031 = vpop.permute.xlu0 %9030
      %9032 = vrot.lane.b32.xlu0 %v9018, 45
      %v9033 = vpop.permute.xlu0 %9032
      %9034 = vrot.lane.b32.xlu0 %v9020, 45
      %v9035 = vpop.permute.xlu0 %9034
      %9036 = vrot.lane.b32.xlu0 %v9022, 45
      %v9037 = vpop.permute.xlu0 %9036
      %9038 = vrot.lane.b32.xlu0 %v9024, 45
      %v9039 = vpop.permute.xlu0 %9038
      %9040 = vrot.lane.b32.xlu0 %v9026, 45
      %v9041 = vpop.permute.xlu0 %9040
      %v9042 = vsel %vm4436, %v9029, %v9031
      %v9043 = vsel %vm4436, %v9031, %v9033
      %v9044 = vsel %vm4436, %v9033, %v9035
      %v9045 = vsel %vm4436, %v9035, %v9037
      %v9046 = vsel %vm4436, %v9037, %v9039
      %v9047 = vsel %vm4436, %v9039, %v9041
      %v9049 = vsel %vm365, %v9008, 0
      %v9052 = vsel %vm254, %v9042, 0
      %v9055 = vsel %vm254, %v9043, 0
      %v9058 = vsel %vm254, %v9044, 0
      %v9061 = vsel %vm254, %v9045, 0
      %v9064 = vsel %vm254, %v9046, 0
      %v9067 = vsel %vm254, %v9047, 0
      %v9070 = vsel %vm254, %v9041, 0
      %9072 = vmatpush.bf16.msra.mxu0 0
      %9073 = vmatpush.bf16.msra.mxu0 0
      %9074 = vmatpush.bf16.msra.mxu0 0
      %9075 = vmatpush.bf16.msra.mxu0 0
      %9076 = vmatpush.bf16.msra.mxu0 0
      %9077 = vmatpush.bf16.msra.mxu0 0
      %9078 = vmatpush.bf16.msra.mxu0 0
      %9079 = vmatpush.bf16.msra.mxu0 %v9052
      %9080 = vmatmul.bf16.gmra.mxu0 %v9049
      %v9081 = vpop.f32.mrf.mxu0
      %v9082 = vadd.f32 0.0, %v9081
      %v9083 = vpop.f32.mrf.mxu0
      %9084 = vdwg.mxu0
      %9085 = vmatpush.bf16.msra.mxu0 0
      %9086 = vmatpush.bf16.msra.mxu0 0
      %9087 = vmatpush.bf16.msra.mxu0 0
      %9088 = vmatpush.bf16.msra.mxu0 0
      %9089 = vmatpush.bf16.msra.mxu0 0
      %9090 = vmatpush.bf16.msra.mxu0 0
      %9091 = vmatpush.bf16.msra.mxu0 0
      %9092 = vmatpush.bf16.msra.mxu0 %v9055
      %9093 = vmatmul.bf16.gmra.mxu0 %v9049
      %v9094 = vpop.f32.mrf.mxu0
      %v9095 = vadd.f32 0.0, %v9094
      %v9096 = vpop.f32.mrf.mxu0
      %9097 = vdwg.mxu0
      %9098 = vmatpush.bf16.msra.mxu0 0
      %9099 = vmatpush.bf16.msra.mxu0 0
      %9100 = vmatpush.bf16.msra.mxu0 0
      %9101 = vmatpush.bf16.msra.mxu0 0
      %9102 = vmatpush.bf16.msra.mxu0 0
      %9103 = vmatpush.bf16.msra.mxu0 0
      %9104 = vmatpush.bf16.msra.mxu0 0
      %9105 = vmatpush.bf16.msra.mxu0 %v9058
      %9106 = vmatmul.bf16.gmra.mxu0 %v9049
      %v9107 = vpop.f32.mrf.mxu0
      %v9108 = vadd.f32 0.0, %v9107
      %v9109 = vpop.f32.mrf.mxu0
      %9110 = vdwg.mxu0
      %9111 = vmatpush.bf16.msra.mxu0 0
      %9112 = vmatpush.bf16.msra.mxu0 0
      %9113 = vmatpush.bf16.msra.mxu0 0
      %9114 = vmatpush.bf16.msra.mxu0 0
      %9115 = vmatpush.bf16.msra.mxu0 0
      %9116 = vmatpush.bf16.msra.mxu0 0
      %9117 = vmatpush.bf16.msra.mxu0 0
      %9118 = vmatpush.bf16.msra.mxu0 %v9061
      %9119 = vmatmul.bf16.gmra.mxu0 %v9049
      %v9120 = vpop.f32.mrf.mxu0
      %v9121 = vadd.f32 0.0, %v9120
      %v9122 = vpop.f32.mrf.mxu0
      %9123 = vdwg.mxu0
      %9124 = vmatpush.bf16.msra.mxu0 0
      %9125 = vmatpush.bf16.msra.mxu0 0
      %9126 = vmatpush.bf16.msra.mxu0 0
      %9127 = vmatpush.bf16.msra.mxu0 0
      %9128 = vmatpush.bf16.msra.mxu0 0
      %9129 = vmatpush.bf16.msra.mxu0 0
      %9130 = vmatpush.bf16.msra.mxu0 0
      %9131 = vmatpush.bf16.msra.mxu0 %v9064
      %9132 = vmatmul.bf16.gmra.mxu0 %v9049
      %v9133 = vpop.f32.mrf.mxu0
      %v9134 = vadd.f32 0.0, %v9133
      %v9135 = vpop.f32.mrf.mxu0
      %9136 = vdwg.mxu0
      %9137 = vmatpush.bf16.msra.mxu0 0
      %9138 = vmatpush.bf16.msra.mxu0 0
      %9139 = vmatpush.bf16.msra.mxu0 0
      %9140 = vmatpush.bf16.msra.mxu0 0
      %9141 = vmatpush.bf16.msra.mxu0 0
      %9142 = vmatpush.bf16.msra.mxu0 0
      %9143 = vmatpush.bf16.msra.mxu0 0
      %9144 = vmatpush.bf16.msra.mxu0 %v9067
      %9145 = vmatmul.bf16.gmra.mxu0 %v9049
      %v9146 = vpop.f32.mrf.mxu0
      %v9147 = vadd.f32 0.0, %v9146
      %v9148 = vpop.f32.mrf.mxu0
      %9149 = vdwg.mxu0
      %9150 = vmatpush.bf16.msra.mxu0 0
      %9151 = vmatpush.bf16.msra.mxu0 0
      %9152 = vmatpush.bf16.msra.mxu0 0
      %9153 = vmatpush.bf16.msra.mxu0 0
      %9154 = vmatpush.bf16.msra.mxu0 0
      %9155 = vmatpush.bf16.msra.mxu0 0
      %9156 = vmatpush.bf16.msra.mxu0 0
      %9157 = vmatpush.bf16.msra.mxu0 %v9070
      %9158 = vmatmul.bf16.gmra.mxu0 %v9049
      %v9159 = vpop.f32.mrf.mxu0
      %v9160 = vadd.f32 0.0, %v9159
      %v9161 = vpop.f32.mrf.mxu0
      %9162 = vdwg.mxu0
      %v9163 = vadd.f32 %v8998, %v9082
      %v9164 = vadd.f32 %v8999, %v9095
      %v9165 = vadd.f32 %v9000, %v9108
      %v9166 = vadd.f32 %v9001, %v9121
      %v9167 = vadd.f32 %v9002, %v9134
      %v9168 = vadd.f32 %v9003, %v9147
      %v9169 = vadd.f32 %v9004, %v9160
      %v9170 = vld [vmem:[#allocation2 + $0x2] sm:$0xff]
      %v9171 = vld [vmem:[#allocation2 + $0xa] sm:$0x3f]
      %s9172 = scalar_lea.vmem %s2, 46
      %v9173 = vld [vmem:[%s9172] sm:$0x3]
      %9175 = vst [vmem:[#allocation1] ss:$4 sm:$0xff] %v9170
      %s9177 = scalar_lea.vmem [#allocation1], 32
      %9178 = vst [vmem:[%s9177] ss:$4 sm:$0xff] %v9171
      %v9179 = vld.sshfl [vmem:[#allocation1] sm:$0xff pattern:$0x73625140]
      %v9181 = vld.sshfl [vmem:[#allocation1 + $0x8] sm:$0xff pattern:$0x73625140]
      %v9183 = vld.sshfl [vmem:[#allocation1 + $0x10] sm:$0xff pattern:$0x73625140]
      %v9185 = vld.sshfl [vmem:[#allocation1 + $0x18] sm:$0xff pattern:$0x73625140]
      %v9187 = vld.sshfl [vmem:[#allocation1 + $0x20] sm:$0xff pattern:$0x73625140]
      %v9189 = vld.sshfl [vmem:[#allocation1 + $0x28] sm:$0xff pattern:$0x73625140]
      %v9191 = vld.sshfl [vmem:[#allocation1 + $0x30] sm:$0xff pattern:$0x73625140]
      %9193 = vrot.lane.b32.xlu0 %v9179, 44
      %v9194 = vpop.permute.xlu0 %9193
      %9195 = vrot.lane.b32.xlu0 %v9181, 44
      %v9196 = vpop.permute.xlu0 %9195
      %9197 = vrot.lane.b32.xlu0 %v9183, 44
      %v9198 = vpop.permute.xlu0 %9197
      %9199 = vrot.lane.b32.xlu0 %v9185, 44
      %v9200 = vpop.permute.xlu0 %9199
      %9201 = vrot.lane.b32.xlu0 %v9187, 44
      %v9202 = vpop.permute.xlu0 %9201
      %9203 = vrot.lane.b32.xlu0 %v9189, 44
      %v9204 = vpop.permute.xlu0 %9203
      %9205 = vrot.lane.b32.xlu0 %v9191, 44
      %v9206 = vpop.permute.xlu0 %9205
      %v9207 = vsel %vm4624, %v9194, %v9196
      %v9208 = vsel %vm4624, %v9196, %v9198
      %v9209 = vsel %vm4624, %v9198, %v9200
      %v9210 = vsel %vm4624, %v9200, %v9202
      %v9211 = vsel %vm4624, %v9202, %v9204
      %v9212 = vsel %vm4624, %v9204, %v9206
      %v9214 = vsel %vm365, %v9173, 0
      %v9217 = vsel %vm254, %v9207, 0
      %v9220 = vsel %vm254, %v9208, 0
      %v9223 = vsel %vm254, %v9209, 0
      %v9226 = vsel %vm254, %v9210, 0
      %v9229 = vsel %vm254, %v9211, 0
      %v9232 = vsel %vm254, %v9212, 0
      %v9235 = vsel %vm254, %v9206, 0
      %9237 = vmatpush.bf16.msra.mxu0 0
      %9238 = vmatpush.bf16.msra.mxu0 0
      %9239 = vmatpush.bf16.msra.mxu0 0
      %9240 = vmatpush.bf16.msra.mxu0 0
      %9241 = vmatpush.bf16.msra.mxu0 0
      %9242 = vmatpush.bf16.msra.mxu0 0
      %9243 = vmatpush.bf16.msra.mxu0 0
      %9244 = vmatpush.bf16.msra.mxu0 %v9217
      %9245 = vmatmul.bf16.gmra.mxu0 %v9214
      %v9246 = vpop.f32.mrf.mxu0
      %v9247 = vadd.f32 0.0, %v9246
      %v9248 = vpop.f32.mrf.mxu0
      %9249 = vdwg.mxu0
      %9250 = vmatpush.bf16.msra.mxu0 0
      %9251 = vmatpush.bf16.msra.mxu0 0
      %9252 = vmatpush.bf16.msra.mxu0 0
      %9253 = vmatpush.bf16.msra.mxu0 0
      %9254 = vmatpush.bf16.msra.mxu0 0
      %9255 = vmatpush.bf16.msra.mxu0 0
      %9256 = vmatpush.bf16.msra.mxu0 0
      %9257 = vmatpush.bf16.msra.mxu0 %v9220
      %9258 = vmatmul.bf16.gmra.mxu0 %v9214
      %v9259 = vpop.f32.mrf.mxu0
      %v9260 = vadd.f32 0.0, %v9259
      %v9261 = vpop.f32.mrf.mxu0
      %9262 = vdwg.mxu0
      %9263 = vmatpush.bf16.msra.mxu0 0
      %9264 = vmatpush.bf16.msra.mxu0 0
      %9265 = vmatpush.bf16.msra.mxu0 0
      %9266 = vmatpush.bf16.msra.mxu0 0
      %9267 = vmatpush.bf16.msra.mxu0 0
      %9268 = vmatpush.bf16.msra.mxu0 0
      %9269 = vmatpush.bf16.msra.mxu0 0
      %9270 = vmatpush.bf16.msra.mxu0 %v9223
      %9271 = vmatmul.bf16.gmra.mxu0 %v9214
      %v9272 = vpop.f32.mrf.mxu0
      %v9273 = vadd.f32 0.0, %v9272
      %v9274 = vpop.f32.mrf.mxu0
      %9275 = vdwg.mxu0
      %9276 = vmatpush.bf16.msra.mxu0 0
      %9277 = vmatpush.bf16.msra.mxu0 0
      %9278 = vmatpush.bf16.msra.mxu0 0
      %9279 = vmatpush.bf16.msra.mxu0 0
      %9280 = vmatpush.bf16.msra.mxu0 0
      %9281 = vmatpush.bf16.msra.mxu0 0
      %9282 = vmatpush.bf16.msra.mxu0 0
      %9283 = vmatpush.bf16.msra.mxu0 %v9226
      %9284 = vmatmul.bf16.gmra.mxu0 %v9214
      %v9285 = vpop.f32.mrf.mxu0
      %v9286 = vadd.f32 0.0, %v9285
      %v9287 = vpop.f32.mrf.mxu0
      %9288 = vdwg.mxu0
      %9289 = vmatpush.bf16.msra.mxu0 0
      %9290 = vmatpush.bf16.msra.mxu0 0
      %9291 = vmatpush.bf16.msra.mxu0 0
      %9292 = vmatpush.bf16.msra.mxu0 0
      %9293 = vmatpush.bf16.msra.mxu0 0
      %9294 = vmatpush.bf16.msra.mxu0 0
      %9295 = vmatpush.bf16.msra.mxu0 0
      %9296 = vmatpush.bf16.msra.mxu0 %v9229
      %9297 = vmatmul.bf16.gmra.mxu0 %v9214
      %v9298 = vpop.f32.mrf.mxu0
      %v9299 = vadd.f32 0.0, %v9298
      %v9300 = vpop.f32.mrf.mxu0
      %9301 = vdwg.mxu0
      %9302 = vmatpush.bf16.msra.mxu0 0
      %9303 = vmatpush.bf16.msra.mxu0 0
      %9304 = vmatpush.bf16.msra.mxu0 0
      %9305 = vmatpush.bf16.msra.mxu0 0
      %9306 = vmatpush.bf16.msra.mxu0 0
      %9307 = vmatpush.bf16.msra.mxu0 0
      %9308 = vmatpush.bf16.msra.mxu0 0
      %9309 = vmatpush.bf16.msra.mxu0 %v9232
      %9310 = vmatmul.bf16.gmra.mxu0 %v9214
      %v9311 = vpop.f32.mrf.mxu0
      %v9312 = vadd.f32 0.0, %v9311
      %v9313 = vpop.f32.mrf.mxu0
      %9314 = vdwg.mxu0
      %9315 = vmatpush.bf16.msra.mxu0 0
      %9316 = vmatpush.bf16.msra.mxu0 0
      %9317 = vmatpush.bf16.msra.mxu0 0
      %9318 = vmatpush.bf16.msra.mxu0 0
      %9319 = vmatpush.bf16.msra.mxu0 0
      %9320 = vmatpush.bf16.msra.mxu0 0
      %9321 = vmatpush.bf16.msra.mxu0 0
      %9322 = vmatpush.bf16.msra.mxu0 %v9235
      %9323 = vmatmul.bf16.gmra.mxu0 %v9214
      %v9324 = vpop.f32.mrf.mxu0
      %v9325 = vadd.f32 0.0, %v9324
      %v9326 = vpop.f32.mrf.mxu0
      %9327 = vdwg.mxu0
      %v9328 = vadd.f32 %v9163, %v9247
      %v9329 = vadd.f32 %v9164, %v9260
      %v9330 = vadd.f32 %v9165, %v9273
      %v9331 = vadd.f32 %v9166, %v9286
      %v9332 = vadd.f32 %v9167, %v9299
      %v9333 = vadd.f32 %v9168, %v9312
      %v9334 = vadd.f32 %v9169, %v9325
      %v9335 = vld [vmem:[#allocation2 + $0x2] sm:$0xff]
      %v9336 = vld [vmem:[#allocation2 + $0xa] sm:$0x3f]
      %s9337 = scalar_lea.vmem %s2, 48
      %v9338 = vld [vmem:[%s9337] sm:$0x3]
      %9340 = vst [vmem:[#allocation1] ss:$4 sm:$0xff] %v9335
      %s9342 = scalar_lea.vmem [#allocation1], 32
      %9343 = vst [vmem:[%s9342] ss:$4 sm:$0xff] %v9336
      %v9344 = vld.sshfl [vmem:[#allocation1] sm:$0xff pattern:$0x73625140]
      %v9346 = vld.sshfl [vmem:[#allocation1 + $0x8] sm:$0xff pattern:$0x73625140]
      %v9348 = vld.sshfl [vmem:[#allocation1 + $0x10] sm:$0xff pattern:$0x73625140]
      %v9350 = vld.sshfl [vmem:[#allocation1 + $0x18] sm:$0xff pattern:$0x73625140]
      %v9352 = vld.sshfl [vmem:[#allocation1 + $0x20] sm:$0xff pattern:$0x73625140]
      %v9354 = vld.sshfl [vmem:[#allocation1 + $0x28] sm:$0xff pattern:$0x73625140]
      %v9356 = vld.sshfl [vmem:[#allocation1 + $0x30] sm:$0xff pattern:$0x73625140]
      %9358 = vrot.lane.b32.xlu0 %v9344, 36
      %v9359 = vpop.permute.xlu0 %9358
      %9360 = vrot.lane.b32.xlu0 %v9346, 36
      %v9361 = vpop.permute.xlu0 %9360
      %9362 = vrot.lane.b32.xlu0 %v9348, 36
      %v9363 = vpop.permute.xlu0 %9362
      %9364 = vrot.lane.b32.xlu0 %v9350, 36
      %v9365 = vpop.permute.xlu0 %9364
      %9366 = vrot.lane.b32.xlu0 %v9352, 36
      %v9367 = vpop.permute.xlu0 %9366
      %9368 = vrot.lane.b32.xlu0 %v9354, 36
      %v9369 = vpop.permute.xlu0 %9368
      %9370 = vrot.lane.b32.xlu0 %v9356, 36
      %v9371 = vpop.permute.xlu0 %9370
      %v9372 = vsel %vm4812, %v9359, %v9361
      %v9373 = vsel %vm4812, %v9361, %v9363
      %v9374 = vsel %vm4812, %v9363, %v9365
      %v9375 = vsel %vm4812, %v9365, %v9367
      %v9376 = vsel %vm4812, %v9367, %v9369
      %v9377 = vsel %vm4812, %v9369, %v9371
      %v9379 = vsel %vm365, %v9338, 0
      %v9382 = vsel %vm254, %v9372, 0
      %v9385 = vsel %vm254, %v9373, 0
      %v9388 = vsel %vm254, %v9374, 0
      %v9391 = vsel %vm254, %v9375, 0
      %v9394 = vsel %vm254, %v9376, 0
      %v9397 = vsel %vm254, %v9377, 0
      %v9400 = vsel %vm254, %v9371, 0
      %9402 = vmatpush.bf16.msra.mxu0 0
      %9403 = vmatpush.bf16.msra.mxu0 0
      %9404 = vmatpush.bf16.msra.mxu0 0
      %9405 = vmatpush.bf16.msra.mxu0 0
      %9406 = vmatpush.bf16.msra.mxu0 0
      %9407 = vmatpush.bf16.msra.mxu0 0
      %9408 = vmatpush.bf16.msra.mxu0 0
      %9409 = vmatpush.bf16.msra.mxu0 %v9382
      %9410 = vmatmul.bf16.gmra.mxu0 %v9379
      %v9411 = vpop.f32.mrf.mxu0
      %v9412 = vadd.f32 0.0, %v9411
      %v9413 = vpop.f32.mrf.mxu0
      %9414 = vdwg.mxu0
      %9415 = vmatpush.bf16.msra.mxu0 0
      %9416 = vmatpush.bf16.msra.mxu0 0
      %9417 = vmatpush.bf16.msra.mxu0 0
      %9418 = vmatpush.bf16.msra.mxu0 0
      %9419 = vmatpush.bf16.msra.mxu0 0
      %9420 = vmatpush.bf16.msra.mxu0 0
      %9421 = vmatpush.bf16.msra.mxu0 0
      %9422 = vmatpush.bf16.msra.mxu0 %v9385
      %9423 = vmatmul.bf16.gmra.mxu0 %v9379
      %v9424 = vpop.f32.mrf.mxu0
      %v9425 = vadd.f32 0.0, %v9424
      %v9426 = vpop.f32.mrf.mxu0
      %9427 = vdwg.mxu0
      %9428 = vmatpush.bf16.msra.mxu0 0
      %9429 = vmatpush.bf16.msra.mxu0 0
      %9430 = vmatpush.bf16.msra.mxu0 0
      %9431 = vmatpush.bf16.msra.mxu0 0
      %9432 = vmatpush.bf16.msra.mxu0 0
      %9433 = vmatpush.bf16.msra.mxu0 0
      %9434 = vmatpush.bf16.msra.mxu0 0
      %9435 = vmatpush.bf16.msra.mxu0 %v9388
      %9436 = vmatmul.bf16.gmra.mxu0 %v9379
      %v9437 = vpop.f32.mrf.mxu0
      %v9438 = vadd.f32 0.0, %v9437
      %v9439 = vpop.f32.mrf.mxu0
      %9440 = vdwg.mxu0
      %9441 = vmatpush.bf16.msra.mxu0 0
      %9442 = vmatpush.bf16.msra.mxu0 0
      %9443 = vmatpush.bf16.msra.mxu0 0
      %9444 = vmatpush.bf16.msra.mxu0 0
      %9445 = vmatpush.bf16.msra.mxu0 0
      %9446 = vmatpush.bf16.msra.mxu0 0
      %9447 = vmatpush.bf16.msra.mxu0 0
      %9448 = vmatpush.bf16.msra.mxu0 %v9391
      %9449 = vmatmul.bf16.gmra.mxu0 %v9379
      %v9450 = vpop.f32.mrf.mxu0
      %v9451 = vadd.f32 0.0, %v9450
      %v9452 = vpop.f32.mrf.mxu0
      %9453 = vdwg.mxu0
      %9454 = vmatpush.bf16.msra.mxu0 0
      %9455 = vmatpush.bf16.msra.mxu0 0
      %9456 = vmatpush.bf16.msra.mxu0 0
      %9457 = vmatpush.bf16.msra.mxu0 0
      %9458 = vmatpush.bf16.msra.mxu0 0
      %9459 = vmatpush.bf16.msra.mxu0 0
      %9460 = vmatpush.bf16.msra.mxu0 0
      %9461 = vmatpush.bf16.msra.mxu0 %v9394
      %9462 = vmatmul.bf16.gmra.mxu0 %v9379
      %v9463 = vpop.f32.mrf.mxu0
      %v9464 = vadd.f32 0.0, %v9463
      %v9465 = vpop.f32.mrf.mxu0
      %9466 = vdwg.mxu0
      %9467 = vmatpush.bf16.msra.mxu0 0
      %9468 = vmatpush.bf16.msra.mxu0 0
      %9469 = vmatpush.bf16.msra.mxu0 0
      %9470 = vmatpush.bf16.msra.mxu0 0
      %9471 = vmatpush.bf16.msra.mxu0 0
      %9472 = vmatpush.bf16.msra.mxu0 0
      %9473 = vmatpush.bf16.msra.mxu0 0
      %9474 = vmatpush.bf16.msra.mxu0 %v9397
      %9475 = vmatmul.bf16.gmra.mxu0 %v9379
      %v9476 = vpop.f32.mrf.mxu0
      %v9477 = vadd.f32 0.0, %v9476
      %v9478 = vpop.f32.mrf.mxu0
      %9479 = vdwg.mxu0
      %9480 = vmatpush.bf16.msra.mxu0 0
      %9481 = vmatpush.bf16.msra.mxu0 0
      %9482 = vmatpush.bf16.msra.mxu0 0
      %9483 = vmatpush.bf16.msra.mxu0 0
      %9484 = vmatpush.bf16.msra.mxu0 0
      %9485 = vmatpush.bf16.msra.mxu0 0
      %9486 = vmatpush.bf16.msra.mxu0 0
      %9487 = vmatpush.bf16.msra.mxu0 %v9400
      %9488 = vmatmul.bf16.gmra.mxu0 %v9379
      %v9489 = vpop.f32.mrf.mxu0
      %v9490 = vadd.f32 0.0, %v9489
      %v9491 = vpop.f32.mrf.mxu0
      %9492 = vdwg.mxu0
      %v9493 = vadd.f32 %v9328, %v9412
      %v9494 = vadd.f32 %v9329, %v9425
      %v9495 = vadd.f32 %v9330, %v9438
      %v9496 = vadd.f32 %v9331, %v9451
      %v9497 = vadd.f32 %v9332, %v9464
      %v9498 = vadd.f32 %v9333, %v9477
      %v9499 = vadd.f32 %v9334, %v9490
      %v9500 = vld [vmem:[#allocation2 + $0x2] sm:$0xff]
      %v9501 = vld [vmem:[#allocation2 + $0xa] sm:$0x3f]
      %s9502 = scalar_lea.vmem %s2, 50
      %v9503 = vld [vmem:[%s9502] sm:$0x3]
      %9505 = vst [vmem:[#allocation1] ss:$4 sm:$0xff] %v9500
      %s9507 = scalar_lea.vmem [#allocation1], 32
      %9508 = vst [vmem:[%s9507] ss:$4 sm:$0xff] %v9501
      %v9509 = vld.sshfl [vmem:[#allocation1] sm:$0xff pattern:$0x73625140]
      %v9511 = vld.sshfl [vmem:[#allocation1 + $0x8] sm:$0xff pattern:$0x73625140]
      %v9513 = vld.sshfl [vmem:[#allocation1 + $0x10] sm:$0xff pattern:$0x73625140]
      %v9515 = vld.sshfl [vmem:[#allocation1 + $0x18] sm:$0xff pattern:$0x73625140]
      %v9517 = vld.sshfl [vmem:[#allocation1 + $0x20] sm:$0xff pattern:$0x73625140]
      %v9519 = vld.sshfl [vmem:[#allocation1 + $0x28] sm:$0xff pattern:$0x73625140]
      %v9521 = vld.sshfl [vmem:[#allocation1 + $0x30] sm:$0xff pattern:$0x73625140]
      %9523 = vrot.lane.b32.xlu0 %v9509, 35
      %v9524 = vpop.permute.xlu0 %9523
      %9525 = vrot.lane.b32.xlu0 %v9511, 35
      %v9526 = vpop.permute.xlu0 %9525
      %9527 = vrot.lane.b32.xlu0 %v9513, 35
      %v9528 = vpop.permute.xlu0 %9527
      %9529 = vrot.lane.b32.xlu0 %v9515, 35
      %v9530 = vpop.permute.xlu0 %9529
      %9531 = vrot.lane.b32.xlu0 %v9517, 35
      %v9532 = vpop.permute.xlu0 %9531
      %9533 = vrot.lane.b32.xlu0 %v9519, 35
      %v9534 = vpop.permute.xlu0 %9533
      %9535 = vrot.lane.b32.xlu0 %v9521, 35
      %v9536 = vpop.permute.xlu0 %9535
      %v9537 = vsel %vm5000, %v9524, %v9526
      %v9538 = vsel %vm5000, %v9526, %v9528
      %v9539 = vsel %vm5000, %v9528, %v9530
      %v9540 = vsel %vm5000, %v9530, %v9532
      %v9541 = vsel %vm5000, %v9532, %v9534
      %v9542 = vsel %vm5000, %v9534, %v9536
      %v9544 = vsel %vm365, %v9503, 0
      %v9547 = vsel %vm254, %v9537, 0
      %v9550 = vsel %vm254, %v9538, 0
      %v9553 = vsel %vm254, %v9539, 0
      %v9556 = vsel %vm254, %v9540, 0
      %v9559 = vsel %vm254, %v9541, 0
      %v9562 = vsel %vm254, %v9542, 0
      %v9565 = vsel %vm254, %v9536, 0
      %9567 = vmatpush.bf16.msra.mxu0 0
      %9568 = vmatpush.bf16.msra.mxu0 0
      %9569 = vmatpush.bf16.msra.mxu0 0
      %9570 = vmatpush.bf16.msra.mxu0 0
      %9571 = vmatpush.bf16.msra.mxu0 0
      %9572 = vmatpush.bf16.msra.mxu0 0
      %9573 = vmatpush.bf16.msra.mxu0 0
      %9574 = vmatpush.bf16.msra.mxu0 %v9547
      %9575 = vmatmul.bf16.gmra.mxu0 %v9544
      %v9576 = vpop.f32.mrf.mxu0
      %v9577 = vadd.f32 0.0, %v9576
      %v9578 = vpop.f32.mrf.mxu0
      %9579 = vdwg.mxu0
      %9580 = vmatpush.bf16.msra.mxu0 0
      %9581 = vmatpush.bf16.msra.mxu0 0
      %9582 = vmatpush.bf16.msra.mxu0 0
      %9583 = vmatpush.bf16.msra.mxu0 0
      %9584 = vmatpush.bf16.msra.mxu0 0
      %9585 = vmatpush.bf16.msra.mxu0 0
      %9586 = vmatpush.bf16.msra.mxu0 0
      %9587 = vmatpush.bf16.msra.mxu0 %v9550
      %9588 = vmatmul.bf16.gmra.mxu0 %v9544
      %v9589 = vpop.f32.mrf.mxu0
      %v9590 = vadd.f32 0.0, %v9589
      %v9591 = vpop.f32.mrf.mxu0
      %9592 = vdwg.mxu0
      %9593 = vmatpush.bf16.msra.mxu0 0
      %9594 = vmatpush.bf16.msra.mxu0 0
      %9595 = vmatpush.bf16.msra.mxu0 0
      %9596 = vmatpush.bf16.msra.mxu0 0
      %9597 = vmatpush.bf16.msra.mxu0 0
      %9598 = vmatpush.bf16.msra.mxu0 0
      %9599 = vmatpush.bf16.msra.mxu0 0
      %9600 = vmatpush.bf16.msra.mxu0 %v9553
      %9601 = vmatmul.bf16.gmra.mxu0 %v9544
      %v9602 = vpop.f32.mrf.mxu0
      %v9603 = vadd.f32 0.0, %v9602
      %v9604 = vpop.f32.mrf.mxu0
      %9605 = vdwg.mxu0
      %9606 = vmatpush.bf16.msra.mxu0 0
      %9607 = vmatpush.bf16.msra.mxu0 0
      %9608 = vmatpush.bf16.msra.mxu0 0
      %9609 = vmatpush.bf16.msra.mxu0 0
      %9610 = vmatpush.bf16.msra.mxu0 0
      %9611 = vmatpush.bf16.msra.mxu0 0
      %9612 = vmatpush.bf16.msra.mxu0 0
      %9613 = vmatpush.bf16.msra.mxu0 %v9556
      %9614 = vmatmul.bf16.gmra.mxu0 %v9544
      %v9615 = vpop.f32.mrf.mxu0
      %v9616 = vadd.f32 0.0, %v9615
      %v9617 = vpop.f32.mrf.mxu0
      %9618 = vdwg.mxu0
      %9619 = vmatpush.bf16.msra.mxu0 0
      %9620 = vmatpush.bf16.msra.mxu0 0
      %9621 = vmatpush.bf16.msra.mxu0 0
      %9622 = vmatpush.bf16.msra.mxu0 0
      %9623 = vmatpush.bf16.msra.mxu0 0
      %9624 = vmatpush.bf16.msra.mxu0 0
      %9625 = vmatpush.bf16.msra.mxu0 0
      %9626 = vmatpush.bf16.msra.mxu0 %v9559
      %9627 = vmatmul.bf16.gmra.mxu0 %v9544
      %v9628 = vpop.f32.mrf.mxu0
      %v9629 = vadd.f32 0.0, %v9628
      %v9630 = vpop.f32.mrf.mxu0
      %9631 = vdwg.mxu0
      %9632 = vmatpush.bf16.msra.mxu0 0
      %9633 = vmatpush.bf16.msra.mxu0 0
      %9634 = vmatpush.bf16.msra.mxu0 0
      %9635 = vmatpush.bf16.msra.mxu0 0
      %9636 = vmatpush.bf16.msra.mxu0 0
      %9637 = vmatpush.bf16.msra.mxu0 0
      %9638 = vmatpush.bf16.msra.mxu0 0
      %9639 = vmatpush.bf16.msra.mxu0 %v9562
      %9640 = vmatmul.bf16.gmra.mxu0 %v9544
      %v9641 = vpop.f32.mrf.mxu0
      %v9642 = vadd.f32 0.0, %v9641
      %v9643 = vpop.f32.mrf.mxu0
      %9644 = vdwg.mxu0
      %9645 = vmatpush.bf16.msra.mxu0 0
      %9646 = vmatpush.bf16.msra.mxu0 0
      %9647 = vmatpush.bf16.msra.mxu0 0
      %9648 = vmatpush.bf16.msra.mxu0 0
      %9649 = vmatpush.bf16.msra.mxu0 0
      %9650 = vmatpush.bf16.msra.mxu0 0
      %9651 = vmatpush.bf16.msra.mxu0 0
      %9652 = vmatpush.bf16.msra.mxu0 %v9565
      %9653 = vmatmul.bf16.gmra.mxu0 %v9544
      %v9654 = vpop.f32.mrf.mxu0
      %v9655 = vadd.f32 0.0, %v9654
      %v9656 = vpop.f32.mrf.mxu0
      %9657 = vdwg.mxu0
      %v9658 = vadd.f32 %v9493, %v9577
      %v9659 = vadd.f32 %v9494, %v9590
      %v9660 = vadd.f32 %v9495, %v9603
      %v9661 = vadd.f32 %v9496, %v9616
      %v9662 = vadd.f32 %v9497, %v9629
      %v9663 = vadd.f32 %v9498, %v9642
      %v9664 = vadd.f32 %v9499, %v9655
      %v9665 = vld [vmem:[#allocation2 + $0x2] sm:$0xff]
      %v9666 = vld [vmem:[#allocation2 + $0xa] sm:$0x3f]
      %s9667 = scalar_lea.vmem %s2, 52
      %v9668 = vld [vmem:[%s9667] sm:$0x3]
      %9670 = vst [vmem:[#allocation1] ss:$4 sm:$0xff] %v9665
      %s9672 = scalar_lea.vmem [#allocation1], 32
      %9673 = vst [vmem:[%s9672] ss:$4 sm:$0xff] %v9666
      %v9674 = vld.sshfl [vmem:[#allocation1] sm:$0xff pattern:$0x73625140]
      %v9676 = vld.sshfl [vmem:[#allocation1 + $0x8] sm:$0xff pattern:$0x73625140]
      %v9678 = vld.sshfl [vmem:[#allocation1 + $0x10] sm:$0xff pattern:$0x73625140]
      %v9680 = vld.sshfl [vmem:[#allocation1 + $0x18] sm:$0xff pattern:$0x73625140]
      %v9682 = vld.sshfl [vmem:[#allocation1 + $0x20] sm:$0xff pattern:$0x73625140]
      %v9684 = vld.sshfl [vmem:[#allocation1 + $0x28] sm:$0xff pattern:$0x73625140]
      %v9686 = vld.sshfl [vmem:[#allocation1 + $0x30] sm:$0xff pattern:$0x73625140]
      %9688 = vrot.lane.b32.xlu0 %v9674, 34
      %v9689 = vpop.permute.xlu0 %9688
      %9690 = vrot.lane.b32.xlu0 %v9676, 34
      %v9691 = vpop.permute.xlu0 %9690
      %9692 = vrot.lane.b32.xlu0 %v9678, 34
      %v9693 = vpop.permute.xlu0 %9692
      %9694 = vrot.lane.b32.xlu0 %v9680, 34
      %v9695 = vpop.permute.xlu0 %9694
      %9696 = vrot.lane.b32.xlu0 %v9682, 34
      %v9697 = vpop.permute.xlu0 %9696
      %9698 = vrot.lane.b32.xlu0 %v9684, 34
      %v9699 = vpop.permute.xlu0 %9698
      %9700 = vrot.lane.b32.xlu0 %v9686, 34
      %v9701 = vpop.permute.xlu0 %9700
      %v9702 = vsel %vm5188, %v9689, %v9691
      %v9703 = vsel %vm5188, %v9691, %v9693
      %v9704 = vsel %vm5188, %v9693, %v9695
      %v9705 = vsel %vm5188, %v9695, %v9697
      %v9706 = vsel %vm5188, %v9697, %v9699
      %v9707 = vsel %vm5188, %v9699, %v9701
      %v9709 = vsel %vm365, %v9668, 0
      %v9712 = vsel %vm254, %v9702, 0
      %v9715 = vsel %vm254, %v9703, 0
      %v9718 = vsel %vm254, %v9704, 0
      %v9721 = vsel %vm254, %v9705, 0
      %v9724 = vsel %vm254, %v9706, 0
      %v9727 = vsel %vm254, %v9707, 0
      %v9730 = vsel %vm254, %v9701, 0
      %9732 = vmatpush.bf16.msra.mxu0 0
      %9733 = vmatpush.bf16.msra.mxu0 0
      %9734 = vmatpush.bf16.msra.mxu0 0
      %9735 = vmatpush.bf16.msra.mxu0 0
      %9736 = vmatpush.bf16.msra.mxu0 0
      %9737 = vmatpush.bf16.msra.mxu0 0
      %9738 = vmatpush.bf16.msra.mxu0 0
      %9739 = vmatpush.bf16.msra.mxu0 %v9712
      %9740 = vmatmul.bf16.gmra.mxu0 %v9709
      %v9741 = vpop.f32.mrf.mxu0
      %v9742 = vadd.f32 0.0, %v9741
      %v9743 = vpop.f32.mrf.mxu0
      %9744 = vdwg.mxu0
      %9745 = vmatpush.bf16.msra.mxu0 0
      %9746 = vmatpush.bf16.msra.mxu0 0
      %9747 = vmatpush.bf16.msra.mxu0 0
      %9748 = vmatpush.bf16.msra.mxu0 0
      %9749 = vmatpush.bf16.msra.mxu0 0
      %9750 = vmatpush.bf16.msra.mxu0 0
      %9751 = vmatpush.bf16.msra.mxu0 0
      %9752 = vmatpush.bf16.msra.mxu0 %v9715
      %9753 = vmatmul.bf16.gmra.mxu0 %v9709
      %v9754 = vpop.f32.mrf.mxu0
      %v9755 = vadd.f32 0.0, %v9754
      %v9756 = vpop.f32.mrf.mxu0
      %9757 = vdwg.mxu0
      %9758 = vmatpush.bf16.msra.mxu0 0
      %9759 = vmatpush.bf16.msra.mxu0 0
      %9760 = vmatpush.bf16.msra.mxu0 0
      %9761 = vmatpush.bf16.msra.mxu0 0
      %9762 = vmatpush.bf16.msra.mxu0 0
      %9763 = vmatpush.bf16.msra.mxu0 0
      %9764 = vmatpush.bf16.msra.mxu0 0
      %9765 = vmatpush.bf16.msra.mxu0 %v9718
      %9766 = vmatmul.bf16.gmra.mxu0 %v9709
      %v9767 = vpop.f32.mrf.mxu0
      %v9768 = vadd.f32 0.0, %v9767
      %v9769 = vpop.f32.mrf.mxu0
      %9770 = vdwg.mxu0
      %9771 = vmatpush.bf16.msra.mxu0 0
      %9772 = vmatpush.bf16.msra.mxu0 0
      %9773 = vmatpush.bf16.msra.mxu0 0
      %9774 = vmatpush.bf16.msra.mxu0 0
      %9775 = vmatpush.bf16.msra.mxu0 0
      %9776 = vmatpush.bf16.msra.mxu0 0
      %9777 = vmatpush.bf16.msra.mxu0 0
      %9778 = vmatpush.bf16.msra.mxu0 %v9721
      %9779 = vmatmul.bf16.gmra.mxu0 %v9709
      %v9780 = vpop.f32.mrf.mxu0
      %v9781 = vadd.f32 0.0, %v9780
      %v9782 = vpop.f32.mrf.mxu0
      %9783 = vdwg.mxu0
      %9784 = vmatpush.bf16.msra.mxu0 0
      %9785 = vmatpush.bf16.msra.mxu0 0
      %9786 = vmatpush.bf16.msra.mxu0 0
      %9787 = vmatpush.bf16.msra.mxu0 0
      %9788 = vmatpush.bf16.msra.mxu0 0
      %9789 = vmatpush.bf16.msra.mxu0 0
      %9790 = vmatpush.bf16.msra.mxu0 0
      %9791 = vmatpush.bf16.msra.mxu0 %v9724
      %9792 = vmatmul.bf16.gmra.mxu0 %v9709
      %v9793 = vpop.f32.mrf.mxu0
      %v9794 = vadd.f32 0.0, %v9793
      %v9795 = vpop.f32.mrf.mxu0
      %9796 = vdwg.mxu0
      %9797 = vmatpush.bf16.msra.mxu0 0
      %9798 = vmatpush.bf16.msra.mxu0 0
      %9799 = vmatpush.bf16.msra.mxu0 0
      %9800 = vmatpush.bf16.msra.mxu0 0
      %9801 = vmatpush.bf16.msra.mxu0 0
      %9802 = vmatpush.bf16.msra.mxu0 0
      %9803 = vmatpush.bf16.msra.mxu0 0
      %9804 = vmatpush.bf16.msra.mxu0 %v9727
      %9805 = vmatmul.bf16.gmra.mxu0 %v9709
      %v9806 = vpop.f32.mrf.mxu0
      %v9807 = vadd.f32 0.0, %v9806
      %v9808 = vpop.f32.mrf.mxu0
      %9809 = vdwg.mxu0
      %9810 = vmatpush.bf16.msra.mxu0 0
      %9811 = vmatpush.bf16.msra.mxu0 0
      %9812 = vmatpush.bf16.msra.mxu0 0
      %9813 = vmatpush.bf16.msra.mxu0 0
      %9814 = vmatpush.bf16.msra.mxu0 0
      %9815 = vmatpush.bf16.msra.mxu0 0
      %9816 = vmatpush.bf16.msra.mxu0 0
      %9817 = vmatpush.bf16.msra.mxu0 %v9730
      %9818 = vmatmul.bf16.gmra.mxu0 %v9709
      %v9819 = vpop.f32.mrf.mxu0
      %v9820 = vadd.f32 0.0, %v9819
      %v9821 = vpop.f32.mrf.mxu0
      %9822 = vdwg.mxu0
      %v9823 = vadd.f32 %v9658, %v9742
      %v9824 = vadd.f32 %v9659, %v9755
      %v9825 = vadd.f32 %v9660, %v9768
      %v9826 = vadd.f32 %v9661, %v9781
      %v9827 = vadd.f32 %v9662, %v9794
      %v9828 = vadd.f32 %v9663, %v9807
      %v9829 = vadd.f32 %v9664, %v9820
      %v9830 = vld [vmem:[%s246] sm:$0xff]
      %v9831 = vld [vmem:[%s246 + $0x8] sm:$0xff]
      %v9832 = vld [vmem:[%s246 + $0x10] sm:$0xff]
      %v9833 = vld [vmem:[%s246 + $0x18] sm:$0xf]
      %v9834 = vld [vmem:[%s4] sm:$0xf]
      %9836 = vset.pattern.permute.xlu0 0
      %9837 = vperm.xlu0 %9836, %v9834
      %v9838 = vpop.permute.xlu0 %9837
      %v9840 = vadd.f32 %v9823, %v9838
      %v9841 = vadd.f32 %v9824, %v9838
      %v9842 = vadd.f32 %v9825, %v9838
      %v9843 = vadd.f32 %v9826, %v9838
      %v9844 = vadd.f32 %v9827, %v9838
      %v9845 = vadd.f32 %v9828, %v9838
      %v9846 = vadd.f32 %v9829, %v9838
      %9851 = vst [vmem:[#allocation1] ss:$2 sm:$0xff] %v9830
      %s9852 = scalar_lea.vmem [#allocation1], 16
      %9853 = vst [vmem:[%s9852] ss:$2 sm:$0xff] %v9831
      %s9854 = scalar_lea.vmem [#allocation1], 32
      %9855 = vst [vmem:[%s9854] ss:$2 sm:$0xff] %v9832
      %s9856 = scalar_lea.vmem [#allocation1], 48
      %9857 = vst [vmem:[%s9856] ss:$2 sm:$0xff] %v9833
      %v9858 = vld.sshfl [vmem:[#allocation1] sm:$0xff pattern:$0x75316420]
      %v9859 = vld.sshfl [vmem:[#allocation1 + $0x8] sm:$0xff pattern:$0x75316420]
      %v9860 = vld.sshfl [vmem:[#allocation1 + $0x10] sm:$0xff pattern:$0x75316420]
      %v9861 = vld.sshfl [vmem:[#allocation1 + $0x18] sm:$0xff pattern:$0x75316420]
      %v9862 = vld.sshfl [vmem:[#allocation1 + $0x20] sm:$0xff pattern:$0x75316420]
      %v9863 = vld.sshfl [vmem:[#allocation1 + $0x28] sm:$0xff pattern:$0x75316420]
      %v9864 = vld.sshfl [vmem:[#allocation1 + $0x30] sm:$0xff pattern:$0x75316420]
      %9865 = vrot.lane.b32.xlu0 %v9858, 17
      %v9866 = vpop.permute.xlu0 %9865
      %9867 = vrot.lane.b32.xlu0 %v9859, 17
      %v9868 = vpop.permute.xlu0 %9867
      %9869 = vrot.lane.b32.xlu0 %v9860, 17
      %v9870 = vpop.permute.xlu0 %9869
      %9871 = vrot.lane.b32.xlu0 %v9861, 17
      %v9872 = vpop.permute.xlu0 %9871
      %9873 = vrot.lane.b32.xlu0 %v9862, 17
      %v9874 = vpop.permute.xlu0 %9873
      %9875 = vrot.lane.b32.xlu0 %v9863, 17
      %v9876 = vpop.permute.xlu0 %9875
      %9877 = vrot.lane.b32.xlu0 %v9864, 17
      %v9878 = vpop.permute.xlu0 %9877
      %vm9879 = vcmask 138240
      %v9880 = vsel %vm9879, %v9866, %v9868
      %v9881 = vsel %vm9879, %v9868, %v9870
      %v9882 = vsel %vm9879, %v9870, %v9872
      %v9883 = vsel %vm9879, %v9872, %v9874
      %v9884 = vsel %vm9879, %v9874, %v9876
      %v9885 = vsel %vm9879, %v9876, %v9878
      %v9893 = vadd.f32 %v9840, %v9880
      %v9894 = vadd.f32 %v9841, %v9881
      %v9895 = vadd.f32 %v9842, %v9882
      %v9896 = vadd.f32 %v9843, %v9883
      %v9897 = vadd.f32 %v9844, %v9884
      %v9898 = vadd.f32 %v9845, %v9885
      %v9899 = vadd.f32 %v9846, %v9878
      %v9900 = vmax.f32 %v9893, 0.0
      %v9901 = vmax.f32 %v9894, 0.0
      %v9902 = vmax.f32 %v9895, 0.0
      %v9903 = vmax.f32 %v9896, 0.0
      %v9904 = vmax.f32 %v9897, 0.0
      %v9905 = vmax.f32 %v9898, 0.0
      %v9906 = vmax.f32 %v9899, 0.0
      %v9913 = vrot.slane %v9901, 4
      %v9914 = vrot.slane %v9903, 4
      %v9915 = vrot.slane %v9905, 4
      %v9916 = vsel %vm5380, %v9900, %v9913
      %v9917 = vsel %vm5380, %v9902, %v9914
      %v9918 = vsel %vm5380, %v9904, %v9915
      %9922 = vst [vmem:[%s251] sm:$0xff] %v9916
      %9923 = vst [vmem:[%s251 + $0x8] sm:$0xff] %v9917
      %9924 = vst [vmem:[%s251 + $0x10] sm:$0xff] %v9918
      %vm9925 = vcmask 76800
      %9926 = vst.msk [vmem:[%s251 + $0x18] sm:$0xf] %vm9925, %v9906
      %p9927 = scmp.lt.s32.totalorder %s17, 1
      %s9928 = scalar_select %p9927, %s17, 1
      %s9929 = smul.addr %s9928, 7
      %s9930 = smul.addr %s9929, 4
      %s9931 = scalar_lea.vmem %s6, %s9930
      // Predicated region
      $region45: #{basic_block_forward.1} parent=43 // pred_check
        %p9932 = pneg %p166
      $region46: #{basic_block_forward.1} parent=43 // pred_check_branch
        %9934 = sbr.rel (%p9932) target = $region48
      $region47: #{basic_block_forward.1} parent=43 // pred_region
        _
      $region48: #{basic_block_forward.1} parent=43 // pred_fallthru
        _
    $region44: #{basic_block_forward.1} parent=5 // pred_fallthru
      _
    %p9935 = scmp.le.s32.totalorder 2, %s12
    // Predicated region
    $region49: #{basic_block_forward.1} parent=5 // pred_check
      %p9936 = pneg %p9935
    $region50: #{basic_block_forward.1} parent=5 // pred_check_branch
      %9938 = sbr.rel (%p9936) target = $region52
    $region51: #{basic_block_forward.1} parent=5 // pred_region
      %s9939 = ssub.s32 %s12, 2
      // Predicated region
      $region53: #{basic_block_forward.1} parent=51 // pred_check
        %p9940 = pneg %p172
      $region54: #{basic_block_forward.1} parent=51 // pred_check_branch
        %9942 = sbr.rel (%p9940) target = $region56
      $region55: #{basic_block_forward.1} parent=51 // pred_region
        %p9943 = scmp.lt.s32.totalorder %s18, 1
        %s9944 = scalar_select %p9943, %s18, 1
        %s9945 = smul.addr %s9944, 7
        %s9946 = smul.addr %s9945, 4
        %s9947 = scalar_lea.vmem %s6, %s9946
      $region56: #{basic_block_forward.1} parent=51 // pred_fallthru
        _
    $region52: #{basic_block_forward.1} parent=5 // pred_fallthru
      _
  $region6: #{basic_block_forward.1} parent=0 // loop_footer
    %s16 = sadd.s32 1, %s12
  $region7: #{basic_block_forward.1} parent=0 // loop_footer_branch
    %11 = sbr.rel target = $region3
  $region8: #{basic_block_forward.1} parent=0 // loop_exit
    _

</llo_original>
